<compile_context>
chip_gen: v7x
topology: tpu7x:2x2x1
jax: 0.10.0
libtpu: 0.0.40
codegen_flags: <defaults>
</compile_context>

<pallas_src>
import functools
import math

import jax
import jax.numpy as jnp
from jax.experimental import pallas as pl
from jax.experimental.pallas import tpu as pltpu

# ----------------------------- model config ---------------------------------
HIDDEN = 32        # model_opt.rnn_size == model_opt.tgt_word_vec_size
HEADS = 4
HEAD_DIM = HIDDEN // HEADS
FF_DIM = 64        # positionwise feed-forward inner dim
ACTION = 8         # model_opt.action_size
VOCAB = 50
PAD = 1            # onmt word_padding_idx
ENC_LAYERS = 2
DEC_LAYERS = 2     # TransformerDecoderWithStates(2, ...)
EPS = 1e-6
NEG = -1e18
BF16 = jnp.bfloat16

# Attention-module order for packed params:
#   0: enc L0 self, 1: enc L1 self,
#   2: dec L0 self, 3: dec L0 ctx, 4: dec L1 self, 5: dec L1 ctx
# LayerNorm order:
#   0: enc L0 pre-attn, 1: enc L0 ff, 2: enc L1 pre-attn, 3: enc L1 ff,
#   4: enc final, 5..7: dec L0 (ln1, ln2, ff), 8..10: dec L1 (ln1, ln2, ff),
#   11: dec final
# FF order: 0: enc L0, 1: enc L1, 2: dec L0, 3: dec L1

WEIGHT_KEYS = ("aw_qkv", "ab_qkv", "aw_out", "ab_out",
               "ln_g", "ln_b",
               "ff_w1", "ff_b1", "ff_w2", "ff_b2",
               "proj_w", "proj_b", "val_wT", "val_b")


# ----------------------------- fused Pallas kernel ---------------------------
def _critic_kernel(tgt_x_ref, hyp_x_ref, sa_ref,
                   enc_b_ref, dself_b_ref, dctx_b_ref,
                   aw_qkv_ref, ab_qkv_ref, aw_out_ref, ab_out_ref,
                   ln_g_ref, ln_b_ref,
                   ff_w1_ref, ff_b1_ref, ff_w2_ref, ff_b2_ref,
                   proj_w_ref, proj_b_ref,
                   val_wT_ref, val_b_ref,
                   out_ref):
    f32 = jnp.float32
    nt_dims = (((1,), (1,)), ((), ()))          # contract last dims (A @ B^T)

    # bf16 MXU operands, f32 accumulation; elementwise math stays f32.
    def mm(a, b):
        return jnp.dot(a.astype(BF16), b.astype(BF16),
                       preferred_element_type=f32)

    def mm_nt(a, b):
        return jax.lax.dot_general(a.astype(BF16), b.astype(BF16), nt_dims,
                                   preferred_element_type=f32)

    def layer_norm(x, i):
        # onmt LayerNorm: gain * (x - mean) / (unbiased_std + eps) + bias
        g = ln_g_ref[i]                          # (1, d)
        beta = ln_b_ref[i]                       # (1, d)
        mean = jnp.mean(x, axis=-1, keepdims=True)
        dx = x - mean
        var = jnp.sum(dx * dx, axis=-1, keepdims=True) * (1.0 / (HIDDEN - 1))
        inv = pl.reciprocal(jnp.sqrt(var) + EPS, approx=True)
        return dx * inv * g + beta

    def attention(m, xq, xkv, bias, is_self):
        # xq: (Rq, d)  xkv: (Rk, d)  bias: (Rq, Rk) additive (-1e18 = masked).
        # Batch handled via block-diagonal bias (rows are batch-major b*L).
        # Q weights/biases are pre-scaled by 1/sqrt(HEAD_DIM) at pack time.
        if is_self:
            qkv = mm(xq, aw_qkv_ref[m]) + ab_qkv_ref[m]          # (R, 3d)
            q = qkv[:, :HIDDEN]
            k = qkv[:, HIDDEN:2 * HIDDEN]
            v = qkv[:, 2 * HIDDEN:]
        else:
            q = mm(xq, aw_qkv_ref[m, :, :HIDDEN]) + ab_qkv_ref[m, :, :HIDDEN]
            kv = mm(xkv, aw_qkv_ref[m, :, HIDDEN:]) + ab_qkv_ref[m, :, HIDDEN:]
            k = kv[:, :HIDDEN]
            v = kv[:, HIDDEN:]
        ctx_heads = []
        for h in range(HEADS):
            sl = slice(h * HEAD_DIM, (h + 1) * HEAD_DIM)
            s = mm_nt(q[:, sl], k[:, sl]) + bias                 # (Rq, Rk)
            s_max = jnp.max(s, axis=-1, keepdims=True)
            p = jnp.exp(s - s_max)
            p = p * pl.reciprocal(jnp.sum(p, axis=-1, keepdims=True),
                                  approx=True)
            ctx_heads.append(mm(p, v[:, sl]))                    # (Rq, Dh)
        ctx = jnp.concatenate(ctx_heads, axis=-1)                # (Rq, d)
        return mm(ctx, aw_out_ref[m]) + ab_out_ref[m]

    def feed_forward(f, ln_i, x):
        # onmt PositionwiseFeedForward: x + w2(relu(w1(LN(x))))
        h1 = layer_norm(x, ln_i)
        h1 = jnp.maximum(mm(h1, ff_w1_ref[f]) + ff_b1_ref[f], 0.0)
        return x + mm(h1, ff_w2_ref[f]) + ff_b2_ref[f]

    # ---------------- tgt TransformerEncoder ----------------
    x = tgt_x_ref[0]                                     # (Rt, d)
    enc_bias = enc_b_ref[0]                              # (Rt, Rt)
    for l in range(ENC_LAYERS):
        xn = layer_norm(x, 2 * l)
        ctx = attention(l, xn, xn, enc_bias, True)
        x = feed_forward(l, 2 * l + 1, ctx + x)
    memory = layer_norm(x, 4)                            # (Rt, d)

    # ---------------- action/state query projection ----------------
    query = mm(sa_ref[0], proj_w_ref[...]) + proj_b_ref[...]      # (Rh, d)
    y = hyp_x_ref[0] + query

    # ---------------- hyp TransformerDecoderWithStates ----------------
    dself_bias = dself_b_ref[0]                          # (Rh, Rh)
    dctx_bias = dctx_b_ref[0]                            # (Rh, Rt)
    for l in range(DEC_LAYERS):
        yn = layer_norm(y, 5 + 3 * l)
        q = attention(2 + 2 * l, yn, yn, dself_bias, True) + y
        qn = layer_norm(q, 6 + 3 * l)
        mid = attention(3 + 2 * l, qn, memory, dctx_bias, False)
        y = feed_forward(2 + l, 7 + 3 * l, mid + q)
    dec_out = layer_norm(y, 11)                          # (Rh, d)

    # ---------------- value head: Linear(d, 1) + tanh, lane-oriented ---------
    v = mm_nt(val_wT_ref[...], dec_out) + val_b_ref[...]          # (1, Rh)
    out_ref[0] = jnp.tanh(v)


# ----------------------------- glue (plain JAX) -------------------------------
def positional_encoding(max_len, dim):
    position = jnp.arange(max_len, dtype=jnp.float32)[:, None]
    div_term = jnp.exp(jnp.arange(0, dim, 2, dtype=jnp.float32)
                       * -(math.log(10000.0) / dim))
    pe = jnp.zeros((max_len, dim), dtype=jnp.float32)
    pe = pe.at[:, 0::2].set(jnp.sin(position * div_term))
    pe = pe.at[:, 1::2].set(jnp.cos(position * div_term))
    return pe[:, None, :]                                 # (L, 1, dim)


def embed(table, ids):
    """onmt Embeddings with positional encoding: lut * sqrt(d) + PE."""
    L = ids.shape[0]
    e = jnp.take(table, ids, axis=0) * math.sqrt(HIDDEN)  # (L, b, d)
    return e + positional_encoding(L, HIDDEN)


def _block_bias(nc, bc, Lq, Lk, key_pad, causal):
    """(nc, bc*Lq, bc*Lk) additive bias: -1e18 where masked, 0 elsewhere.

    Masked = cross-batch (within chunk) OR key-pad OR (optional) future.
    key_pad: (nc, bc*Lk) bool.
    """
    rq = jnp.arange(bc * Lq) // Lq
    ck = jnp.arange(bc * Lk) // Lk
    m = rq[:, None] != ck[None, :]
    if causal:
        qi = jnp.arange(bc * Lq) % Lq
        ki = jnp.arange(bc * Lk) % Lk
        m = m | (ki[None, :] > qi[:, None])
    m = m[None, :, :] | key_pad[:, None, :]
    return jnp.where(m, jnp.float32(NEG), jnp.float32(0.0))


def _num_batch_chunks(b):
    """Split batch across TensorCores on v7x (2 TC/chip); else 1 chunk."""
    try:
        kind = jax.devices()[0].device_kind.lower()
    except Exception:
        return 1
    if "v7" in kind and b % 2 == 0:
        return 2
    return 1


# ----------------------------- full critic forward ----------------------------
def ddpg_critic_forward(packed, states, tgt, actions, hyp, num_chunks=1):
    """
    states : (seq_len, b, rnn_size)       float32
    tgt    : (tgt_seq_len, b, 1)          int32  token ids
    actions: (seq_len, b, action_size)    float32
    hyp    : (hyp_seq_len, b, 1)          int32  token ids (hyp_seq_len==seq_len)
    returns: (seq_len, b, 1)              Q(a_t, s_t) in (-1, 1)
    """
    d = HIDDEN
    tgt_ids = tgt[:, :, 0]                         # (T, b)
    hyp_ids = hyp[:, :, 0]                         # (H, b)
    T, b = tgt_ids.shape
    Hs = hyp_ids.shape[0]
    nc = num_chunks if (b % num_chunks == 0) else 1
    bc = b // nc

    # Embeddings + positional encodings (tiny XLA glue), batch-major rows,
    # then chunked along the leading (grid) axis.
    tgt_x = jnp.transpose(embed(packed["dec_emb"], tgt_ids), (1, 0, 2))
    hyp_x = jnp.transpose(embed(packed["enc_emb"], hyp_ids), (1, 0, 2))
    sa = jnp.transpose(jnp.concatenate([states, actions], axis=2), (1, 0, 2))
    tgt_x3 = tgt_x.reshape(nc, bc * T, d)
    hyp_x3 = hyp_x.reshape(nc, bc * Hs, d)
    sa3 = sa.reshape(nc, bc * Hs, d + ACTION)

    # Additive score biases (shared across heads/layers); batch handled
    # block-diagonally within each chunk.
    src_pad = (tgt_ids.T == PAD).reshape(nc, bc * T)
    hyp_pad = (hyp_ids.T == PAD).reshape(nc, bc * Hs)
    enc_bias = _block_bias(nc, bc, T, T, src_pad, causal=False)
    dself_bias = _block_bias(nc, bc, Hs, Hs, hyp_pad, causal=True)
    dctx_bias = _block_bias(nc, bc, Hs, T, src_pad, causal=False)

    def chunk_spec(a):
        return pl.BlockSpec((1,) + a.shape[1:], lambda i: (i, 0, 0))

    def const_spec(a):
        nd = a.ndim
        return pl.BlockSpec(a.shape, lambda i, nd=nd: (0,) * nd)

    data = (tgt_x3, hyp_x3, sa3, enc_bias, dself_bias, dctx_bias)
    weights = tuple(packed[k] for k in WEIGHT_KEYS)

    out = pl.pallas_call(
        _critic_kernel,
        grid=(nc,),
        in_specs=[chunk_spec(a) for a in data] + [const_spec(w) for w in weights],
        out_specs=pl.BlockSpec((1, 1, bc * Hs), lambda i: (i, 0, 0)),
        out_shape=jax.ShapeDtypeStruct((nc, 1, bc * Hs), jnp.float32),
        compiler_params=pltpu.CompilerParams(
            dimension_semantics=("parallel",)),
    )(*data, *weights)

    return jnp.transpose(out.reshape(b, Hs))[:, :, None]      # (H, b, 1)


# ----------------------------- parameter packing -------------------------------
def _pack_attn(pa):
    scale = 1.0 / math.sqrt(HEAD_DIM)
    # Fold the softmax scale into the Q weights/bias; fuse Q|K|V along lanes.
    w_qkv = jnp.concatenate([pa["wq"] * scale, pa["wk"], pa["wv"]], axis=1)
    b_qkv = jnp.concatenate([pa["bq"] * scale, pa["bk"], pa["bv"]],
                            axis=0).reshape(1, 3 * HIDDEN)
    return w_qkv, b_qkv, pa["wo"], pa["bo"].reshape(1, HIDDEN)


def pack_params(p):
    enc, dec = p["enc_layers"], p["dec_layers"]
    attn_modules = [enc[0]["attn"], enc[1]["attn"],
                    dec[0]["self_attn"], dec[0]["ctx_attn"],
                    dec[1]["self_attn"], dec[1]["ctx_attn"]]
    packs = [_pack_attn(a) for a in attn_modules]

    ln_gs = [enc[0]["ln_g"], enc[0]["ff"]["ln_g"], enc[1]["ln_g"], enc[1]["ff"]["ln_g"],
             p["enc_ln_g"],
             dec[0]["ln1_g"], dec[0]["ln2_g"], dec[0]["ff"]["ln_g"],
             dec[1]["ln1_g"], dec[1]["ln2_g"], dec[1]["ff"]["ln_g"],
             p["dec_ln_g"]]
    ln_bs = [enc[0]["ln_b"], enc[0]["ff"]["ln_b"], enc[1]["ln_b"], enc[1]["ff"]["ln_b"],
             p["enc_ln_b"],
             dec[0]["ln1_b"], dec[0]["ln2_b"], dec[0]["ff"]["ln_b"],
             dec[1]["ln1_b"], dec[1]["ln2_b"], dec[1]["ff"]["ln_b"],
             p["dec_ln_b"]]
    ffs = [enc[0]["ff"], enc[1]["ff"], dec[0]["ff"], dec[1]["ff"]]

    return {
        "dec_emb": p["dec_emb"], "enc_emb": p["enc_emb"],
        # Matmul weights stored bf16 (MXU-native on v6e/v7x); biases stay f32.
        "aw_qkv": jnp.stack([x[0] for x in packs]).astype(BF16),    # (6, 32, 96)
        "ab_qkv": jnp.stack([x[1] for x in packs]),                 # (6, 1, 96)
        "aw_out": jnp.stack([x[2] for x in packs]).astype(BF16),    # (6, 32, 32)
        "ab_out": jnp.stack([x[3] for x in packs]),                 # (6, 1, 32)
        "ln_g": jnp.stack(ln_gs).reshape(12, 1, HIDDEN),
        "ln_b": jnp.stack(ln_bs).reshape(12, 1, HIDDEN),
        "ff_w1": jnp.stack([f["w1"] for f in ffs]).astype(BF16),    # (4, 32, 64)
        "ff_b1": jnp.stack([f["b1"].reshape(1, FF_DIM) for f in ffs]),
        "ff_w2": jnp.stack([f["w2"] for f in ffs]).astype(BF16),    # (4, 64, 32)
        "ff_b2": jnp.stack([f["b2"].reshape(1, HIDDEN) for f in ffs]),
        "proj_w": p["proj_w"].astype(BF16),                         # (40, 32)
        "proj_b": p["proj_b"].reshape(1, HIDDEN),
        "val_wT": p["val_w"].T.astype(BF16),                        # (1, 32)
        "val_b": p["val_b"].reshape(1, 1),
    }


# ----------------------------- deterministic init ------------------------------
def _lin(key, fan_in, fan_out):
    k1, k2 = jax.random.split(key)
    bound = 1.0 / math.sqrt(fan_in)
    w = jax.random.uniform(k1, (fan_in, fan_out), jnp.float32, -bound, bound)
    bias = jax.random.uniform(k2, (fan_out,), jnp.float32, -bound, bound)
    return w, bias


def _attn_params(key):
    ks = jax.random.split(key, 4)
    wq, bq = _lin(ks[0], HIDDEN, HIDDEN)
    wk, bk = _lin(ks[1], HIDDEN, HIDDEN)
    wv, bv = _lin(ks[2], HIDDEN, HIDDEN)
    wo, bo = _lin(ks[3], HIDDEN, HIDDEN)
    return dict(wq=wq, bq=bq, wk=wk, bk=bk, wv=wv, bv=bv, wo=wo, bo=bo)


def _ff_params(key):
    k1, k2 = jax.random.split(key)
    w1, b1 = _lin(k1, HIDDEN, FF_DIM)
    w2, b2 = _lin(k2, FF_DIM, HIDDEN)
    return dict(ln_g=jnp.ones((HIDDEN,)), ln_b=jnp.zeros((HIDDEN,)),
                w1=w1, b1=b1, w2=w2, b2=b2)


def init_params(key):
    keys = jax.random.split(key, 16)
    params = {
        "dec_emb": 0.1 * jax.random.normal(keys[0], (VOCAB, HIDDEN), jnp.float32),
        "enc_emb": 0.1 * jax.random.normal(keys[1], (VOCAB, HIDDEN), jnp.float32),
        "enc_ln_g": jnp.ones((HIDDEN,)), "enc_ln_b": jnp.zeros((HIDDEN,)),
        "dec_ln_g": jnp.ones((HIDDEN,)), "dec_ln_b": jnp.zeros((HIDDEN,)),
    }
    params["proj_w"], params["proj_b"] = _lin(keys[2], HIDDEN + ACTION, HIDDEN)
    params["val_w"], params["val_b"] = _lin(keys[3], HIDDEN, 1)

    enc_layers = []
    for i in range(ENC_LAYERS):
        k1, k2 = jax.random.split(keys[4 + i])
        enc_layers.append(dict(ln_g=jnp.ones((HIDDEN,)), ln_b=jnp.zeros((HIDDEN,)),
                               attn=_attn_params(k1), ff=_ff_params(k2)))
    params["enc_layers"] = enc_layers

    dec_layers = []
    for i in range(DEC_LAYERS):
        k1, k2, k3 = jax.random.split(keys[8 + i], 3)
        dec_layers.append(dict(
            ln1_g=jnp.ones((HIDDEN,)), ln1_b=jnp.zeros((HIDDEN,)),
            ln2_g=jnp.ones((HIDDEN,)), ln2_b=jnp.zeros((HIDDEN,)),
            self_attn=_attn_params(k1), ctx_attn=_attn_params(k2),
            ff=_ff_params(k3)))
    params["dec_layers"] = dec_layers
    # TODO(synk): MLPResBlock res_layers exist in __init__ but are never used
    #             in ddpg_critic_layer.forward, so no parameters are created.
    return params


# ----------------------------- demo -------------------------------------------
if __name__ == "__main__":
    key = jax.random.PRNGKey(0)
    kp, ks, ka, kt, kh = jax.random.split(key, 5)

    params = init_params(kp)
    packed = pack_params(params)      # one-time packing into VMEM-friendly arrays

    B = 2
    SEQ = 8        # states / actions / hyp length
    TGT = 10       # tgt (memory) length

    states = jax.random.normal(ks, (SEQ, B, HIDDEN), jnp.float32)
    actions = jax.random.normal(ka, (SEQ, B, ACTION), jnp.float32)
    tgt = jax.random.randint(kt, (TGT, B, 1), 2, VOCAB, jnp.int32)
    hyp = jax.random.randint(kh, (SEQ, B, 1), 2, VOCAB, jnp.int32)
    # introduce some padding tokens to exercise the mask path
    tgt = tgt.at[-1, 1, 0].set(PAD)
    hyp = hyp.at[-1, 0, 0].set(PAD)

    nc = _num_batch_chunks(B)         # 2 on v7x (both TensorCores), else 1
    fwd = jax.jit(functools.partial(ddpg_critic_forward, packed, num_chunks=nc))
    q_values = fwd(states, tgt, actions, hyp)
    jax.block_until_ready(q_values)

    assert q_values.shape == (SEQ, B, 1)
    assert bool(jnp.all(jnp.isfinite(q_values)))
    assert bool(jnp.all(jnp.abs(q_values) <= 1.0))
    print("KERNEL_OK")
</pallas_src>

<mosaic_0001>
module attributes {stable_mosaic.version = 11 : i64} {
  func.func @_critic_kernel(%arg0: i32, %arg1: memref<1x20x32xf32, #tpu.memory_space<vmem>>, %arg2: memref<1x16x32xf32, #tpu.memory_space<vmem>>, %arg3: memref<1x16x40xf32, #tpu.memory_space<vmem>>, %arg4: memref<1x20x20xf32, #tpu.memory_space<vmem>>, %arg5: memref<1x16x16xf32, #tpu.memory_space<vmem>>, %arg6: memref<1x16x20xf32, #tpu.memory_space<vmem>>, %arg7: memref<6x32x96xbf16, #tpu.memory_space<vmem>>, %arg8: memref<6x1x96xf32, #tpu.memory_space<vmem>>, %arg9: memref<6x32x32xbf16, #tpu.memory_space<vmem>>, %arg10: memref<6x1x32xf32, #tpu.memory_space<vmem>>, %arg11: memref<12x1x32xf32, #tpu.memory_space<vmem>>, %arg12: memref<12x1x32xf32, #tpu.memory_space<vmem>>, %arg13: memref<4x32x64xbf16, #tpu.memory_space<vmem>>, %arg14: memref<4x1x64xf32, #tpu.memory_space<vmem>>, %arg15: memref<4x64x32xbf16, #tpu.memory_space<vmem>>, %arg16: memref<4x1x32xf32, #tpu.memory_space<vmem>>, %arg17: memref<40x32xbf16, #tpu.memory_space<vmem>>, %arg18: memref<1x32xf32, #tpu.memory_space<vmem>>, %arg19: memref<1x32xbf16, #tpu.memory_space<vmem>>, %arg20: memref<1x1xf32, #tpu.memory_space<vmem>>, %arg21: memref<1x1x16xf32, #tpu.memory_space<vmem>>) attributes {dimension_semantics = [#tpu.dimension_semantics<parallel>], iteration_bounds = array<i64: 1>, scalar_prefetch = 0 : i64, scratch_operands = 0 : i64, tpu.core_type = #tpu.core_type<tc>, window_params = [{transform_indices = @transform_0, window_bounds = array<i64: 1, 20, 32>}, {transform_indices = @transform_1, window_bounds = array<i64: 1, 16, 32>}, {transform_indices = @transform_2, window_bounds = array<i64: 1, 16, 40>}, {transform_indices = @transform_3, window_bounds = array<i64: 1, 20, 20>}, {transform_indices = @transform_4, window_bounds = array<i64: 1, 16, 16>}, {transform_indices = @transform_5, window_bounds = array<i64: 1, 16, 20>}, {pipeline_mode = #tpu.pipeline_mode<synchronous>, transform_indices = @transform_6, window_bounds = array<i64: 6, 32, 96>}, {pipeline_mode = #tpu.pipeline_mode<synchronous>, transform_indices = @transform_7, window_bounds = array<i64: 6, 1, 96>}, {pipeline_mode = #tpu.pipeline_mode<synchronous>, transform_indices = @transform_8, window_bounds = array<i64: 6, 32, 32>}, {pipeline_mode = #tpu.pipeline_mode<synchronous>, transform_indices = @transform_9, window_bounds = array<i64: 6, 1, 32>}, {pipeline_mode = #tpu.pipeline_mode<synchronous>, transform_indices = @transform_10, window_bounds = array<i64: 12, 1, 32>}, {pipeline_mode = #tpu.pipeline_mode<synchronous>, transform_indices = @transform_11, window_bounds = array<i64: 12, 1, 32>}, {pipeline_mode = #tpu.pipeline_mode<synchronous>, transform_indices = @transform_12, window_bounds = array<i64: 4, 32, 64>}, {pipeline_mode = #tpu.pipeline_mode<synchronous>, transform_indices = @transform_13, window_bounds = array<i64: 4, 1, 64>}, {pipeline_mode = #tpu.pipeline_mode<synchronous>, transform_indices = @transform_14, window_bounds = array<i64: 4, 64, 32>}, {pipeline_mode = #tpu.pipeline_mode<synchronous>, transform_indices = @transform_15, window_bounds = array<i64: 4, 1, 32>}, {pipeline_mode = #tpu.pipeline_mode<synchronous>, transform_indices = @transform_16, window_bounds = array<i64: 40, 32>}, {pipeline_mode = #tpu.pipeline_mode<synchronous>, transform_indices = @transform_17, window_bounds = array<i64: 1, 32>}, {pipeline_mode = #tpu.pipeline_mode<synchronous>, transform_indices = @transform_18, window_bounds = array<i64: 1, 32>}, {pipeline_mode = #tpu.pipeline_mode<synchronous>, transform_indices = @transform_19, window_bounds = array<i64: 1, 1>}, {transform_indices = @transform_20, window_bounds = array<i64: 1, 1, 16>}]} {
    %c0 = arith.constant 0 : index
    %c0_0 = arith.constant 0 : index
    %c0_1 = arith.constant 0 : index
    %0 = vector.load %arg1[%c0, %c0_0, %c0_1] : memref<1x20x32xf32, #tpu.memory_space<vmem>>, vector<1x20x32xf32>
    %1 = vector.shape_cast %0 : vector<1x20x32xf32> to vector<20x32xf32>
    %c0_2 = arith.constant 0 : index
    %c0_3 = arith.constant 0 : index
    %c0_4 = arith.constant 0 : index
    %2 = vector.load %arg4[%c0_2, %c0_3, %c0_4] : memref<1x20x20xf32, #tpu.memory_space<vmem>>, vector<1x20x20xf32>
    %3 = vector.shape_cast %2 : vector<1x20x20xf32> to vector<20x20xf32>
    %c0_5 = arith.constant 0 : index
    %c0_6 = arith.constant 0 : index
    %c0_7 = arith.constant 0 : index
    %4 = vector.load %arg11[%c0_5, %c0_6, %c0_7] : memref<12x1x32xf32, #tpu.memory_space<vmem>>, vector<1x1x32xf32>
    %5 = vector.shape_cast %4 : vector<1x1x32xf32> to vector<1x32xf32>
    %c0_8 = arith.constant 0 : index
    %c0_9 = arith.constant 0 : index
    %c0_10 = arith.constant 0 : index
    %6 = vector.load %arg12[%c0_8, %c0_9, %c0_10] : memref<12x1x32xf32, #tpu.memory_space<vmem>>, vector<1x1x32xf32>
    %7 = vector.shape_cast %6 : vector<1x1x32xf32> to vector<1x32xf32>
    %cst = arith.constant dense<0.000000e+00> : vector<20xf32>
    %8 = vector.multi_reduction <add>, %1, %cst [1] : vector<20x32xf32> to vector<20xf32>
    %9 = vector.shape_cast %8 : vector<20xf32> to vector<20x1xf32>
    %cst_11 = arith.constant 3.200000e+01 : f32
    %10 = vector.broadcast %cst_11 : f32 to vector<20x1xf32>
    %11 = arith.divf %9, %10 : vector<20x1xf32>
    %12 = vector.broadcast %11 : vector<20x1xf32> to vector<20x32xf32>
    %13 = arith.subf %1, %12 : vector<20x32xf32>
    %14 = arith.mulf %13, %13 : vector<20x32xf32>
    %cst_12 = arith.constant dense<0.000000e+00> : vector<20xf32>
    %15 = vector.multi_reduction <add>, %14, %cst_12 [1] : vector<20x32xf32> to vector<20xf32>
    %16 = vector.shape_cast %15 : vector<20xf32> to vector<20x1xf32>
    %cst_13 = arith.constant 0.0322580636 : f32
    %17 = vector.broadcast %cst_13 : f32 to vector<20x1xf32>
    %18 = arith.mulf %16, %17 : vector<20x1xf32>
    %19 = math.sqrt %18 : vector<20x1xf32>
    %cst_14 = arith.constant 9.99999997E-7 : f32
    %20 = vector.broadcast %cst_14 : f32 to vector<20x1xf32>
    %21 = arith.addf %19, %20 : vector<20x1xf32>
    %22 = tpu.reciprocal %21 {approx = true} : vector<20x1xf32> -> vector<20x1xf32>
    %23 = vector.broadcast %22 : vector<20x1xf32> to vector<20x32xf32>
    %24 = arith.mulf %13, %23 : vector<20x32xf32>
    %25 = vector.broadcast %5 : vector<1x32xf32> to vector<20x32xf32>
    %26 = arith.mulf %24, %25 : vector<20x32xf32>
    %27 = vector.broadcast %7 : vector<1x32xf32> to vector<20x32xf32>
    %28 = arith.addf %26, %27 : vector<20x32xf32>
    %c0_15 = arith.constant 0 : index
    %c0_16 = arith.constant 0 : index
    %c0_17 = arith.constant 0 : index
    %29 = vector.load %arg7[%c0_15, %c0_16, %c0_17] : memref<6x32x96xbf16, #tpu.memory_space<vmem>>, vector<1x32x96xbf16>
    %30 = vector.shape_cast %29 : vector<1x32x96xbf16> to vector<32x96xbf16>
    %31 = arith.truncf %28 : vector<20x32xf32> to vector<20x32xbf16>
    %cst_18 = arith.constant dense<0.000000e+00> : vector<20x96xf32>
    %32 = tpu.matmul %31, %30, %cst_18 {dimension_numbers = #tpu.dot_dimension_numbers<[1], [0], [0], [1], [0, 0, 1, 1], [], []>} : vector<20x32xbf16>, vector<32x96xbf16>, vector<20x96xf32> -> vector<20x96xf32>
    %c0_19 = arith.constant 0 : index
    %c0_20 = arith.constant 0 : index
    %c0_21 = arith.constant 0 : index
    %33 = vector.load %arg8[%c0_19, %c0_20, %c0_21] : memref<6x1x96xf32, #tpu.memory_space<vmem>>, vector<1x1x96xf32>
    %34 = vector.shape_cast %33 : vector<1x1x96xf32> to vector<1x96xf32>
    %35 = vector.broadcast %34 : vector<1x96xf32> to vector<20x96xf32>
    %36 = arith.addf %32, %35 : vector<20x96xf32>
    %37 = vector.extract_strided_slice %36 {offsets = [0, 0], sizes = [20, 32], strides = [1, 1]} : vector<20x96xf32> to vector<20x32xf32>
    %38 = vector.extract_strided_slice %36 {offsets = [0, 32], sizes = [20, 32], strides = [1, 1]} : vector<20x96xf32> to vector<20x32xf32>
    %39 = vector.extract_strided_slice %36 {offsets = [0, 64], sizes = [20, 32], strides = [1, 1]} : vector<20x96xf32> to vector<20x32xf32>
    %40 = vector.extract_strided_slice %37 {offsets = [0, 0], sizes = [20, 8], strides = [1, 1]} : vector<20x32xf32> to vector<20x8xf32>
    %41 = vector.extract_strided_slice %38 {offsets = [0, 0], sizes = [20, 8], strides = [1, 1]} : vector<20x32xf32> to vector<20x8xf32>
    %42 = arith.truncf %40 : vector<20x8xf32> to vector<20x8xbf16>
    %43 = arith.truncf %41 : vector<20x8xf32> to vector<20x8xbf16>
    %cst_22 = arith.constant dense<0.000000e+00> : vector<20x20xf32>
    %44 = tpu.matmul %42, %43, %cst_22 {dimension_numbers = #tpu.dot_dimension_numbers<[1], [1], [0], [0], [0, 0, 1, 0], [], []>} : vector<20x8xbf16>, vector<20x8xbf16>, vector<20x20xf32> -> vector<20x20xf32>
    %45 = arith.addf %44, %3 : vector<20x20xf32>
    %cst_23 = arith.constant dense<0xFF800000> : vector<20xf32>
    %46 = vector.multi_reduction <maximumf>, %45, %cst_23 [1] : vector<20x20xf32> to vector<20xf32>
    %47 = vector.shape_cast %46 : vector<20xf32> to vector<20x1xf32>
    %48 = vector.broadcast %47 : vector<20x1xf32> to vector<20x20xf32>
    %49 = arith.subf %45, %48 : vector<20x20xf32>
    %50 = math.exp %49 : vector<20x20xf32>
    %cst_24 = arith.constant dense<0.000000e+00> : vector<20xf32>
    %51 = vector.multi_reduction <add>, %50, %cst_24 [1] : vector<20x20xf32> to vector<20xf32>
    %52 = vector.shape_cast %51 : vector<20xf32> to vector<20x1xf32>
    %53 = tpu.reciprocal %52 {approx = true} : vector<20x1xf32> -> vector<20x1xf32>
    %54 = vector.broadcast %53 : vector<20x1xf32> to vector<20x20xf32>
    %55 = arith.mulf %50, %54 : vector<20x20xf32>
    %56 = vector.extract_strided_slice %39 {offsets = [0, 0], sizes = [20, 8], strides = [1, 1]} : vector<20x32xf32> to vector<20x8xf32>
    %57 = arith.truncf %55 : vector<20x20xf32> to vector<20x20xbf16>
    %58 = arith.truncf %56 : vector<20x8xf32> to vector<20x8xbf16>
    %cst_25 = arith.constant dense<0.000000e+00> : vector<20x8xf32>
    %59 = tpu.matmul %57, %58, %cst_25 {dimension_numbers = #tpu.dot_dimension_numbers<[1], [0], [0], [1], [0, 0, 1, 1], [], []>} : vector<20x20xbf16>, vector<20x8xbf16>, vector<20x8xf32> -> vector<20x8xf32>
    %60 = vector.extract_strided_slice %37 {offsets = [0, 8], sizes = [20, 8], strides = [1, 1]} : vector<20x32xf32> to vector<20x8xf32>
    %61 = vector.extract_strided_slice %38 {offsets = [0, 8], sizes = [20, 8], strides = [1, 1]} : vector<20x32xf32> to vector<20x8xf32>
    %62 = arith.truncf %60 : vector<20x8xf32> to vector<20x8xbf16>
    %63 = arith.truncf %61 : vector<20x8xf32> to vector<20x8xbf16>
    %cst_26 = arith.constant dense<0.000000e+00> : vector<20x20xf32>
    %64 = tpu.matmul %62, %63, %cst_26 {dimension_numbers = #tpu.dot_dimension_numbers<[1], [1], [0], [0], [0, 0, 1, 0], [], []>} : vector<20x8xbf16>, vector<20x8xbf16>, vector<20x20xf32> -> vector<20x20xf32>
    %65 = arith.addf %64, %3 : vector<20x20xf32>
    %cst_27 = arith.constant dense<0xFF800000> : vector<20xf32>
    %66 = vector.multi_reduction <maximumf>, %65, %cst_27 [1] : vector<20x20xf32> to vector<20xf32>
    %67 = vector.shape_cast %66 : vector<20xf32> to vector<20x1xf32>
    %68 = vector.broadcast %67 : vector<20x1xf32> to vector<20x20xf32>
    %69 = arith.subf %65, %68 : vector<20x20xf32>
    %70 = math.exp %69 : vector<20x20xf32>
    %cst_28 = arith.constant dense<0.000000e+00> : vector<20xf32>
    %71 = vector.multi_reduction <add>, %70, %cst_28 [1] : vector<20x20xf32> to vector<20xf32>
    %72 = vector.shape_cast %71 : vector<20xf32> to vector<20x1xf32>
    %73 = tpu.reciprocal %72 {approx = true} : vector<20x1xf32> -> vector<20x1xf32>
    %74 = vector.broadcast %73 : vector<20x1xf32> to vector<20x20xf32>
    %75 = arith.mulf %70, %74 : vector<20x20xf32>
    %76 = vector.extract_strided_slice %39 {offsets = [0, 8], sizes = [20, 8], strides = [1, 1]} : vector<20x32xf32> to vector<20x8xf32>
    %77 = arith.truncf %75 : vector<20x20xf32> to vector<20x20xbf16>
    %78 = arith.truncf %76 : vector<20x8xf32> to vector<20x8xbf16>
    %cst_29 = arith.constant dense<0.000000e+00> : vector<20x8xf32>
    %79 = tpu.matmul %77, %78, %cst_29 {dimension_numbers = #tpu.dot_dimension_numbers<[1], [0], [0], [1], [0, 0, 1, 1], [], []>} : vector<20x20xbf16>, vector<20x8xbf16>, vector<20x8xf32> -> vector<20x8xf32>
    %80 = vector.extract_strided_slice %37 {offsets = [0, 16], sizes = [20, 8], strides = [1, 1]} : vector<20x32xf32> to vector<20x8xf32>
    %81 = vector.extract_strided_slice %38 {offsets = [0, 16], sizes = [20, 8], strides = [1, 1]} : vector<20x32xf32> to vector<20x8xf32>
    %82 = arith.truncf %80 : vector<20x8xf32> to vector<20x8xbf16>
    %83 = arith.truncf %81 : vector<20x8xf32> to vector<20x8xbf16>
    %cst_30 = arith.constant dense<0.000000e+00> : vector<20x20xf32>
    %84 = tpu.matmul %82, %83, %cst_30 {dimension_numbers = #tpu.dot_dimension_numbers<[1], [1], [0], [0], [0, 0, 1, 0], [], []>} : vector<20x8xbf16>, vector<20x8xbf16>, vector<20x20xf32> -> vector<20x20xf32>
    %85 = arith.addf %84, %3 : vector<20x20xf32>
    %cst_31 = arith.constant dense<0xFF800000> : vector<20xf32>
    %86 = vector.multi_reduction <maximumf>, %85, %cst_31 [1] : vector<20x20xf32> to vector<20xf32>
    %87 = vector.shape_cast %86 : vector<20xf32> to vector<20x1xf32>
    %88 = vector.broadcast %87 : vector<20x1xf32> to vector<20x20xf32>
    %89 = arith.subf %85, %88 : vector<20x20xf32>
    %90 = math.exp %89 : vector<20x20xf32>
    %cst_32 = arith.constant dense<0.000000e+00> : vector<20xf32>
    %91 = vector.multi_reduction <add>, %90, %cst_32 [1] : vector<20x20xf32> to vector<20xf32>
    %92 = vector.shape_cast %91 : vector<20xf32> to vector<20x1xf32>
    %93 = tpu.reciprocal %92 {approx = true} : vector<20x1xf32> -> vector<20x1xf32>
    %94 = vector.broadcast %93 : vector<20x1xf32> to vector<20x20xf32>
    %95 = arith.mulf %90, %94 : vector<20x20xf32>
    %96 = vector.extract_strided_slice %39 {offsets = [0, 16], sizes = [20, 8], strides = [1, 1]} : vector<20x32xf32> to vector<20x8xf32>
    %97 = arith.truncf %95 : vector<20x20xf32> to vector<20x20xbf16>
    %98 = arith.truncf %96 : vector<20x8xf32> to vector<20x8xbf16>
    %cst_33 = arith.constant dense<0.000000e+00> : vector<20x8xf32>
    %99 = tpu.matmul %97, %98, %cst_33 {dimension_numbers = #tpu.dot_dimension_numbers<[1], [0], [0], [1], [0, 0, 1, 1], [], []>} : vector<20x20xbf16>, vector<20x8xbf16>, vector<20x8xf32> -> vector<20x8xf32>
    %100 = vector.extract_strided_slice %37 {offsets = [0, 24], sizes = [20, 8], strides = [1, 1]} : vector<20x32xf32> to vector<20x8xf32>
    %101 = vector.extract_strided_slice %38 {offsets = [0, 24], sizes = [20, 8], strides = [1, 1]} : vector<20x32xf32> to vector<20x8xf32>
    %102 = arith.truncf %100 : vector<20x8xf32> to vector<20x8xbf16>
    %103 = arith.truncf %101 : vector<20x8xf32> to vector<20x8xbf16>
    %cst_34 = arith.constant dense<0.000000e+00> : vector<20x20xf32>
    %104 = tpu.matmul %102, %103, %cst_34 {dimension_numbers = #tpu.dot_dimension_numbers<[1], [1], [0], [0], [0, 0, 1, 0], [], []>} : vector<20x8xbf16>, vector<20x8xbf16>, vector<20x20xf32> -> vector<20x20xf32>
    %105 = arith.addf %104, %3 : vector<20x20xf32>
    %cst_35 = arith.constant dense<0xFF800000> : vector<20xf32>
    %106 = vector.multi_reduction <maximumf>, %105, %cst_35 [1] : vector<20x20xf32> to vector<20xf32>
    %107 = vector.shape_cast %106 : vector<20xf32> to vector<20x1xf32>
    %108 = vector.broadcast %107 : vector<20x1xf32> to vector<20x20xf32>
    %109 = arith.subf %105, %108 : vector<20x20xf32>
    %110 = math.exp %109 : vector<20x20xf32>
    %cst_36 = arith.constant dense<0.000000e+00> : vector<20xf32>
    %111 = vector.multi_reduction <add>, %110, %cst_36 [1] : vector<20x20xf32> to vector<20xf32>
    %112 = vector.shape_cast %111 : vector<20xf32> to vector<20x1xf32>
    %113 = tpu.reciprocal %112 {approx = true} : vector<20x1xf32> -> vector<20x1xf32>
    %114 = vector.broadcast %113 : vector<20x1xf32> to vector<20x20xf32>
    %115 = arith.mulf %110, %114 : vector<20x20xf32>
    %116 = vector.extract_strided_slice %39 {offsets = [0, 24], sizes = [20, 8], strides = [1, 1]} : vector<20x32xf32> to vector<20x8xf32>
    %117 = arith.truncf %115 : vector<20x20xf32> to vector<20x20xbf16>
    %118 = arith.truncf %116 : vector<20x8xf32> to vector<20x8xbf16>
    %cst_37 = arith.constant dense<0.000000e+00> : vector<20x8xf32>
    %119 = tpu.matmul %117, %118, %cst_37 {dimension_numbers = #tpu.dot_dimension_numbers<[1], [0], [0], [1], [0, 0, 1, 1], [], []>} : vector<20x20xbf16>, vector<20x8xbf16>, vector<20x8xf32> -> vector<20x8xf32>
    %120 = tpu.concatenate %59, %79, %99, %119 in 1 : vector<20x8xf32>, vector<20x8xf32>, vector<20x8xf32>, vector<20x8xf32> -> vector<20x32xf32>
    %c0_38 = arith.constant 0 : index
    %c0_39 = arith.constant 0 : index
    %c0_40 = arith.constant 0 : index
    %121 = vector.load %arg9[%c0_38, %c0_39, %c0_40] : memref<6x32x32xbf16, #tpu.memory_space<vmem>>, vector<1x32x32xbf16>
    %122 = vector.shape_cast %121 : vector<1x32x32xbf16> to vector<32x32xbf16>
    %123 = arith.truncf %120 : vector<20x32xf32> to vector<20x32xbf16>
    %cst_41 = arith.constant dense<0.000000e+00> : vector<20x32xf32>
    %124 = tpu.matmul %123, %122, %cst_41 {dimension_numbers = #tpu.dot_dimension_numbers<[1], [0], [0], [1], [0, 0, 1, 1], [], []>} : vector<20x32xbf16>, vector<32x32xbf16>, vector<20x32xf32> -> vector<20x32xf32>
    %c0_42 = arith.constant 0 : index
    %c0_43 = arith.constant 0 : index
    %c0_44 = arith.constant 0 : index
    %125 = vector.load %arg10[%c0_42, %c0_43, %c0_44] : memref<6x1x32xf32, #tpu.memory_space<vmem>>, vector<1x1x32xf32>
    %126 = vector.shape_cast %125 : vector<1x1x32xf32> to vector<1x32xf32>
    %127 = vector.broadcast %126 : vector<1x32xf32> to vector<20x32xf32>
    %128 = arith.addf %124, %127 : vector<20x32xf32>
    %129 = arith.addf %128, %1 : vector<20x32xf32>
    %c1 = arith.constant 1 : index
    %c0_45 = arith.constant 0 : index
    %c0_46 = arith.constant 0 : index
    %130 = vector.load %arg11[%c1, %c0_45, %c0_46] : memref<12x1x32xf32, #tpu.memory_space<vmem>>, vector<1x1x32xf32>
    %131 = vector.shape_cast %130 : vector<1x1x32xf32> to vector<1x32xf32>
    %c1_47 = arith.constant 1 : index
    %c0_48 = arith.constant 0 : index
    %c0_49 = arith.constant 0 : index
    %132 = vector.load %arg12[%c1_47, %c0_48, %c0_49] : memref<12x1x32xf32, #tpu.memory_space<vmem>>, vector<1x1x32xf32>
    %133 = vector.shape_cast %132 : vector<1x1x32xf32> to vector<1x32xf32>
    %cst_50 = arith.constant dense<0.000000e+00> : vector<20xf32>
    %134 = vector.multi_reduction <add>, %129, %cst_50 [1] : vector<20x32xf32> to vector<20xf32>
    %135 = vector.shape_cast %134 : vector<20xf32> to vector<20x1xf32>
    %cst_51 = arith.constant 3.200000e+01 : f32
    %136 = vector.broadcast %cst_51 : f32 to vector<20x1xf32>
    %137 = arith.divf %135, %136 : vector<20x1xf32>
    %138 = vector.broadcast %137 : vector<20x1xf32> to vector<20x32xf32>
    %139 = arith.subf %129, %138 : vector<20x32xf32>
    %140 = arith.mulf %139, %139 : vector<20x32xf32>
    %cst_52 = arith.constant dense<0.000000e+00> : vector<20xf32>
    %141 = vector.multi_reduction <add>, %140, %cst_52 [1] : vector<20x32xf32> to vector<20xf32>
    %142 = vector.shape_cast %141 : vector<20xf32> to vector<20x1xf32>
    %cst_53 = arith.constant 0.0322580636 : f32
    %143 = vector.broadcast %cst_53 : f32 to vector<20x1xf32>
    %144 = arith.mulf %142, %143 : vector<20x1xf32>
    %145 = math.sqrt %144 : vector<20x1xf32>
    %cst_54 = arith.constant 9.99999997E-7 : f32
    %146 = vector.broadcast %cst_54 : f32 to vector<20x1xf32>
    %147 = arith.addf %145, %146 : vector<20x1xf32>
    %148 = tpu.reciprocal %147 {approx = true} : vector<20x1xf32> -> vector<20x1xf32>
    %149 = vector.broadcast %148 : vector<20x1xf32> to vector<20x32xf32>
    %150 = arith.mulf %139, %149 : vector<20x32xf32>
    %151 = vector.broadcast %131 : vector<1x32xf32> to vector<20x32xf32>
    %152 = arith.mulf %150, %151 : vector<20x32xf32>
    %153 = vector.broadcast %133 : vector<1x32xf32> to vector<20x32xf32>
    %154 = arith.addf %152, %153 : vector<20x32xf32>
    %c0_55 = arith.constant 0 : index
    %c0_56 = arith.constant 0 : index
    %c0_57 = arith.constant 0 : index
    %155 = vector.load %arg13[%c0_55, %c0_56, %c0_57] : memref<4x32x64xbf16, #tpu.memory_space<vmem>>, vector<1x32x64xbf16>
    %156 = vector.shape_cast %155 : vector<1x32x64xbf16> to vector<32x64xbf16>
    %157 = arith.truncf %154 : vector<20x32xf32> to vector<20x32xbf16>
    %cst_58 = arith.constant dense<0.000000e+00> : vector<20x64xf32>
    %158 = tpu.matmul %157, %156, %cst_58 {dimension_numbers = #tpu.dot_dimension_numbers<[1], [0], [0], [1], [0, 0, 1, 1], [], []>} : vector<20x32xbf16>, vector<32x64xbf16>, vector<20x64xf32> -> vector<20x64xf32>
    %c0_59 = arith.constant 0 : index
    %c0_60 = arith.constant 0 : index
    %c0_61 = arith.constant 0 : index
    %159 = vector.load %arg14[%c0_59, %c0_60, %c0_61] : memref<4x1x64xf32, #tpu.memory_space<vmem>>, vector<1x1x64xf32>
    %160 = vector.shape_cast %159 : vector<1x1x64xf32> to vector<1x64xf32>
    %161 = vector.broadcast %160 : vector<1x64xf32> to vector<20x64xf32>
    %162 = arith.addf %158, %161 : vector<20x64xf32>
    %cst_62 = arith.constant 0.000000e+00 : f32
    %163 = vector.broadcast %cst_62 : f32 to vector<20x64xf32>
    %164 = arith.maximumf %162, %163 : vector<20x64xf32>
    %c0_63 = arith.constant 0 : index
    %c0_64 = arith.constant 0 : index
    %c0_65 = arith.constant 0 : index
    %165 = vector.load %arg15[%c0_63, %c0_64, %c0_65] : memref<4x64x32xbf16, #tpu.memory_space<vmem>>, vector<1x64x32xbf16>
    %166 = vector.shape_cast %165 : vector<1x64x32xbf16> to vector<64x32xbf16>
    %167 = arith.truncf %164 : vector<20x64xf32> to vector<20x64xbf16>
    %cst_66 = arith.constant dense<0.000000e+00> : vector<20x32xf32>
    %168 = tpu.matmul %167, %166, %cst_66 {dimension_numbers = #tpu.dot_dimension_numbers<[1], [0], [0], [1], [0, 0, 1, 1], [], []>} : vector<20x64xbf16>, vector<64x32xbf16>, vector<20x32xf32> -> vector<20x32xf32>
    %169 = arith.addf %129, %168 : vector<20x32xf32>
    %c0_67 = arith.constant 0 : index
    %c0_68 = arith.constant 0 : index
    %c0_69 = arith.constant 0 : index
    %170 = vector.load %arg16[%c0_67, %c0_68, %c0_69] : memref<4x1x32xf32, #tpu.memory_space<vmem>>, vector<1x1x32xf32>
    %171 = vector.shape_cast %170 : vector<1x1x32xf32> to vector<1x32xf32>
    %172 = vector.broadcast %171 : vector<1x32xf32> to vector<20x32xf32>
    %173 = arith.addf %169, %172 : vector<20x32xf32>
    %c2 = arith.constant 2 : index
    %c0_70 = arith.constant 0 : index
    %c0_71 = arith.constant 0 : index
    %174 = vector.load %arg11[%c2, %c0_70, %c0_71] : memref<12x1x32xf32, #tpu.memory_space<vmem>>, vector<1x1x32xf32>
    %175 = vector.shape_cast %174 : vector<1x1x32xf32> to vector<1x32xf32>
    %c2_72 = arith.constant 2 : index
    %c0_73 = arith.constant 0 : index
    %c0_74 = arith.constant 0 : index
    %176 = vector.load %arg12[%c2_72, %c0_73, %c0_74] : memref<12x1x32xf32, #tpu.memory_space<vmem>>, vector<1x1x32xf32>
    %177 = vector.shape_cast %176 : vector<1x1x32xf32> to vector<1x32xf32>
    %cst_75 = arith.constant dense<0.000000e+00> : vector<20xf32>
    %178 = vector.multi_reduction <add>, %173, %cst_75 [1] : vector<20x32xf32> to vector<20xf32>
    %179 = vector.shape_cast %178 : vector<20xf32> to vector<20x1xf32>
    %cst_76 = arith.constant 3.200000e+01 : f32
    %180 = vector.broadcast %cst_76 : f32 to vector<20x1xf32>
    %181 = arith.divf %179, %180 : vector<20x1xf32>
    %182 = vector.broadcast %181 : vector<20x1xf32> to vector<20x32xf32>
    %183 = arith.subf %173, %182 : vector<20x32xf32>
    %184 = arith.mulf %183, %183 : vector<20x32xf32>
    %cst_77 = arith.constant dense<0.000000e+00> : vector<20xf32>
    %185 = vector.multi_reduction <add>, %184, %cst_77 [1] : vector<20x32xf32> to vector<20xf32>
    %186 = vector.shape_cast %185 : vector<20xf32> to vector<20x1xf32>
    %cst_78 = arith.constant 0.0322580636 : f32
    %187 = vector.broadcast %cst_78 : f32 to vector<20x1xf32>
    %188 = arith.mulf %186, %187 : vector<20x1xf32>
    %189 = math.sqrt %188 : vector<20x1xf32>
    %cst_79 = arith.constant 9.99999997E-7 : f32
    %190 = vector.broadcast %cst_79 : f32 to vector<20x1xf32>
    %191 = arith.addf %189, %190 : vector<20x1xf32>
    %192 = tpu.reciprocal %191 {approx = true} : vector<20x1xf32> -> vector<20x1xf32>
    %193 = vector.broadcast %192 : vector<20x1xf32> to vector<20x32xf32>
    %194 = arith.mulf %183, %193 : vector<20x32xf32>
    %195 = vector.broadcast %175 : vector<1x32xf32> to vector<20x32xf32>
    %196 = arith.mulf %194, %195 : vector<20x32xf32>
    %197 = vector.broadcast %177 : vector<1x32xf32> to vector<20x32xf32>
    %198 = arith.addf %196, %197 : vector<20x32xf32>
    %c1_80 = arith.constant 1 : index
    %c0_81 = arith.constant 0 : index
    %c0_82 = arith.constant 0 : index
    %199 = vector.load %arg7[%c1_80, %c0_81, %c0_82] : memref<6x32x96xbf16, #tpu.memory_space<vmem>>, vector<1x32x96xbf16>
    %200 = vector.shape_cast %199 : vector<1x32x96xbf16> to vector<32x96xbf16>
    %201 = arith.truncf %198 : vector<20x32xf32> to vector<20x32xbf16>
    %cst_83 = arith.constant dense<0.000000e+00> : vector<20x96xf32>
    %202 = tpu.matmul %201, %200, %cst_83 {dimension_numbers = #tpu.dot_dimension_numbers<[1], [0], [0], [1], [0, 0, 1, 1], [], []>} : vector<20x32xbf16>, vector<32x96xbf16>, vector<20x96xf32> -> vector<20x96xf32>
    %c1_84 = arith.constant 1 : index
    %c0_85 = arith.constant 0 : index
    %c0_86 = arith.constant 0 : index
    %203 = vector.load %arg8[%c1_84, %c0_85, %c0_86] : memref<6x1x96xf32, #tpu.memory_space<vmem>>, vector<1x1x96xf32>
    %204 = vector.shape_cast %203 : vector<1x1x96xf32> to vector<1x96xf32>
    %205 = vector.broadcast %204 : vector<1x96xf32> to vector<20x96xf32>
    %206 = arith.addf %202, %205 : vector<20x96xf32>
    %207 = vector.extract_strided_slice %206 {offsets = [0, 0], sizes = [20, 32], strides = [1, 1]} : vector<20x96xf32> to vector<20x32xf32>
    %208 = vector.extract_strided_slice %206 {offsets = [0, 32], sizes = [20, 32], strides = [1, 1]} : vector<20x96xf32> to vector<20x32xf32>
    %209 = vector.extract_strided_slice %206 {offsets = [0, 64], sizes = [20, 32], strides = [1, 1]} : vector<20x96xf32> to vector<20x32xf32>
    %210 = vector.extract_strided_slice %207 {offsets = [0, 0], sizes = [20, 8], strides = [1, 1]} : vector<20x32xf32> to vector<20x8xf32>
    %211 = vector.extract_strided_slice %208 {offsets = [0, 0], sizes = [20, 8], strides = [1, 1]} : vector<20x32xf32> to vector<20x8xf32>
    %212 = arith.truncf %210 : vector<20x8xf32> to vector<20x8xbf16>
    %213 = arith.truncf %211 : vector<20x8xf32> to vector<20x8xbf16>
    %cst_87 = arith.constant dense<0.000000e+00> : vector<20x20xf32>
    %214 = tpu.matmul %212, %213, %cst_87 {dimension_numbers = #tpu.dot_dimension_numbers<[1], [1], [0], [0], [0, 0, 1, 0], [], []>} : vector<20x8xbf16>, vector<20x8xbf16>, vector<20x20xf32> -> vector<20x20xf32>
    %215 = arith.addf %214, %3 : vector<20x20xf32>
    %cst_88 = arith.constant dense<0xFF800000> : vector<20xf32>
    %216 = vector.multi_reduction <maximumf>, %215, %cst_88 [1] : vector<20x20xf32> to vector<20xf32>
    %217 = vector.shape_cast %216 : vector<20xf32> to vector<20x1xf32>
    %218 = vector.broadcast %217 : vector<20x1xf32> to vector<20x20xf32>
    %219 = arith.subf %215, %218 : vector<20x20xf32>
    %220 = math.exp %219 : vector<20x20xf32>
    %cst_89 = arith.constant dense<0.000000e+00> : vector<20xf32>
    %221 = vector.multi_reduction <add>, %220, %cst_89 [1] : vector<20x20xf32> to vector<20xf32>
    %222 = vector.shape_cast %221 : vector<20xf32> to vector<20x1xf32>
    %223 = tpu.reciprocal %222 {approx = true} : vector<20x1xf32> -> vector<20x1xf32>
    %224 = vector.broadcast %223 : vector<20x1xf32> to vector<20x20xf32>
    %225 = arith.mulf %220, %224 : vector<20x20xf32>
    %226 = vector.extract_strided_slice %209 {offsets = [0, 0], sizes = [20, 8], strides = [1, 1]} : vector<20x32xf32> to vector<20x8xf32>
    %227 = arith.truncf %225 : vector<20x20xf32> to vector<20x20xbf16>
    %228 = arith.truncf %226 : vector<20x8xf32> to vector<20x8xbf16>
    %cst_90 = arith.constant dense<0.000000e+00> : vector<20x8xf32>
    %229 = tpu.matmul %227, %228, %cst_90 {dimension_numbers = #tpu.dot_dimension_numbers<[1], [0], [0], [1], [0, 0, 1, 1], [], []>} : vector<20x20xbf16>, vector<20x8xbf16>, vector<20x8xf32> -> vector<20x8xf32>
    %230 = vector.extract_strided_slice %207 {offsets = [0, 8], sizes = [20, 8], strides = [1, 1]} : vector<20x32xf32> to vector<20x8xf32>
    %231 = vector.extract_strided_slice %208 {offsets = [0, 8], sizes = [20, 8], strides = [1, 1]} : vector<20x32xf32> to vector<20x8xf32>
    %232 = arith.truncf %230 : vector<20x8xf32> to vector<20x8xbf16>
    %233 = arith.truncf %231 : vector<20x8xf32> to vector<20x8xbf16>
    %cst_91 = arith.constant dense<0.000000e+00> : vector<20x20xf32>
    %234 = tpu.matmul %232, %233, %cst_91 {dimension_numbers = #tpu.dot_dimension_numbers<[1], [1], [0], [0], [0, 0, 1, 0], [], []>} : vector<20x8xbf16>, vector<20x8xbf16>, vector<20x20xf32> -> vector<20x20xf32>
    %235 = arith.addf %234, %3 : vector<20x20xf32>
    %cst_92 = arith.constant dense<0xFF800000> : vector<20xf32>
    %236 = vector.multi_reduction <maximumf>, %235, %cst_92 [1] : vector<20x20xf32> to vector<20xf32>
    %237 = vector.shape_cast %236 : vector<20xf32> to vector<20x1xf32>
    %238 = vector.broadcast %237 : vector<20x1xf32> to vector<20x20xf32>
    %239 = arith.subf %235, %238 : vector<20x20xf32>
    %240 = math.exp %239 : vector<20x20xf32>
    %cst_93 = arith.constant dense<0.000000e+00> : vector<20xf32>
    %241 = vector.multi_reduction <add>, %240, %cst_93 [1] : vector<20x20xf32> to vector<20xf32>
    %242 = vector.shape_cast %241 : vector<20xf32> to vector<20x1xf32>
    %243 = tpu.reciprocal %242 {approx = true} : vector<20x1xf32> -> vector<20x1xf32>
    %244 = vector.broadcast %243 : vector<20x1xf32> to vector<20x20xf32>
    %245 = arith.mulf %240, %244 : vector<20x20xf32>
    %246 = vector.extract_strided_slice %209 {offsets = [0, 8], sizes = [20, 8], strides = [1, 1]} : vector<20x32xf32> to vector<20x8xf32>
    %247 = arith.truncf %245 : vector<20x20xf32> to vector<20x20xbf16>
    %248 = arith.truncf %246 : vector<20x8xf32> to vector<20x8xbf16>
    %cst_94 = arith.constant dense<0.000000e+00> : vector<20x8xf32>
    %249 = tpu.matmul %247, %248, %cst_94 {dimension_numbers = #tpu.dot_dimension_numbers<[1], [0], [0], [1], [0, 0, 1, 1], [], []>} : vector<20x20xbf16>, vector<20x8xbf16>, vector<20x8xf32> -> vector<20x8xf32>
    %250 = vector.extract_strided_slice %207 {offsets = [0, 16], sizes = [20, 8], strides = [1, 1]} : vector<20x32xf32> to vector<20x8xf32>
    %251 = vector.extract_strided_slice %208 {offsets = [0, 16], sizes = [20, 8], strides = [1, 1]} : vector<20x32xf32> to vector<20x8xf32>
    %252 = arith.truncf %250 : vector<20x8xf32> to vector<20x8xbf16>
    %253 = arith.truncf %251 : vector<20x8xf32> to vector<20x8xbf16>
    %cst_95 = arith.constant dense<0.000000e+00> : vector<20x20xf32>
    %254 = tpu.matmul %252, %253, %cst_95 {dimension_numbers = #tpu.dot_dimension_numbers<[1], [1], [0], [0], [0, 0, 1, 0], [], []>} : vector<20x8xbf16>, vector<20x8xbf16>, vector<20x20xf32> -> vector<20x20xf32>
    %255 = arith.addf %254, %3 : vector<20x20xf32>
    %cst_96 = arith.constant dense<0xFF800000> : vector<20xf32>
    %256 = vector.multi_reduction <maximumf>, %255, %cst_96 [1] : vector<20x20xf32> to vector<20xf32>
    %257 = vector.shape_cast %256 : vector<20xf32> to vector<20x1xf32>
    %258 = vector.broadcast %257 : vector<20x1xf32> to vector<20x20xf32>
    %259 = arith.subf %255, %258 : vector<20x20xf32>
    %260 = math.exp %259 : vector<20x20xf32>
    %cst_97 = arith.constant dense<0.000000e+00> : vector<20xf32>
    %261 = vector.multi_reduction <add>, %260, %cst_97 [1] : vector<20x20xf32> to vector<20xf32>
    %262 = vector.shape_cast %261 : vector<20xf32> to vector<20x1xf32>
    %263 = tpu.reciprocal %262 {approx = true} : vector<20x1xf32> -> vector<20x1xf32>
    %264 = vector.broadcast %263 : vector<20x1xf32> to vector<20x20xf32>
    %265 = arith.mulf %260, %264 : vector<20x20xf32>
    %266 = vector.extract_strided_slice %209 {offsets = [0, 16], sizes = [20, 8], strides = [1, 1]} : vector<20x32xf32> to vector<20x8xf32>
    %267 = arith.truncf %265 : vector<20x20xf32> to vector<20x20xbf16>
    %268 = arith.truncf %266 : vector<20x8xf32> to vector<20x8xbf16>
    %cst_98 = arith.constant dense<0.000000e+00> : vector<20x8xf32>
    %269 = tpu.matmul %267, %268, %cst_98 {dimension_numbers = #tpu.dot_dimension_numbers<[1], [0], [0], [1], [0, 0, 1, 1], [], []>} : vector<20x20xbf16>, vector<20x8xbf16>, vector<20x8xf32> -> vector<20x8xf32>
    %270 = vector.extract_strided_slice %207 {offsets = [0, 24], sizes = [20, 8], strides = [1, 1]} : vector<20x32xf32> to vector<20x8xf32>
    %271 = vector.extract_strided_slice %208 {offsets = [0, 24], sizes = [20, 8], strides = [1, 1]} : vector<20x32xf32> to vector<20x8xf32>
    %272 = arith.truncf %270 : vector<20x8xf32> to vector<20x8xbf16>
    %273 = arith.truncf %271 : vector<20x8xf32> to vector<20x8xbf16>
    %cst_99 = arith.constant dense<0.000000e+00> : vector<20x20xf32>
    %274 = tpu.matmul %272, %273, %cst_99 {dimension_numbers = #tpu.dot_dimension_numbers<[1], [1], [0], [0], [0, 0, 1, 0], [], []>} : vector<20x8xbf16>, vector<20x8xbf16>, vector<20x20xf32> -> vector<20x20xf32>
    %275 = arith.addf %274, %3 : vector<20x20xf32>
    %cst_100 = arith.constant dense<0xFF800000> : vector<20xf32>
    %276 = vector.multi_reduction <maximumf>, %275, %cst_100 [1] : vector<20x20xf32> to vector<20xf32>
    %277 = vector.shape_cast %276 : vector<20xf32> to vector<20x1xf32>
    %278 = vector.broadcast %277 : vector<20x1xf32> to vector<20x20xf32>
    %279 = arith.subf %275, %278 : vector<20x20xf32>
    %280 = math.exp %279 : vector<20x20xf32>
    %cst_101 = arith.constant dense<0.000000e+00> : vector<20xf32>
    %281 = vector.multi_reduction <add>, %280, %cst_101 [1] : vector<20x20xf32> to vector<20xf32>
    %282 = vector.shape_cast %281 : vector<20xf32> to vector<20x1xf32>
    %283 = tpu.reciprocal %282 {approx = true} : vector<20x1xf32> -> vector<20x1xf32>
    %284 = vector.broadcast %283 : vector<20x1xf32> to vector<20x20xf32>
    %285 = arith.mulf %280, %284 : vector<20x20xf32>
    %286 = vector.extract_strided_slice %209 {offsets = [0, 24], sizes = [20, 8], strides = [1, 1]} : vector<20x32xf32> to vector<20x8xf32>
    %287 = arith.truncf %285 : vector<20x20xf32> to vector<20x20xbf16>
    %288 = arith.truncf %286 : vector<20x8xf32> to vector<20x8xbf16>
    %cst_102 = arith.constant dense<0.000000e+00> : vector<20x8xf32>
    %289 = tpu.matmul %287, %288, %cst_102 {dimension_numbers = #tpu.dot_dimension_numbers<[1], [0], [0], [1], [0, 0, 1, 1], [], []>} : vector<20x20xbf16>, vector<20x8xbf16>, vector<20x8xf32> -> vector<20x8xf32>
    %290 = tpu.concatenate %229, %249, %269, %289 in 1 : vector<20x8xf32>, vector<20x8xf32>, vector<20x8xf32>, vector<20x8xf32> -> vector<20x32xf32>
    %c1_103 = arith.constant 1 : index
    %c0_104 = arith.constant 0 : index
    %c0_105 = arith.constant 0 : index
    %291 = vector.load %arg9[%c1_103, %c0_104, %c0_105] : memref<6x32x32xbf16, #tpu.memory_space<vmem>>, vector<1x32x32xbf16>
    %292 = vector.shape_cast %291 : vector<1x32x32xbf16> to vector<32x32xbf16>
    %293 = arith.truncf %290 : vector<20x32xf32> to vector<20x32xbf16>
    %cst_106 = arith.constant dense<0.000000e+00> : vector<20x32xf32>
    %294 = tpu.matmul %293, %292, %cst_106 {dimension_numbers = #tpu.dot_dimension_numbers<[1], [0], [0], [1], [0, 0, 1, 1], [], []>} : vector<20x32xbf16>, vector<32x32xbf16>, vector<20x32xf32> -> vector<20x32xf32>
    %c1_107 = arith.constant 1 : index
    %c0_108 = arith.constant 0 : index
    %c0_109 = arith.constant 0 : index
    %295 = vector.load %arg10[%c1_107, %c0_108, %c0_109] : memref<6x1x32xf32, #tpu.memory_space<vmem>>, vector<1x1x32xf32>
    %296 = vector.shape_cast %295 : vector<1x1x32xf32> to vector<1x32xf32>
    %297 = vector.broadcast %296 : vector<1x32xf32> to vector<20x32xf32>
    %298 = arith.addf %294, %297 : vector<20x32xf32>
    %299 = arith.addf %298, %173 : vector<20x32xf32>
    %c3 = arith.constant 3 : index
    %c0_110 = arith.constant 0 : index
    %c0_111 = arith.constant 0 : index
    %300 = vector.load %arg11[%c3, %c0_110, %c0_111] : memref<12x1x32xf32, #tpu.memory_space<vmem>>, vector<1x1x32xf32>
    %301 = vector.shape_cast %300 : vector<1x1x32xf32> to vector<1x32xf32>
    %c3_112 = arith.constant 3 : index
    %c0_113 = arith.constant 0 : index
    %c0_114 = arith.constant 0 : index
    %302 = vector.load %arg12[%c3_112, %c0_113, %c0_114] : memref<12x1x32xf32, #tpu.memory_space<vmem>>, vector<1x1x32xf32>
    %303 = vector.shape_cast %302 : vector<1x1x32xf32> to vector<1x32xf32>
    %cst_115 = arith.constant dense<0.000000e+00> : vector<20xf32>
    %304 = vector.multi_reduction <add>, %299, %cst_115 [1] : vector<20x32xf32> to vector<20xf32>
    %305 = vector.shape_cast %304 : vector<20xf32> to vector<20x1xf32>
    %cst_116 = arith.constant 3.200000e+01 : f32
    %306 = vector.broadcast %cst_116 : f32 to vector<20x1xf32>
    %307 = arith.divf %305, %306 : vector<20x1xf32>
    %308 = vector.broadcast %307 : vector<20x1xf32> to vector<20x32xf32>
    %309 = arith.subf %299, %308 : vector<20x32xf32>
    %310 = arith.mulf %309, %309 : vector<20x32xf32>
    %cst_117 = arith.constant dense<0.000000e+00> : vector<20xf32>
    %311 = vector.multi_reduction <add>, %310, %cst_117 [1] : vector<20x32xf32> to vector<20xf32>
    %312 = vector.shape_cast %311 : vector<20xf32> to vector<20x1xf32>
    %cst_118 = arith.constant 0.0322580636 : f32
    %313 = vector.broadcast %cst_118 : f32 to vector<20x1xf32>
    %314 = arith.mulf %312, %313 : vector<20x1xf32>
    %315 = math.sqrt %314 : vector<20x1xf32>
    %cst_119 = arith.constant 9.99999997E-7 : f32
    %316 = vector.broadcast %cst_119 : f32 to vector<20x1xf32>
    %317 = arith.addf %315, %316 : vector<20x1xf32>
    %318 = tpu.reciprocal %317 {approx = true} : vector<20x1xf32> -> vector<20x1xf32>
    %319 = vector.broadcast %318 : vector<20x1xf32> to vector<20x32xf32>
    %320 = arith.mulf %309, %319 : vector<20x32xf32>
    %321 = vector.broadcast %301 : vector<1x32xf32> to vector<20x32xf32>
    %322 = arith.mulf %320, %321 : vector<20x32xf32>
    %323 = vector.broadcast %303 : vector<1x32xf32> to vector<20x32xf32>
    %324 = arith.addf %322, %323 : vector<20x32xf32>
    %c1_120 = arith.constant 1 : index
    %c0_121 = arith.constant 0 : index
    %c0_122 = arith.constant 0 : index
    %325 = vector.load %arg13[%c1_120, %c0_121, %c0_122] : memref<4x32x64xbf16, #tpu.memory_space<vmem>>, vector<1x32x64xbf16>
    %326 = vector.shape_cast %325 : vector<1x32x64xbf16> to vector<32x64xbf16>
    %327 = arith.truncf %324 : vector<20x32xf32> to vector<20x32xbf16>
    %cst_123 = arith.constant dense<0.000000e+00> : vector<20x64xf32>
    %328 = tpu.matmul %327, %326, %cst_123 {dimension_numbers = #tpu.dot_dimension_numbers<[1], [0], [0], [1], [0, 0, 1, 1], [], []>} : vector<20x32xbf16>, vector<32x64xbf16>, vector<20x64xf32> -> vector<20x64xf32>
    %c1_124 = arith.constant 1 : index
    %c0_125 = arith.constant 0 : index
    %c0_126 = arith.constant 0 : index
    %329 = vector.load %arg14[%c1_124, %c0_125, %c0_126] : memref<4x1x64xf32, #tpu.memory_space<vmem>>, vector<1x1x64xf32>
    %330 = vector.shape_cast %329 : vector<1x1x64xf32> to vector<1x64xf32>
    %331 = vector.broadcast %330 : vector<1x64xf32> to vector<20x64xf32>
    %332 = arith.addf %328, %331 : vector<20x64xf32>
    %cst_127 = arith.constant 0.000000e+00 : f32
    %333 = vector.broadcast %cst_127 : f32 to vector<20x64xf32>
    %334 = arith.maximumf %332, %333 : vector<20x64xf32>
    %c1_128 = arith.constant 1 : index
    %c0_129 = arith.constant 0 : index
    %c0_130 = arith.constant 0 : index
    %335 = vector.load %arg15[%c1_128, %c0_129, %c0_130] : memref<4x64x32xbf16, #tpu.memory_space<vmem>>, vector<1x64x32xbf16>
    %336 = vector.shape_cast %335 : vector<1x64x32xbf16> to vector<64x32xbf16>
    %337 = arith.truncf %334 : vector<20x64xf32> to vector<20x64xbf16>
    %cst_131 = arith.constant dense<0.000000e+00> : vector<20x32xf32>
    %338 = tpu.matmul %337, %336, %cst_131 {dimension_numbers = #tpu.dot_dimension_numbers<[1], [0], [0], [1], [0, 0, 1, 1], [], []>} : vector<20x64xbf16>, vector<64x32xbf16>, vector<20x32xf32> -> vector<20x32xf32>
    %339 = arith.addf %299, %338 : vector<20x32xf32>
    %c1_132 = arith.constant 1 : index
    %c0_133 = arith.constant 0 : index
    %c0_134 = arith.constant 0 : index
    %340 = vector.load %arg16[%c1_132, %c0_133, %c0_134] : memref<4x1x32xf32, #tpu.memory_space<vmem>>, vector<1x1x32xf32>
    %341 = vector.shape_cast %340 : vector<1x1x32xf32> to vector<1x32xf32>
    %342 = vector.broadcast %341 : vector<1x32xf32> to vector<20x32xf32>
    %343 = arith.addf %339, %342 : vector<20x32xf32>
    %c4 = arith.constant 4 : index
    %c0_135 = arith.constant 0 : index
    %c0_136 = arith.constant 0 : index
    %344 = vector.load %arg11[%c4, %c0_135, %c0_136] : memref<12x1x32xf32, #tpu.memory_space<vmem>>, vector<1x1x32xf32>
    %345 = vector.shape_cast %344 : vector<1x1x32xf32> to vector<1x32xf32>
    %c4_137 = arith.constant 4 : index
    %c0_138 = arith.constant 0 : index
    %c0_139 = arith.constant 0 : index
    %346 = vector.load %arg12[%c4_137, %c0_138, %c0_139] : memref<12x1x32xf32, #tpu.memory_space<vmem>>, vector<1x1x32xf32>
    %347 = vector.shape_cast %346 : vector<1x1x32xf32> to vector<1x32xf32>
    %cst_140 = arith.constant dense<0.000000e+00> : vector<20xf32>
    %348 = vector.multi_reduction <add>, %343, %cst_140 [1] : vector<20x32xf32> to vector<20xf32>
    %349 = vector.shape_cast %348 : vector<20xf32> to vector<20x1xf32>
    %cst_141 = arith.constant 3.200000e+01 : f32
    %350 = vector.broadcast %cst_141 : f32 to vector<20x1xf32>
    %351 = arith.divf %349, %350 : vector<20x1xf32>
    %352 = vector.broadcast %351 : vector<20x1xf32> to vector<20x32xf32>
    %353 = arith.subf %343, %352 : vector<20x32xf32>
    %354 = arith.mulf %353, %353 : vector<20x32xf32>
    %cst_142 = arith.constant dense<0.000000e+00> : vector<20xf32>
    %355 = vector.multi_reduction <add>, %354, %cst_142 [1] : vector<20x32xf32> to vector<20xf32>
    %356 = vector.shape_cast %355 : vector<20xf32> to vector<20x1xf32>
    %cst_143 = arith.constant 0.0322580636 : f32
    %357 = vector.broadcast %cst_143 : f32 to vector<20x1xf32>
    %358 = arith.mulf %356, %357 : vector<20x1xf32>
    %359 = math.sqrt %358 : vector<20x1xf32>
    %cst_144 = arith.constant 9.99999997E-7 : f32
    %360 = vector.broadcast %cst_144 : f32 to vector<20x1xf32>
    %361 = arith.addf %359, %360 : vector<20x1xf32>
    %362 = tpu.reciprocal %361 {approx = true} : vector<20x1xf32> -> vector<20x1xf32>
    %363 = vector.broadcast %362 : vector<20x1xf32> to vector<20x32xf32>
    %364 = arith.mulf %353, %363 : vector<20x32xf32>
    %365 = vector.broadcast %345 : vector<1x32xf32> to vector<20x32xf32>
    %366 = arith.mulf %364, %365 : vector<20x32xf32>
    %367 = vector.broadcast %347 : vector<1x32xf32> to vector<20x32xf32>
    %368 = arith.addf %366, %367 : vector<20x32xf32>
    %c0_145 = arith.constant 0 : index
    %c0_146 = arith.constant 0 : index
    %c0_147 = arith.constant 0 : index
    %369 = vector.load %arg3[%c0_145, %c0_146, %c0_147] : memref<1x16x40xf32, #tpu.memory_space<vmem>>, vector<1x16x40xf32>
    %370 = vector.shape_cast %369 : vector<1x16x40xf32> to vector<16x40xf32>
    %c0_148 = arith.constant 0 : index
    %c0_149 = arith.constant 0 : index
    %371 = vector.load %arg17[%c0_148, %c0_149] : memref<40x32xbf16, #tpu.memory_space<vmem>>, vector<40x32xbf16>
    %372 = arith.truncf %370 : vector<16x40xf32> to vector<16x40xbf16>
    %cst_150 = arith.constant dense<0.000000e+00> : vector<16x32xf32>
    %373 = tpu.matmul %372, %371, %cst_150 {dimension_numbers = #tpu.dot_dimension_numbers<[1], [0], [0], [1], [0, 0, 1, 1], [], []>} : vector<16x40xbf16>, vector<40x32xbf16>, vector<16x32xf32> -> vector<16x32xf32>
    %c0_151 = arith.constant 0 : index
    %c0_152 = arith.constant 0 : index
    %374 = vector.load %arg18[%c0_151, %c0_152] : memref<1x32xf32, #tpu.memory_space<vmem>>, vector<1x32xf32>
    %375 = vector.broadcast %374 : vector<1x32xf32> to vector<16x32xf32>
    %376 = arith.addf %373, %375 : vector<16x32xf32>
    %c0_153 = arith.constant 0 : index
    %c0_154 = arith.constant 0 : index
    %c0_155 = arith.constant 0 : index
    %377 = vector.load %arg2[%c0_153, %c0_154, %c0_155] : memref<1x16x32xf32, #tpu.memory_space<vmem>>, vector<1x16x32xf32>
    %378 = vector.shape_cast %377 : vector<1x16x32xf32> to vector<16x32xf32>
    %379 = arith.addf %378, %376 : vector<16x32xf32>
    %c0_156 = arith.constant 0 : index
    %c0_157 = arith.constant 0 : index
    %c0_158 = arith.constant 0 : index
    %380 = vector.load %arg5[%c0_156, %c0_157, %c0_158] : memref<1x16x16xf32, #tpu.memory_space<vmem>>, vector<1x16x16xf32>
    %381 = vector.shape_cast %380 : vector<1x16x16xf32> to vector<16x16xf32>
    %c0_159 = arith.constant 0 : index
    %c0_160 = arith.constant 0 : index
    %c0_161 = arith.constant 0 : index
    %382 = vector.load %arg6[%c0_159, %c0_160, %c0_161] : memref<1x16x20xf32, #tpu.memory_space<vmem>>, vector<1x16x20xf32>
    %383 = vector.shape_cast %382 : vector<1x16x20xf32> to vector<16x20xf32>
    %c5 = arith.constant 5 : index
    %c0_162 = arith.constant 0 : index
    %c0_163 = arith.constant 0 : index
    %384 = vector.load %arg11[%c5, %c0_162, %c0_163] : memref<12x1x32xf32, #tpu.memory_space<vmem>>, vector<1x1x32xf32>
    %385 = vector.shape_cast %384 : vector<1x1x32xf32> to vector<1x32xf32>
    %c5_164 = arith.constant 5 : index
    %c0_165 = arith.constant 0 : index
    %c0_166 = arith.constant 0 : index
    %386 = vector.load %arg12[%c5_164, %c0_165, %c0_166] : memref<12x1x32xf32, #tpu.memory_space<vmem>>, vector<1x1x32xf32>
    %387 = vector.shape_cast %386 : vector<1x1x32xf32> to vector<1x32xf32>
    %cst_167 = arith.constant dense<0.000000e+00> : vector<16xf32>
    %388 = vector.multi_reduction <add>, %379, %cst_167 [1] : vector<16x32xf32> to vector<16xf32>
    %389 = vector.shape_cast %388 : vector<16xf32> to vector<16x1xf32>
    %cst_168 = arith.constant 3.200000e+01 : f32
    %390 = vector.broadcast %cst_168 : f32 to vector<16x1xf32>
    %391 = arith.divf %389, %390 : vector<16x1xf32>
    %392 = vector.broadcast %391 : vector<16x1xf32> to vector<16x32xf32>
    %393 = arith.subf %379, %392 : vector<16x32xf32>
    %394 = arith.mulf %393, %393 : vector<16x32xf32>
    %cst_169 = arith.constant dense<0.000000e+00> : vector<16xf32>
    %395 = vector.multi_reduction <add>, %394, %cst_169 [1] : vector<16x32xf32> to vector<16xf32>
    %396 = vector.shape_cast %395 : vector<16xf32> to vector<16x1xf32>
    %cst_170 = arith.constant 0.0322580636 : f32
    %397 = vector.broadcast %cst_170 : f32 to vector<16x1xf32>
    %398 = arith.mulf %396, %397 : vector<16x1xf32>
    %399 = math.sqrt %398 : vector<16x1xf32>
    %cst_171 = arith.constant 9.99999997E-7 : f32
    %400 = vector.broadcast %cst_171 : f32 to vector<16x1xf32>
    %401 = arith.addf %399, %400 : vector<16x1xf32>
    %402 = tpu.reciprocal %401 {approx = true} : vector<16x1xf32> -> vector<16x1xf32>
    %403 = vector.broadcast %402 : vector<16x1xf32> to vector<16x32xf32>
    %404 = arith.mulf %393, %403 : vector<16x32xf32>
    %405 = vector.broadcast %385 : vector<1x32xf32> to vector<16x32xf32>
    %406 = arith.mulf %404, %405 : vector<16x32xf32>
    %407 = vector.broadcast %387 : vector<1x32xf32> to vector<16x32xf32>
    %408 = arith.addf %406, %407 : vector<16x32xf32>
    %c2_172 = arith.constant 2 : index
    %c0_173 = arith.constant 0 : index
    %c0_174 = arith.constant 0 : index
    %409 = vector.load %arg7[%c2_172, %c0_173, %c0_174] : memref<6x32x96xbf16, #tpu.memory_space<vmem>>, vector<1x32x96xbf16>
    %410 = vector.shape_cast %409 : vector<1x32x96xbf16> to vector<32x96xbf16>
    %411 = arith.truncf %408 : vector<16x32xf32> to vector<16x32xbf16>
    %cst_175 = arith.constant dense<0.000000e+00> : vector<16x96xf32>
    %412 = tpu.matmul %411, %410, %cst_175 {dimension_numbers = #tpu.dot_dimension_numbers<[1], [0], [0], [1], [0, 0, 1, 1], [], []>} : vector<16x32xbf16>, vector<32x96xbf16>, vector<16x96xf32> -> vector<16x96xf32>
    %c2_176 = arith.constant 2 : index
    %c0_177 = arith.constant 0 : index
    %c0_178 = arith.constant 0 : index
    %413 = vector.load %arg8[%c2_176, %c0_177, %c0_178] : memref<6x1x96xf32, #tpu.memory_space<vmem>>, vector<1x1x96xf32>
    %414 = vector.shape_cast %413 : vector<1x1x96xf32> to vector<1x96xf32>
    %415 = vector.broadcast %414 : vector<1x96xf32> to vector<16x96xf32>
    %416 = arith.addf %412, %415 : vector<16x96xf32>
    %417 = vector.extract_strided_slice %416 {offsets = [0, 0], sizes = [16, 32], strides = [1, 1]} : vector<16x96xf32> to vector<16x32xf32>
    %418 = vector.extract_strided_slice %416 {offsets = [0, 32], sizes = [16, 32], strides = [1, 1]} : vector<16x96xf32> to vector<16x32xf32>
    %419 = vector.extract_strided_slice %416 {offsets = [0, 64], sizes = [16, 32], strides = [1, 1]} : vector<16x96xf32> to vector<16x32xf32>
    %420 = vector.extract_strided_slice %417 {offsets = [0, 0], sizes = [16, 8], strides = [1, 1]} : vector<16x32xf32> to vector<16x8xf32>
    %421 = vector.extract_strided_slice %418 {offsets = [0, 0], sizes = [16, 8], strides = [1, 1]} : vector<16x32xf32> to vector<16x8xf32>
    %422 = arith.truncf %420 : vector<16x8xf32> to vector<16x8xbf16>
    %423 = arith.truncf %421 : vector<16x8xf32> to vector<16x8xbf16>
    %cst_179 = arith.constant dense<0.000000e+00> : vector<16x16xf32>
    %424 = tpu.matmul %422, %423, %cst_179 {dimension_numbers = #tpu.dot_dimension_numbers<[1], [1], [0], [0], [0, 0, 1, 0], [], []>} : vector<16x8xbf16>, vector<16x8xbf16>, vector<16x16xf32> -> vector<16x16xf32>
    %425 = arith.addf %424, %381 : vector<16x16xf32>
    %cst_180 = arith.constant dense<0xFF800000> : vector<16xf32>
    %426 = vector.multi_reduction <maximumf>, %425, %cst_180 [1] : vector<16x16xf32> to vector<16xf32>
    %427 = vector.shape_cast %426 : vector<16xf32> to vector<16x1xf32>
    %428 = vector.broadcast %427 : vector<16x1xf32> to vector<16x16xf32>
    %429 = arith.subf %425, %428 : vector<16x16xf32>
    %430 = math.exp %429 : vector<16x16xf32>
    %cst_181 = arith.constant dense<0.000000e+00> : vector<16xf32>
    %431 = vector.multi_reduction <add>, %430, %cst_181 [1] : vector<16x16xf32> to vector<16xf32>
    %432 = vector.shape_cast %431 : vector<16xf32> to vector<16x1xf32>
    %433 = tpu.reciprocal %432 {approx = true} : vector<16x1xf32> -> vector<16x1xf32>
    %434 = vector.broadcast %433 : vector<16x1xf32> to vector<16x16xf32>
    %435 = arith.mulf %430, %434 : vector<16x16xf32>
    %436 = vector.extract_strided_slice %419 {offsets = [0, 0], sizes = [16, 8], strides = [1, 1]} : vector<16x32xf32> to vector<16x8xf32>
    %437 = arith.truncf %435 : vector<16x16xf32> to vector<16x16xbf16>
    %438 = arith.truncf %436 : vector<16x8xf32> to vector<16x8xbf16>
    %cst_182 = arith.constant dense<0.000000e+00> : vector<16x8xf32>
    %439 = tpu.matmul %437, %438, %cst_182 {dimension_numbers = #tpu.dot_dimension_numbers<[1], [0], [0], [1], [0, 0, 1, 1], [], []>} : vector<16x16xbf16>, vector<16x8xbf16>, vector<16x8xf32> -> vector<16x8xf32>
    %440 = vector.extract_strided_slice %417 {offsets = [0, 8], sizes = [16, 8], strides = [1, 1]} : vector<16x32xf32> to vector<16x8xf32>
    %441 = vector.extract_strided_slice %418 {offsets = [0, 8], sizes = [16, 8], strides = [1, 1]} : vector<16x32xf32> to vector<16x8xf32>
    %442 = arith.truncf %440 : vector<16x8xf32> to vector<16x8xbf16>
    %443 = arith.truncf %441 : vector<16x8xf32> to vector<16x8xbf16>
    %cst_183 = arith.constant dense<0.000000e+00> : vector<16x16xf32>
    %444 = tpu.matmul %442, %443, %cst_183 {dimension_numbers = #tpu.dot_dimension_numbers<[1], [1], [0], [0], [0, 0, 1, 0], [], []>} : vector<16x8xbf16>, vector<16x8xbf16>, vector<16x16xf32> -> vector<16x16xf32>
    %445 = arith.addf %444, %381 : vector<16x16xf32>
    %cst_184 = arith.constant dense<0xFF800000> : vector<16xf32>
    %446 = vector.multi_reduction <maximumf>, %445, %cst_184 [1] : vector<16x16xf32> to vector<16xf32>
    %447 = vector.shape_cast %446 : vector<16xf32> to vector<16x1xf32>
    %448 = vector.broadcast %447 : vector<16x1xf32> to vector<16x16xf32>
    %449 = arith.subf %445, %448 : vector<16x16xf32>
    %450 = math.exp %449 : vector<16x16xf32>
    %cst_185 = arith.constant dense<0.000000e+00> : vector<16xf32>
    %451 = vector.multi_reduction <add>, %450, %cst_185 [1] : vector<16x16xf32> to vector<16xf32>
    %452 = vector.shape_cast %451 : vector<16xf32> to vector<16x1xf32>
    %453 = tpu.reciprocal %452 {approx = true} : vector<16x1xf32> -> vector<16x1xf32>
    %454 = vector.broadcast %453 : vector<16x1xf32> to vector<16x16xf32>
    %455 = arith.mulf %450, %454 : vector<16x16xf32>
    %456 = vector.extract_strided_slice %419 {offsets = [0, 8], sizes = [16, 8], strides = [1, 1]} : vector<16x32xf32> to vector<16x8xf32>
    %457 = arith.truncf %455 : vector<16x16xf32> to vector<16x16xbf16>
    %458 = arith.truncf %456 : vector<16x8xf32> to vector<16x8xbf16>
    %cst_186 = arith.constant dense<0.000000e+00> : vector<16x8xf32>
    %459 = tpu.matmul %457, %458, %cst_186 {dimension_numbers = #tpu.dot_dimension_numbers<[1], [0], [0], [1], [0, 0, 1, 1], [], []>} : vector<16x16xbf16>, vector<16x8xbf16>, vector<16x8xf32> -> vector<16x8xf32>
    %460 = vector.extract_strided_slice %417 {offsets = [0, 16], sizes = [16, 8], strides = [1, 1]} : vector<16x32xf32> to vector<16x8xf32>
    %461 = vector.extract_strided_slice %418 {offsets = [0, 16], sizes = [16, 8], strides = [1, 1]} : vector<16x32xf32> to vector<16x8xf32>
    %462 = arith.truncf %460 : vector<16x8xf32> to vector<16x8xbf16>
    %463 = arith.truncf %461 : vector<16x8xf32> to vector<16x8xbf16>
    %cst_187 = arith.constant dense<0.000000e+00> : vector<16x16xf32>
    %464 = tpu.matmul %462, %463, %cst_187 {dimension_numbers = #tpu.dot_dimension_numbers<[1], [1], [0], [0], [0, 0, 1, 0], [], []>} : vector<16x8xbf16>, vector<16x8xbf16>, vector<16x16xf32> -> vector<16x16xf32>
    %465 = arith.addf %464, %381 : vector<16x16xf32>
    %cst_188 = arith.constant dense<0xFF800000> : vector<16xf32>
    %466 = vector.multi_reduction <maximumf>, %465, %cst_188 [1] : vector<16x16xf32> to vector<16xf32>
    %467 = vector.shape_cast %466 : vector<16xf32> to vector<16x1xf32>
    %468 = vector.broadcast %467 : vector<16x1xf32> to vector<16x16xf32>
    %469 = arith.subf %465, %468 : vector<16x16xf32>
    %470 = math.exp %469 : vector<16x16xf32>
    %cst_189 = arith.constant dense<0.000000e+00> : vector<16xf32>
    %471 = vector.multi_reduction <add>, %470, %cst_189 [1] : vector<16x16xf32> to vector<16xf32>
    %472 = vector.shape_cast %471 : vector<16xf32> to vector<16x1xf32>
    %473 = tpu.reciprocal %472 {approx = true} : vector<16x1xf32> -> vector<16x1xf32>
    %474 = vector.broadcast %473 : vector<16x1xf32> to vector<16x16xf32>
    %475 = arith.mulf %470, %474 : vector<16x16xf32>
    %476 = vector.extract_strided_slice %419 {offsets = [0, 16], sizes = [16, 8], strides = [1, 1]} : vector<16x32xf32> to vector<16x8xf32>
    %477 = arith.truncf %475 : vector<16x16xf32> to vector<16x16xbf16>
    %478 = arith.truncf %476 : vector<16x8xf32> to vector<16x8xbf16>
    %cst_190 = arith.constant dense<0.000000e+00> : vector<16x8xf32>
    %479 = tpu.matmul %477, %478, %cst_190 {dimension_numbers = #tpu.dot_dimension_numbers<[1], [0], [0], [1], [0, 0, 1, 1], [], []>} : vector<16x16xbf16>, vector<16x8xbf16>, vector<16x8xf32> -> vector<16x8xf32>
    %480 = vector.extract_strided_slice %417 {offsets = [0, 24], sizes = [16, 8], strides = [1, 1]} : vector<16x32xf32> to vector<16x8xf32>
    %481 = vector.extract_strided_slice %418 {offsets = [0, 24], sizes = [16, 8], strides = [1, 1]} : vector<16x32xf32> to vector<16x8xf32>
    %482 = arith.truncf %480 : vector<16x8xf32> to vector<16x8xbf16>
    %483 = arith.truncf %481 : vector<16x8xf32> to vector<16x8xbf16>
    %cst_191 = arith.constant dense<0.000000e+00> : vector<16x16xf32>
    %484 = tpu.matmul %482, %483, %cst_191 {dimension_numbers = #tpu.dot_dimension_numbers<[1], [1], [0], [0], [0, 0, 1, 0], [], []>} : vector<16x8xbf16>, vector<16x8xbf16>, vector<16x16xf32> -> vector<16x16xf32>
    %485 = arith.addf %484, %381 : vector<16x16xf32>
    %cst_192 = arith.constant dense<0xFF800000> : vector<16xf32>
    %486 = vector.multi_reduction <maximumf>, %485, %cst_192 [1] : vector<16x16xf32> to vector<16xf32>
    %487 = vector.shape_cast %486 : vector<16xf32> to vector<16x1xf32>
    %488 = vector.broadcast %487 : vector<16x1xf32> to vector<16x16xf32>
    %489 = arith.subf %485, %488 : vector<16x16xf32>
    %490 = math.exp %489 : vector<16x16xf32>
    %cst_193 = arith.constant dense<0.000000e+00> : vector<16xf32>
    %491 = vector.multi_reduction <add>, %490, %cst_193 [1] : vector<16x16xf32> to vector<16xf32>
    %492 = vector.shape_cast %491 : vector<16xf32> to vector<16x1xf32>
    %493 = tpu.reciprocal %492 {approx = true} : vector<16x1xf32> -> vector<16x1xf32>
    %494 = vector.broadcast %493 : vector<16x1xf32> to vector<16x16xf32>
    %495 = arith.mulf %490, %494 : vector<16x16xf32>
    %496 = vector.extract_strided_slice %419 {offsets = [0, 24], sizes = [16, 8], strides = [1, 1]} : vector<16x32xf32> to vector<16x8xf32>
    %497 = arith.truncf %495 : vector<16x16xf32> to vector<16x16xbf16>
    %498 = arith.truncf %496 : vector<16x8xf32> to vector<16x8xbf16>
    %cst_194 = arith.constant dense<0.000000e+00> : vector<16x8xf32>
    %499 = tpu.matmul %497, %498, %cst_194 {dimension_numbers = #tpu.dot_dimension_numbers<[1], [0], [0], [1], [0, 0, 1, 1], [], []>} : vector<16x16xbf16>, vector<16x8xbf16>, vector<16x8xf32> -> vector<16x8xf32>
    %500 = tpu.concatenate %439, %459, %479, %499 in 1 : vector<16x8xf32>, vector<16x8xf32>, vector<16x8xf32>, vector<16x8xf32> -> vector<16x32xf32>
    %c2_195 = arith.constant 2 : index
    %c0_196 = arith.constant 0 : index
    %c0_197 = arith.constant 0 : index
    %501 = vector.load %arg9[%c2_195, %c0_196, %c0_197] : memref<6x32x32xbf16, #tpu.memory_space<vmem>>, vector<1x32x32xbf16>
    %502 = vector.shape_cast %501 : vector<1x32x32xbf16> to vector<32x32xbf16>
    %503 = arith.truncf %500 : vector<16x32xf32> to vector<16x32xbf16>
    %cst_198 = arith.constant dense<0.000000e+00> : vector<16x32xf32>
    %504 = tpu.matmul %503, %502, %cst_198 {dimension_numbers = #tpu.dot_dimension_numbers<[1], [0], [0], [1], [0, 0, 1, 1], [], []>} : vector<16x32xbf16>, vector<32x32xbf16>, vector<16x32xf32> -> vector<16x32xf32>
    %c2_199 = arith.constant 2 : index
    %c0_200 = arith.constant 0 : index
    %c0_201 = arith.constant 0 : index
    %505 = vector.load %arg10[%c2_199, %c0_200, %c0_201] : memref<6x1x32xf32, #tpu.memory_space<vmem>>, vector<1x1x32xf32>
    %506 = vector.shape_cast %505 : vector<1x1x32xf32> to vector<1x32xf32>
    %507 = vector.broadcast %506 : vector<1x32xf32> to vector<16x32xf32>
    %508 = arith.addf %504, %507 : vector<16x32xf32>
    %509 = arith.addf %508, %379 : vector<16x32xf32>
    %c6 = arith.constant 6 : index
    %c0_202 = arith.constant 0 : index
    %c0_203 = arith.constant 0 : index
    %510 = vector.load %arg11[%c6, %c0_202, %c0_203] : memref<12x1x32xf32, #tpu.memory_space<vmem>>, vector<1x1x32xf32>
    %511 = vector.shape_cast %510 : vector<1x1x32xf32> to vector<1x32xf32>
    %c6_204 = arith.constant 6 : index
    %c0_205 = arith.constant 0 : index
    %c0_206 = arith.constant 0 : index
    %512 = vector.load %arg12[%c6_204, %c0_205, %c0_206] : memref<12x1x32xf32, #tpu.memory_space<vmem>>, vector<1x1x32xf32>
    %513 = vector.shape_cast %512 : vector<1x1x32xf32> to vector<1x32xf32>
    %cst_207 = arith.constant dense<0.000000e+00> : vector<16xf32>
    %514 = vector.multi_reduction <add>, %509, %cst_207 [1] : vector<16x32xf32> to vector<16xf32>
    %515 = vector.shape_cast %514 : vector<16xf32> to vector<16x1xf32>
    %cst_208 = arith.constant 3.200000e+01 : f32
    %516 = vector.broadcast %cst_208 : f32 to vector<16x1xf32>
    %517 = arith.divf %515, %516 : vector<16x1xf32>
    %518 = vector.broadcast %517 : vector<16x1xf32> to vector<16x32xf32>
    %519 = arith.subf %509, %518 : vector<16x32xf32>
    %520 = arith.mulf %519, %519 : vector<16x32xf32>
    %cst_209 = arith.constant dense<0.000000e+00> : vector<16xf32>
    %521 = vector.multi_reduction <add>, %520, %cst_209 [1] : vector<16x32xf32> to vector<16xf32>
    %522 = vector.shape_cast %521 : vector<16xf32> to vector<16x1xf32>
    %cst_210 = arith.constant 0.0322580636 : f32
    %523 = vector.broadcast %cst_210 : f32 to vector<16x1xf32>
    %524 = arith.mulf %522, %523 : vector<16x1xf32>
    %525 = math.sqrt %524 : vector<16x1xf32>
    %cst_211 = arith.constant 9.99999997E-7 : f32
    %526 = vector.broadcast %cst_211 : f32 to vector<16x1xf32>
    %527 = arith.addf %525, %526 : vector<16x1xf32>
    %528 = tpu.reciprocal %527 {approx = true} : vector<16x1xf32> -> vector<16x1xf32>
    %529 = vector.broadcast %528 : vector<16x1xf32> to vector<16x32xf32>
    %530 = arith.mulf %519, %529 : vector<16x32xf32>
    %531 = vector.broadcast %511 : vector<1x32xf32> to vector<16x32xf32>
    %532 = arith.mulf %530, %531 : vector<16x32xf32>
    %533 = vector.broadcast %513 : vector<1x32xf32> to vector<16x32xf32>
    %534 = arith.addf %532, %533 : vector<16x32xf32>
    %c3_212 = arith.constant 3 : index
    %c0_213 = arith.constant 0 : index
    %c0_214 = arith.constant 0 : index
    %535 = vector.load %arg7[%c3_212, %c0_213, %c0_214] : memref<6x32x96xbf16, #tpu.memory_space<vmem>>, vector<1x32x32xbf16>
    %536 = vector.shape_cast %535 : vector<1x32x32xbf16> to vector<32x32xbf16>
    %537 = arith.truncf %534 : vector<16x32xf32> to vector<16x32xbf16>
    %cst_215 = arith.constant dense<0.000000e+00> : vector<16x32xf32>
    %538 = tpu.matmul %537, %536, %cst_215 {dimension_numbers = #tpu.dot_dimension_numbers<[1], [0], [0], [1], [0, 0, 1, 1], [], []>} : vector<16x32xbf16>, vector<32x32xbf16>, vector<16x32xf32> -> vector<16x32xf32>
    %c3_216 = arith.constant 3 : index
    %c0_217 = arith.constant 0 : index
    %c0_218 = arith.constant 0 : index
    %539 = vector.load %arg8[%c3_216, %c0_217, %c0_218] : memref<6x1x96xf32, #tpu.memory_space<vmem>>, vector<1x1x32xf32>
    %540 = vector.shape_cast %539 : vector<1x1x32xf32> to vector<1x32xf32>
    %541 = vector.broadcast %540 : vector<1x32xf32> to vector<16x32xf32>
    %542 = arith.addf %538, %541 : vector<16x32xf32>
    %c3_219 = arith.constant 3 : index
    %c0_220 = arith.constant 0 : index
    %c32 = arith.constant 32 : index
    %543 = vector.load %arg7[%c3_219, %c0_220, %c32] : memref<6x32x96xbf16, #tpu.memory_space<vmem>>, vector<1x32x64xbf16>
    %544 = vector.shape_cast %543 : vector<1x32x64xbf16> to vector<32x64xbf16>
    %545 = arith.truncf %368 : vector<20x32xf32> to vector<20x32xbf16>
    %cst_221 = arith.constant dense<0.000000e+00> : vector<20x64xf32>
    %546 = tpu.matmul %545, %544, %cst_221 {dimension_numbers = #tpu.dot_dimension_numbers<[1], [0], [0], [1], [0, 0, 1, 1], [], []>} : vector<20x32xbf16>, vector<32x64xbf16>, vector<20x64xf32> -> vector<20x64xf32>
    %c3_222 = arith.constant 3 : index
    %c0_223 = arith.constant 0 : index
    %c32_224 = arith.constant 32 : index
    %547 = vector.load %arg8[%c3_222, %c0_223, %c32_224] : memref<6x1x96xf32, #tpu.memory_space<vmem>>, vector<1x1x64xf32>
    %548 = vector.shape_cast %547 : vector<1x1x64xf32> to vector<1x64xf32>
    %549 = vector.broadcast %548 : vector<1x64xf32> to vector<20x64xf32>
    %550 = arith.addf %546, %549 : vector<20x64xf32>
    %551 = vector.extract_strided_slice %550 {offsets = [0, 0], sizes = [20, 32], strides = [1, 1]} : vector<20x64xf32> to vector<20x32xf32>
    %552 = vector.extract_strided_slice %550 {offsets = [0, 32], sizes = [20, 32], strides = [1, 1]} : vector<20x64xf32> to vector<20x32xf32>
    %553 = vector.extract_strided_slice %542 {offsets = [0, 0], sizes = [16, 8], strides = [1, 1]} : vector<16x32xf32> to vector<16x8xf32>
    %554 = vector.extract_strided_slice %551 {offsets = [0, 0], sizes = [20, 8], strides = [1, 1]} : vector<20x32xf32> to vector<20x8xf32>
    %555 = arith.truncf %553 : vector<16x8xf32> to vector<16x8xbf16>
    %556 = arith.truncf %554 : vector<20x8xf32> to vector<20x8xbf16>
    %cst_225 = arith.constant dense<0.000000e+00> : vector<16x20xf32>
    %557 = tpu.matmul %555, %556, %cst_225 {dimension_numbers = #tpu.dot_dimension_numbers<[1], [1], [0], [0], [0, 0, 1, 0], [], []>} : vector<16x8xbf16>, vector<20x8xbf16>, vector<16x20xf32> -> vector<16x20xf32>
    %558 = arith.addf %557, %383 : vector<16x20xf32>
    %cst_226 = arith.constant dense<0xFF800000> : vector<16xf32>
    %559 = vector.multi_reduction <maximumf>, %558, %cst_226 [1] : vector<16x20xf32> to vector<16xf32>
    %560 = vector.shape_cast %559 : vector<16xf32> to vector<16x1xf32>
    %561 = vector.broadcast %560 : vector<16x1xf32> to vector<16x20xf32>
    %562 = arith.subf %558, %561 : vector<16x20xf32>
    %563 = math.exp %562 : vector<16x20xf32>
    %cst_227 = arith.constant dense<0.000000e+00> : vector<16xf32>
    %564 = vector.multi_reduction <add>, %563, %cst_227 [1] : vector<16x20xf32> to vector<16xf32>
    %565 = vector.shape_cast %564 : vector<16xf32> to vector<16x1xf32>
    %566 = tpu.reciprocal %565 {approx = true} : vector<16x1xf32> -> vector<16x1xf32>
    %567 = vector.broadcast %566 : vector<16x1xf32> to vector<16x20xf32>
    %568 = arith.mulf %563, %567 : vector<16x20xf32>
    %569 = vector.extract_strided_slice %552 {offsets = [0, 0], sizes = [20, 8], strides = [1, 1]} : vector<20x32xf32> to vector<20x8xf32>
    %570 = arith.truncf %568 : vector<16x20xf32> to vector<16x20xbf16>
    %571 = arith.truncf %569 : vector<20x8xf32> to vector<20x8xbf16>
    %cst_228 = arith.constant dense<0.000000e+00> : vector<16x8xf32>
    %572 = tpu.matmul %570, %571, %cst_228 {dimension_numbers = #tpu.dot_dimension_numbers<[1], [0], [0], [1], [0, 0, 1, 1], [], []>} : vector<16x20xbf16>, vector<20x8xbf16>, vector<16x8xf32> -> vector<16x8xf32>
    %573 = vector.extract_strided_slice %542 {offsets = [0, 8], sizes = [16, 8], strides = [1, 1]} : vector<16x32xf32> to vector<16x8xf32>
    %574 = vector.extract_strided_slice %551 {offsets = [0, 8], sizes = [20, 8], strides = [1, 1]} : vector<20x32xf32> to vector<20x8xf32>
    %575 = arith.truncf %573 : vector<16x8xf32> to vector<16x8xbf16>
    %576 = arith.truncf %574 : vector<20x8xf32> to vector<20x8xbf16>
    %cst_229 = arith.constant dense<0.000000e+00> : vector<16x20xf32>
    %577 = tpu.matmul %575, %576, %cst_229 {dimension_numbers = #tpu.dot_dimension_numbers<[1], [1], [0], [0], [0, 0, 1, 0], [], []>} : vector<16x8xbf16>, vector<20x8xbf16>, vector<16x20xf32> -> vector<16x20xf32>
    %578 = arith.addf %577, %383 : vector<16x20xf32>
    %cst_230 = arith.constant dense<0xFF800000> : vector<16xf32>
    %579 = vector.multi_reduction <maximumf>, %578, %cst_230 [1] : vector<16x20xf32> to vector<16xf32>
    %580 = vector.shape_cast %579 : vector<16xf32> to vector<16x1xf32>
    %581 = vector.broadcast %580 : vector<16x1xf32> to vector<16x20xf32>
    %582 = arith.subf %578, %581 : vector<16x20xf32>
    %583 = math.exp %582 : vector<16x20xf32>
    %cst_231 = arith.constant dense<0.000000e+00> : vector<16xf32>
    %584 = vector.multi_reduction <add>, %583, %cst_231 [1] : vector<16x20xf32> to vector<16xf32>
    %585 = vector.shape_cast %584 : vector<16xf32> to vector<16x1xf32>
    %586 = tpu.reciprocal %585 {approx = true} : vector<16x1xf32> -> vector<16x1xf32>
    %587 = vector.broadcast %586 : vector<16x1xf32> to vector<16x20xf32>
    %588 = arith.mulf %583, %587 : vector<16x20xf32>
    %589 = vector.extract_strided_slice %552 {offsets = [0, 8], sizes = [20, 8], strides = [1, 1]} : vector<20x32xf32> to vector<20x8xf32>
    %590 = arith.truncf %588 : vector<16x20xf32> to vector<16x20xbf16>
    %591 = arith.truncf %589 : vector<20x8xf32> to vector<20x8xbf16>
    %cst_232 = arith.constant dense<0.000000e+00> : vector<16x8xf32>
    %592 = tpu.matmul %590, %591, %cst_232 {dimension_numbers = #tpu.dot_dimension_numbers<[1], [0], [0], [1], [0, 0, 1, 1], [], []>} : vector<16x20xbf16>, vector<20x8xbf16>, vector<16x8xf32> -> vector<16x8xf32>
    %593 = vector.extract_strided_slice %542 {offsets = [0, 16], sizes = [16, 8], strides = [1, 1]} : vector<16x32xf32> to vector<16x8xf32>
    %594 = vector.extract_strided_slice %551 {offsets = [0, 16], sizes = [20, 8], strides = [1, 1]} : vector<20x32xf32> to vector<20x8xf32>
    %595 = arith.truncf %593 : vector<16x8xf32> to vector<16x8xbf16>
    %596 = arith.truncf %594 : vector<20x8xf32> to vector<20x8xbf16>
    %cst_233 = arith.constant dense<0.000000e+00> : vector<16x20xf32>
    %597 = tpu.matmul %595, %596, %cst_233 {dimension_numbers = #tpu.dot_dimension_numbers<[1], [1], [0], [0], [0, 0, 1, 0], [], []>} : vector<16x8xbf16>, vector<20x8xbf16>, vector<16x20xf32> -> vector<16x20xf32>
    %598 = arith.addf %597, %383 : vector<16x20xf32>
    %cst_234 = arith.constant dense<0xFF800000> : vector<16xf32>
    %599 = vector.multi_reduction <maximumf>, %598, %cst_234 [1] : vector<16x20xf32> to vector<16xf32>
    %600 = vector.shape_cast %599 : vector<16xf32> to vector<16x1xf32>
    %601 = vector.broadcast %600 : vector<16x1xf32> to vector<16x20xf32>
    %602 = arith.subf %598, %601 : vector<16x20xf32>
    %603 = math.exp %602 : vector<16x20xf32>
    %cst_235 = arith.constant dense<0.000000e+00> : vector<16xf32>
    %604 = vector.multi_reduction <add>, %603, %cst_235 [1] : vector<16x20xf32> to vector<16xf32>
    %605 = vector.shape_cast %604 : vector<16xf32> to vector<16x1xf32>
    %606 = tpu.reciprocal %605 {approx = true} : vector<16x1xf32> -> vector<16x1xf32>
    %607 = vector.broadcast %606 : vector<16x1xf32> to vector<16x20xf32>
    %608 = arith.mulf %603, %607 : vector<16x20xf32>
    %609 = vector.extract_strided_slice %552 {offsets = [0, 16], sizes = [20, 8], strides = [1, 1]} : vector<20x32xf32> to vector<20x8xf32>
    %610 = arith.truncf %608 : vector<16x20xf32> to vector<16x20xbf16>
    %611 = arith.truncf %609 : vector<20x8xf32> to vector<20x8xbf16>
    %cst_236 = arith.constant dense<0.000000e+00> : vector<16x8xf32>
    %612 = tpu.matmul %610, %611, %cst_236 {dimension_numbers = #tpu.dot_dimension_numbers<[1], [0], [0], [1], [0, 0, 1, 1], [], []>} : vector<16x20xbf16>, vector<20x8xbf16>, vector<16x8xf32> -> vector<16x8xf32>
    %613 = vector.extract_strided_slice %542 {offsets = [0, 24], sizes = [16, 8], strides = [1, 1]} : vector<16x32xf32> to vector<16x8xf32>
    %614 = vector.extract_strided_slice %551 {offsets = [0, 24], sizes = [20, 8], strides = [1, 1]} : vector<20x32xf32> to vector<20x8xf32>
    %615 = arith.truncf %613 : vector<16x8xf32> to vector<16x8xbf16>
    %616 = arith.truncf %614 : vector<20x8xf32> to vector<20x8xbf16>
    %cst_237 = arith.constant dense<0.000000e+00> : vector<16x20xf32>
    %617 = tpu.matmul %615, %616, %cst_237 {dimension_numbers = #tpu.dot_dimension_numbers<[1], [1], [0], [0], [0, 0, 1, 0], [], []>} : vector<16x8xbf16>, vector<20x8xbf16>, vector<16x20xf32> -> vector<16x20xf32>
    %618 = arith.addf %617, %383 : vector<16x20xf32>
    %cst_238 = arith.constant dense<0xFF800000> : vector<16xf32>
    %619 = vector.multi_reduction <maximumf>, %618, %cst_238 [1] : vector<16x20xf32> to vector<16xf32>
    %620 = vector.shape_cast %619 : vector<16xf32> to vector<16x1xf32>
    %621 = vector.broadcast %620 : vector<16x1xf32> to vector<16x20xf32>
    %622 = arith.subf %618, %621 : vector<16x20xf32>
    %623 = math.exp %622 : vector<16x20xf32>
    %cst_239 = arith.constant dense<0.000000e+00> : vector<16xf32>
    %624 = vector.multi_reduction <add>, %623, %cst_239 [1] : vector<16x20xf32> to vector<16xf32>
    %625 = vector.shape_cast %624 : vector<16xf32> to vector<16x1xf32>
    %626 = tpu.reciprocal %625 {approx = true} : vector<16x1xf32> -> vector<16x1xf32>
    %627 = vector.broadcast %626 : vector<16x1xf32> to vector<16x20xf32>
    %628 = arith.mulf %623, %627 : vector<16x20xf32>
    %629 = vector.extract_strided_slice %552 {offsets = [0, 24], sizes = [20, 8], strides = [1, 1]} : vector<20x32xf32> to vector<20x8xf32>
    %630 = arith.truncf %628 : vector<16x20xf32> to vector<16x20xbf16>
    %631 = arith.truncf %629 : vector<20x8xf32> to vector<20x8xbf16>
    %cst_240 = arith.constant dense<0.000000e+00> : vector<16x8xf32>
    %632 = tpu.matmul %630, %631, %cst_240 {dimension_numbers = #tpu.dot_dimension_numbers<[1], [0], [0], [1], [0, 0, 1, 1], [], []>} : vector<16x20xbf16>, vector<20x8xbf16>, vector<16x8xf32> -> vector<16x8xf32>
    %633 = tpu.concatenate %572, %592, %612, %632 in 1 : vector<16x8xf32>, vector<16x8xf32>, vector<16x8xf32>, vector<16x8xf32> -> vector<16x32xf32>
    %c3_241 = arith.constant 3 : index
    %c0_242 = arith.constant 0 : index
    %c0_243 = arith.constant 0 : index
    %634 = vector.load %arg9[%c3_241, %c0_242, %c0_243] : memref<6x32x32xbf16, #tpu.memory_space<vmem>>, vector<1x32x32xbf16>
    %635 = vector.shape_cast %634 : vector<1x32x32xbf16> to vector<32x32xbf16>
    %636 = arith.truncf %633 : vector<16x32xf32> to vector<16x32xbf16>
    %cst_244 = arith.constant dense<0.000000e+00> : vector<16x32xf32>
    %637 = tpu.matmul %636, %635, %cst_244 {dimension_numbers = #tpu.dot_dimension_numbers<[1], [0], [0], [1], [0, 0, 1, 1], [], []>} : vector<16x32xbf16>, vector<32x32xbf16>, vector<16x32xf32> -> vector<16x32xf32>
    %c3_245 = arith.constant 3 : index
    %c0_246 = arith.constant 0 : index
    %c0_247 = arith.constant 0 : index
    %638 = vector.load %arg10[%c3_245, %c0_246, %c0_247] : memref<6x1x32xf32, #tpu.memory_space<vmem>>, vector<1x1x32xf32>
    %639 = vector.shape_cast %638 : vector<1x1x32xf32> to vector<1x32xf32>
    %640 = vector.broadcast %639 : vector<1x32xf32> to vector<16x32xf32>
    %641 = arith.addf %637, %640 : vector<16x32xf32>
    %642 = arith.addf %641, %509 : vector<16x32xf32>
    %c7 = arith.constant 7 : index
    %c0_248 = arith.constant 0 : index
    %c0_249 = arith.constant 0 : index
    %643 = vector.load %arg11[%c7, %c0_248, %c0_249] : memref<12x1x32xf32, #tpu.memory_space<vmem>>, vector<1x1x32xf32>
    %644 = vector.shape_cast %643 : vector<1x1x32xf32> to vector<1x32xf32>
    %c7_250 = arith.constant 7 : index
    %c0_251 = arith.constant 0 : index
    %c0_252 = arith.constant 0 : index
    %645 = vector.load %arg12[%c7_250, %c0_251, %c0_252] : memref<12x1x32xf32, #tpu.memory_space<vmem>>, vector<1x1x32xf32>
    %646 = vector.shape_cast %645 : vector<1x1x32xf32> to vector<1x32xf32>
    %cst_253 = arith.constant dense<0.000000e+00> : vector<16xf32>
    %647 = vector.multi_reduction <add>, %642, %cst_253 [1] : vector<16x32xf32> to vector<16xf32>
    %648 = vector.shape_cast %647 : vector<16xf32> to vector<16x1xf32>
    %cst_254 = arith.constant 3.200000e+01 : f32
    %649 = vector.broadcast %cst_254 : f32 to vector<16x1xf32>
    %650 = arith.divf %648, %649 : vector<16x1xf32>
    %651 = vector.broadcast %650 : vector<16x1xf32> to vector<16x32xf32>
    %652 = arith.subf %642, %651 : vector<16x32xf32>
    %653 = arith.mulf %652, %652 : vector<16x32xf32>
    %cst_255 = arith.constant dense<0.000000e+00> : vector<16xf32>
    %654 = vector.multi_reduction <add>, %653, %cst_255 [1] : vector<16x32xf32> to vector<16xf32>
    %655 = vector.shape_cast %654 : vector<16xf32> to vector<16x1xf32>
    %cst_256 = arith.constant 0.0322580636 : f32
    %656 = vector.broadcast %cst_256 : f32 to vector<16x1xf32>
    %657 = arith.mulf %655, %656 : vector<16x1xf32>
    %658 = math.sqrt %657 : vector<16x1xf32>
    %cst_257 = arith.constant 9.99999997E-7 : f32
    %659 = vector.broadcast %cst_257 : f32 to vector<16x1xf32>
    %660 = arith.addf %658, %659 : vector<16x1xf32>
    %661 = tpu.reciprocal %660 {approx = true} : vector<16x1xf32> -> vector<16x1xf32>
    %662 = vector.broadcast %661 : vector<16x1xf32> to vector<16x32xf32>
    %663 = arith.mulf %652, %662 : vector<16x32xf32>
    %664 = vector.broadcast %644 : vector<1x32xf32> to vector<16x32xf32>
    %665 = arith.mulf %663, %664 : vector<16x32xf32>
    %666 = vector.broadcast %646 : vector<1x32xf32> to vector<16x32xf32>
    %667 = arith.addf %665, %666 : vector<16x32xf32>
    %c2_258 = arith.constant 2 : index
    %c0_259 = arith.constant 0 : index
    %c0_260 = arith.constant 0 : index
    %668 = vector.load %arg13[%c2_258, %c0_259, %c0_260] : memref<4x32x64xbf16, #tpu.memory_space<vmem>>, vector<1x32x64xbf16>
    %669 = vector.shape_cast %668 : vector<1x32x64xbf16> to vector<32x64xbf16>
    %670 = arith.truncf %667 : vector<16x32xf32> to vector<16x32xbf16>
    %cst_261 = arith.constant dense<0.000000e+00> : vector<16x64xf32>
    %671 = tpu.matmul %670, %669, %cst_261 {dimension_numbers = #tpu.dot_dimension_numbers<[1], [0], [0], [1], [0, 0, 1, 1], [], []>} : vector<16x32xbf16>, vector<32x64xbf16>, vector<16x64xf32> -> vector<16x64xf32>
    %c2_262 = arith.constant 2 : index
    %c0_263 = arith.constant 0 : index
    %c0_264 = arith.constant 0 : index
    %672 = vector.load %arg14[%c2_262, %c0_263, %c0_264] : memref<4x1x64xf32, #tpu.memory_space<vmem>>, vector<1x1x64xf32>
    %673 = vector.shape_cast %672 : vector<1x1x64xf32> to vector<1x64xf32>
    %674 = vector.broadcast %673 : vector<1x64xf32> to vector<16x64xf32>
    %675 = arith.addf %671, %674 : vector<16x64xf32>
    %cst_265 = arith.constant 0.000000e+00 : f32
    %676 = vector.broadcast %cst_265 : f32 to vector<16x64xf32>
    %677 = arith.maximumf %675, %676 : vector<16x64xf32>
    %c2_266 = arith.constant 2 : index
    %c0_267 = arith.constant 0 : index
    %c0_268 = arith.constant 0 : index
    %678 = vector.load %arg15[%c2_266, %c0_267, %c0_268] : memref<4x64x32xbf16, #tpu.memory_space<vmem>>, vector<1x64x32xbf16>
    %679 = vector.shape_cast %678 : vector<1x64x32xbf16> to vector<64x32xbf16>
    %680 = arith.truncf %677 : vector<16x64xf32> to vector<16x64xbf16>
    %cst_269 = arith.constant dense<0.000000e+00> : vector<16x32xf32>
    %681 = tpu.matmul %680, %679, %cst_269 {dimension_numbers = #tpu.dot_dimension_numbers<[1], [0], [0], [1], [0, 0, 1, 1], [], []>} : vector<16x64xbf16>, vector<64x32xbf16>, vector<16x32xf32> -> vector<16x32xf32>
    %682 = arith.addf %642, %681 : vector<16x32xf32>
    %c2_270 = arith.constant 2 : index
    %c0_271 = arith.constant 0 : index
    %c0_272 = arith.constant 0 : index
    %683 = vector.load %arg16[%c2_270, %c0_271, %c0_272] : memref<4x1x32xf32, #tpu.memory_space<vmem>>, vector<1x1x32xf32>
    %684 = vector.shape_cast %683 : vector<1x1x32xf32> to vector<1x32xf32>
    %685 = vector.broadcast %684 : vector<1x32xf32> to vector<16x32xf32>
    %686 = arith.addf %682, %685 : vector<16x32xf32>
    %c8 = arith.constant 8 : index
    %c0_273 = arith.constant 0 : index
    %c0_274 = arith.constant 0 : index
    %687 = vector.load %arg11[%c8, %c0_273, %c0_274] : memref<12x1x32xf32, #tpu.memory_space<vmem>>, vector<1x1x32xf32>
    %688 = vector.shape_cast %687 : vector<1x1x32xf32> to vector<1x32xf32>
    %c8_275 = arith.constant 8 : index
    %c0_276 = arith.constant 0 : index
    %c0_277 = arith.constant 0 : index
    %689 = vector.load %arg12[%c8_275, %c0_276, %c0_277] : memref<12x1x32xf32, #tpu.memory_space<vmem>>, vector<1x1x32xf32>
    %690 = vector.shape_cast %689 : vector<1x1x32xf32> to vector<1x32xf32>
    %cst_278 = arith.constant dense<0.000000e+00> : vector<16xf32>
    %691 = vector.multi_reduction <add>, %686, %cst_278 [1] : vector<16x32xf32> to vector<16xf32>
    %692 = vector.shape_cast %691 : vector<16xf32> to vector<16x1xf32>
    %cst_279 = arith.constant 3.200000e+01 : f32
    %693 = vector.broadcast %cst_279 : f32 to vector<16x1xf32>
    %694 = arith.divf %692, %693 : vector<16x1xf32>
    %695 = vector.broadcast %694 : vector<16x1xf32> to vector<16x32xf32>
    %696 = arith.subf %686, %695 : vector<16x32xf32>
    %697 = arith.mulf %696, %696 : vector<16x32xf32>
    %cst_280 = arith.constant dense<0.000000e+00> : vector<16xf32>
    %698 = vector.multi_reduction <add>, %697, %cst_280 [1] : vector<16x32xf32> to vector<16xf32>
    %699 = vector.shape_cast %698 : vector<16xf32> to vector<16x1xf32>
    %cst_281 = arith.constant 0.0322580636 : f32
    %700 = vector.broadcast %cst_281 : f32 to vector<16x1xf32>
    %701 = arith.mulf %699, %700 : vector<16x1xf32>
    %702 = math.sqrt %701 : vector<16x1xf32>
    %cst_282 = arith.constant 9.99999997E-7 : f32
    %703 = vector.broadcast %cst_282 : f32 to vector<16x1xf32>
    %704 = arith.addf %702, %703 : vector<16x1xf32>
    %705 = tpu.reciprocal %704 {approx = true} : vector<16x1xf32> -> vector<16x1xf32>
    %706 = vector.broadcast %705 : vector<16x1xf32> to vector<16x32xf32>
    %707 = arith.mulf %696, %706 : vector<16x32xf32>
    %708 = vector.broadcast %688 : vector<1x32xf32> to vector<16x32xf32>
    %709 = arith.mulf %707, %708 : vector<16x32xf32>
    %710 = vector.broadcast %690 : vector<1x32xf32> to vector<16x32xf32>
    %711 = arith.addf %709, %710 : vector<16x32xf32>
    %c4_283 = arith.constant 4 : index
    %c0_284 = arith.constant 0 : index
    %c0_285 = arith.constant 0 : index
    %712 = vector.load %arg7[%c4_283, %c0_284, %c0_285] : memref<6x32x96xbf16, #tpu.memory_space<vmem>>, vector<1x32x96xbf16>
    %713 = vector.shape_cast %712 : vector<1x32x96xbf16> to vector<32x96xbf16>
    %714 = arith.truncf %711 : vector<16x32xf32> to vector<16x32xbf16>
    %cst_286 = arith.constant dense<0.000000e+00> : vector<16x96xf32>
    %715 = tpu.matmul %714, %713, %cst_286 {dimension_numbers = #tpu.dot_dimension_numbers<[1], [0], [0], [1], [0, 0, 1, 1], [], []>} : vector<16x32xbf16>, vector<32x96xbf16>, vector<16x96xf32> -> vector<16x96xf32>
    %c4_287 = arith.constant 4 : index
    %c0_288 = arith.constant 0 : index
    %c0_289 = arith.constant 0 : index
    %716 = vector.load %arg8[%c4_287, %c0_288, %c0_289] : memref<6x1x96xf32, #tpu.memory_space<vmem>>, vector<1x1x96xf32>
    %717 = vector.shape_cast %716 : vector<1x1x96xf32> to vector<1x96xf32>
    %718 = vector.broadcast %717 : vector<1x96xf32> to vector<16x96xf32>
    %719 = arith.addf %715, %718 : vector<16x96xf32>
    %720 = vector.extract_strided_slice %719 {offsets = [0, 0], sizes = [16, 32], strides = [1, 1]} : vector<16x96xf32> to vector<16x32xf32>
    %721 = vector.extract_strided_slice %719 {offsets = [0, 32], sizes = [16, 32], strides = [1, 1]} : vector<16x96xf32> to vector<16x32xf32>
    %722 = vector.extract_strided_slice %719 {offsets = [0, 64], sizes = [16, 32], strides = [1, 1]} : vector<16x96xf32> to vector<16x32xf32>
    %723 = vector.extract_strided_slice %720 {offsets = [0, 0], sizes = [16, 8], strides = [1, 1]} : vector<16x32xf32> to vector<16x8xf32>
    %724 = vector.extract_strided_slice %721 {offsets = [0, 0], sizes = [16, 8], strides = [1, 1]} : vector<16x32xf32> to vector<16x8xf32>
    %725 = arith.truncf %723 : vector<16x8xf32> to vector<16x8xbf16>
    %726 = arith.truncf %724 : vector<16x8xf32> to vector<16x8xbf16>
    %cst_290 = arith.constant dense<0.000000e+00> : vector<16x16xf32>
    %727 = tpu.matmul %725, %726, %cst_290 {dimension_numbers = #tpu.dot_dimension_numbers<[1], [1], [0], [0], [0, 0, 1, 0], [], []>} : vector<16x8xbf16>, vector<16x8xbf16>, vector<16x16xf32> -> vector<16x16xf32>
    %728 = arith.addf %727, %381 : vector<16x16xf32>
    %cst_291 = arith.constant dense<0xFF800000> : vector<16xf32>
    %729 = vector.multi_reduction <maximumf>, %728, %cst_291 [1] : vector<16x16xf32> to vector<16xf32>
    %730 = vector.shape_cast %729 : vector<16xf32> to vector<16x1xf32>
    %731 = vector.broadcast %730 : vector<16x1xf32> to vector<16x16xf32>
    %732 = arith.subf %728, %731 : vector<16x16xf32>
    %733 = math.exp %732 : vector<16x16xf32>
    %cst_292 = arith.constant dense<0.000000e+00> : vector<16xf32>
    %734 = vector.multi_reduction <add>, %733, %cst_292 [1] : vector<16x16xf32> to vector<16xf32>
    %735 = vector.shape_cast %734 : vector<16xf32> to vector<16x1xf32>
    %736 = tpu.reciprocal %735 {approx = true} : vector<16x1xf32> -> vector<16x1xf32>
    %737 = vector.broadcast %736 : vector<16x1xf32> to vector<16x16xf32>
    %738 = arith.mulf %733, %737 : vector<16x16xf32>
    %739 = vector.extract_strided_slice %722 {offsets = [0, 0], sizes = [16, 8], strides = [1, 1]} : vector<16x32xf32> to vector<16x8xf32>
    %740 = arith.truncf %738 : vector<16x16xf32> to vector<16x16xbf16>
    %741 = arith.truncf %739 : vector<16x8xf32> to vector<16x8xbf16>
    %cst_293 = arith.constant dense<0.000000e+00> : vector<16x8xf32>
    %742 = tpu.matmul %740, %741, %cst_293 {dimension_numbers = #tpu.dot_dimension_numbers<[1], [0], [0], [1], [0, 0, 1, 1], [], []>} : vector<16x16xbf16>, vector<16x8xbf16>, vector<16x8xf32> -> vector<16x8xf32>
    %743 = vector.extract_strided_slice %720 {offsets = [0, 8], sizes = [16, 8], strides = [1, 1]} : vector<16x32xf32> to vector<16x8xf32>
    %744 = vector.extract_strided_slice %721 {offsets = [0, 8], sizes = [16, 8], strides = [1, 1]} : vector<16x32xf32> to vector<16x8xf32>
    %745 = arith.truncf %743 : vector<16x8xf32> to vector<16x8xbf16>
    %746 = arith.truncf %744 : vector<16x8xf32> to vector<16x8xbf16>
    %cst_294 = arith.constant dense<0.000000e+00> : vector<16x16xf32>
    %747 = tpu.matmul %745, %746, %cst_294 {dimension_numbers = #tpu.dot_dimension_numbers<[1], [1], [0], [0], [0, 0, 1, 0], [], []>} : vector<16x8xbf16>, vector<16x8xbf16>, vector<16x16xf32> -> vector<16x16xf32>
    %748 = arith.addf %747, %381 : vector<16x16xf32>
    %cst_295 = arith.constant dense<0xFF800000> : vector<16xf32>
    %749 = vector.multi_reduction <maximumf>, %748, %cst_295 [1] : vector<16x16xf32> to vector<16xf32>
    %750 = vector.shape_cast %749 : vector<16xf32> to vector<16x1xf32>
    %751 = vector.broadcast %750 : vector<16x1xf32> to vector<16x16xf32>
    %752 = arith.subf %748, %751 : vector<16x16xf32>
    %753 = math.exp %752 : vector<16x16xf32>
    %cst_296 = arith.constant dense<0.000000e+00> : vector<16xf32>
    %754 = vector.multi_reduction <add>, %753, %cst_296 [1] : vector<16x16xf32> to vector<16xf32>
    %755 = vector.shape_cast %754 : vector<16xf32> to vector<16x1xf32>
    %756 = tpu.reciprocal %755 {approx = true} : vector<16x1xf32> -> vector<16x1xf32>
    %757 = vector.broadcast %756 : vector<16x1xf32> to vector<16x16xf32>
    %758 = arith.mulf %753, %757 : vector<16x16xf32>
    %759 = vector.extract_strided_slice %722 {offsets = [0, 8], sizes = [16, 8], strides = [1, 1]} : vector<16x32xf32> to vector<16x8xf32>
    %760 = arith.truncf %758 : vector<16x16xf32> to vector<16x16xbf16>
    %761 = arith.truncf %759 : vector<16x8xf32> to vector<16x8xbf16>
    %cst_297 = arith.constant dense<0.000000e+00> : vector<16x8xf32>
    %762 = tpu.matmul %760, %761, %cst_297 {dimension_numbers = #tpu.dot_dimension_numbers<[1], [0], [0], [1], [0, 0, 1, 1], [], []>} : vector<16x16xbf16>, vector<16x8xbf16>, vector<16x8xf32> -> vector<16x8xf32>
    %763 = vector.extract_strided_slice %720 {offsets = [0, 16], sizes = [16, 8], strides = [1, 1]} : vector<16x32xf32> to vector<16x8xf32>
    %764 = vector.extract_strided_slice %721 {offsets = [0, 16], sizes = [16, 8], strides = [1, 1]} : vector<16x32xf32> to vector<16x8xf32>
    %765 = arith.truncf %763 : vector<16x8xf32> to vector<16x8xbf16>
    %766 = arith.truncf %764 : vector<16x8xf32> to vector<16x8xbf16>
    %cst_298 = arith.constant dense<0.000000e+00> : vector<16x16xf32>
    %767 = tpu.matmul %765, %766, %cst_298 {dimension_numbers = #tpu.dot_dimension_numbers<[1], [1], [0], [0], [0, 0, 1, 0], [], []>} : vector<16x8xbf16>, vector<16x8xbf16>, vector<16x16xf32> -> vector<16x16xf32>
    %768 = arith.addf %767, %381 : vector<16x16xf32>
    %cst_299 = arith.constant dense<0xFF800000> : vector<16xf32>
    %769 = vector.multi_reduction <maximumf>, %768, %cst_299 [1] : vector<16x16xf32> to vector<16xf32>
    %770 = vector.shape_cast %769 : vector<16xf32> to vector<16x1xf32>
    %771 = vector.broadcast %770 : vector<16x1xf32> to vector<16x16xf32>
    %772 = arith.subf %768, %771 : vector<16x16xf32>
    %773 = math.exp %772 : vector<16x16xf32>
    %cst_300 = arith.constant dense<0.000000e+00> : vector<16xf32>
    %774 = vector.multi_reduction <add>, %773, %cst_300 [1] : vector<16x16xf32> to vector<16xf32>
    %775 = vector.shape_cast %774 : vector<16xf32> to vector<16x1xf32>
    %776 = tpu.reciprocal %775 {approx = true} : vector<16x1xf32> -> vector<16x1xf32>
    %777 = vector.broadcast %776 : vector<16x1xf32> to vector<16x16xf32>
    %778 = arith.mulf %773, %777 : vector<16x16xf32>
    %779 = vector.extract_strided_slice %722 {offsets = [0, 16], sizes = [16, 8], strides = [1, 1]} : vector<16x32xf32> to vector<16x8xf32>
    %780 = arith.truncf %778 : vector<16x16xf32> to vector<16x16xbf16>
    %781 = arith.truncf %779 : vector<16x8xf32> to vector<16x8xbf16>
    %cst_301 = arith.constant dense<0.000000e+00> : vector<16x8xf32>
    %782 = tpu.matmul %780, %781, %cst_301 {dimension_numbers = #tpu.dot_dimension_numbers<[1], [0], [0], [1], [0, 0, 1, 1], [], []>} : vector<16x16xbf16>, vector<16x8xbf16>, vector<16x8xf32> -> vector<16x8xf32>
    %783 = vector.extract_strided_slice %720 {offsets = [0, 24], sizes = [16, 8], strides = [1, 1]} : vector<16x32xf32> to vector<16x8xf32>
    %784 = vector.extract_strided_slice %721 {offsets = [0, 24], sizes = [16, 8], strides = [1, 1]} : vector<16x32xf32> to vector<16x8xf32>
    %785 = arith.truncf %783 : vector<16x8xf32> to vector<16x8xbf16>
    %786 = arith.truncf %784 : vector<16x8xf32> to vector<16x8xbf16>
    %cst_302 = arith.constant dense<0.000000e+00> : vector<16x16xf32>
    %787 = tpu.matmul %785, %786, %cst_302 {dimension_numbers = #tpu.dot_dimension_numbers<[1], [1], [0], [0], [0, 0, 1, 0], [], []>} : vector<16x8xbf16>, vector<16x8xbf16>, vector<16x16xf32> -> vector<16x16xf32>
    %788 = arith.addf %787, %381 : vector<16x16xf32>
    %cst_303 = arith.constant dense<0xFF800000> : vector<16xf32>
    %789 = vector.multi_reduction <maximumf>, %788, %cst_303 [1] : vector<16x16xf32> to vector<16xf32>
    %790 = vector.shape_cast %789 : vector<16xf32> to vector<16x1xf32>
    %791 = vector.broadcast %790 : vector<16x1xf32> to vector<16x16xf32>
    %792 = arith.subf %788, %791 : vector<16x16xf32>
    %793 = math.exp %792 : vector<16x16xf32>
    %cst_304 = arith.constant dense<0.000000e+00> : vector<16xf32>
    %794 = vector.multi_reduction <add>, %793, %cst_304 [1] : vector<16x16xf32> to vector<16xf32>
    %795 = vector.shape_cast %794 : vector<16xf32> to vector<16x1xf32>
    %796 = tpu.reciprocal %795 {approx = true} : vector<16x1xf32> -> vector<16x1xf32>
    %797 = vector.broadcast %796 : vector<16x1xf32> to vector<16x16xf32>
    %798 = arith.mulf %793, %797 : vector<16x16xf32>
    %799 = vector.extract_strided_slice %722 {offsets = [0, 24], sizes = [16, 8], strides = [1, 1]} : vector<16x32xf32> to vector<16x8xf32>
    %800 = arith.truncf %798 : vector<16x16xf32> to vector<16x16xbf16>
    %801 = arith.truncf %799 : vector<16x8xf32> to vector<16x8xbf16>
    %cst_305 = arith.constant dense<0.000000e+00> : vector<16x8xf32>
    %802 = tpu.matmul %800, %801, %cst_305 {dimension_numbers = #tpu.dot_dimension_numbers<[1], [0], [0], [1], [0, 0, 1, 1], [], []>} : vector<16x16xbf16>, vector<16x8xbf16>, vector<16x8xf32> -> vector<16x8xf32>
    %803 = tpu.concatenate %742, %762, %782, %802 in 1 : vector<16x8xf32>, vector<16x8xf32>, vector<16x8xf32>, vector<16x8xf32> -> vector<16x32xf32>
    %c4_306 = arith.constant 4 : index
    %c0_307 = arith.constant 0 : index
    %c0_308 = arith.constant 0 : index
    %804 = vector.load %arg9[%c4_306, %c0_307, %c0_308] : memref<6x32x32xbf16, #tpu.memory_space<vmem>>, vector<1x32x32xbf16>
    %805 = vector.shape_cast %804 : vector<1x32x32xbf16> to vector<32x32xbf16>
    %806 = arith.truncf %803 : vector<16x32xf32> to vector<16x32xbf16>
    %cst_309 = arith.constant dense<0.000000e+00> : vector<16x32xf32>
    %807 = tpu.matmul %806, %805, %cst_309 {dimension_numbers = #tpu.dot_dimension_numbers<[1], [0], [0], [1], [0, 0, 1, 1], [], []>} : vector<16x32xbf16>, vector<32x32xbf16>, vector<16x32xf32> -> vector<16x32xf32>
    %c4_310 = arith.constant 4 : index
    %c0_311 = arith.constant 0 : index
    %c0_312 = arith.constant 0 : index
    %808 = vector.load %arg10[%c4_310, %c0_311, %c0_312] : memref<6x1x32xf32, #tpu.memory_space<vmem>>, vector<1x1x32xf32>
    %809 = vector.shape_cast %808 : vector<1x1x32xf32> to vector<1x32xf32>
    %810 = vector.broadcast %809 : vector<1x32xf32> to vector<16x32xf32>
    %811 = arith.addf %807, %810 : vector<16x32xf32>
    %812 = arith.addf %811, %686 : vector<16x32xf32>
    %c9 = arith.constant 9 : index
    %c0_313 = arith.constant 0 : index
    %c0_314 = arith.constant 0 : index
    %813 = vector.load %arg11[%c9, %c0_313, %c0_314] : memref<12x1x32xf32, #tpu.memory_space<vmem>>, vector<1x1x32xf32>
    %814 = vector.shape_cast %813 : vector<1x1x32xf32> to vector<1x32xf32>
    %c9_315 = arith.constant 9 : index
    %c0_316 = arith.constant 0 : index
    %c0_317 = arith.constant 0 : index
    %815 = vector.load %arg12[%c9_315, %c0_316, %c0_317] : memref<12x1x32xf32, #tpu.memory_space<vmem>>, vector<1x1x32xf32>
    %816 = vector.shape_cast %815 : vector<1x1x32xf32> to vector<1x32xf32>
    %cst_318 = arith.constant dense<0.000000e+00> : vector<16xf32>
    %817 = vector.multi_reduction <add>, %812, %cst_318 [1] : vector<16x32xf32> to vector<16xf32>
    %818 = vector.shape_cast %817 : vector<16xf32> to vector<16x1xf32>
    %cst_319 = arith.constant 3.200000e+01 : f32
    %819 = vector.broadcast %cst_319 : f32 to vector<16x1xf32>
    %820 = arith.divf %818, %819 : vector<16x1xf32>
    %821 = vector.broadcast %820 : vector<16x1xf32> to vector<16x32xf32>
    %822 = arith.subf %812, %821 : vector<16x32xf32>
    %823 = arith.mulf %822, %822 : vector<16x32xf32>
    %cst_320 = arith.constant dense<0.000000e+00> : vector<16xf32>
    %824 = vector.multi_reduction <add>, %823, %cst_320 [1] : vector<16x32xf32> to vector<16xf32>
    %825 = vector.shape_cast %824 : vector<16xf32> to vector<16x1xf32>
    %cst_321 = arith.constant 0.0322580636 : f32
    %826 = vector.broadcast %cst_321 : f32 to vector<16x1xf32>
    %827 = arith.mulf %825, %826 : vector<16x1xf32>
    %828 = math.sqrt %827 : vector<16x1xf32>
    %cst_322 = arith.constant 9.99999997E-7 : f32
    %829 = vector.broadcast %cst_322 : f32 to vector<16x1xf32>
    %830 = arith.addf %828, %829 : vector<16x1xf32>
    %831 = tpu.reciprocal %830 {approx = true} : vector<16x1xf32> -> vector<16x1xf32>
    %832 = vector.broadcast %831 : vector<16x1xf32> to vector<16x32xf32>
    %833 = arith.mulf %822, %832 : vector<16x32xf32>
    %834 = vector.broadcast %814 : vector<1x32xf32> to vector<16x32xf32>
    %835 = arith.mulf %833, %834 : vector<16x32xf32>
    %836 = vector.broadcast %816 : vector<1x32xf32> to vector<16x32xf32>
    %837 = arith.addf %835, %836 : vector<16x32xf32>
    %c5_323 = arith.constant 5 : index
    %c0_324 = arith.constant 0 : index
    %c0_325 = arith.constant 0 : index
    %838 = vector.load %arg7[%c5_323, %c0_324, %c0_325] : memref<6x32x96xbf16, #tpu.memory_space<vmem>>, vector<1x32x32xbf16>
    %839 = vector.shape_cast %838 : vector<1x32x32xbf16> to vector<32x32xbf16>
    %840 = arith.truncf %837 : vector<16x32xf32> to vector<16x32xbf16>
    %cst_326 = arith.constant dense<0.000000e+00> : vector<16x32xf32>
    %841 = tpu.matmul %840, %839, %cst_326 {dimension_numbers = #tpu.dot_dimension_numbers<[1], [0], [0], [1], [0, 0, 1, 1], [], []>} : vector<16x32xbf16>, vector<32x32xbf16>, vector<16x32xf32> -> vector<16x32xf32>
    %c5_327 = arith.constant 5 : index
    %c0_328 = arith.constant 0 : index
    %c0_329 = arith.constant 0 : index
    %842 = vector.load %arg8[%c5_327, %c0_328, %c0_329] : memref<6x1x96xf32, #tpu.memory_space<vmem>>, vector<1x1x32xf32>
    %843 = vector.shape_cast %842 : vector<1x1x32xf32> to vector<1x32xf32>
    %844 = vector.broadcast %843 : vector<1x32xf32> to vector<16x32xf32>
    %845 = arith.addf %841, %844 : vector<16x32xf32>
    %c5_330 = arith.constant 5 : index
    %c0_331 = arith.constant 0 : index
    %c32_332 = arith.constant 32 : index
    %846 = vector.load %arg7[%c5_330, %c0_331, %c32_332] : memref<6x32x96xbf16, #tpu.memory_space<vmem>>, vector<1x32x64xbf16>
    %847 = vector.shape_cast %846 : vector<1x32x64xbf16> to vector<32x64xbf16>
    %848 = arith.truncf %368 : vector<20x32xf32> to vector<20x32xbf16>
    %cst_333 = arith.constant dense<0.000000e+00> : vector<20x64xf32>
    %849 = tpu.matmul %848, %847, %cst_333 {dimension_numbers = #tpu.dot_dimension_numbers<[1], [0], [0], [1], [0, 0, 1, 1], [], []>} : vector<20x32xbf16>, vector<32x64xbf16>, vector<20x64xf32> -> vector<20x64xf32>
    %c5_334 = arith.constant 5 : index
    %c0_335 = arith.constant 0 : index
    %c32_336 = arith.constant 32 : index
    %850 = vector.load %arg8[%c5_334, %c0_335, %c32_336] : memref<6x1x96xf32, #tpu.memory_space<vmem>>, vector<1x1x64xf32>
    %851 = vector.shape_cast %850 : vector<1x1x64xf32> to vector<1x64xf32>
    %852 = vector.broadcast %851 : vector<1x64xf32> to vector<20x64xf32>
    %853 = arith.addf %849, %852 : vector<20x64xf32>
    %854 = vector.extract_strided_slice %853 {offsets = [0, 0], sizes = [20, 32], strides = [1, 1]} : vector<20x64xf32> to vector<20x32xf32>
    %855 = vector.extract_strided_slice %853 {offsets = [0, 32], sizes = [20, 32], strides = [1, 1]} : vector<20x64xf32> to vector<20x32xf32>
    %856 = vector.extract_strided_slice %845 {offsets = [0, 0], sizes = [16, 8], strides = [1, 1]} : vector<16x32xf32> to vector<16x8xf32>
    %857 = vector.extract_strided_slice %854 {offsets = [0, 0], sizes = [20, 8], strides = [1, 1]} : vector<20x32xf32> to vector<20x8xf32>
    %858 = arith.truncf %856 : vector<16x8xf32> to vector<16x8xbf16>
    %859 = arith.truncf %857 : vector<20x8xf32> to vector<20x8xbf16>
    %cst_337 = arith.constant dense<0.000000e+00> : vector<16x20xf32>
    %860 = tpu.matmul %858, %859, %cst_337 {dimension_numbers = #tpu.dot_dimension_numbers<[1], [1], [0], [0], [0, 0, 1, 0], [], []>} : vector<16x8xbf16>, vector<20x8xbf16>, vector<16x20xf32> -> vector<16x20xf32>
    %861 = arith.addf %860, %383 : vector<16x20xf32>
    %cst_338 = arith.constant dense<0xFF800000> : vector<16xf32>
    %862 = vector.multi_reduction <maximumf>, %861, %cst_338 [1] : vector<16x20xf32> to vector<16xf32>
    %863 = vector.shape_cast %862 : vector<16xf32> to vector<16x1xf32>
    %864 = vector.broadcast %863 : vector<16x1xf32> to vector<16x20xf32>
    %865 = arith.subf %861, %864 : vector<16x20xf32>
    %866 = math.exp %865 : vector<16x20xf32>
    %cst_339 = arith.constant dense<0.000000e+00> : vector<16xf32>
    %867 = vector.multi_reduction <add>, %866, %cst_339 [1] : vector<16x20xf32> to vector<16xf32>
    %868 = vector.shape_cast %867 : vector<16xf32> to vector<16x1xf32>
    %869 = tpu.reciprocal %868 {approx = true} : vector<16x1xf32> -> vector<16x1xf32>
    %870 = vector.broadcast %869 : vector<16x1xf32> to vector<16x20xf32>
    %871 = arith.mulf %866, %870 : vector<16x20xf32>
    %872 = vector.extract_strided_slice %855 {offsets = [0, 0], sizes = [20, 8], strides = [1, 1]} : vector<20x32xf32> to vector<20x8xf32>
    %873 = arith.truncf %871 : vector<16x20xf32> to vector<16x20xbf16>
    %874 = arith.truncf %872 : vector<20x8xf32> to vector<20x8xbf16>
    %cst_340 = arith.constant dense<0.000000e+00> : vector<16x8xf32>
    %875 = tpu.matmul %873, %874, %cst_340 {dimension_numbers = #tpu.dot_dimension_numbers<[1], [0], [0], [1], [0, 0, 1, 1], [], []>} : vector<16x20xbf16>, vector<20x8xbf16>, vector<16x8xf32> -> vector<16x8xf32>
    %876 = vector.extract_strided_slice %845 {offsets = [0, 8], sizes = [16, 8], strides = [1, 1]} : vector<16x32xf32> to vector<16x8xf32>
    %877 = vector.extract_strided_slice %854 {offsets = [0, 8], sizes = [20, 8], strides = [1, 1]} : vector<20x32xf32> to vector<20x8xf32>
    %878 = arith.truncf %876 : vector<16x8xf32> to vector<16x8xbf16>
    %879 = arith.truncf %877 : vector<20x8xf32> to vector<20x8xbf16>
    %cst_341 = arith.constant dense<0.000000e+00> : vector<16x20xf32>
    %880 = tpu.matmul %878, %879, %cst_341 {dimension_numbers = #tpu.dot_dimension_numbers<[1], [1], [0], [0], [0, 0, 1, 0], [], []>} : vector<16x8xbf16>, vector<20x8xbf16>, vector<16x20xf32> -> vector<16x20xf32>
    %881 = arith.addf %880, %383 : vector<16x20xf32>
    %cst_342 = arith.constant dense<0xFF800000> : vector<16xf32>
    %882 = vector.multi_reduction <maximumf>, %881, %cst_342 [1] : vector<16x20xf32> to vector<16xf32>
    %883 = vector.shape_cast %882 : vector<16xf32> to vector<16x1xf32>
    %884 = vector.broadcast %883 : vector<16x1xf32> to vector<16x20xf32>
    %885 = arith.subf %881, %884 : vector<16x20xf32>
    %886 = math.exp %885 : vector<16x20xf32>
    %cst_343 = arith.constant dense<0.000000e+00> : vector<16xf32>
    %887 = vector.multi_reduction <add>, %886, %cst_343 [1] : vector<16x20xf32> to vector<16xf32>
    %888 = vector.shape_cast %887 : vector<16xf32> to vector<16x1xf32>
    %889 = tpu.reciprocal %888 {approx = true} : vector<16x1xf32> -> vector<16x1xf32>
    %890 = vector.broadcast %889 : vector<16x1xf32> to vector<16x20xf32>
    %891 = arith.mulf %886, %890 : vector<16x20xf32>
    %892 = vector.extract_strided_slice %855 {offsets = [0, 8], sizes = [20, 8], strides = [1, 1]} : vector<20x32xf32> to vector<20x8xf32>
    %893 = arith.truncf %891 : vector<16x20xf32> to vector<16x20xbf16>
    %894 = arith.truncf %892 : vector<20x8xf32> to vector<20x8xbf16>
    %cst_344 = arith.constant dense<0.000000e+00> : vector<16x8xf32>
    %895 = tpu.matmul %893, %894, %cst_344 {dimension_numbers = #tpu.dot_dimension_numbers<[1], [0], [0], [1], [0, 0, 1, 1], [], []>} : vector<16x20xbf16>, vector<20x8xbf16>, vector<16x8xf32> -> vector<16x8xf32>
    %896 = vector.extract_strided_slice %845 {offsets = [0, 16], sizes = [16, 8], strides = [1, 1]} : vector<16x32xf32> to vector<16x8xf32>
    %897 = vector.extract_strided_slice %854 {offsets = [0, 16], sizes = [20, 8], strides = [1, 1]} : vector<20x32xf32> to vector<20x8xf32>
    %898 = arith.truncf %896 : vector<16x8xf32> to vector<16x8xbf16>
    %899 = arith.truncf %897 : vector<20x8xf32> to vector<20x8xbf16>
    %cst_345 = arith.constant dense<0.000000e+00> : vector<16x20xf32>
    %900 = tpu.matmul %898, %899, %cst_345 {dimension_numbers = #tpu.dot_dimension_numbers<[1], [1], [0], [0], [0, 0, 1, 0], [], []>} : vector<16x8xbf16>, vector<20x8xbf16>, vector<16x20xf32> -> vector<16x20xf32>
    %901 = arith.addf %900, %383 : vector<16x20xf32>
    %cst_346 = arith.constant dense<0xFF800000> : vector<16xf32>
    %902 = vector.multi_reduction <maximumf>, %901, %cst_346 [1] : vector<16x20xf32> to vector<16xf32>
    %903 = vector.shape_cast %902 : vector<16xf32> to vector<16x1xf32>
    %904 = vector.broadcast %903 : vector<16x1xf32> to vector<16x20xf32>
    %905 = arith.subf %901, %904 : vector<16x20xf32>
    %906 = math.exp %905 : vector<16x20xf32>
    %cst_347 = arith.constant dense<0.000000e+00> : vector<16xf32>
    %907 = vector.multi_reduction <add>, %906, %cst_347 [1] : vector<16x20xf32> to vector<16xf32>
    %908 = vector.shape_cast %907 : vector<16xf32> to vector<16x1xf32>
    %909 = tpu.reciprocal %908 {approx = true} : vector<16x1xf32> -> vector<16x1xf32>
    %910 = vector.broadcast %909 : vector<16x1xf32> to vector<16x20xf32>
    %911 = arith.mulf %906, %910 : vector<16x20xf32>
    %912 = vector.extract_strided_slice %855 {offsets = [0, 16], sizes = [20, 8], strides = [1, 1]} : vector<20x32xf32> to vector<20x8xf32>
    %913 = arith.truncf %911 : vector<16x20xf32> to vector<16x20xbf16>
    %914 = arith.truncf %912 : vector<20x8xf32> to vector<20x8xbf16>
    %cst_348 = arith.constant dense<0.000000e+00> : vector<16x8xf32>
    %915 = tpu.matmul %913, %914, %cst_348 {dimension_numbers = #tpu.dot_dimension_numbers<[1], [0], [0], [1], [0, 0, 1, 1], [], []>} : vector<16x20xbf16>, vector<20x8xbf16>, vector<16x8xf32> -> vector<16x8xf32>
    %916 = vector.extract_strided_slice %845 {offsets = [0, 24], sizes = [16, 8], strides = [1, 1]} : vector<16x32xf32> to vector<16x8xf32>
    %917 = vector.extract_strided_slice %854 {offsets = [0, 24], sizes = [20, 8], strides = [1, 1]} : vector<20x32xf32> to vector<20x8xf32>
    %918 = arith.truncf %916 : vector<16x8xf32> to vector<16x8xbf16>
    %919 = arith.truncf %917 : vector<20x8xf32> to vector<20x8xbf16>
    %cst_349 = arith.constant dense<0.000000e+00> : vector<16x20xf32>
    %920 = tpu.matmul %918, %919, %cst_349 {dimension_numbers = #tpu.dot_dimension_numbers<[1], [1], [0], [0], [0, 0, 1, 0], [], []>} : vector<16x8xbf16>, vector<20x8xbf16>, vector<16x20xf32> -> vector<16x20xf32>
    %921 = arith.addf %920, %383 : vector<16x20xf32>
    %cst_350 = arith.constant dense<0xFF800000> : vector<16xf32>
    %922 = vector.multi_reduction <maximumf>, %921, %cst_350 [1] : vector<16x20xf32> to vector<16xf32>
    %923 = vector.shape_cast %922 : vector<16xf32> to vector<16x1xf32>
    %924 = vector.broadcast %923 : vector<16x1xf32> to vector<16x20xf32>
    %925 = arith.subf %921, %924 : vector<16x20xf32>
    %926 = math.exp %925 : vector<16x20xf32>
    %cst_351 = arith.constant dense<0.000000e+00> : vector<16xf32>
    %927 = vector.multi_reduction <add>, %926, %cst_351 [1] : vector<16x20xf32> to vector<16xf32>
    %928 = vector.shape_cast %927 : vector<16xf32> to vector<16x1xf32>
    %929 = tpu.reciprocal %928 {approx = true} : vector<16x1xf32> -> vector<16x1xf32>
    %930 = vector.broadcast %929 : vector<16x1xf32> to vector<16x20xf32>
    %931 = arith.mulf %926, %930 : vector<16x20xf32>
    %932 = vector.extract_strided_slice %855 {offsets = [0, 24], sizes = [20, 8], strides = [1, 1]} : vector<20x32xf32> to vector<20x8xf32>
    %933 = arith.truncf %931 : vector<16x20xf32> to vector<16x20xbf16>
    %934 = arith.truncf %932 : vector<20x8xf32> to vector<20x8xbf16>
    %cst_352 = arith.constant dense<0.000000e+00> : vector<16x8xf32>
    %935 = tpu.matmul %933, %934, %cst_352 {dimension_numbers = #tpu.dot_dimension_numbers<[1], [0], [0], [1], [0, 0, 1, 1], [], []>} : vector<16x20xbf16>, vector<20x8xbf16>, vector<16x8xf32> -> vector<16x8xf32>
    %936 = tpu.concatenate %875, %895, %915, %935 in 1 : vector<16x8xf32>, vector<16x8xf32>, vector<16x8xf32>, vector<16x8xf32> -> vector<16x32xf32>
    %c5_353 = arith.constant 5 : index
    %c0_354 = arith.constant 0 : index
    %c0_355 = arith.constant 0 : index
    %937 = vector.load %arg9[%c5_353, %c0_354, %c0_355] : memref<6x32x32xbf16, #tpu.memory_space<vmem>>, vector<1x32x32xbf16>
    %938 = vector.shape_cast %937 : vector<1x32x32xbf16> to vector<32x32xbf16>
    %939 = arith.truncf %936 : vector<16x32xf32> to vector<16x32xbf16>
    %cst_356 = arith.constant dense<0.000000e+00> : vector<16x32xf32>
    %940 = tpu.matmul %939, %938, %cst_356 {dimension_numbers = #tpu.dot_dimension_numbers<[1], [0], [0], [1], [0, 0, 1, 1], [], []>} : vector<16x32xbf16>, vector<32x32xbf16>, vector<16x32xf32> -> vector<16x32xf32>
    %c5_357 = arith.constant 5 : index
    %c0_358 = arith.constant 0 : index
    %c0_359 = arith.constant 0 : index
    %941 = vector.load %arg10[%c5_357, %c0_358, %c0_359] : memref<6x1x32xf32, #tpu.memory_space<vmem>>, vector<1x1x32xf32>
    %942 = vector.shape_cast %941 : vector<1x1x32xf32> to vector<1x32xf32>
    %943 = vector.broadcast %942 : vector<1x32xf32> to vector<16x32xf32>
    %944 = arith.addf %940, %943 : vector<16x32xf32>
    %945 = arith.addf %944, %812 : vector<16x32xf32>
    %c10 = arith.constant 10 : index
    %c0_360 = arith.constant 0 : index
    %c0_361 = arith.constant 0 : index
    %946 = vector.load %arg11[%c10, %c0_360, %c0_361] : memref<12x1x32xf32, #tpu.memory_space<vmem>>, vector<1x1x32xf32>
    %947 = vector.shape_cast %946 : vector<1x1x32xf32> to vector<1x32xf32>
    %c10_362 = arith.constant 10 : index
    %c0_363 = arith.constant 0 : index
    %c0_364 = arith.constant 0 : index
    %948 = vector.load %arg12[%c10_362, %c0_363, %c0_364] : memref<12x1x32xf32, #tpu.memory_space<vmem>>, vector<1x1x32xf32>
    %949 = vector.shape_cast %948 : vector<1x1x32xf32> to vector<1x32xf32>
    %cst_365 = arith.constant dense<0.000000e+00> : vector<16xf32>
    %950 = vector.multi_reduction <add>, %945, %cst_365 [1] : vector<16x32xf32> to vector<16xf32>
    %951 = vector.shape_cast %950 : vector<16xf32> to vector<16x1xf32>
    %cst_366 = arith.constant 3.200000e+01 : f32
    %952 = vector.broadcast %cst_366 : f32 to vector<16x1xf32>
    %953 = arith.divf %951, %952 : vector<16x1xf32>
    %954 = vector.broadcast %953 : vector<16x1xf32> to vector<16x32xf32>
    %955 = arith.subf %945, %954 : vector<16x32xf32>
    %956 = arith.mulf %955, %955 : vector<16x32xf32>
    %cst_367 = arith.constant dense<0.000000e+00> : vector<16xf32>
    %957 = vector.multi_reduction <add>, %956, %cst_367 [1] : vector<16x32xf32> to vector<16xf32>
    %958 = vector.shape_cast %957 : vector<16xf32> to vector<16x1xf32>
    %cst_368 = arith.constant 0.0322580636 : f32
    %959 = vector.broadcast %cst_368 : f32 to vector<16x1xf32>
    %960 = arith.mulf %958, %959 : vector<16x1xf32>
    %961 = math.sqrt %960 : vector<16x1xf32>
    %cst_369 = arith.constant 9.99999997E-7 : f32
    %962 = vector.broadcast %cst_369 : f32 to vector<16x1xf32>
    %963 = arith.addf %961, %962 : vector<16x1xf32>
    %964 = tpu.reciprocal %963 {approx = true} : vector<16x1xf32> -> vector<16x1xf32>
    %965 = vector.broadcast %964 : vector<16x1xf32> to vector<16x32xf32>
    %966 = arith.mulf %955, %965 : vector<16x32xf32>
    %967 = vector.broadcast %947 : vector<1x32xf32> to vector<16x32xf32>
    %968 = arith.mulf %966, %967 : vector<16x32xf32>
    %969 = vector.broadcast %949 : vector<1x32xf32> to vector<16x32xf32>
    %970 = arith.addf %968, %969 : vector<16x32xf32>
    %c3_370 = arith.constant 3 : index
    %c0_371 = arith.constant 0 : index
    %c0_372 = arith.constant 0 : index
    %971 = vector.load %arg13[%c3_370, %c0_371, %c0_372] : memref<4x32x64xbf16, #tpu.memory_space<vmem>>, vector<1x32x64xbf16>
    %972 = vector.shape_cast %971 : vector<1x32x64xbf16> to vector<32x64xbf16>
    %973 = arith.truncf %970 : vector<16x32xf32> to vector<16x32xbf16>
    %cst_373 = arith.constant dense<0.000000e+00> : vector<16x64xf32>
    %974 = tpu.matmul %973, %972, %cst_373 {dimension_numbers = #tpu.dot_dimension_numbers<[1], [0], [0], [1], [0, 0, 1, 1], [], []>} : vector<16x32xbf16>, vector<32x64xbf16>, vector<16x64xf32> -> vector<16x64xf32>
    %c3_374 = arith.constant 3 : index
    %c0_375 = arith.constant 0 : index
    %c0_376 = arith.constant 0 : index
    %975 = vector.load %arg14[%c3_374, %c0_375, %c0_376] : memref<4x1x64xf32, #tpu.memory_space<vmem>>, vector<1x1x64xf32>
    %976 = vector.shape_cast %975 : vector<1x1x64xf32> to vector<1x64xf32>
    %977 = vector.broadcast %976 : vector<1x64xf32> to vector<16x64xf32>
    %978 = arith.addf %974, %977 : vector<16x64xf32>
    %cst_377 = arith.constant 0.000000e+00 : f32
    %979 = vector.broadcast %cst_377 : f32 to vector<16x64xf32>
    %980 = arith.maximumf %978, %979 : vector<16x64xf32>
    %c3_378 = arith.constant 3 : index
    %c0_379 = arith.constant 0 : index
    %c0_380 = arith.constant 0 : index
    %981 = vector.load %arg15[%c3_378, %c0_379, %c0_380] : memref<4x64x32xbf16, #tpu.memory_space<vmem>>, vector<1x64x32xbf16>
    %982 = vector.shape_cast %981 : vector<1x64x32xbf16> to vector<64x32xbf16>
    %983 = arith.truncf %980 : vector<16x64xf32> to vector<16x64xbf16>
    %cst_381 = arith.constant dense<0.000000e+00> : vector<16x32xf32>
    %984 = tpu.matmul %983, %982, %cst_381 {dimension_numbers = #tpu.dot_dimension_numbers<[1], [0], [0], [1], [0, 0, 1, 1], [], []>} : vector<16x64xbf16>, vector<64x32xbf16>, vector<16x32xf32> -> vector<16x32xf32>
    %985 = arith.addf %945, %984 : vector<16x32xf32>
    %c3_382 = arith.constant 3 : index
    %c0_383 = arith.constant 0 : index
    %c0_384 = arith.constant 0 : index
    %986 = vector.load %arg16[%c3_382, %c0_383, %c0_384] : memref<4x1x32xf32, #tpu.memory_space<vmem>>, vector<1x1x32xf32>
    %987 = vector.shape_cast %986 : vector<1x1x32xf32> to vector<1x32xf32>
    %988 = vector.broadcast %987 : vector<1x32xf32> to vector<16x32xf32>
    %989 = arith.addf %985, %988 : vector<16x32xf32>
    %c11 = arith.constant 11 : index
    %c0_385 = arith.constant 0 : index
    %c0_386 = arith.constant 0 : index
    %990 = vector.load %arg11[%c11, %c0_385, %c0_386] : memref<12x1x32xf32, #tpu.memory_space<vmem>>, vector<1x1x32xf32>
    %991 = vector.shape_cast %990 : vector<1x1x32xf32> to vector<1x32xf32>
    %c11_387 = arith.constant 11 : index
    %c0_388 = arith.constant 0 : index
    %c0_389 = arith.constant 0 : index
    %992 = vector.load %arg12[%c11_387, %c0_388, %c0_389] : memref<12x1x32xf32, #tpu.memory_space<vmem>>, vector<1x1x32xf32>
    %993 = vector.shape_cast %992 : vector<1x1x32xf32> to vector<1x32xf32>
    %cst_390 = arith.constant dense<0.000000e+00> : vector<16xf32>
    %994 = vector.multi_reduction <add>, %989, %cst_390 [1] : vector<16x32xf32> to vector<16xf32>
    %995 = vector.shape_cast %994 : vector<16xf32> to vector<16x1xf32>
    %cst_391 = arith.constant 3.200000e+01 : f32
    %996 = vector.broadcast %cst_391 : f32 to vector<16x1xf32>
    %997 = arith.divf %995, %996 : vector<16x1xf32>
    %998 = vector.broadcast %997 : vector<16x1xf32> to vector<16x32xf32>
    %999 = arith.subf %989, %998 : vector<16x32xf32>
    %1000 = arith.mulf %999, %999 : vector<16x32xf32>
    %cst_392 = arith.constant dense<0.000000e+00> : vector<16xf32>
    %1001 = vector.multi_reduction <add>, %1000, %cst_392 [1] : vector<16x32xf32> to vector<16xf32>
    %1002 = vector.shape_cast %1001 : vector<16xf32> to vector<16x1xf32>
    %cst_393 = arith.constant 0.0322580636 : f32
    %1003 = vector.broadcast %cst_393 : f32 to vector<16x1xf32>
    %1004 = arith.mulf %1002, %1003 : vector<16x1xf32>
    %1005 = math.sqrt %1004 : vector<16x1xf32>
    %cst_394 = arith.constant 9.99999997E-7 : f32
    %1006 = vector.broadcast %cst_394 : f32 to vector<16x1xf32>
    %1007 = arith.addf %1005, %1006 : vector<16x1xf32>
    %1008 = tpu.reciprocal %1007 {approx = true} : vector<16x1xf32> -> vector<16x1xf32>
    %1009 = vector.broadcast %1008 : vector<16x1xf32> to vector<16x32xf32>
    %1010 = arith.mulf %999, %1009 : vector<16x32xf32>
    %1011 = vector.broadcast %991 : vector<1x32xf32> to vector<16x32xf32>
    %1012 = arith.mulf %1010, %1011 : vector<16x32xf32>
    %1013 = vector.broadcast %993 : vector<1x32xf32> to vector<16x32xf32>
    %1014 = arith.addf %1012, %1013 : vector<16x32xf32>
    %c0_395 = arith.constant 0 : index
    %c0_396 = arith.constant 0 : index
    %1015 = vector.load %arg19[%c0_395, %c0_396] : memref<1x32xbf16, #tpu.memory_space<vmem>>, vector<1x32xbf16>
    %1016 = arith.truncf %1014 : vector<16x32xf32> to vector<16x32xbf16>
    %cst_397 = arith.constant dense<0.000000e+00> : vector<1x16xf32>
    %1017 = tpu.matmul %1015, %1016, %cst_397 {dimension_numbers = #tpu.dot_dimension_numbers<[1], [1], [0], [0], [0, 0, 1, 0], [], []>} : vector<1x32xbf16>, vector<16x32xbf16>, vector<1x16xf32> -> vector<1x16xf32>
    %c0_398 = arith.constant 0 : index
    %c0_399 = arith.constant 0 : index
    %1018 = vector.load %arg20[%c0_398, %c0_399] : memref<1x1xf32, #tpu.memory_space<vmem>>, vector<1x1xf32>
    %1019 = vector.broadcast %1018 : vector<1x1xf32> to vector<1x16xf32>
    %1020 = arith.addf %1017, %1019 : vector<1x16xf32>
    %1021 = math.tanh %1020 : vector<1x16xf32>
    %c0_400 = arith.constant 0 : index
    %c0_401 = arith.constant 0 : index
    %c0_402 = arith.constant 0 : index
    %1022 = vector.load %arg21[%c0_400, %c0_401, %c0_402] : memref<1x1x16xf32, #tpu.memory_space<vmem>>, vector<1x1x16xf32>
    %1023 = vector.shape_cast %1022 : vector<1x1x16xf32> to vector<1x16xf32>
    %1024 = vector.shape_cast %1021 : vector<1x16xf32> to vector<1x1x16xf32>
    tpu.vector_store %arg21[%c0_400, %c0_401, %c0_402], %1024 {strides = array<i32>} : memref<1x1x16xf32, #tpu.memory_space<vmem>>, vector<1x1x16xf32>,
    return
  }
  func.func @transform_0(%arg0: i32) -> (i32, i32, i32) {
    %c0_i32 = arith.constant 0 : i32
    %c0_i32_0 = arith.constant 0 : i32
    %c0_i32_1 = arith.constant 0 : i32
    return %arg0, %c0_i32, %c0_i32_0 : i32, i32, i32
  }
  func.func @transform_1(%arg0: i32) -> (i32, i32, i32) {
    %c0_i32 = arith.constant 0 : i32
    %c0_i32_0 = arith.constant 0 : i32
    %c0_i32_1 = arith.constant 0 : i32
    return %arg0, %c0_i32, %c0_i32_0 : i32, i32, i32
  }
  func.func @transform_2(%arg0: i32) -> (i32, i32, i32) {
    %c0_i32 = arith.constant 0 : i32
    %c0_i32_0 = arith.constant 0 : i32
    %c0_i32_1 = arith.constant 0 : i32
    return %arg0, %c0_i32, %c0_i32_0 : i32, i32, i32
  }
  func.func @transform_3(%arg0: i32) -> (i32, i32, i32) {
    %c0_i32 = arith.constant 0 : i32
    %c0_i32_0 = arith.constant 0 : i32
    %c0_i32_1 = arith.constant 0 : i32
    return %arg0, %c0_i32, %c0_i32_0 : i32, i32, i32
  }
  func.func @transform_4(%arg0: i32) -> (i32, i32, i32) {
    %c0_i32 = arith.constant 0 : i32
    %c0_i32_0 = arith.constant 0 : i32
    %c0_i32_1 = arith.constant 0 : i32
    return %arg0, %c0_i32, %c0_i32_0 : i32, i32, i32
  }
  func.func @transform_5(%arg0: i32) -> (i32, i32, i32) {
    %c0_i32 = arith.constant 0 : i32
    %c0_i32_0 = arith.constant 0 : i32
    %c0_i32_1 = arith.constant 0 : i32
    return %arg0, %c0_i32, %c0_i32_0 : i32, i32, i32
  }
  func.func @transform_6(%arg0: i32) -> (i32, i32, i32) {
    %c0_i32 = arith.constant 0 : i32
    %c0_i32_0 = arith.constant 0 : i32
    %c0_i32_1 = arith.constant 0 : i32
    %c0_i32_2 = arith.constant 0 : i32
    return %c0_i32, %c0_i32_0, %c0_i32_1 : i32, i32, i32
  }
  func.func @transform_7(%arg0: i32) -> (i32, i32, i32) {
    %c0_i32 = arith.constant 0 : i32
    %c0_i32_0 = arith.constant 0 : i32
    %c0_i32_1 = arith.constant 0 : i32
    %c0_i32_2 = arith.constant 0 : i32
    return %c0_i32, %c0_i32_0, %c0_i32_1 : i32, i32, i32
  }
  func.func @transform_8(%arg0: i32) -> (i32, i32, i32) {
    %c0_i32 = arith.constant 0 : i32
    %c0_i32_0 = arith.constant 0 : i32
    %c0_i32_1 = arith.constant 0 : i32
    %c0_i32_2 = arith.constant 0 : i32
    return %c0_i32, %c0_i32_0, %c0_i32_1 : i32, i32, i32
  }
  func.func @transform_9(%arg0: i32) -> (i32, i32, i32) {
    %c0_i32 = arith.constant 0 : i32
    %c0_i32_0 = arith.constant 0 : i32
    %c0_i32_1 = arith.constant 0 : i32
    %c0_i32_2 = arith.constant 0 : i32
    return %c0_i32, %c0_i32_0, %c0_i32_1 : i32, i32, i32
  }
  func.func @transform_10(%arg0: i32) -> (i32, i32, i32) {
    %c0_i32 = arith.constant 0 : i32
    %c0_i32_0 = arith.constant 0 : i32
    %c0_i32_1 = arith.constant 0 : i32
    %c0_i32_2 = arith.constant 0 : i32
    return %c0_i32, %c0_i32_0, %c0_i32_1 : i32, i32, i32
  }
  func.func @transform_11(%arg0: i32) -> (i32, i32, i32) {
    %c0_i32 = arith.constant 0 : i32
    %c0_i32_0 = arith.constant 0 : i32
    %c0_i32_1 = arith.constant 0 : i32
    %c0_i32_2 = arith.constant 0 : i32
    return %c0_i32, %c0_i32_0, %c0_i32_1 : i32, i32, i32
  }
  func.func @transform_12(%arg0: i32) -> (i32, i32, i32) {
    %c0_i32 = arith.constant 0 : i32
    %c0_i32_0 = arith.constant 0 : i32
    %c0_i32_1 = arith.constant 0 : i32
    %c0_i32_2 = arith.constant 0 : i32
    return %c0_i32, %c0_i32_0, %c0_i32_1 : i32, i32, i32
  }
  func.func @transform_13(%arg0: i32) -> (i32, i32, i32) {
    %c0_i32 = arith.constant 0 : i32
    %c0_i32_0 = arith.constant 0 : i32
    %c0_i32_1 = arith.constant 0 : i32
    %c0_i32_2 = arith.constant 0 : i32
    return %c0_i32, %c0_i32_0, %c0_i32_1 : i32, i32, i32
  }
  func.func @transform_14(%arg0: i32) -> (i32, i32, i32) {
    %c0_i32 = arith.constant 0 : i32
    %c0_i32_0 = arith.constant 0 : i32
    %c0_i32_1 = arith.constant 0 : i32
    %c0_i32_2 = arith.constant 0 : i32
    return %c0_i32, %c0_i32_0, %c0_i32_1 : i32, i32, i32
  }
  func.func @transform_15(%arg0: i32) -> (i32, i32, i32) {
    %c0_i32 = arith.constant 0 : i32
    %c0_i32_0 = arith.constant 0 : i32
    %c0_i32_1 = arith.constant 0 : i32
    %c0_i32_2 = arith.constant 0 : i32
    return %c0_i32, %c0_i32_0, %c0_i32_1 : i32, i32, i32
  }
  func.func @transform_16(%arg0: i32) -> (i32, i32) {
    %c0_i32 = arith.constant 0 : i32
    %c0_i32_0 = arith.constant 0 : i32
    %c0_i32_1 = arith.constant 0 : i32
    return %c0_i32, %c0_i32_0 : i32, i32
  }
  func.func @transform_17(%arg0: i32) -> (i32, i32) {
    %c0_i32 = arith.constant 0 : i32
    %c0_i32_0 = arith.constant 0 : i32
    %c0_i32_1 = arith.constant 0 : i32
    return %c0_i32, %c0_i32_0 : i32, i32
  }
  func.func @transform_18(%arg0: i32) -> (i32, i32) {
    %c0_i32 = arith.constant 0 : i32
    %c0_i32_0 = arith.constant 0 : i32
    %c0_i32_1 = arith.constant 0 : i32
    return %c0_i32, %c0_i32_0 : i32, i32
  }
  func.func @transform_19(%arg0: i32) -> (i32, i32) {
    %c0_i32 = arith.constant 0 : i32
    %c0_i32_0 = arith.constant 0 : i32
    %c0_i32_1 = arith.constant 0 : i32
    return %c0_i32, %c0_i32_0 : i32, i32
  }
  func.func @transform_20(%arg0: i32) -> (i32, i32, i32) {
    %c0_i32 = arith.constant 0 : i32
    %c0_i32_0 = arith.constant 0 : i32
    %c0_i32_1 = arith.constant 0 : i32
    return %arg0, %c0_i32, %c0_i32_0 : i32, i32, i32
  }
}

</mosaic_0001>

<llo_original>
// kernel: ddpg_critic_forward.1
$region0: #{ddpg_critic_forward.1}
  #allocation0 [shape = 'u32[]', space=smem, size = 0x4, offset = 0x4, fixed_abs, tag = 'smem constant byte address 0x4 - core index']
  #allocation1 [shape = 'u32[144,128]{1,0:T(1,128)}', space=vmem, size = 0x12000, scoped, tag = 'internal scratch']
  #allocation2 [shape = 'f32[1,1]{1,0:T(1,128)S(1)}', space=vmem, size = 0x200, scoped, tag = 'scoped memory for ddpg_critic_forward.1']
  %s0 = inlined_call_operand.vmem [shape: f32[1,20,32], index: 0, kind: input, shape index: {}]
  %s1 = inlined_call_operand.vmem [shape: f32[1,16,32], index: 1, kind: input, shape index: {}]
  %s2 = inlined_call_operand.vmem [shape: f32[1,16,40], index: 2, kind: input, shape index: {}]
  %s3 = inlined_call_operand.vmem [shape: f32[1,20,20], index: 3, kind: input, shape index: {}]
  %s4 = inlined_call_operand.vmem [shape: f32[1,16,16], index: 4, kind: input, shape index: {}]
  %s5 = inlined_call_operand.vmem [shape: f32[1,16,20], index: 5, kind: input, shape index: {}]
  %s6 = inlined_call_operand.vmem [shape: bf16[6,32,96], index: 6, kind: input, shape index: {}]
  %s7 = inlined_call_operand.vmem [shape: f32[6,1,96], index: 7, kind: input, shape index: {}]
  %s8 = inlined_call_operand.vmem [shape: bf16[6,32,32], index: 8, kind: input, shape index: {}]
  %s9 = inlined_call_operand.vmem [shape: f32[6,1,32], index: 9, kind: input, shape index: {}]
  %s10 = inlined_call_operand.vmem [shape: f32[12,1,32], index: 10, kind: input, shape index: {}]
  %s11 = inlined_call_operand.vmem [shape: f32[12,1,32], index: 11, kind: input, shape index: {}]
  %s12 = inlined_call_operand.vmem [shape: bf16[4,32,64], index: 12, kind: input, shape index: {}]
  %s13 = inlined_call_operand.vmem [shape: f32[4,1,64], index: 13, kind: input, shape index: {}]
  %s14 = inlined_call_operand.vmem [shape: bf16[4,64,32], index: 14, kind: input, shape index: {}]
  %s15 = inlined_call_operand.vmem [shape: f32[4,1,32], index: 15, kind: input, shape index: {}]
  %s16 = inlined_call_operand.vmem [shape: bf16[40,32], index: 16, kind: input, shape index: {}]
  %s17 = inlined_call_operand.vmem [shape: f32[1,32], index: 17, kind: input, shape index: {}]
  %s18 = inlined_call_operand.vmem [shape: bf16[1,32], index: 18, kind: input, shape index: {}]
  %s19 = inlined_call_operand.<no memory space> [shape: f32[1,1], index: 19, kind: input, shape index: {}]
  %s20 = inlined_call_operand.vmem [shape: f32[1,1,16], index: 20, kind: output, shape index: {}]
  %s21 = sld [smem:[#allocation0]]
  $region90: #{ddpg_critic_forward.1} parent=0
    _
  %s23 = ssub.s32 1, %s21
  %s24 = scalar_select 0, %s23, %s21
  %v25 = vstv %s19
  %26 = vst [vmem:[#allocation2] sm:$0x1] %v25
  // Predicated region
  $region2: #{ddpg_critic_forward.1} parent=0 // pred_check
    _
  $region3: #{ddpg_critic_forward.1} parent=0 // pred_check_branch
    %28 = sbr.rel (0) target = $region5
  $region4: #{ddpg_critic_forward.1} parent=0 // pred_region
    _
  $region5: #{ddpg_critic_forward.1} parent=0 // pred_fallthru
    _
  // Predicated region
  $region6: #{ddpg_critic_forward.1} parent=0 // pred_check
    _
  $region7: #{ddpg_critic_forward.1} parent=0 // pred_check_branch
    %30 = sbr.rel (0) target = $region9
  $region8: #{ddpg_critic_forward.1} parent=0 // pred_region
    _
  $region9: #{ddpg_critic_forward.1} parent=0 // pred_fallthru
    _
  // Predicated region
  $region10: #{ddpg_critic_forward.1} parent=0 // pred_check
    _
  $region11: #{ddpg_critic_forward.1} parent=0 // pred_check_branch
    %32 = sbr.rel (0) target = $region13
  $region12: #{ddpg_critic_forward.1} parent=0 // pred_region
    _
  $region13: #{ddpg_critic_forward.1} parent=0 // pred_fallthru
    _
  // Predicated region
  $region14: #{ddpg_critic_forward.1} parent=0 // pred_check
    _
  $region15: #{ddpg_critic_forward.1} parent=0 // pred_check_branch
    %34 = sbr.rel (0) target = $region17
  $region16: #{ddpg_critic_forward.1} parent=0 // pred_region
    _
  $region17: #{ddpg_critic_forward.1} parent=0 // pred_fallthru
    _
  // Predicated region
  $region18: #{ddpg_critic_forward.1} parent=0 // pred_check
    _
  $region19: #{ddpg_critic_forward.1} parent=0 // pred_check_branch
    %36 = sbr.rel (0) target = $region21
  $region20: #{ddpg_critic_forward.1} parent=0 // pred_region
    _
  $region21: #{ddpg_critic_forward.1} parent=0 // pred_fallthru
    _
  // Predicated region
  $region22: #{ddpg_critic_forward.1} parent=0 // pred_check
    _
  $region23: #{ddpg_critic_forward.1} parent=0 // pred_check_branch
    %38 = sbr.rel (0) target = $region25
  $region24: #{ddpg_critic_forward.1} parent=0 // pred_region
    _
  $region25: #{ddpg_critic_forward.1} parent=0 // pred_fallthru
    _
  // Predicated region
  $region26: #{ddpg_critic_forward.1} parent=0 // pred_check
    _
  $region27: #{ddpg_critic_forward.1} parent=0 // pred_check_branch
    %40 = sbr.rel (0) target = $region29
  $region28: #{ddpg_critic_forward.1} parent=0 // pred_region
    _
  $region29: #{ddpg_critic_forward.1} parent=0 // pred_fallthru
    _
  // Predicated region
  $region30: #{ddpg_critic_forward.1} parent=0 // pred_check
    _
  $region31: #{ddpg_critic_forward.1} parent=0 // pred_check_branch
    %42 = sbr.rel (0) target = $region33
  $region32: #{ddpg_critic_forward.1} parent=0 // pred_region
    _
  $region33: #{ddpg_critic_forward.1} parent=0 // pred_fallthru
    _
  // Predicated region
  $region34: #{ddpg_critic_forward.1} parent=0 // pred_check
    _
  $region35: #{ddpg_critic_forward.1} parent=0 // pred_check_branch
    %44 = sbr.rel (0) target = $region37
  $region36: #{ddpg_critic_forward.1} parent=0 // pred_region
    _
  $region37: #{ddpg_critic_forward.1} parent=0 // pred_fallthru
    _
  // Predicated region
  $region38: #{ddpg_critic_forward.1} parent=0 // pred_check
    _
  $region39: #{ddpg_critic_forward.1} parent=0 // pred_check_branch
    %46 = sbr.rel (0) target = $region41
  $region40: #{ddpg_critic_forward.1} parent=0 // pred_region
    _
  $region41: #{ddpg_critic_forward.1} parent=0 // pred_fallthru
    _
  // Predicated region
  $region42: #{ddpg_critic_forward.1} parent=0 // pred_check
    _
  $region43: #{ddpg_critic_forward.1} parent=0 // pred_check_branch
    %48 = sbr.rel (0) target = $region45
  $region44: #{ddpg_critic_forward.1} parent=0 // pred_region
    _
  $region45: #{ddpg_critic_forward.1} parent=0 // pred_fallthru
    _
  // Predicated region
  $region46: #{ddpg_critic_forward.1} parent=0 // pred_check
    _
  $region47: #{ddpg_critic_forward.1} parent=0 // pred_check_branch
    %50 = sbr.rel (0) target = $region49
  $region48: #{ddpg_critic_forward.1} parent=0 // pred_region
    _
  $region49: #{ddpg_critic_forward.1} parent=0 // pred_fallthru
    _
  // Predicated region
  $region50: #{ddpg_critic_forward.1} parent=0 // pred_check
    _
  $region51: #{ddpg_critic_forward.1} parent=0 // pred_check_branch
    %52 = sbr.rel (0) target = $region53
  $region52: #{ddpg_critic_forward.1} parent=0 // pred_region
    _
  $region53: #{ddpg_critic_forward.1} parent=0 // pred_fallthru
    _
  // Predicated region
  $region54: #{ddpg_critic_forward.1} parent=0 // pred_check
    _
  $region55: #{ddpg_critic_forward.1} parent=0 // pred_check_branch
    %54 = sbr.rel (0) target = $region57
  $region56: #{ddpg_critic_forward.1} parent=0 // pred_region
    _
  $region57: #{ddpg_critic_forward.1} parent=0 // pred_fallthru
    _
  // Predicated region
  $region58: #{ddpg_critic_forward.1} parent=0 // pred_check
    _
  $region59: #{ddpg_critic_forward.1} parent=0 // pred_check_branch
    %56 = sbr.rel (0) target = $region61
  $region60: #{ddpg_critic_forward.1} parent=0 // pred_region
    _
  $region61: #{ddpg_critic_forward.1} parent=0 // pred_fallthru
    _
  // Predicated region
  $region62: #{ddpg_critic_forward.1} parent=0 // pred_check
    _
  $region63: #{ddpg_critic_forward.1} parent=0 // pred_check_branch
    %58 = sbr.rel (0) target = $region65
  $region64: #{ddpg_critic_forward.1} parent=0 // pred_region
    _
  $region65: #{ddpg_critic_forward.1} parent=0 // pred_fallthru
    _
  // Predicated region
  $region66: #{ddpg_critic_forward.1} parent=0 // pred_check
    _
  $region67: #{ddpg_critic_forward.1} parent=0 // pred_check_branch
    %60 = sbr.rel (0) target = $region69
  $region68: #{ddpg_critic_forward.1} parent=0 // pred_region
    _
  $region69: #{ddpg_critic_forward.1} parent=0 // pred_fallthru
    _
  // Predicated region
  $region70: #{ddpg_critic_forward.1} parent=0 // pred_check
    _
  $region71: #{ddpg_critic_forward.1} parent=0 // pred_check_branch
    %62 = sbr.rel (0) target = $region73
  $region72: #{ddpg_critic_forward.1} parent=0 // pred_region
    _
  $region73: #{ddpg_critic_forward.1} parent=0 // pred_fallthru
    _
  // Predicated region
  $region74: #{ddpg_critic_forward.1} parent=0 // pred_check
    _
  $region75: #{ddpg_critic_forward.1} parent=0 // pred_check_branch
    %64 = sbr.rel (0) target = $region77
  $region76: #{ddpg_critic_forward.1} parent=0 // pred_region
    _
  $region77: #{ddpg_critic_forward.1} parent=0 // pred_fallthru
    _
  // Predicated region
  $region78: #{ddpg_critic_forward.1} parent=0 // pred_check
    _
  $region79: #{ddpg_critic_forward.1} parent=0 // pred_check_branch
    %66 = sbr.rel (0) target = $region81
  $region80: #{ddpg_critic_forward.1} parent=0 // pred_region
    _
  $region81: #{ddpg_critic_forward.1} parent=0 // pred_fallthru
    _
  %v68 = vld [vmem:[%s0] sm:$0xff]
  %v69 = vld [vmem:[%s0 + $0x8] sm:$0xff]
  %v70 = vld [vmem:[%s0 + $0x10] sm:$0xf]
  %v71 = vld [vmem:[%s3] sm:$0xff]
  %v72 = vld [vmem:[%s3 + $0x8] sm:$0xff]
  %v73 = vld [vmem:[%s3 + $0x10] sm:$0xf]
  %v74 = vld [vmem:[%s10] sm:$0x1]
  %v75 = vld [vmem:[%s11] sm:$0x1]
  %vm76 = vcmask 261120
  %v77 = vsel %vm76, %v68, 0.0
  %78 = vadd.xlane.f32.xlu0 %v77
  %v79 = vpop.xlane.xlu0 %78
  %v80 = vsel %vm76, %v69, 0.0
  %81 = vadd.xlane.f32.xlu0 %v80
  %v82 = vpop.xlane.xlu0 %81
  %vm83 = vcmask 257024
  %v84 = vsel %vm83, %v70, 0.0
  %85 = vadd.xlane.f32.xlu0 %v84
  %v86 = vpop.xlane.xlu0 %85
  %v87 = vrcp.pop 32.0
  %v88 = vmul.f32 %v79, %v87
  %v89 = vmul.f32 %v82, %v87
  %v90 = vmul.f32 %v86, %v87
  %v91 = vsub.f32 %v68, %v88
  %v92 = vsub.f32 %v69, %v89
  %v93 = vsub.f32 %v70, %v90
  %v94 = vmul.f32 %v91, %v91
  %v95 = vmul.f32 %v92, %v92
  %v96 = vmul.f32 %v93, %v93
  %v97 = vsel %vm76, %v94, 0.0
  %98 = vadd.xlane.f32.xlu0 %v97
  %v99 = vpop.xlane.xlu0 %98
  %v100 = vsel %vm76, %v95, 0.0
  %101 = vadd.xlane.f32.xlu0 %v100
  %v102 = vpop.xlane.xlu0 %101
  %v103 = vsel %vm83, %v96, 0.0
  %104 = vadd.xlane.f32.xlu0 %v103
  %v105 = vpop.xlane.xlu0 %104
  %v106 = vmul.f32 %v99, 0.032258064
  %v107 = vmul.f32 %v102, 0.032258064
  %v108 = vmul.f32 %v105, 0.032258064
  %v109 = vrsqrt.pop %v106
  %v110 = vmul.f32 %v106, %v109
  %vm111 = vcmp.eq.f32.partialorder %v106, inf
  %v112 = vsel %vm111, %v106, %v110
  %vm113 = vcmp.eq.f32.partialorder %v106, 0.0
  %v114 = vand.u32 %v106, 2147483648
  %v115 = vsel %vm113, %v114, %v112
  %v116 = vrsqrt.pop %v107
  %v117 = vmul.f32 %v107, %v116
  %vm118 = vcmp.eq.f32.partialorder %v107, inf
  %v119 = vsel %vm118, %v107, %v117
  %vm120 = vcmp.eq.f32.partialorder %v107, 0.0
  %v121 = vand.u32 %v107, 2147483648
  %v122 = vsel %vm120, %v121, %v119
  %v123 = vrsqrt.pop %v108
  %v124 = vmul.f32 %v108, %v123
  %vm125 = vcmp.eq.f32.partialorder %v108, inf
  %v126 = vsel %vm125, %v108, %v124
  %vm127 = vcmp.eq.f32.partialorder %v108, 0.0
  %v128 = vand.u32 %v108, 2147483648
  %v129 = vsel %vm127, %v128, %v126
  %v130 = vadd.f32 %v115, 1e-06
  %v131 = vadd.f32 %v122, 1e-06
  %v132 = vadd.f32 %v129, 1e-06
  %v133 = vrcp.pop %v130
  %v134 = vrcp.pop %v131
  %v135 = vrcp.pop %v132
  %v136 = vmul.f32 %v91, %v133
  %v137 = vmul.f32 %v92, %v134
  %v138 = vmul.f32 %v93, %v135
  %v140 = vlaneseq
  %v141 = vshrl.u32 %v140, 7
  %v142 = vsub.s32 0, %v141
  %v143 = vrot.slane %v74, %v142
  %v145 = vmul.f32 %v136, %v143
  %v146 = vmul.f32 %v137, %v143
  %v147 = vmul.f32 %v138, %v143
  %v149 = vlaneseq
  %v150 = vshrl.u32 %v149, 7
  %v151 = vsub.s32 0, %v150
  %v152 = vrot.slane %v75, %v151
  %v154 = vadd.f32 %v145, %v152
  %v155 = vadd.f32 %v146, %v152
  %v156 = vadd.f32 %v147, %v152
  %v157 = vld [vmem:[%s6] sm:$0xf]
  %v158 = vld [vmem:[%s6 + $0x4] sm:$0xf]
  %v159 = vld [vmem:[%s6 + $0x8] sm:$0xf]
  %v160 = vld [vmem:[%s6 + $0xc] sm:$0xf]
  %v161 = vpack.c.bf16 %v155, %v154
  %v162 = vpack.c.bf16 %v156, %v156
  %v163 = vld [vmem:[%s7] sm:$0x1]
  %v165 = vlaneseq
  %v166 = vshrl.u32 %v165, 7
  %v167 = vsub.s32 0, %v166
  %v168 = vrot.slane %v163, %v167
  %v174 = vunpack.c.l.b16 %v157
  %v175 = vunpack.c.l.b16 %v158
  %v176 = vunpack.c.l.b16 %v159
  %v177 = vunpack.c.l.b16 %v160
  %v178 = vpack.c.b16 %v175, %v174
  %v179 = vpack.c.b16 %v177, %v176
  %v183 = vsel %vm76, %v161, 0
  %v186 = vsel %vm76, %v162, 0
  %188 = vmatprep.subr.bf16.mxu0 0
  %189 = vmatpush1.bf16.msra.mxu0 %v178
  %190 = vmatprep.subr.bf16.mxu0 0
  %191 = vmatpush1.bf16.msra.mxu0 %v179
  %192 = vmatprep.subr.bf16.mxu0 0
  %193 = vmatpush1.bf16.msra.mxu0 0
  %194 = vmatprep.subr.bf16.mxu0 0
  %195 = vmatpush1.bf16.msra.mxu0 0
  %196 = vmatprep.subr.bf16.mxu0 0
  %197 = vmatpush1.bf16.msra.mxu0 0
  %198 = vmatprep.subr.bf16.mxu0 0
  %199 = vmatpush1.bf16.msra.mxu0 0
  %200 = vmatprep.subr.bf16.mxu0 0
  %201 = vmatpush1.bf16.msra.mxu0 0
  %202 = vmatprep.subr.bf16.mxu0 0
  %203 = vmatpush1.bf16.msra.mxu0 0
  %204 = vmatprep.subr.bf16.mxu0 0
  %205 = vmatpush1.bf16.msra.mxu0 0
  %206 = vmatprep.subr.bf16.mxu0 0
  %207 = vmatpush1.bf16.msra.mxu0 0
  %208 = vmatprep.subr.bf16.mxu0 0
  %209 = vmatpush1.bf16.msra.mxu0 0
  %210 = vmatprep.subr.bf16.mxu0 0
  %211 = vmatpush1.bf16.msra.mxu0 0
  %212 = vmatprep.subr.bf16.mxu0 0
  %213 = vmatpush1.bf16.msra.mxu0 0
  %214 = vmatprep.subr.bf16.mxu0 0
  %215 = vmatpush1.bf16.msra.mxu0 0
  %216 = vmatprep.subr.bf16.mxu0 0
  %217 = vmatpush1.bf16.msra.mxu0 0
  %218 = vmatprep.subr.bf16.mxu0 0
  %219 = vmatpush1.bf16.msra.mxu0 0
  %220 = vmatprep.mubr.bf16.mxu0 0
  %221 = vmatmul.mubr.bf16.gmra.mrb[0].mxu0 %v183
  %v222 = vpop.f32.mrb[0].mxu0
  %v223 = vadd.f32 %v168, %v222
  %v224 = vpop.f32.mrb[0].mxu0
  %v225 = vpop.f32.mrb[0].mxu0
  %v226 = vadd.f32 %v168, %v225
  %v227 = vpop.f32.mrb[0].mxu0
  %228 = vmatprep.mubr.bf16.mxu0 0
  %229 = vmatmul.mubr.bf16.gmra.mrb[0].mxu0 %v186
  %v230 = vpop.f32.mrb[0].mxu0
  %v231 = vadd.f32 %v168, %v230
  %v232 = vpop.f32.mrb[0].mxu0
  %v233 = vpop.f32.mrb[0].mxu0
  %v234 = vpop.f32.mrb[0].mxu0
  %235 = vdwg.mxu0
  %v236 = vpack.c.bf16 %v226, %v223
  %v237 = vpack.c.bf16 %v231, %v231
  %240 = vrot.lane.b32.xlu0 %v236, 96
  %v241 = vpop.permute.xlu0 %240
  %242 = vrot.lane.b32.xlu0 %v237, 96
  %v243 = vpop.permute.xlu0 %242
  %vm244 = vcmask 64512
  %v246 = vsel %vm244, %v236, 0
  %v249 = vsel %vm244, %v237, 0
  %v252 = vsel %vm244, %v241, 0
  %v255 = vsel %vm244, %v243, 0
  %257 = vmatprep.subr.bf16.mxu0 0
  %258 = vmatpush1.bf16.xpose.msra.mxu0 %v252
  %259 = vmatprep.subr.bf16.mxu0 0
  %260 = vmatpush1.bf16.xpose.msra.mxu0 %v255
  %261 = vmatprep.subr.bf16.mxu0 0
  %262 = vmatpush1.bf16.xpose.msra.mxu0 0
  %263 = vmatprep.subr.bf16.mxu0 0
  %264 = vmatpush1.bf16.xpose.msra.mxu0 0
  %265 = vmatprep.subr.bf16.mxu0 0
  %266 = vmatpush1.bf16.xpose.msra.mxu0 0
  %267 = vmatprep.subr.bf16.mxu0 0
  %268 = vmatpush1.bf16.xpose.msra.mxu0 0
  %269 = vmatprep.subr.bf16.mxu0 0
  %270 = vmatpush1.bf16.xpose.msra.mxu0 0
  %271 = vmatprep.subr.bf16.mxu0 0
  %272 = vmatpush1.bf16.xpose.msra.mxu0 0
  %273 = vmatprep.subr.bf16.mxu0 0
  %274 = vmatpush1.bf16.xpose.msra.mxu0 0
  %275 = vmatprep.subr.bf16.mxu0 0
  %276 = vmatpush1.bf16.xpose.msra.mxu0 0
  %277 = vmatprep.subr.bf16.mxu0 0
  %278 = vmatpush1.bf16.xpose.msra.mxu0 0
  %279 = vmatprep.subr.bf16.mxu0 0
  %280 = vmatpush1.bf16.xpose.msra.mxu0 0
  %281 = vmatprep.subr.bf16.mxu0 0
  %282 = vmatpush1.bf16.xpose.msra.mxu0 0
  %283 = vmatprep.subr.bf16.mxu0 0
  %284 = vmatpush1.bf16.xpose.msra.mxu0 0
  %285 = vmatprep.subr.bf16.mxu0 0
  %286 = vmatpush1.bf16.xpose.msra.mxu0 0
  %287 = vmatprep.subr.bf16.mxu0 0
  %288 = vmatpush1.bf16.xpose.msra.mxu0 0
  %289 = vmatprep.mubr.bf16.mxu0 0
  %290 = vmatmul.mubr.bf16.gmra.mrb[0].mxu0 %v246
  %v291 = vpop.f32.mrb[0].mxu0
  %v292 = vadd.f32 %v71, %v291
  %v293 = vpop.f32.mrb[0].mxu0
  %v294 = vpop.f32.mrb[0].mxu0
  %v295 = vadd.f32 %v72, %v294
  %v296 = vpop.f32.mrb[0].mxu0
  %297 = vmatprep.mubr.bf16.mxu0 0
  %298 = vmatmul.mubr.bf16.gmra.mrb[0].mxu0 %v249
  %v299 = vpop.f32.mrb[0].mxu0
  %v300 = vadd.f32 %v73, %v299
  %v301 = vpop.f32.mrb[0].mxu0
  %v302 = vpop.f32.mrb[0].mxu0
  %v303 = vpop.f32.mrb[0].mxu0
  %304 = vdwg.mxu0
  %vm305 = vcmask 162816
  %v306 = vsel %vm305, %v292, -inf
  %307 = vmax.xlane.f32.xlu0 %v306
  %v308 = vpop.xlane.xlu0 %307
  %v309 = vsel %vm305, %v295, -inf
  %310 = vmax.xlane.f32.xlu0 %v309
  %v311 = vpop.xlane.xlu0 %310
  %vm312 = vcmask 158720
  %v313 = vsel %vm312, %v300, -inf
  %314 = vmax.xlane.f32.xlu0 %v313
  %v315 = vpop.xlane.xlu0 %314
  %v316 = vsub.f32 %v292, %v308
  %v317 = vsub.f32 %v295, %v311
  %v318 = vsub.f32 %v300, %v315
  %v319 = vmul.f32 %v316, 1.442695
  %v320 = vpow.pop %v319
  %v321 = vmul.f32 %v317, 1.442695
  %v322 = vpow.pop %v321
  %v323 = vmul.f32 %v318, 1.442695
  %v324 = vpow.pop %v323
  %v325 = vsel %vm305, %v320, 0.0
  %326 = vadd.xlane.f32.xlu0 %v325
  %v327 = vpop.xlane.xlu0 %326
  %v328 = vsel %vm305, %v322, 0.0
  %329 = vadd.xlane.f32.xlu0 %v328
  %v330 = vpop.xlane.xlu0 %329
  %v331 = vsel %vm312, %v324, 0.0
  %332 = vadd.xlane.f32.xlu0 %v331
  %v333 = vpop.xlane.xlu0 %332
  %v334 = vrcp.pop %v327
  %v335 = vrcp.pop %v330
  %v336 = vrcp.pop %v333
  %v337 = vmul.f32 %v320, %v334
  %v338 = vmul.f32 %v322, %v335
  %v339 = vmul.f32 %v324, %v336
  %v340 = vpack.c.bf16 %v338, %v337
  %v341 = vpack.c.bf16 %v339, %v339
  %342 = vrot.lane.b32.xlu0 %v236, 64
  %v343 = vpop.permute.xlu0 %342
  %344 = vrot.lane.b32.xlu0 %v237, 64
  %v345 = vpop.permute.xlu0 %344
  %v348 = vsel %vm305, %v340, 0
  %v351 = vsel %vm305, %v341, 0
  %vm353 = vcmask 1041408
  %v355 = vsel %vm353, %v345, 0
  %357 = vmatprep.subr.bf16.mxu0 0
  %358 = vmatpush1.bf16.msra.mxu0 %v343
  %359 = vmatprep.subr.bf16.mxu0 0
  %360 = vmatpush1.bf16.msra.mxu0 %v355
  %361 = vmatprep.subr.bf16.mxu0 0
  %362 = vmatpush1.bf16.msra.mxu0 0
  %363 = vmatprep.subr.bf16.mxu0 0
  %364 = vmatpush1.bf16.msra.mxu0 0
  %365 = vmatprep.subr.bf16.mxu0 0
  %366 = vmatpush1.bf16.msra.mxu0 0
  %367 = vmatprep.subr.bf16.mxu0 0
  %368 = vmatpush1.bf16.msra.mxu0 0
  %369 = vmatprep.subr.bf16.mxu0 0
  %370 = vmatpush1.bf16.msra.mxu0 0
  %371 = vmatprep.subr.bf16.mxu0 0
  %372 = vmatpush1.bf16.msra.mxu0 0
  %373 = vmatprep.subr.bf16.mxu0 0
  %374 = vmatpush1.bf16.msra.mxu0 0
  %375 = vmatprep.subr.bf16.mxu0 0
  %376 = vmatpush1.bf16.msra.mxu0 0
  %377 = vmatprep.subr.bf16.mxu0 0
  %378 = vmatpush1.bf16.msra.mxu0 0
  %379 = vmatprep.subr.bf16.mxu0 0
  %380 = vmatpush1.bf16.msra.mxu0 0
  %381 = vmatprep.subr.bf16.mxu0 0
  %382 = vmatpush1.bf16.msra.mxu0 0
  %383 = vmatprep.subr.bf16.mxu0 0
  %384 = vmatpush1.bf16.msra.mxu0 0
  %385 = vmatprep.subr.bf16.mxu0 0
  %386 = vmatpush1.bf16.msra.mxu0 0
  %387 = vmatprep.subr.bf16.mxu0 0
  %388 = vmatpush1.bf16.msra.mxu0 0
  %389 = vmatprep.mubr.bf16.mxu0 0
  %390 = vmatmul.mubr.bf16.gmra.mrb[0].mxu0 %v348
  %v391 = vpop.f32.mrb[0].mxu0
  %v392 = vadd.f32 0.0, %v391
  %v393 = vpop.f32.mrb[0].mxu0
  %v394 = vpop.f32.mrb[0].mxu0
  %v395 = vadd.f32 0.0, %v394
  %v396 = vpop.f32.mrb[0].mxu0
  %397 = vmatprep.mubr.bf16.mxu0 0
  %398 = vmatmul.mubr.bf16.gmra.mrb[0].mxu0 %v351
  %v399 = vpop.f32.mrb[0].mxu0
  %v400 = vadd.f32 0.0, %v399
  %v401 = vpop.f32.mrb[0].mxu0
  %v402 = vpop.f32.mrb[0].mxu0
  %v403 = vpop.f32.mrb[0].mxu0
  %404 = vdwg.mxu0
  %405 = vrot.lane.b32.xlu0 %v236, 120
  %v406 = vpop.permute.xlu0 %405
  %407 = vrot.lane.b32.xlu0 %v237, 120
  %v408 = vpop.permute.xlu0 %407
  %409 = vrot.lane.b32.xlu0 %v236, 88
  %v410 = vpop.permute.xlu0 %409
  %411 = vrot.lane.b32.xlu0 %v237, 88
  %v412 = vpop.permute.xlu0 %411
  %v414 = vsel %vm244, %v406, 0
  %v417 = vsel %vm244, %v408, 0
  %v420 = vsel %vm244, %v410, 0
  %v423 = vsel %vm244, %v412, 0
  %425 = vmatprep.subr.bf16.mxu0 0
  %426 = vmatpush1.bf16.xpose.msra.mxu0 %v420
  %427 = vmatprep.subr.bf16.mxu0 0
  %428 = vmatpush1.bf16.xpose.msra.mxu0 %v423
  %429 = vmatprep.subr.bf16.mxu0 0
  %430 = vmatpush1.bf16.xpose.msra.mxu0 0
  %431 = vmatprep.subr.bf16.mxu0 0
  %432 = vmatpush1.bf16.xpose.msra.mxu0 0
  %433 = vmatprep.subr.bf16.mxu0 0
  %434 = vmatpush1.bf16.xpose.msra.mxu0 0
  %435 = vmatprep.subr.bf16.mxu0 0
  %436 = vmatpush1.bf16.xpose.msra.mxu0 0
  %437 = vmatprep.subr.bf16.mxu0 0
  %438 = vmatpush1.bf16.xpose.msra.mxu0 0
  %439 = vmatprep.subr.bf16.mxu0 0
  %440 = vmatpush1.bf16.xpose.msra.mxu0 0
  %441 = vmatprep.subr.bf16.mxu0 0
  %442 = vmatpush1.bf16.xpose.msra.mxu0 0
  %443 = vmatprep.subr.bf16.mxu0 0
  %444 = vmatpush1.bf16.xpose.msra.mxu0 0
  %445 = vmatprep.subr.bf16.mxu0 0
  %446 = vmatpush1.bf16.xpose.msra.mxu0 0
  %447 = vmatprep.subr.bf16.mxu0 0
  %448 = vmatpush1.bf16.xpose.msra.mxu0 0
  %449 = vmatprep.subr.bf16.mxu0 0
  %450 = vmatpush1.bf16.xpose.msra.mxu0 0
  %451 = vmatprep.subr.bf16.mxu0 0
  %452 = vmatpush1.bf16.xpose.msra.mxu0 0
  %453 = vmatprep.subr.bf16.mxu0 0
  %454 = vmatpush1.bf16.xpose.msra.mxu0 0
  %455 = vmatprep.subr.bf16.mxu0 0
  %456 = vmatpush1.bf16.xpose.msra.mxu0 0
  %457 = vmatprep.mubr.bf16.mxu0 0
  %458 = vmatmul.mubr.bf16.gmra.mrb[0].mxu0 %v414
  %v459 = vpop.f32.mrb[0].mxu0
  %v460 = vadd.f32 %v71, %v459
  %v461 = vpop.f32.mrb[0].mxu0
  %v462 = vpop.f32.mrb[0].mxu0
  %v463 = vadd.f32 %v72, %v462
  %v464 = vpop.f32.mrb[0].mxu0
  %465 = vmatprep.mubr.bf16.mxu0 0
  %466 = vmatmul.mubr.bf16.gmra.mrb[0].mxu0 %v417
  %v467 = vpop.f32.mrb[0].mxu0
  %v468 = vadd.f32 %v73, %v467
  %v469 = vpop.f32.mrb[0].mxu0
  %v470 = vpop.f32.mrb[0].mxu0
  %v471 = vpop.f32.mrb[0].mxu0
  %472 = vdwg.mxu0
  %v473 = vsel %vm305, %v460, -inf
  %474 = vmax.xlane.f32.xlu0 %v473
  %v475 = vpop.xlane.xlu0 %474
  %v476 = vsel %vm305, %v463, -inf
  %477 = vmax.xlane.f32.xlu0 %v476
  %v478 = vpop.xlane.xlu0 %477
  %v479 = vsel %vm312, %v468, -inf
  %480 = vmax.xlane.f32.xlu0 %v479
  %v481 = vpop.xlane.xlu0 %480
  %v482 = vsub.f32 %v460, %v475
  %v483 = vsub.f32 %v463, %v478
  %v484 = vsub.f32 %v468, %v481
  %v485 = vmul.f32 %v482, 1.442695
  %v486 = vpow.pop %v485
  %v487 = vmul.f32 %v483, 1.442695
  %v488 = vpow.pop %v487
  %v489 = vmul.f32 %v484, 1.442695
  %v490 = vpow.pop %v489
  %v491 = vsel %vm305, %v486, 0.0
  %492 = vadd.xlane.f32.xlu0 %v491
  %v493 = vpop.xlane.xlu0 %492
  %v494 = vsel %vm305, %v488, 0.0
  %495 = vadd.xlane.f32.xlu0 %v494
  %v496 = vpop.xlane.xlu0 %495
  %v497 = vsel %vm312, %v490, 0.0
  %498 = vadd.xlane.f32.xlu0 %v497
  %v499 = vpop.xlane.xlu0 %498
  %v500 = vrcp.pop %v493
  %v501 = vrcp.pop %v496
  %v502 = vrcp.pop %v499
  %v503 = vmul.f32 %v486, %v500
  %v504 = vmul.f32 %v488, %v501
  %v505 = vmul.f32 %v490, %v502
  %v506 = vpack.c.bf16 %v504, %v503
  %v507 = vpack.c.bf16 %v505, %v505
  %508 = vrot.lane.b32.xlu0 %v236, 56
  %v509 = vpop.permute.xlu0 %508
  %510 = vrot.lane.b32.xlu0 %v237, 56
  %v511 = vpop.permute.xlu0 %510
  %v514 = vsel %vm305, %v506, 0
  %v517 = vsel %vm305, %v507, 0
  %v520 = vsel %vm353, %v511, 0
  %522 = vmatprep.subr.bf16.mxu0 0
  %523 = vmatpush1.bf16.msra.mxu0 %v509
  %524 = vmatprep.subr.bf16.mxu0 0
  %525 = vmatpush1.bf16.msra.mxu0 %v520
  %526 = vmatprep.subr.bf16.mxu0 0
  %527 = vmatpush1.bf16.msra.mxu0 0
  %528 = vmatprep.subr.bf16.mxu0 0
  %529 = vmatpush1.bf16.msra.mxu0 0
  %530 = vmatprep.subr.bf16.mxu0 0
  %531 = vmatpush1.bf16.msra.mxu0 0
  %532 = vmatprep.subr.bf16.mxu0 0
  %533 = vmatpush1.bf16.msra.mxu0 0
  %534 = vmatprep.subr.bf16.mxu0 0
  %535 = vmatpush1.bf16.msra.mxu0 0
  %536 = vmatprep.subr.bf16.mxu0 0
  %537 = vmatpush1.bf16.msra.mxu0 0
  %538 = vmatprep.subr.bf16.mxu0 0
  %539 = vmatpush1.bf16.msra.mxu0 0
  %540 = vmatprep.subr.bf16.mxu0 0
  %541 = vmatpush1.bf16.msra.mxu0 0
  %542 = vmatprep.subr.bf16.mxu0 0
  %543 = vmatpush1.bf16.msra.mxu0 0
  %544 = vmatprep.subr.bf16.mxu0 0
  %545 = vmatpush1.bf16.msra.mxu0 0
  %546 = vmatprep.subr.bf16.mxu0 0
  %547 = vmatpush1.bf16.msra.mxu0 0
  %548 = vmatprep.subr.bf16.mxu0 0
  %549 = vmatpush1.bf16.msra.mxu0 0
  %550 = vmatprep.subr.bf16.mxu0 0
  %551 = vmatpush1.bf16.msra.mxu0 0
  %552 = vmatprep.subr.bf16.mxu0 0
  %553 = vmatpush1.bf16.msra.mxu0 0
  %554 = vmatprep.mubr.bf16.mxu0 0
  %555 = vmatmul.mubr.bf16.gmra.mrb[0].mxu0 %v514
  %v556 = vpop.f32.mrb[0].mxu0
  %v557 = vadd.f32 0.0, %v556
  %v558 = vpop.f32.mrb[0].mxu0
  %v559 = vpop.f32.mrb[0].mxu0
  %v560 = vadd.f32 0.0, %v559
  %v561 = vpop.f32.mrb[0].mxu0
  %562 = vmatprep.mubr.bf16.mxu0 0
  %563 = vmatmul.mubr.bf16.gmra.mrb[0].mxu0 %v517
  %v564 = vpop.f32.mrb[0].mxu0
  %v565 = vadd.f32 0.0, %v564
  %v566 = vpop.f32.mrb[0].mxu0
  %v567 = vpop.f32.mrb[0].mxu0
  %v568 = vpop.f32.mrb[0].mxu0
  %569 = vdwg.mxu0
  %570 = vrot.lane.b32.xlu0 %v236, 112
  %v571 = vpop.permute.xlu0 %570
  %572 = vrot.lane.b32.xlu0 %v237, 112
  %v573 = vpop.permute.xlu0 %572
  %574 = vrot.lane.b32.xlu0 %v236, 80
  %v575 = vpop.permute.xlu0 %574
  %576 = vrot.lane.b32.xlu0 %v237, 80
  %v577 = vpop.permute.xlu0 %576
  %v579 = vsel %vm244, %v571, 0
  %v582 = vsel %vm244, %v573, 0
  %v585 = vsel %vm244, %v575, 0
  %v588 = vsel %vm244, %v577, 0
  %590 = vmatprep.subr.bf16.mxu0 0
  %591 = vmatpush1.bf16.xpose.msra.mxu0 %v585
  %592 = vmatprep.subr.bf16.mxu0 0
  %593 = vmatpush1.bf16.xpose.msra.mxu0 %v588
  %594 = vmatprep.subr.bf16.mxu0 0
  %595 = vmatpush1.bf16.xpose.msra.mxu0 0
  %596 = vmatprep.subr.bf16.mxu0 0
  %597 = vmatpush1.bf16.xpose.msra.mxu0 0
  %598 = vmatprep.subr.bf16.mxu0 0
  %599 = vmatpush1.bf16.xpose.msra.mxu0 0
  %600 = vmatprep.subr.bf16.mxu0 0
  %601 = vmatpush1.bf16.xpose.msra.mxu0 0
  %602 = vmatprep.subr.bf16.mxu0 0
  %603 = vmatpush1.bf16.xpose.msra.mxu0 0
  %604 = vmatprep.subr.bf16.mxu0 0
  %605 = vmatpush1.bf16.xpose.msra.mxu0 0
  %606 = vmatprep.subr.bf16.mxu0 0
  %607 = vmatpush1.bf16.xpose.msra.mxu0 0
  %608 = vmatprep.subr.bf16.mxu0 0
  %609 = vmatpush1.bf16.xpose.msra.mxu0 0
  %610 = vmatprep.subr.bf16.mxu0 0
  %611 = vmatpush1.bf16.xpose.msra.mxu0 0
  %612 = vmatprep.subr.bf16.mxu0 0
  %613 = vmatpush1.bf16.xpose.msra.mxu0 0
  %614 = vmatprep.subr.bf16.mxu0 0
  %615 = vmatpush1.bf16.xpose.msra.mxu0 0
  %616 = vmatprep.subr.bf16.mxu0 0
  %617 = vmatpush1.bf16.xpose.msra.mxu0 0
  %618 = vmatprep.subr.bf16.mxu0 0
  %619 = vmatpush1.bf16.xpose.msra.mxu0 0
  %620 = vmatprep.subr.bf16.mxu0 0
  %621 = vmatpush1.bf16.xpose.msra.mxu0 0
  %622 = vmatprep.mubr.bf16.mxu0 0
  %623 = vmatmul.mubr.bf16.gmra.mrb[0].mxu0 %v579
  %v624 = vpop.f32.mrb[0].mxu0
  %v625 = vadd.f32 %v71, %v624
  %v626 = vpop.f32.mrb[0].mxu0
  %v627 = vpop.f32.mrb[0].mxu0
  %v628 = vadd.f32 %v72, %v627
  %v629 = vpop.f32.mrb[0].mxu0
  %630 = vmatprep.mubr.bf16.mxu0 0
  %631 = vmatmul.mubr.bf16.gmra.mrb[0].mxu0 %v582
  %v632 = vpop.f32.mrb[0].mxu0
  %v633 = vadd.f32 %v73, %v632
  %v634 = vpop.f32.mrb[0].mxu0
  %v635 = vpop.f32.mrb[0].mxu0
  %v636 = vpop.f32.mrb[0].mxu0
  %637 = vdwg.mxu0
  %v638 = vsel %vm305, %v625, -inf
  %639 = vmax.xlane.f32.xlu0 %v638
  %v640 = vpop.xlane.xlu0 %639
  %v641 = vsel %vm305, %v628, -inf
  %642 = vmax.xlane.f32.xlu0 %v641
  %v643 = vpop.xlane.xlu0 %642
  %v644 = vsel %vm312, %v633, -inf
  %645 = vmax.xlane.f32.xlu0 %v644
  %v646 = vpop.xlane.xlu0 %645
  %v647 = vsub.f32 %v625, %v640
  %v648 = vsub.f32 %v628, %v643
  %v649 = vsub.f32 %v633, %v646
  %v650 = vmul.f32 %v647, 1.442695
  %v651 = vpow.pop %v650
  %v652 = vmul.f32 %v648, 1.442695
  %v653 = vpow.pop %v652
  %v654 = vmul.f32 %v649, 1.442695
  %v655 = vpow.pop %v654
  %v656 = vsel %vm305, %v651, 0.0
  %657 = vadd.xlane.f32.xlu0 %v656
  %v658 = vpop.xlane.xlu0 %657
  %v659 = vsel %vm305, %v653, 0.0
  %660 = vadd.xlane.f32.xlu0 %v659
  %v661 = vpop.xlane.xlu0 %660
  %v662 = vsel %vm312, %v655, 0.0
  %663 = vadd.xlane.f32.xlu0 %v662
  %v664 = vpop.xlane.xlu0 %663
  %v665 = vrcp.pop %v658
  %v666 = vrcp.pop %v661
  %v667 = vrcp.pop %v664
  %v668 = vmul.f32 %v651, %v665
  %v669 = vmul.f32 %v653, %v666
  %v670 = vmul.f32 %v655, %v667
  %v671 = vpack.c.bf16 %v669, %v668
  %v672 = vpack.c.bf16 %v670, %v670
  %673 = vrot.lane.b32.xlu0 %v236, 48
  %v674 = vpop.permute.xlu0 %673
  %675 = vrot.lane.b32.xlu0 %v237, 48
  %v676 = vpop.permute.xlu0 %675
  %v679 = vsel %vm305, %v671, 0
  %v682 = vsel %vm305, %v672, 0
  %v685 = vsel %vm353, %v676, 0
  %687 = vmatprep.subr.bf16.mxu0 0
  %688 = vmatpush1.bf16.msra.mxu0 %v674
  %689 = vmatprep.subr.bf16.mxu0 0
  %690 = vmatpush1.bf16.msra.mxu0 %v685
  %691 = vmatprep.subr.bf16.mxu0 0
  %692 = vmatpush1.bf16.msra.mxu0 0
  %693 = vmatprep.subr.bf16.mxu0 0
  %694 = vmatpush1.bf16.msra.mxu0 0
  %695 = vmatprep.subr.bf16.mxu0 0
  %696 = vmatpush1.bf16.msra.mxu0 0
  %697 = vmatprep.subr.bf16.mxu0 0
  %698 = vmatpush1.bf16.msra.mxu0 0
  %699 = vmatprep.subr.bf16.mxu0 0
  %700 = vmatpush1.bf16.msra.mxu0 0
  %701 = vmatprep.subr.bf16.mxu0 0
  %702 = vmatpush1.bf16.msra.mxu0 0
  %703 = vmatprep.subr.bf16.mxu0 0
  %704 = vmatpush1.bf16.msra.mxu0 0
  %705 = vmatprep.subr.bf16.mxu0 0
  %706 = vmatpush1.bf16.msra.mxu0 0
  %707 = vmatprep.subr.bf16.mxu0 0
  %708 = vmatpush1.bf16.msra.mxu0 0
  %709 = vmatprep.subr.bf16.mxu0 0
  %710 = vmatpush1.bf16.msra.mxu0 0
  %711 = vmatprep.subr.bf16.mxu0 0
  %712 = vmatpush1.bf16.msra.mxu0 0
  %713 = vmatprep.subr.bf16.mxu0 0
  %714 = vmatpush1.bf16.msra.mxu0 0
  %715 = vmatprep.subr.bf16.mxu0 0
  %716 = vmatpush1.bf16.msra.mxu0 0
  %717 = vmatprep.subr.bf16.mxu0 0
  %718 = vmatpush1.bf16.msra.mxu0 0
  %719 = vmatprep.mubr.bf16.mxu0 0
  %720 = vmatmul.mubr.bf16.gmra.mrb[0].mxu0 %v679
  %v721 = vpop.f32.mrb[0].mxu0
  %v722 = vadd.f32 0.0, %v721
  %v723 = vpop.f32.mrb[0].mxu0
  %v724 = vpop.f32.mrb[0].mxu0
  %v725 = vadd.f32 0.0, %v724
  %v726 = vpop.f32.mrb[0].mxu0
  %727 = vmatprep.mubr.bf16.mxu0 0
  %728 = vmatmul.mubr.bf16.gmra.mrb[0].mxu0 %v682
  %v729 = vpop.f32.mrb[0].mxu0
  %v730 = vadd.f32 0.0, %v729
  %v731 = vpop.f32.mrb[0].mxu0
  %v732 = vpop.f32.mrb[0].mxu0
  %v733 = vpop.f32.mrb[0].mxu0
  %734 = vdwg.mxu0
  %735 = vrot.lane.b32.xlu0 %v236, 104
  %v736 = vpop.permute.xlu0 %735
  %737 = vrot.lane.b32.xlu0 %v237, 104
  %v738 = vpop.permute.xlu0 %737
  %739 = vrot.lane.b32.xlu0 %v236, 72
  %v740 = vpop.permute.xlu0 %739
  %741 = vrot.lane.b32.xlu0 %v237, 72
  %v742 = vpop.permute.xlu0 %741
  %v744 = vsel %vm244, %v736, 0
  %v747 = vsel %vm244, %v738, 0
  %v750 = vsel %vm244, %v740, 0
  %v753 = vsel %vm244, %v742, 0
  %755 = vmatprep.subr.bf16.mxu0 0
  %756 = vmatpush1.bf16.xpose.msra.mxu0 %v750
  %757 = vmatprep.subr.bf16.mxu0 0
  %758 = vmatpush1.bf16.xpose.msra.mxu0 %v753
  %759 = vmatprep.subr.bf16.mxu0 0
  %760 = vmatpush1.bf16.xpose.msra.mxu0 0
  %761 = vmatprep.subr.bf16.mxu0 0
  %762 = vmatpush1.bf16.xpose.msra.mxu0 0
  %763 = vmatprep.subr.bf16.mxu0 0
  %764 = vmatpush1.bf16.xpose.msra.mxu0 0
  %765 = vmatprep.subr.bf16.mxu0 0
  %766 = vmatpush1.bf16.xpose.msra.mxu0 0
  %767 = vmatprep.subr.bf16.mxu0 0
  %768 = vmatpush1.bf16.xpose.msra.mxu0 0
  %769 = vmatprep.subr.bf16.mxu0 0
  %770 = vmatpush1.bf16.xpose.msra.mxu0 0
  %771 = vmatprep.subr.bf16.mxu0 0
  %772 = vmatpush1.bf16.xpose.msra.mxu0 0
  %773 = vmatprep.subr.bf16.mxu0 0
  %774 = vmatpush1.bf16.xpose.msra.mxu0 0
  %775 = vmatprep.subr.bf16.mxu0 0
  %776 = vmatpush1.bf16.xpose.msra.mxu0 0
  %777 = vmatprep.subr.bf16.mxu0 0
  %778 = vmatpush1.bf16.xpose.msra.mxu0 0
  %779 = vmatprep.subr.bf16.mxu0 0
  %780 = vmatpush1.bf16.xpose.msra.mxu0 0
  %781 = vmatprep.subr.bf16.mxu0 0
  %782 = vmatpush1.bf16.xpose.msra.mxu0 0
  %783 = vmatprep.subr.bf16.mxu0 0
  %784 = vmatpush1.bf16.xpose.msra.mxu0 0
  %785 = vmatprep.subr.bf16.mxu0 0
  %786 = vmatpush1.bf16.xpose.msra.mxu0 0
  %787 = vmatprep.mubr.bf16.mxu0 0
  %788 = vmatmul.mubr.bf16.gmra.mrb[0].mxu0 %v744
  %v789 = vpop.f32.mrb[0].mxu0
  %v790 = vadd.f32 %v71, %v789
  %v791 = vpop.f32.mrb[0].mxu0
  %v792 = vpop.f32.mrb[0].mxu0
  %v793 = vadd.f32 %v72, %v792
  %v794 = vpop.f32.mrb[0].mxu0
  %795 = vmatprep.mubr.bf16.mxu0 0
  %796 = vmatmul.mubr.bf16.gmra.mrb[0].mxu0 %v747
  %v797 = vpop.f32.mrb[0].mxu0
  %v798 = vadd.f32 %v73, %v797
  %v799 = vpop.f32.mrb[0].mxu0
  %v800 = vpop.f32.mrb[0].mxu0
  %v801 = vpop.f32.mrb[0].mxu0
  %802 = vdwg.mxu0
  %v803 = vsel %vm305, %v790, -inf
  %804 = vmax.xlane.f32.xlu0 %v803
  %v805 = vpop.xlane.xlu0 %804
  %v806 = vsel %vm305, %v793, -inf
  %807 = vmax.xlane.f32.xlu0 %v806
  %v808 = vpop.xlane.xlu0 %807
  %v809 = vsel %vm312, %v798, -inf
  %810 = vmax.xlane.f32.xlu0 %v809
  %v811 = vpop.xlane.xlu0 %810
  %v812 = vsub.f32 %v790, %v805
  %v813 = vsub.f32 %v793, %v808
  %v814 = vsub.f32 %v798, %v811
  %v815 = vmul.f32 %v812, 1.442695
  %v816 = vpow.pop %v815
  %v817 = vmul.f32 %v813, 1.442695
  %v818 = vpow.pop %v817
  %v819 = vmul.f32 %v814, 1.442695
  %v820 = vpow.pop %v819
  %v821 = vsel %vm305, %v816, 0.0
  %822 = vadd.xlane.f32.xlu0 %v821
  %v823 = vpop.xlane.xlu0 %822
  %v824 = vsel %vm305, %v818, 0.0
  %825 = vadd.xlane.f32.xlu0 %v824
  %v826 = vpop.xlane.xlu0 %825
  %v827 = vsel %vm312, %v820, 0.0
  %828 = vadd.xlane.f32.xlu0 %v827
  %v829 = vpop.xlane.xlu0 %828
  %v830 = vrcp.pop %v823
  %v831 = vrcp.pop %v826
  %v832 = vrcp.pop %v829
  %v833 = vmul.f32 %v816, %v830
  %v834 = vmul.f32 %v818, %v831
  %v835 = vmul.f32 %v820, %v832
  %v836 = vpack.c.bf16 %v834, %v833
  %v837 = vpack.c.bf16 %v835, %v835
  %838 = vrot.lane.b32.xlu0 %v236, 40
  %v839 = vpop.permute.xlu0 %838
  %840 = vrot.lane.b32.xlu0 %v237, 40
  %v841 = vpop.permute.xlu0 %840
  %v844 = vsel %vm305, %v836, 0
  %v847 = vsel %vm305, %v837, 0
  %v850 = vsel %vm353, %v841, 0
  %852 = vmatprep.subr.bf16.mxu0 0
  %853 = vmatpush1.bf16.msra.mxu0 %v839
  %854 = vmatprep.subr.bf16.mxu0 0
  %855 = vmatpush1.bf16.msra.mxu0 %v850
  %856 = vmatprep.subr.bf16.mxu0 0
  %857 = vmatpush1.bf16.msra.mxu0 0
  %858 = vmatprep.subr.bf16.mxu0 0
  %859 = vmatpush1.bf16.msra.mxu0 0
  %860 = vmatprep.subr.bf16.mxu0 0
  %861 = vmatpush1.bf16.msra.mxu0 0
  %862 = vmatprep.subr.bf16.mxu0 0
  %863 = vmatpush1.bf16.msra.mxu0 0
  %864 = vmatprep.subr.bf16.mxu0 0
  %865 = vmatpush1.bf16.msra.mxu0 0
  %866 = vmatprep.subr.bf16.mxu0 0
  %867 = vmatpush1.bf16.msra.mxu0 0
  %868 = vmatprep.subr.bf16.mxu0 0
  %869 = vmatpush1.bf16.msra.mxu0 0
  %870 = vmatprep.subr.bf16.mxu0 0
  %871 = vmatpush1.bf16.msra.mxu0 0
  %872 = vmatprep.subr.bf16.mxu0 0
  %873 = vmatpush1.bf16.msra.mxu0 0
  %874 = vmatprep.subr.bf16.mxu0 0
  %875 = vmatpush1.bf16.msra.mxu0 0
  %876 = vmatprep.subr.bf16.mxu0 0
  %877 = vmatpush1.bf16.msra.mxu0 0
  %878 = vmatprep.subr.bf16.mxu0 0
  %879 = vmatpush1.bf16.msra.mxu0 0
  %880 = vmatprep.subr.bf16.mxu0 0
  %881 = vmatpush1.bf16.msra.mxu0 0
  %882 = vmatprep.subr.bf16.mxu0 0
  %883 = vmatpush1.bf16.msra.mxu0 0
  %884 = vmatprep.mubr.bf16.mxu0 0
  %885 = vmatmul.mubr.bf16.gmra.mrb[0].mxu0 %v844
  %v886 = vpop.f32.mrb[0].mxu0
  %v887 = vadd.f32 0.0, %v886
  %v888 = vpop.f32.mrb[0].mxu0
  %v889 = vpop.f32.mrb[0].mxu0
  %v890 = vadd.f32 0.0, %v889
  %v891 = vpop.f32.mrb[0].mxu0
  %892 = vmatprep.mubr.bf16.mxu0 0
  %893 = vmatmul.mubr.bf16.gmra.mrb[0].mxu0 %v847
  %v894 = vpop.f32.mrb[0].mxu0
  %v895 = vadd.f32 0.0, %v894
  %v896 = vpop.f32.mrb[0].mxu0
  %v897 = vpop.f32.mrb[0].mxu0
  %v898 = vpop.f32.mrb[0].mxu0
  %899 = vdwg.mxu0
  %903 = vrot.lane.b32.xlu0 %v557, 8
  %v904 = vpop.permute.xlu0 %903
  %905 = vrot.lane.b32.xlu0 %v560, 8
  %v906 = vpop.permute.xlu0 %905
  %907 = vrot.lane.b32.xlu0 %v565, 8
  %v908 = vpop.permute.xlu0 %907
  %915 = vrot.lane.b32.xlu0 %v722, 16
  %v916 = vpop.permute.xlu0 %915
  %917 = vrot.lane.b32.xlu0 %v725, 16
  %v918 = vpop.permute.xlu0 %917
  %919 = vrot.lane.b32.xlu0 %v730, 16
  %v920 = vpop.permute.xlu0 %919
  %927 = vrot.lane.b32.xlu0 %v887, 24
  %v928 = vpop.permute.xlu0 %927
  %929 = vrot.lane.b32.xlu0 %v890, 24
  %v930 = vpop.permute.xlu0 %929
  %931 = vrot.lane.b32.xlu0 %v895, 24
  %v932 = vpop.permute.xlu0 %931
  %v936 = vsel %vm244, %v392, %v904
  %v937 = vsel %vm244, %v395, %v906
  %v938 = vsel %vm244, %v400, %v908
  %vm939 = vcmask 130048
  %v940 = vsel %vm939, %v936, %v916
  %v941 = vsel %vm939, %v937, %v918
  %v942 = vsel %vm939, %v938, %v920
  %vm943 = vcmask 195584
  %v944 = vsel %vm943, %v940, %v928
  %v945 = vsel %vm943, %v941, %v930
  %v946 = vsel %vm943, %v942, %v932
  %v947 = vld [vmem:[%s8] sm:$0xf]
  %v948 = vld [vmem:[%s8 + $0x4] sm:$0xf]
  %v949 = vld [vmem:[%s8 + $0x8] sm:$0xf]
  %v950 = vld [vmem:[%s8 + $0xc] sm:$0xf]
  %v951 = vpack.c.bf16 %v945, %v944
  %v952 = vpack.c.bf16 %v946, %v946
  %v953 = vld [vmem:[%s9] sm:$0x1]
  %v955 = vlaneseq
  %v956 = vshrl.u32 %v955, 7
  %v957 = vsub.s32 0, %v956
  %v958 = vrot.slane %v953, %v957
  %v964 = vunpack.c.l.b16 %v947
  %v965 = vunpack.c.l.b16 %v948
  %v966 = vunpack.c.l.b16 %v949
  %v967 = vunpack.c.l.b16 %v950
  %v968 = vpack.c.b16 %v965, %v964
  %v969 = vpack.c.b16 %v967, %v966
  %v973 = vsel %vm76, %v951, 0
  %v976 = vsel %vm76, %v952, 0
  %978 = vmatprep.subr.bf16.mxu0 0
  %979 = vmatpush1.bf16.msra.mxu0 %v968
  %980 = vmatprep.subr.bf16.mxu0 0
  %981 = vmatpush1.bf16.msra.mxu0 %v969
  %982 = vmatprep.subr.bf16.mxu0 0
  %983 = vmatpush1.bf16.msra.mxu0 0
  %984 = vmatprep.subr.bf16.mxu0 0
  %985 = vmatpush1.bf16.msra.mxu0 0
  %986 = vmatprep.subr.bf16.mxu0 0
  %987 = vmatpush1.bf16.msra.mxu0 0
  %988 = vmatprep.subr.bf16.mxu0 0
  %989 = vmatpush1.bf16.msra.mxu0 0
  %990 = vmatprep.subr.bf16.mxu0 0
  %991 = vmatpush1.bf16.msra.mxu0 0
  %992 = vmatprep.subr.bf16.mxu0 0
  %993 = vmatpush1.bf16.msra.mxu0 0
  %994 = vmatprep.subr.bf16.mxu0 0
  %995 = vmatpush1.bf16.msra.mxu0 0
  %996 = vmatprep.subr.bf16.mxu0 0
  %997 = vmatpush1.bf16.msra.mxu0 0
  %998 = vmatprep.subr.bf16.mxu0 0
  %999 = vmatpush1.bf16.msra.mxu0 0
  %1000 = vmatprep.subr.bf16.mxu0 0
  %1001 = vmatpush1.bf16.msra.mxu0 0
  %1002 = vmatprep.subr.bf16.mxu0 0
  %1003 = vmatpush1.bf16.msra.mxu0 0
  %1004 = vmatprep.subr.bf16.mxu0 0
  %1005 = vmatpush1.bf16.msra.mxu0 0
  %1006 = vmatprep.subr.bf16.mxu0 0
  %1007 = vmatpush1.bf16.msra.mxu0 0
  %1008 = vmatprep.subr.bf16.mxu0 0
  %1009 = vmatpush1.bf16.msra.mxu0 0
  %1010 = vmatprep.mubr.bf16.mxu0 0
  %1011 = vmatmul.mubr.bf16.gmra.mrb[0].mxu0 %v973
  %v1012 = vpop.f32.mrb[0].mxu0
  %v1013 = vadd.f32 %v958, %v1012
  %v1014 = vpop.f32.mrb[0].mxu0
  %v1015 = vpop.f32.mrb[0].mxu0
  %v1016 = vadd.f32 %v958, %v1015
  %v1017 = vpop.f32.mrb[0].mxu0
  %1018 = vmatprep.mubr.bf16.mxu0 0
  %1019 = vmatmul.mubr.bf16.gmra.mrb[0].mxu0 %v976
  %v1020 = vpop.f32.mrb[0].mxu0
  %v1021 = vadd.f32 %v958, %v1020
  %v1022 = vpop.f32.mrb[0].mxu0
  %v1023 = vpop.f32.mrb[0].mxu0
  %v1024 = vpop.f32.mrb[0].mxu0
  %1025 = vdwg.mxu0
  %v1026 = vadd.f32 %v1013, %v68
  %v1027 = vadd.f32 %v1016, %v69
  %v1028 = vadd.f32 %v1021, %v70
  %s1029 = scalar_lea.vmem %s10, 1
  %v1030 = vld [vmem:[%s1029] sm:$0x1]
  %s1031 = scalar_lea.vmem %s11, 1
  %v1032 = vld [vmem:[%s1031] sm:$0x1]
  %v1033 = vsel %vm76, %v1026, 0.0
  %1034 = vadd.xlane.f32.xlu0 %v1033
  %v1035 = vpop.xlane.xlu0 %1034
  %v1036 = vsel %vm76, %v1027, 0.0
  %1037 = vadd.xlane.f32.xlu0 %v1036
  %v1038 = vpop.xlane.xlu0 %1037
  %v1039 = vsel %vm83, %v1028, 0.0
  %1040 = vadd.xlane.f32.xlu0 %v1039
  %v1041 = vpop.xlane.xlu0 %1040
  %v1042 = vmul.f32 %v1035, %v87
  %v1043 = vmul.f32 %v1038, %v87
  %v1044 = vmul.f32 %v1041, %v87
  %v1045 = vsub.f32 %v1026, %v1042
  %v1046 = vsub.f32 %v1027, %v1043
  %v1047 = vsub.f32 %v1028, %v1044
  %v1048 = vmul.f32 %v1045, %v1045
  %v1049 = vmul.f32 %v1046, %v1046
  %v1050 = vmul.f32 %v1047, %v1047
  %v1051 = vsel %vm76, %v1048, 0.0
  %1052 = vadd.xlane.f32.xlu0 %v1051
  %v1053 = vpop.xlane.xlu0 %1052
  %v1054 = vsel %vm76, %v1049, 0.0
  %1055 = vadd.xlane.f32.xlu0 %v1054
  %v1056 = vpop.xlane.xlu0 %1055
  %v1057 = vsel %vm83, %v1050, 0.0
  %1058 = vadd.xlane.f32.xlu0 %v1057
  %v1059 = vpop.xlane.xlu0 %1058
  %v1060 = vmul.f32 %v1053, 0.032258064
  %v1061 = vmul.f32 %v1056, 0.032258064
  %v1062 = vmul.f32 %v1059, 0.032258064
  %v1063 = vrsqrt.pop %v1060
  %v1064 = vmul.f32 %v1060, %v1063
  %vm1065 = vcmp.eq.f32.partialorder %v1060, inf
  %v1066 = vsel %vm1065, %v1060, %v1064
  %vm1067 = vcmp.eq.f32.partialorder %v1060, 0.0
  %v1068 = vand.u32 %v1060, 2147483648
  %v1069 = vsel %vm1067, %v1068, %v1066
  %v1070 = vrsqrt.pop %v1061
  %v1071 = vmul.f32 %v1061, %v1070
  %vm1072 = vcmp.eq.f32.partialorder %v1061, inf
  %v1073 = vsel %vm1072, %v1061, %v1071
  %vm1074 = vcmp.eq.f32.partialorder %v1061, 0.0
  %v1075 = vand.u32 %v1061, 2147483648
  %v1076 = vsel %vm1074, %v1075, %v1073
  %v1077 = vrsqrt.pop %v1062
  %v1078 = vmul.f32 %v1062, %v1077
  %vm1079 = vcmp.eq.f32.partialorder %v1062, inf
  %v1080 = vsel %vm1079, %v1062, %v1078
  %vm1081 = vcmp.eq.f32.partialorder %v1062, 0.0
  %v1082 = vand.u32 %v1062, 2147483648
  %v1083 = vsel %vm1081, %v1082, %v1080
  %v1084 = vadd.f32 %v1069, 1e-06
  %v1085 = vadd.f32 %v1076, 1e-06
  %v1086 = vadd.f32 %v1083, 1e-06
  %v1087 = vrcp.pop %v1084
  %v1088 = vrcp.pop %v1085
  %v1089 = vrcp.pop %v1086
  %v1090 = vmul.f32 %v1045, %v1087
  %v1091 = vmul.f32 %v1046, %v1088
  %v1092 = vmul.f32 %v1047, %v1089
  %v1094 = vlaneseq
  %v1095 = vshrl.u32 %v1094, 7
  %v1096 = vsub.s32 0, %v1095
  %v1097 = vrot.slane %v1030, %v1096
  %v1099 = vmul.f32 %v1090, %v1097
  %v1100 = vmul.f32 %v1091, %v1097
  %v1101 = vmul.f32 %v1092, %v1097
  %v1103 = vlaneseq
  %v1104 = vshrl.u32 %v1103, 7
  %v1105 = vsub.s32 0, %v1104
  %v1106 = vrot.slane %v1032, %v1105
  %v1108 = vadd.f32 %v1099, %v1106
  %v1109 = vadd.f32 %v1100, %v1106
  %v1110 = vadd.f32 %v1101, %v1106
  %v1111 = vld [vmem:[%s12] sm:$0xf]
  %v1112 = vld [vmem:[%s12 + $0x4] sm:$0xf]
  %v1113 = vld [vmem:[%s12 + $0x8] sm:$0xf]
  %v1114 = vld [vmem:[%s12 + $0xc] sm:$0xf]
  %v1115 = vpack.c.bf16 %v1109, %v1108
  %v1116 = vpack.c.bf16 %v1110, %v1110
  %v1117 = vld [vmem:[%s13] sm:$0x1]
  %v1119 = vlaneseq
  %v1120 = vshrl.u32 %v1119, 7
  %v1121 = vsub.s32 0, %v1120
  %v1122 = vrot.slane %v1117, %v1121
  %v1128 = vunpack.c.l.b16 %v1111
  %v1129 = vunpack.c.l.b16 %v1112
  %v1130 = vunpack.c.l.b16 %v1113
  %v1131 = vunpack.c.l.b16 %v1114
  %v1132 = vpack.c.b16 %v1129, %v1128
  %v1133 = vpack.c.b16 %v1131, %v1130
  %v1137 = vsel %vm76, %v1115, 0
  %v1140 = vsel %vm76, %v1116, 0
  %1142 = vmatprep.subr.bf16.mxu0 0
  %1143 = vmatpush1.bf16.msra.mxu0 %v1132
  %1144 = vmatprep.subr.bf16.mxu0 0
  %1145 = vmatpush1.bf16.msra.mxu0 %v1133
  %1146 = vmatprep.subr.bf16.mxu0 0
  %1147 = vmatpush1.bf16.msra.mxu0 0
  %1148 = vmatprep.subr.bf16.mxu0 0
  %1149 = vmatpush1.bf16.msra.mxu0 0
  %1150 = vmatprep.subr.bf16.mxu0 0
  %1151 = vmatpush1.bf16.msra.mxu0 0
  %1152 = vmatprep.subr.bf16.mxu0 0
  %1153 = vmatpush1.bf16.msra.mxu0 0
  %1154 = vmatprep.subr.bf16.mxu0 0
  %1155 = vmatpush1.bf16.msra.mxu0 0
  %1156 = vmatprep.subr.bf16.mxu0 0
  %1157 = vmatpush1.bf16.msra.mxu0 0
  %1158 = vmatprep.subr.bf16.mxu0 0
  %1159 = vmatpush1.bf16.msra.mxu0 0
  %1160 = vmatprep.subr.bf16.mxu0 0
  %1161 = vmatpush1.bf16.msra.mxu0 0
  %1162 = vmatprep.subr.bf16.mxu0 0
  %1163 = vmatpush1.bf16.msra.mxu0 0
  %1164 = vmatprep.subr.bf16.mxu0 0
  %1165 = vmatpush1.bf16.msra.mxu0 0
  %1166 = vmatprep.subr.bf16.mxu0 0
  %1167 = vmatpush1.bf16.msra.mxu0 0
  %1168 = vmatprep.subr.bf16.mxu0 0
  %1169 = vmatpush1.bf16.msra.mxu0 0
  %1170 = vmatprep.subr.bf16.mxu0 0
  %1171 = vmatpush1.bf16.msra.mxu0 0
  %1172 = vmatprep.subr.bf16.mxu0 0
  %1173 = vmatpush1.bf16.msra.mxu0 0
  %1174 = vmatprep.mubr.bf16.mxu0 0
  %1175 = vmatmul.mubr.bf16.gmra.mrb[0].mxu0 %v1137
  %v1176 = vpop.f32.mrb[0].mxu0
  %v1177 = vadd.f32 %v1122, %v1176
  %v1178 = vpop.f32.mrb[0].mxu0
  %v1179 = vpop.f32.mrb[0].mxu0
  %v1180 = vadd.f32 %v1122, %v1179
  %v1181 = vpop.f32.mrb[0].mxu0
  %1182 = vmatprep.mubr.bf16.mxu0 0
  %1183 = vmatmul.mubr.bf16.gmra.mrb[0].mxu0 %v1140
  %v1184 = vpop.f32.mrb[0].mxu0
  %v1185 = vadd.f32 %v1122, %v1184
  %v1186 = vpop.f32.mrb[0].mxu0
  %v1187 = vpop.f32.mrb[0].mxu0
  %v1188 = vpop.f32.mrb[0].mxu0
  %1189 = vdwg.mxu0
  %v1190 = vmax.f32 %v1177, 0.0
  %v1191 = vmax.f32 %v1180, 0.0
  %v1192 = vmax.f32 %v1185, 0.0
  %v1193 = vld [vmem:[%s14] sm:$0xf]
  %v1194 = vld [vmem:[%s14 + $0x4] sm:$0xf]
  %v1195 = vld [vmem:[%s14 + $0x8] sm:$0xf]
  %v1196 = vld [vmem:[%s14 + $0xc] sm:$0xf]
  %v1197 = vld [vmem:[%s14 + $0x10] sm:$0xf]
  %v1198 = vld [vmem:[%s14 + $0x14] sm:$0xf]
  %v1199 = vld [vmem:[%s14 + $0x18] sm:$0xf]
  %v1200 = vld [vmem:[%s14 + $0x1c] sm:$0xf]
  %v1201 = vpack.c.bf16 %v1191, %v1190
  %v1202 = vpack.c.bf16 %v1192, %v1192
  %v1211 = vunpack.c.l.b16 %v1193
  %v1212 = vunpack.c.l.b16 %v1194
  %v1213 = vunpack.c.l.b16 %v1195
  %v1214 = vunpack.c.l.b16 %v1196
  %v1215 = vunpack.c.l.b16 %v1197
  %v1216 = vunpack.c.l.b16 %v1198
  %v1217 = vunpack.c.l.b16 %v1199
  %v1218 = vunpack.c.l.b16 %v1200
  %v1219 = vpack.c.b16 %v1212, %v1211
  %v1220 = vpack.c.b16 %v1214, %v1213
  %v1221 = vpack.c.b16 %v1216, %v1215
  %v1222 = vpack.c.b16 %v1218, %v1217
  %vm1227 = vcmask 523264
  %v1229 = vsel %vm1227, %v1201, 0
  %v1232 = vsel %vm1227, %v1202, 0
  %1234 = vmatprep.subr.bf16.mxu0 0
  %1235 = vmatpush1.bf16.msra.mxu0 %v1219
  %1236 = vmatprep.subr.bf16.mxu0 0
  %1237 = vmatpush1.bf16.msra.mxu0 %v1220
  %1238 = vmatprep.subr.bf16.mxu0 0
  %1239 = vmatpush1.bf16.msra.mxu0 %v1221
  %1240 = vmatprep.subr.bf16.mxu0 0
  %1241 = vmatpush1.bf16.msra.mxu0 %v1222
  %1242 = vmatprep.subr.bf16.mxu0 0
  %1243 = vmatpush1.bf16.msra.mxu0 0
  %1244 = vmatprep.subr.bf16.mxu0 0
  %1245 = vmatpush1.bf16.msra.mxu0 0
  %1246 = vmatprep.subr.bf16.mxu0 0
  %1247 = vmatpush1.bf16.msra.mxu0 0
  %1248 = vmatprep.subr.bf16.mxu0 0
  %1249 = vmatpush1.bf16.msra.mxu0 0
  %1250 = vmatprep.subr.bf16.mxu0 0
  %1251 = vmatpush1.bf16.msra.mxu0 0
  %1252 = vmatprep.subr.bf16.mxu0 0
  %1253 = vmatpush1.bf16.msra.mxu0 0
  %1254 = vmatprep.subr.bf16.mxu0 0
  %1255 = vmatpush1.bf16.msra.mxu0 0
  %1256 = vmatprep.subr.bf16.mxu0 0
  %1257 = vmatpush1.bf16.msra.mxu0 0
  %1258 = vmatprep.subr.bf16.mxu0 0
  %1259 = vmatpush1.bf16.msra.mxu0 0
  %1260 = vmatprep.subr.bf16.mxu0 0
  %1261 = vmatpush1.bf16.msra.mxu0 0
  %1262 = vmatprep.subr.bf16.mxu0 0
  %1263 = vmatpush1.bf16.msra.mxu0 0
  %1264 = vmatprep.subr.bf16.mxu0 0
  %1265 = vmatpush1.bf16.msra.mxu0 0
  %1266 = vmatprep.mubr.bf16.mxu0 0
  %1267 = vmatmul.mubr.bf16.gmra.mrb[0].mxu0 %v1229
  %v1268 = vpop.f32.mrb[0].mxu0
  %v1269 = vadd.f32 0.0, %v1268
  %v1270 = vpop.f32.mrb[0].mxu0
  %v1271 = vpop.f32.mrb[0].mxu0
  %v1272 = vadd.f32 0.0, %v1271
  %v1273 = vpop.f32.mrb[0].mxu0
  %1274 = vmatprep.mubr.bf16.mxu0 0
  %1275 = vmatmul.mubr.bf16.gmra.mrb[0].mxu0 %v1232
  %v1276 = vpop.f32.mrb[0].mxu0
  %v1277 = vadd.f32 0.0, %v1276
  %v1278 = vpop.f32.mrb[0].mxu0
  %v1279 = vpop.f32.mrb[0].mxu0
  %v1280 = vpop.f32.mrb[0].mxu0
  %1281 = vdwg.mxu0
  %v1282 = vadd.f32 %v1026, %v1269
  %v1283 = vadd.f32 %v1027, %v1272
  %v1284 = vadd.f32 %v1028, %v1277
  %v1285 = vld [vmem:[%s15] sm:$0x1]
  %v1287 = vlaneseq
  %v1288 = vshrl.u32 %v1287, 7
  %v1289 = vsub.s32 0, %v1288
  %v1290 = vrot.slane %v1285, %v1289
  %v1292 = vadd.f32 %v1282, %v1290
  %v1293 = vadd.f32 %v1283, %v1290
  %v1294 = vadd.f32 %v1284, %v1290
  %s1295 = scalar_lea.vmem %s10, 2
  %v1296 = vld [vmem:[%s1295] sm:$0x1]
  %s1297 = scalar_lea.vmem %s11, 2
  %v1298 = vld [vmem:[%s1297] sm:$0x1]
  %v1299 = vsel %vm76, %v1292, 0.0
  %1300 = vadd.xlane.f32.xlu0 %v1299
  %v1301 = vpop.xlane.xlu0 %1300
  %v1302 = vsel %vm76, %v1293, 0.0
  %1303 = vadd.xlane.f32.xlu0 %v1302
  %v1304 = vpop.xlane.xlu0 %1303
  %v1305 = vsel %vm83, %v1294, 0.0
  %1306 = vadd.xlane.f32.xlu0 %v1305
  %v1307 = vpop.xlane.xlu0 %1306
  %v1308 = vmul.f32 %v1301, %v87
  %v1309 = vmul.f32 %v1304, %v87
  %v1310 = vmul.f32 %v1307, %v87
  %v1311 = vsub.f32 %v1292, %v1308
  %v1312 = vsub.f32 %v1293, %v1309
  %v1313 = vsub.f32 %v1294, %v1310
  %v1314 = vmul.f32 %v1311, %v1311
  %v1315 = vmul.f32 %v1312, %v1312
  %v1316 = vmul.f32 %v1313, %v1313
  %v1317 = vsel %vm76, %v1314, 0.0
  %1318 = vadd.xlane.f32.xlu0 %v1317
  %v1319 = vpop.xlane.xlu0 %1318
  %v1320 = vsel %vm76, %v1315, 0.0
  %1321 = vadd.xlane.f32.xlu0 %v1320
  %v1322 = vpop.xlane.xlu0 %1321
  %v1323 = vsel %vm83, %v1316, 0.0
  %1324 = vadd.xlane.f32.xlu0 %v1323
  %v1325 = vpop.xlane.xlu0 %1324
  %v1326 = vmul.f32 %v1319, 0.032258064
  %v1327 = vmul.f32 %v1322, 0.032258064
  %v1328 = vmul.f32 %v1325, 0.032258064
  %v1329 = vrsqrt.pop %v1326
  %v1330 = vmul.f32 %v1326, %v1329
  %vm1331 = vcmp.eq.f32.partialorder %v1326, inf
  %v1332 = vsel %vm1331, %v1326, %v1330
  %vm1333 = vcmp.eq.f32.partialorder %v1326, 0.0
  %v1334 = vand.u32 %v1326, 2147483648
  %v1335 = vsel %vm1333, %v1334, %v1332
  %v1336 = vrsqrt.pop %v1327
  %v1337 = vmul.f32 %v1327, %v1336
  %vm1338 = vcmp.eq.f32.partialorder %v1327, inf
  %v1339 = vsel %vm1338, %v1327, %v1337
  %vm1340 = vcmp.eq.f32.partialorder %v1327, 0.0
  %v1341 = vand.u32 %v1327, 2147483648
  %v1342 = vsel %vm1340, %v1341, %v1339
  %v1343 = vrsqrt.pop %v1328
  %v1344 = vmul.f32 %v1328, %v1343
  %vm1345 = vcmp.eq.f32.partialorder %v1328, inf
  %v1346 = vsel %vm1345, %v1328, %v1344
  %vm1347 = vcmp.eq.f32.partialorder %v1328, 0.0
  %v1348 = vand.u32 %v1328, 2147483648
  %v1349 = vsel %vm1347, %v1348, %v1346
  %v1350 = vadd.f32 %v1335, 1e-06
  %v1351 = vadd.f32 %v1342, 1e-06
  %v1352 = vadd.f32 %v1349, 1e-06
  %v1353 = vrcp.pop %v1350
  %v1354 = vrcp.pop %v1351
  %v1355 = vrcp.pop %v1352
  %v1356 = vmul.f32 %v1311, %v1353
  %v1357 = vmul.f32 %v1312, %v1354
  %v1358 = vmul.f32 %v1313, %v1355
  %v1360 = vlaneseq
  %v1361 = vshrl.u32 %v1360, 7
  %v1362 = vsub.s32 0, %v1361
  %v1363 = vrot.slane %v1296, %v1362
  %v1365 = vmul.f32 %v1356, %v1363
  %v1366 = vmul.f32 %v1357, %v1363
  %v1367 = vmul.f32 %v1358, %v1363
  %v1369 = vlaneseq
  %v1370 = vshrl.u32 %v1369, 7
  %v1371 = vsub.s32 0, %v1370
  %v1372 = vrot.slane %v1298, %v1371
  %v1374 = vadd.f32 %v1365, %v1372
  %v1375 = vadd.f32 %v1366, %v1372
  %v1376 = vadd.f32 %v1367, %v1372
  %s1377 = scalar_lea.vmem %s6, 16
  %v1378 = vld [vmem:[%s1377] sm:$0xf]
  %v1379 = vld [vmem:[%s1377 + $0x4] sm:$0xf]
  %v1380 = vld [vmem:[%s1377 + $0x8] sm:$0xf]
  %v1381 = vld [vmem:[%s1377 + $0xc] sm:$0xf]
  %v1382 = vpack.c.bf16 %v1375, %v1374
  %v1383 = vpack.c.bf16 %v1376, %v1376
  %s1384 = scalar_lea.vmem %s7, 1
  %v1385 = vld [vmem:[%s1384] sm:$0x1]
  %v1387 = vlaneseq
  %v1388 = vshrl.u32 %v1387, 7
  %v1389 = vsub.s32 0, %v1388
  %v1390 = vrot.slane %v1385, %v1389
  %v1396 = vunpack.c.l.b16 %v1378
  %v1397 = vunpack.c.l.b16 %v1379
  %v1398 = vunpack.c.l.b16 %v1380
  %v1399 = vunpack.c.l.b16 %v1381
  %v1400 = vpack.c.b16 %v1397, %v1396
  %v1401 = vpack.c.b16 %v1399, %v1398
  %v1405 = vsel %vm76, %v1382, 0
  %v1408 = vsel %vm76, %v1383, 0
  %1410 = vmatprep.subr.bf16.mxu0 0
  %1411 = vmatpush1.bf16.msra.mxu0 %v1400
  %1412 = vmatprep.subr.bf16.mxu0 0
  %1413 = vmatpush1.bf16.msra.mxu0 %v1401
  %1414 = vmatprep.subr.bf16.mxu0 0
  %1415 = vmatpush1.bf16.msra.mxu0 0
  %1416 = vmatprep.subr.bf16.mxu0 0
  %1417 = vmatpush1.bf16.msra.mxu0 0
  %1418 = vmatprep.subr.bf16.mxu0 0
  %1419 = vmatpush1.bf16.msra.mxu0 0
  %1420 = vmatprep.subr.bf16.mxu0 0
  %1421 = vmatpush1.bf16.msra.mxu0 0
  %1422 = vmatprep.subr.bf16.mxu0 0
  %1423 = vmatpush1.bf16.msra.mxu0 0
  %1424 = vmatprep.subr.bf16.mxu0 0
  %1425 = vmatpush1.bf16.msra.mxu0 0
  %1426 = vmatprep.subr.bf16.mxu0 0
  %1427 = vmatpush1.bf16.msra.mxu0 0
  %1428 = vmatprep.subr.bf16.mxu0 0
  %1429 = vmatpush1.bf16.msra.mxu0 0
  %1430 = vmatprep.subr.bf16.mxu0 0
  %1431 = vmatpush1.bf16.msra.mxu0 0
  %1432 = vmatprep.subr.bf16.mxu0 0
  %1433 = vmatpush1.bf16.msra.mxu0 0
  %1434 = vmatprep.subr.bf16.mxu0 0
  %1435 = vmatpush1.bf16.msra.mxu0 0
  %1436 = vmatprep.subr.bf16.mxu0 0
  %1437 = vmatpush1.bf16.msra.mxu0 0
  %1438 = vmatprep.subr.bf16.mxu0 0
  %1439 = vmatpush1.bf16.msra.mxu0 0
  %1440 = vmatprep.subr.bf16.mxu0 0
  %1441 = vmatpush1.bf16.msra.mxu0 0
  %1442 = vmatprep.mubr.bf16.mxu0 0
  %1443 = vmatmul.mubr.bf16.gmra.mrb[0].mxu0 %v1405
  %v1444 = vpop.f32.mrb[0].mxu0
  %v1445 = vadd.f32 %v1390, %v1444
  %v1446 = vpop.f32.mrb[0].mxu0
  %v1447 = vpop.f32.mrb[0].mxu0
  %v1448 = vadd.f32 %v1390, %v1447
  %v1449 = vpop.f32.mrb[0].mxu0
  %1450 = vmatprep.mubr.bf16.mxu0 0
  %1451 = vmatmul.mubr.bf16.gmra.mrb[0].mxu0 %v1408
  %v1452 = vpop.f32.mrb[0].mxu0
  %v1453 = vadd.f32 %v1390, %v1452
  %v1454 = vpop.f32.mrb[0].mxu0
  %v1455 = vpop.f32.mrb[0].mxu0
  %v1456 = vpop.f32.mrb[0].mxu0
  %1457 = vdwg.mxu0
  %v1458 = vpack.c.bf16 %v1448, %v1445
  %v1459 = vpack.c.bf16 %v1453, %v1453
  %1462 = vrot.lane.b32.xlu0 %v1458, 96
  %v1463 = vpop.permute.xlu0 %1462
  %1464 = vrot.lane.b32.xlu0 %v1459, 96
  %v1465 = vpop.permute.xlu0 %1464
  %v1467 = vsel %vm244, %v1458, 0
  %v1470 = vsel %vm244, %v1459, 0
  %v1473 = vsel %vm244, %v1463, 0
  %v1476 = vsel %vm244, %v1465, 0
  %1478 = vmatprep.subr.bf16.mxu0 0
  %1479 = vmatpush1.bf16.xpose.msra.mxu0 %v1473
  %1480 = vmatprep.subr.bf16.mxu0 0
  %1481 = vmatpush1.bf16.xpose.msra.mxu0 %v1476
  %1482 = vmatprep.subr.bf16.mxu0 0
  %1483 = vmatpush1.bf16.xpose.msra.mxu0 0
  %1484 = vmatprep.subr.bf16.mxu0 0
  %1485 = vmatpush1.bf16.xpose.msra.mxu0 0
  %1486 = vmatprep.subr.bf16.mxu0 0
  %1487 = vmatpush1.bf16.xpose.msra.mxu0 0
  %1488 = vmatprep.subr.bf16.mxu0 0
  %1489 = vmatpush1.bf16.xpose.msra.mxu0 0
  %1490 = vmatprep.subr.bf16.mxu0 0
  %1491 = vmatpush1.bf16.xpose.msra.mxu0 0
  %1492 = vmatprep.subr.bf16.mxu0 0
  %1493 = vmatpush1.bf16.xpose.msra.mxu0 0
  %1494 = vmatprep.subr.bf16.mxu0 0
  %1495 = vmatpush1.bf16.xpose.msra.mxu0 0
  %1496 = vmatprep.subr.bf16.mxu0 0
  %1497 = vmatpush1.bf16.xpose.msra.mxu0 0
  %1498 = vmatprep.subr.bf16.mxu0 0
  %1499 = vmatpush1.bf16.xpose.msra.mxu0 0
  %1500 = vmatprep.subr.bf16.mxu0 0
  %1501 = vmatpush1.bf16.xpose.msra.mxu0 0
  %1502 = vmatprep.subr.bf16.mxu0 0
  %1503 = vmatpush1.bf16.xpose.msra.mxu0 0
  %1504 = vmatprep.subr.bf16.mxu0 0
  %1505 = vmatpush1.bf16.xpose.msra.mxu0 0
  %1506 = vmatprep.subr.bf16.mxu0 0
  %1507 = vmatpush1.bf16.xpose.msra.mxu0 0
  %1508 = vmatprep.subr.bf16.mxu0 0
  %1509 = vmatpush1.bf16.xpose.msra.mxu0 0
  %1510 = vmatprep.mubr.bf16.mxu0 0
  %1511 = vmatmul.mubr.bf16.gmra.mrb[0].mxu0 %v1467
  %v1512 = vpop.f32.mrb[0].mxu0
  %v1513 = vadd.f32 %v71, %v1512
  %v1514 = vpop.f32.mrb[0].mxu0
  %v1515 = vpop.f32.mrb[0].mxu0
  %v1516 = vadd.f32 %v72, %v1515
  %v1517 = vpop.f32.mrb[0].mxu0
  %1518 = vmatprep.mubr.bf16.mxu0 0
  %1519 = vmatmul.mubr.bf16.gmra.mrb[0].mxu0 %v1470
  %v1520 = vpop.f32.mrb[0].mxu0
  %v1521 = vadd.f32 %v73, %v1520
  %v1522 = vpop.f32.mrb[0].mxu0
  %v1523 = vpop.f32.mrb[0].mxu0
  %v1524 = vpop.f32.mrb[0].mxu0
  %1525 = vdwg.mxu0
  %v1526 = vsel %vm305, %v1513, -inf
  %1527 = vmax.xlane.f32.xlu0 %v1526
  %v1528 = vpop.xlane.xlu0 %1527
  %v1529 = vsel %vm305, %v1516, -inf
  %1530 = vmax.xlane.f32.xlu0 %v1529
  %v1531 = vpop.xlane.xlu0 %1530
  %v1532 = vsel %vm312, %v1521, -inf
  %1533 = vmax.xlane.f32.xlu0 %v1532
  %v1534 = vpop.xlane.xlu0 %1533
  %v1535 = vsub.f32 %v1513, %v1528
  %v1536 = vsub.f32 %v1516, %v1531
  %v1537 = vsub.f32 %v1521, %v1534
  %v1538 = vmul.f32 %v1535, 1.442695
  %v1539 = vpow.pop %v1538
  %v1540 = vmul.f32 %v1536, 1.442695
  %v1541 = vpow.pop %v1540
  %v1542 = vmul.f32 %v1537, 1.442695
  %v1543 = vpow.pop %v1542
  %v1544 = vsel %vm305, %v1539, 0.0
  %1545 = vadd.xlane.f32.xlu0 %v1544
  %v1546 = vpop.xlane.xlu0 %1545
  %v1547 = vsel %vm305, %v1541, 0.0
  %1548 = vadd.xlane.f32.xlu0 %v1547
  %v1549 = vpop.xlane.xlu0 %1548
  %v1550 = vsel %vm312, %v1543, 0.0
  %1551 = vadd.xlane.f32.xlu0 %v1550
  %v1552 = vpop.xlane.xlu0 %1551
  %v1553 = vrcp.pop %v1546
  %v1554 = vrcp.pop %v1549
  %v1555 = vrcp.pop %v1552
  %v1556 = vmul.f32 %v1539, %v1553
  %v1557 = vmul.f32 %v1541, %v1554
  %v1558 = vmul.f32 %v1543, %v1555
  %v1559 = vpack.c.bf16 %v1557, %v1556
  %v1560 = vpack.c.bf16 %v1558, %v1558
  %1561 = vrot.lane.b32.xlu0 %v1458, 64
  %v1562 = vpop.permute.xlu0 %1561
  %1563 = vrot.lane.b32.xlu0 %v1459, 64
  %v1564 = vpop.permute.xlu0 %1563
  %v1567 = vsel %vm305, %v1559, 0
  %v1570 = vsel %vm305, %v1560, 0
  %v1573 = vsel %vm353, %v1564, 0
  %1575 = vmatprep.subr.bf16.mxu0 0
  %1576 = vmatpush1.bf16.msra.mxu0 %v1562
  %1577 = vmatprep.subr.bf16.mxu0 0
  %1578 = vmatpush1.bf16.msra.mxu0 %v1573
  %1579 = vmatprep.subr.bf16.mxu0 0
  %1580 = vmatpush1.bf16.msra.mxu0 0
  %1581 = vmatprep.subr.bf16.mxu0 0
  %1582 = vmatpush1.bf16.msra.mxu0 0
  %1583 = vmatprep.subr.bf16.mxu0 0
  %1584 = vmatpush1.bf16.msra.mxu0 0
  %1585 = vmatprep.subr.bf16.mxu0 0
  %1586 = vmatpush1.bf16.msra.mxu0 0
  %1587 = vmatprep.subr.bf16.mxu0 0
  %1588 = vmatpush1.bf16.msra.mxu0 0
  %1589 = vmatprep.subr.bf16.mxu0 0
  %1590 = vmatpush1.bf16.msra.mxu0 0
  %1591 = vmatprep.subr.bf16.mxu0 0
  %1592 = vmatpush1.bf16.msra.mxu0 0
  %1593 = vmatprep.subr.bf16.mxu0 0
  %1594 = vmatpush1.bf16.msra.mxu0 0
  %1595 = vmatprep.subr.bf16.mxu0 0
  %1596 = vmatpush1.bf16.msra.mxu0 0
  %1597 = vmatprep.subr.bf16.mxu0 0
  %1598 = vmatpush1.bf16.msra.mxu0 0
  %1599 = vmatprep.subr.bf16.mxu0 0
  %1600 = vmatpush1.bf16.msra.mxu0 0
  %1601 = vmatprep.subr.bf16.mxu0 0
  %1602 = vmatpush1.bf16.msra.mxu0 0
  %1603 = vmatprep.subr.bf16.mxu0 0
  %1604 = vmatpush1.bf16.msra.mxu0 0
  %1605 = vmatprep.subr.bf16.mxu0 0
  %1606 = vmatpush1.bf16.msra.mxu0 0
  %1607 = vmatprep.mubr.bf16.mxu0 0
  %1608 = vmatmul.mubr.bf16.gmra.mrb[0].mxu0 %v1567
  %v1609 = vpop.f32.mrb[0].mxu0
  %v1610 = vadd.f32 0.0, %v1609
  %v1611 = vpop.f32.mrb[0].mxu0
  %v1612 = vpop.f32.mrb[0].mxu0
  %v1613 = vadd.f32 0.0, %v1612
  %v1614 = vpop.f32.mrb[0].mxu0
  %1615 = vmatprep.mubr.bf16.mxu0 0
  %1616 = vmatmul.mubr.bf16.gmra.mrb[0].mxu0 %v1570
  %v1617 = vpop.f32.mrb[0].mxu0
  %v1618 = vadd.f32 0.0, %v1617
  %v1619 = vpop.f32.mrb[0].mxu0
  %v1620 = vpop.f32.mrb[0].mxu0
  %v1621 = vpop.f32.mrb[0].mxu0
  %1622 = vdwg.mxu0
  %1623 = vrot.lane.b32.xlu0 %v1458, 120
  %v1624 = vpop.permute.xlu0 %1623
  %1625 = vrot.lane.b32.xlu0 %v1459, 120
  %v1626 = vpop.permute.xlu0 %1625
  %1627 = vrot.lane.b32.xlu0 %v1458, 88
  %v1628 = vpop.permute.xlu0 %1627
  %1629 = vrot.lane.b32.xlu0 %v1459, 88
  %v1630 = vpop.permute.xlu0 %1629
  %v1632 = vsel %vm244, %v1624, 0
  %v1635 = vsel %vm244, %v1626, 0
  %v1638 = vsel %vm244, %v1628, 0
  %v1641 = vsel %vm244, %v1630, 0
  %1643 = vmatprep.subr.bf16.mxu0 0
  %1644 = vmatpush1.bf16.xpose.msra.mxu0 %v1638
  %1645 = vmatprep.subr.bf16.mxu0 0
  %1646 = vmatpush1.bf16.xpose.msra.mxu0 %v1641
  %1647 = vmatprep.subr.bf16.mxu0 0
  %1648 = vmatpush1.bf16.xpose.msra.mxu0 0
  %1649 = vmatprep.subr.bf16.mxu0 0
  %1650 = vmatpush1.bf16.xpose.msra.mxu0 0
  %1651 = vmatprep.subr.bf16.mxu0 0
  %1652 = vmatpush1.bf16.xpose.msra.mxu0 0
  %1653 = vmatprep.subr.bf16.mxu0 0
  %1654 = vmatpush1.bf16.xpose.msra.mxu0 0
  %1655 = vmatprep.subr.bf16.mxu0 0
  %1656 = vmatpush1.bf16.xpose.msra.mxu0 0
  %1657 = vmatprep.subr.bf16.mxu0 0
  %1658 = vmatpush1.bf16.xpose.msra.mxu0 0
  %1659 = vmatprep.subr.bf16.mxu0 0
  %1660 = vmatpush1.bf16.xpose.msra.mxu0 0
  %1661 = vmatprep.subr.bf16.mxu0 0
  %1662 = vmatpush1.bf16.xpose.msra.mxu0 0
  %1663 = vmatprep.subr.bf16.mxu0 0
  %1664 = vmatpush1.bf16.xpose.msra.mxu0 0
  %1665 = vmatprep.subr.bf16.mxu0 0
  %1666 = vmatpush1.bf16.xpose.msra.mxu0 0
  %1667 = vmatprep.subr.bf16.mxu0 0
  %1668 = vmatpush1.bf16.xpose.msra.mxu0 0
  %1669 = vmatprep.subr.bf16.mxu0 0
  %1670 = vmatpush1.bf16.xpose.msra.mxu0 0
  %1671 = vmatprep.subr.bf16.mxu0 0
  %1672 = vmatpush1.bf16.xpose.msra.mxu0 0
  %1673 = vmatprep.subr.bf16.mxu0 0
  %1674 = vmatpush1.bf16.xpose.msra.mxu0 0
  %1675 = vmatprep.mubr.bf16.mxu0 0
  %1676 = vmatmul.mubr.bf16.gmra.mrb[0].mxu0 %v1632
  %v1677 = vpop.f32.mrb[0].mxu0
  %v1678 = vadd.f32 %v71, %v1677
  %v1679 = vpop.f32.mrb[0].mxu0
  %v1680 = vpop.f32.mrb[0].mxu0
  %v1681 = vadd.f32 %v72, %v1680
  %v1682 = vpop.f32.mrb[0].mxu0
  %1683 = vmatprep.mubr.bf16.mxu0 0
  %1684 = vmatmul.mubr.bf16.gmra.mrb[0].mxu0 %v1635
  %v1685 = vpop.f32.mrb[0].mxu0
  %v1686 = vadd.f32 %v73, %v1685
  %v1687 = vpop.f32.mrb[0].mxu0
  %v1688 = vpop.f32.mrb[0].mxu0
  %v1689 = vpop.f32.mrb[0].mxu0
  %1690 = vdwg.mxu0
  %v1691 = vsel %vm305, %v1678, -inf
  %1692 = vmax.xlane.f32.xlu0 %v1691
  %v1693 = vpop.xlane.xlu0 %1692
  %v1694 = vsel %vm305, %v1681, -inf
  %1695 = vmax.xlane.f32.xlu0 %v1694
  %v1696 = vpop.xlane.xlu0 %1695
  %v1697 = vsel %vm312, %v1686, -inf
  %1698 = vmax.xlane.f32.xlu0 %v1697
  %v1699 = vpop.xlane.xlu0 %1698
  %v1700 = vsub.f32 %v1678, %v1693
  %v1701 = vsub.f32 %v1681, %v1696
  %v1702 = vsub.f32 %v1686, %v1699
  %v1703 = vmul.f32 %v1700, 1.442695
  %v1704 = vpow.pop %v1703
  %v1705 = vmul.f32 %v1701, 1.442695
  %v1706 = vpow.pop %v1705
  %v1707 = vmul.f32 %v1702, 1.442695
  %v1708 = vpow.pop %v1707
  %v1709 = vsel %vm305, %v1704, 0.0
  %1710 = vadd.xlane.f32.xlu0 %v1709
  %v1711 = vpop.xlane.xlu0 %1710
  %v1712 = vsel %vm305, %v1706, 0.0
  %1713 = vadd.xlane.f32.xlu0 %v1712
  %v1714 = vpop.xlane.xlu0 %1713
  %v1715 = vsel %vm312, %v1708, 0.0
  %1716 = vadd.xlane.f32.xlu0 %v1715
  %v1717 = vpop.xlane.xlu0 %1716
  %v1718 = vrcp.pop %v1711
  %v1719 = vrcp.pop %v1714
  %v1720 = vrcp.pop %v1717
  %v1721 = vmul.f32 %v1704, %v1718
  %v1722 = vmul.f32 %v1706, %v1719
  %v1723 = vmul.f32 %v1708, %v1720
  %v1724 = vpack.c.bf16 %v1722, %v1721
  %v1725 = vpack.c.bf16 %v1723, %v1723
  %1726 = vrot.lane.b32.xlu0 %v1458, 56
  %v1727 = vpop.permute.xlu0 %1726
  %1728 = vrot.lane.b32.xlu0 %v1459, 56
  %v1729 = vpop.permute.xlu0 %1728
  %v1732 = vsel %vm305, %v1724, 0
  %v1735 = vsel %vm305, %v1725, 0
  %v1738 = vsel %vm353, %v1729, 0
  %1740 = vmatprep.subr.bf16.mxu0 0
  %1741 = vmatpush1.bf16.msra.mxu0 %v1727
  %1742 = vmatprep.subr.bf16.mxu0 0
  %1743 = vmatpush1.bf16.msra.mxu0 %v1738
  %1744 = vmatprep.subr.bf16.mxu0 0
  %1745 = vmatpush1.bf16.msra.mxu0 0
  %1746 = vmatprep.subr.bf16.mxu0 0
  %1747 = vmatpush1.bf16.msra.mxu0 0
  %1748 = vmatprep.subr.bf16.mxu0 0
  %1749 = vmatpush1.bf16.msra.mxu0 0
  %1750 = vmatprep.subr.bf16.mxu0 0
  %1751 = vmatpush1.bf16.msra.mxu0 0
  %1752 = vmatprep.subr.bf16.mxu0 0
  %1753 = vmatpush1.bf16.msra.mxu0 0
  %1754 = vmatprep.subr.bf16.mxu0 0
  %1755 = vmatpush1.bf16.msra.mxu0 0
  %1756 = vmatprep.subr.bf16.mxu0 0
  %1757 = vmatpush1.bf16.msra.mxu0 0
  %1758 = vmatprep.subr.bf16.mxu0 0
  %1759 = vmatpush1.bf16.msra.mxu0 0
  %1760 = vmatprep.subr.bf16.mxu0 0
  %1761 = vmatpush1.bf16.msra.mxu0 0
  %1762 = vmatprep.subr.bf16.mxu0 0
  %1763 = vmatpush1.bf16.msra.mxu0 0
  %1764 = vmatprep.subr.bf16.mxu0 0
  %1765 = vmatpush1.bf16.msra.mxu0 0
  %1766 = vmatprep.subr.bf16.mxu0 0
  %1767 = vmatpush1.bf16.msra.mxu0 0
  %1768 = vmatprep.subr.bf16.mxu0 0
  %1769 = vmatpush1.bf16.msra.mxu0 0
  %1770 = vmatprep.subr.bf16.mxu0 0
  %1771 = vmatpush1.bf16.msra.mxu0 0
  %1772 = vmatprep.mubr.bf16.mxu0 0
  %1773 = vmatmul.mubr.bf16.gmra.mrb[0].mxu0 %v1732
  %v1774 = vpop.f32.mrb[0].mxu0
  %v1775 = vadd.f32 0.0, %v1774
  %v1776 = vpop.f32.mrb[0].mxu0
  %v1777 = vpop.f32.mrb[0].mxu0
  %v1778 = vadd.f32 0.0, %v1777
  %v1779 = vpop.f32.mrb[0].mxu0
  %1780 = vmatprep.mubr.bf16.mxu0 0
  %1781 = vmatmul.mubr.bf16.gmra.mrb[0].mxu0 %v1735
  %v1782 = vpop.f32.mrb[0].mxu0
  %v1783 = vadd.f32 0.0, %v1782
  %v1784 = vpop.f32.mrb[0].mxu0
  %v1785 = vpop.f32.mrb[0].mxu0
  %v1786 = vpop.f32.mrb[0].mxu0
  %1787 = vdwg.mxu0
  %1788 = vrot.lane.b32.xlu0 %v1458, 112
  %v1789 = vpop.permute.xlu0 %1788
  %1790 = vrot.lane.b32.xlu0 %v1459, 112
  %v1791 = vpop.permute.xlu0 %1790
  %1792 = vrot.lane.b32.xlu0 %v1458, 80
  %v1793 = vpop.permute.xlu0 %1792
  %1794 = vrot.lane.b32.xlu0 %v1459, 80
  %v1795 = vpop.permute.xlu0 %1794
  %v1797 = vsel %vm244, %v1789, 0
  %v1800 = vsel %vm244, %v1791, 0
  %v1803 = vsel %vm244, %v1793, 0
  %v1806 = vsel %vm244, %v1795, 0
  %1808 = vmatprep.subr.bf16.mxu0 0
  %1809 = vmatpush1.bf16.xpose.msra.mxu0 %v1803
  %1810 = vmatprep.subr.bf16.mxu0 0
  %1811 = vmatpush1.bf16.xpose.msra.mxu0 %v1806
  %1812 = vmatprep.subr.bf16.mxu0 0
  %1813 = vmatpush1.bf16.xpose.msra.mxu0 0
  %1814 = vmatprep.subr.bf16.mxu0 0
  %1815 = vmatpush1.bf16.xpose.msra.mxu0 0
  %1816 = vmatprep.subr.bf16.mxu0 0
  %1817 = vmatpush1.bf16.xpose.msra.mxu0 0
  %1818 = vmatprep.subr.bf16.mxu0 0
  %1819 = vmatpush1.bf16.xpose.msra.mxu0 0
  %1820 = vmatprep.subr.bf16.mxu0 0
  %1821 = vmatpush1.bf16.xpose.msra.mxu0 0
  %1822 = vmatprep.subr.bf16.mxu0 0
  %1823 = vmatpush1.bf16.xpose.msra.mxu0 0
  %1824 = vmatprep.subr.bf16.mxu0 0
  %1825 = vmatpush1.bf16.xpose.msra.mxu0 0
  %1826 = vmatprep.subr.bf16.mxu0 0
  %1827 = vmatpush1.bf16.xpose.msra.mxu0 0
  %1828 = vmatprep.subr.bf16.mxu0 0
  %1829 = vmatpush1.bf16.xpose.msra.mxu0 0
  %1830 = vmatprep.subr.bf16.mxu0 0
  %1831 = vmatpush1.bf16.xpose.msra.mxu0 0
  %1832 = vmatprep.subr.bf16.mxu0 0
  %1833 = vmatpush1.bf16.xpose.msra.mxu0 0
  %1834 = vmatprep.subr.bf16.mxu0 0
  %1835 = vmatpush1.bf16.xpose.msra.mxu0 0
  %1836 = vmatprep.subr.bf16.mxu0 0
  %1837 = vmatpush1.bf16.xpose.msra.mxu0 0
  %1838 = vmatprep.subr.bf16.mxu0 0
  %1839 = vmatpush1.bf16.xpose.msra.mxu0 0
  %1840 = vmatprep.mubr.bf16.mxu0 0
  %1841 = vmatmul.mubr.bf16.gmra.mrb[0].mxu0 %v1797
  %v1842 = vpop.f32.mrb[0].mxu0
  %v1843 = vadd.f32 %v71, %v1842
  %v1844 = vpop.f32.mrb[0].mxu0
  %v1845 = vpop.f32.mrb[0].mxu0
  %v1846 = vadd.f32 %v72, %v1845
  %v1847 = vpop.f32.mrb[0].mxu0
  %1848 = vmatprep.mubr.bf16.mxu0 0
  %1849 = vmatmul.mubr.bf16.gmra.mrb[0].mxu0 %v1800
  %v1850 = vpop.f32.mrb[0].mxu0
  %v1851 = vadd.f32 %v73, %v1850
  %v1852 = vpop.f32.mrb[0].mxu0
  %v1853 = vpop.f32.mrb[0].mxu0
  %v1854 = vpop.f32.mrb[0].mxu0
  %1855 = vdwg.mxu0
  %v1856 = vsel %vm305, %v1843, -inf
  %1857 = vmax.xlane.f32.xlu0 %v1856
  %v1858 = vpop.xlane.xlu0 %1857
  %v1859 = vsel %vm305, %v1846, -inf
  %1860 = vmax.xlane.f32.xlu0 %v1859
  %v1861 = vpop.xlane.xlu0 %1860
  %v1862 = vsel %vm312, %v1851, -inf
  %1863 = vmax.xlane.f32.xlu0 %v1862
  %v1864 = vpop.xlane.xlu0 %1863
  %v1865 = vsub.f32 %v1843, %v1858
  %v1866 = vsub.f32 %v1846, %v1861
  %v1867 = vsub.f32 %v1851, %v1864
  %v1868 = vmul.f32 %v1865, 1.442695
  %v1869 = vpow.pop %v1868
  %v1870 = vmul.f32 %v1866, 1.442695
  %v1871 = vpow.pop %v1870
  %v1872 = vmul.f32 %v1867, 1.442695
  %v1873 = vpow.pop %v1872
  %v1874 = vsel %vm305, %v1869, 0.0
  %1875 = vadd.xlane.f32.xlu0 %v1874
  %v1876 = vpop.xlane.xlu0 %1875
  %v1877 = vsel %vm305, %v1871, 0.0
  %1878 = vadd.xlane.f32.xlu0 %v1877
  %v1879 = vpop.xlane.xlu0 %1878
  %v1880 = vsel %vm312, %v1873, 0.0
  %1881 = vadd.xlane.f32.xlu0 %v1880
  %v1882 = vpop.xlane.xlu0 %1881
  %v1883 = vrcp.pop %v1876
  %v1884 = vrcp.pop %v1879
  %v1885 = vrcp.pop %v1882
  %v1886 = vmul.f32 %v1869, %v1883
  %v1887 = vmul.f32 %v1871, %v1884
  %v1888 = vmul.f32 %v1873, %v1885
  %v1889 = vpack.c.bf16 %v1887, %v1886
  %v1890 = vpack.c.bf16 %v1888, %v1888
  %1891 = vrot.lane.b32.xlu0 %v1458, 48
  %v1892 = vpop.permute.xlu0 %1891
  %1893 = vrot.lane.b32.xlu0 %v1459, 48
  %v1894 = vpop.permute.xlu0 %1893
  %v1897 = vsel %vm305, %v1889, 0
  %v1900 = vsel %vm305, %v1890, 0
  %v1903 = vsel %vm353, %v1894, 0
  %1905 = vmatprep.subr.bf16.mxu0 0
  %1906 = vmatpush1.bf16.msra.mxu0 %v1892
  %1907 = vmatprep.subr.bf16.mxu0 0
  %1908 = vmatpush1.bf16.msra.mxu0 %v1903
  %1909 = vmatprep.subr.bf16.mxu0 0
  %1910 = vmatpush1.bf16.msra.mxu0 0
  %1911 = vmatprep.subr.bf16.mxu0 0
  %1912 = vmatpush1.bf16.msra.mxu0 0
  %1913 = vmatprep.subr.bf16.mxu0 0
  %1914 = vmatpush1.bf16.msra.mxu0 0
  %1915 = vmatprep.subr.bf16.mxu0 0
  %1916 = vmatpush1.bf16.msra.mxu0 0
  %1917 = vmatprep.subr.bf16.mxu0 0
  %1918 = vmatpush1.bf16.msra.mxu0 0
  %1919 = vmatprep.subr.bf16.mxu0 0
  %1920 = vmatpush1.bf16.msra.mxu0 0
  %1921 = vmatprep.subr.bf16.mxu0 0
  %1922 = vmatpush1.bf16.msra.mxu0 0
  %1923 = vmatprep.subr.bf16.mxu0 0
  %1924 = vmatpush1.bf16.msra.mxu0 0
  %1925 = vmatprep.subr.bf16.mxu0 0
  %1926 = vmatpush1.bf16.msra.mxu0 0
  %1927 = vmatprep.subr.bf16.mxu0 0
  %1928 = vmatpush1.bf16.msra.mxu0 0
  %1929 = vmatprep.subr.bf16.mxu0 0
  %1930 = vmatpush1.bf16.msra.mxu0 0
  %1931 = vmatprep.subr.bf16.mxu0 0
  %1932 = vmatpush1.bf16.msra.mxu0 0
  %1933 = vmatprep.subr.bf16.mxu0 0
  %1934 = vmatpush1.bf16.msra.mxu0 0
  %1935 = vmatprep.subr.bf16.mxu0 0
  %1936 = vmatpush1.bf16.msra.mxu0 0
  %1937 = vmatprep.mubr.bf16.mxu0 0
  %1938 = vmatmul.mubr.bf16.gmra.mrb[0].mxu0 %v1897
  %v1939 = vpop.f32.mrb[0].mxu0
  %v1940 = vadd.f32 0.0, %v1939
  %v1941 = vpop.f32.mrb[0].mxu0
  %v1942 = vpop.f32.mrb[0].mxu0
  %v1943 = vadd.f32 0.0, %v1942
  %v1944 = vpop.f32.mrb[0].mxu0
  %1945 = vmatprep.mubr.bf16.mxu0 0
  %1946 = vmatmul.mubr.bf16.gmra.mrb[0].mxu0 %v1900
  %v1947 = vpop.f32.mrb[0].mxu0
  %v1948 = vadd.f32 0.0, %v1947
  %v1949 = vpop.f32.mrb[0].mxu0
  %v1950 = vpop.f32.mrb[0].mxu0
  %v1951 = vpop.f32.mrb[0].mxu0
  %1952 = vdwg.mxu0
  %1953 = vrot.lane.b32.xlu0 %v1458, 104
  %v1954 = vpop.permute.xlu0 %1953
  %1955 = vrot.lane.b32.xlu0 %v1459, 104
  %v1956 = vpop.permute.xlu0 %1955
  %1957 = vrot.lane.b32.xlu0 %v1458, 72
  %v1958 = vpop.permute.xlu0 %1957
  %1959 = vrot.lane.b32.xlu0 %v1459, 72
  %v1960 = vpop.permute.xlu0 %1959
  %v1962 = vsel %vm244, %v1954, 0
  %v1965 = vsel %vm244, %v1956, 0
  %v1968 = vsel %vm244, %v1958, 0
  %v1971 = vsel %vm244, %v1960, 0
  %1973 = vmatprep.subr.bf16.mxu0 0
  %1974 = vmatpush1.bf16.xpose.msra.mxu0 %v1968
  %1975 = vmatprep.subr.bf16.mxu0 0
  %1976 = vmatpush1.bf16.xpose.msra.mxu0 %v1971
  %1977 = vmatprep.subr.bf16.mxu0 0
  %1978 = vmatpush1.bf16.xpose.msra.mxu0 0
  %1979 = vmatprep.subr.bf16.mxu0 0
  %1980 = vmatpush1.bf16.xpose.msra.mxu0 0
  %1981 = vmatprep.subr.bf16.mxu0 0
  %1982 = vmatpush1.bf16.xpose.msra.mxu0 0
  %1983 = vmatprep.subr.bf16.mxu0 0
  %1984 = vmatpush1.bf16.xpose.msra.mxu0 0
  %1985 = vmatprep.subr.bf16.mxu0 0
  %1986 = vmatpush1.bf16.xpose.msra.mxu0 0
  %1987 = vmatprep.subr.bf16.mxu0 0
  %1988 = vmatpush1.bf16.xpose.msra.mxu0 0
  %1989 = vmatprep.subr.bf16.mxu0 0
  %1990 = vmatpush1.bf16.xpose.msra.mxu0 0
  %1991 = vmatprep.subr.bf16.mxu0 0
  %1992 = vmatpush1.bf16.xpose.msra.mxu0 0
  %1993 = vmatprep.subr.bf16.mxu0 0
  %1994 = vmatpush1.bf16.xpose.msra.mxu0 0
  %1995 = vmatprep.subr.bf16.mxu0 0
  %1996 = vmatpush1.bf16.xpose.msra.mxu0 0
  %1997 = vmatprep.subr.bf16.mxu0 0
  %1998 = vmatpush1.bf16.xpose.msra.mxu0 0
  %1999 = vmatprep.subr.bf16.mxu0 0
  %2000 = vmatpush1.bf16.xpose.msra.mxu0 0
  %2001 = vmatprep.subr.bf16.mxu0 0
  %2002 = vmatpush1.bf16.xpose.msra.mxu0 0
  %2003 = vmatprep.subr.bf16.mxu0 0
  %2004 = vmatpush1.bf16.xpose.msra.mxu0 0
  %2005 = vmatprep.mubr.bf16.mxu0 0
  %2006 = vmatmul.mubr.bf16.gmra.mrb[0].mxu0 %v1962
  %v2007 = vpop.f32.mrb[0].mxu0
  %v2008 = vadd.f32 %v71, %v2007
  %v2009 = vpop.f32.mrb[0].mxu0
  %v2010 = vpop.f32.mrb[0].mxu0
  %v2011 = vadd.f32 %v72, %v2010
  %v2012 = vpop.f32.mrb[0].mxu0
  %2013 = vmatprep.mubr.bf16.mxu0 0
  %2014 = vmatmul.mubr.bf16.gmra.mrb[0].mxu0 %v1965
  %v2015 = vpop.f32.mrb[0].mxu0
  %v2016 = vadd.f32 %v73, %v2015
  %v2017 = vpop.f32.mrb[0].mxu0
  %v2018 = vpop.f32.mrb[0].mxu0
  %v2019 = vpop.f32.mrb[0].mxu0
  %2020 = vdwg.mxu0
  %v2021 = vsel %vm305, %v2008, -inf
  %2022 = vmax.xlane.f32.xlu0 %v2021
  %v2023 = vpop.xlane.xlu0 %2022
  %v2024 = vsel %vm305, %v2011, -inf
  %2025 = vmax.xlane.f32.xlu0 %v2024
  %v2026 = vpop.xlane.xlu0 %2025
  %v2027 = vsel %vm312, %v2016, -inf
  %2028 = vmax.xlane.f32.xlu0 %v2027
  %v2029 = vpop.xlane.xlu0 %2028
  %v2030 = vsub.f32 %v2008, %v2023
  %v2031 = vsub.f32 %v2011, %v2026
  %v2032 = vsub.f32 %v2016, %v2029
  %v2033 = vmul.f32 %v2030, 1.442695
  %v2034 = vpow.pop %v2033
  %v2035 = vmul.f32 %v2031, 1.442695
  %v2036 = vpow.pop %v2035
  %v2037 = vmul.f32 %v2032, 1.442695
  %v2038 = vpow.pop %v2037
  %v2039 = vsel %vm305, %v2034, 0.0
  %2040 = vadd.xlane.f32.xlu0 %v2039
  %v2041 = vpop.xlane.xlu0 %2040
  %v2042 = vsel %vm305, %v2036, 0.0
  %2043 = vadd.xlane.f32.xlu0 %v2042
  %v2044 = vpop.xlane.xlu0 %2043
  %v2045 = vsel %vm312, %v2038, 0.0
  %2046 = vadd.xlane.f32.xlu0 %v2045
  %v2047 = vpop.xlane.xlu0 %2046
  %v2048 = vrcp.pop %v2041
  %v2049 = vrcp.pop %v2044
  %v2050 = vrcp.pop %v2047
  %v2051 = vmul.f32 %v2034, %v2048
  %v2052 = vmul.f32 %v2036, %v2049
  %v2053 = vmul.f32 %v2038, %v2050
  %v2054 = vpack.c.bf16 %v2052, %v2051
  %v2055 = vpack.c.bf16 %v2053, %v2053
  %2056 = vrot.lane.b32.xlu0 %v1458, 40
  %v2057 = vpop.permute.xlu0 %2056
  %2058 = vrot.lane.b32.xlu0 %v1459, 40
  %v2059 = vpop.permute.xlu0 %2058
  %v2062 = vsel %vm305, %v2054, 0
  %v2065 = vsel %vm305, %v2055, 0
  %v2068 = vsel %vm353, %v2059, 0
  %2070 = vmatprep.subr.bf16.mxu0 0
  %2071 = vmatpush1.bf16.msra.mxu0 %v2057
  %2072 = vmatprep.subr.bf16.mxu0 0
  %2073 = vmatpush1.bf16.msra.mxu0 %v2068
  %2074 = vmatprep.subr.bf16.mxu0 0
  %2075 = vmatpush1.bf16.msra.mxu0 0
  %2076 = vmatprep.subr.bf16.mxu0 0
  %2077 = vmatpush1.bf16.msra.mxu0 0
  %2078 = vmatprep.subr.bf16.mxu0 0
  %2079 = vmatpush1.bf16.msra.mxu0 0
  %2080 = vmatprep.subr.bf16.mxu0 0
  %2081 = vmatpush1.bf16.msra.mxu0 0
  %2082 = vmatprep.subr.bf16.mxu0 0
  %2083 = vmatpush1.bf16.msra.mxu0 0
  %2084 = vmatprep.subr.bf16.mxu0 0
  %2085 = vmatpush1.bf16.msra.mxu0 0
  %2086 = vmatprep.subr.bf16.mxu0 0
  %2087 = vmatpush1.bf16.msra.mxu0 0
  %2088 = vmatprep.subr.bf16.mxu0 0
  %2089 = vmatpush1.bf16.msra.mxu0 0
  %2090 = vmatprep.subr.bf16.mxu0 0
  %2091 = vmatpush1.bf16.msra.mxu0 0
  %2092 = vmatprep.subr.bf16.mxu0 0
  %2093 = vmatpush1.bf16.msra.mxu0 0
  %2094 = vmatprep.subr.bf16.mxu0 0
  %2095 = vmatpush1.bf16.msra.mxu0 0
  %2096 = vmatprep.subr.bf16.mxu0 0
  %2097 = vmatpush1.bf16.msra.mxu0 0
  %2098 = vmatprep.subr.bf16.mxu0 0
  %2099 = vmatpush1.bf16.msra.mxu0 0
  %2100 = vmatprep.subr.bf16.mxu0 0
  %2101 = vmatpush1.bf16.msra.mxu0 0
  %2102 = vmatprep.mubr.bf16.mxu0 0
  %2103 = vmatmul.mubr.bf16.gmra.mrb[0].mxu0 %v2062
  %v2104 = vpop.f32.mrb[0].mxu0
  %v2105 = vadd.f32 0.0, %v2104
  %v2106 = vpop.f32.mrb[0].mxu0
  %v2107 = vpop.f32.mrb[0].mxu0
  %v2108 = vadd.f32 0.0, %v2107
  %v2109 = vpop.f32.mrb[0].mxu0
  %2110 = vmatprep.mubr.bf16.mxu0 0
  %2111 = vmatmul.mubr.bf16.gmra.mrb[0].mxu0 %v2065
  %v2112 = vpop.f32.mrb[0].mxu0
  %v2113 = vadd.f32 0.0, %v2112
  %v2114 = vpop.f32.mrb[0].mxu0
  %v2115 = vpop.f32.mrb[0].mxu0
  %v2116 = vpop.f32.mrb[0].mxu0
  %2117 = vdwg.mxu0
  %2121 = vrot.lane.b32.xlu0 %v1775, 8
  %v2122 = vpop.permute.xlu0 %2121
  %2123 = vrot.lane.b32.xlu0 %v1778, 8
  %v2124 = vpop.permute.xlu0 %2123
  %2125 = vrot.lane.b32.xlu0 %v1783, 8
  %v2126 = vpop.permute.xlu0 %2125
  %2133 = vrot.lane.b32.xlu0 %v1940, 16
  %v2134 = vpop.permute.xlu0 %2133
  %2135 = vrot.lane.b32.xlu0 %v1943, 16
  %v2136 = vpop.permute.xlu0 %2135
  %2137 = vrot.lane.b32.xlu0 %v1948, 16
  %v2138 = vpop.permute.xlu0 %2137
  %2145 = vrot.lane.b32.xlu0 %v2105, 24
  %v2146 = vpop.permute.xlu0 %2145
  %2147 = vrot.lane.b32.xlu0 %v2108, 24
  %v2148 = vpop.permute.xlu0 %2147
  %2149 = vrot.lane.b32.xlu0 %v2113, 24
  %v2150 = vpop.permute.xlu0 %2149
  %v2154 = vsel %vm244, %v1610, %v2122
  %v2155 = vsel %vm244, %v1613, %v2124
  %v2156 = vsel %vm244, %v1618, %v2126
  %v2157 = vsel %vm939, %v2154, %v2134
  %v2158 = vsel %vm939, %v2155, %v2136
  %v2159 = vsel %vm939, %v2156, %v2138
  %v2160 = vsel %vm943, %v2157, %v2146
  %v2161 = vsel %vm943, %v2158, %v2148
  %v2162 = vsel %vm943, %v2159, %v2150
  %s2163 = scalar_lea.vmem %s8, 16
  %v2164 = vld [vmem:[%s2163] sm:$0xf]
  %v2165 = vld [vmem:[%s2163 + $0x4] sm:$0xf]
  %v2166 = vld [vmem:[%s2163 + $0x8] sm:$0xf]
  %v2167 = vld [vmem:[%s2163 + $0xc] sm:$0xf]
  %v2168 = vpack.c.bf16 %v2161, %v2160
  %v2169 = vpack.c.bf16 %v2162, %v2162
  %s2170 = scalar_lea.vmem %s9, 1
  %v2171 = vld [vmem:[%s2170] sm:$0x1]
  %v2173 = vlaneseq
  %v2174 = vshrl.u32 %v2173, 7
  %v2175 = vsub.s32 0, %v2174
  %v2176 = vrot.slane %v2171, %v2175
  %v2182 = vunpack.c.l.b16 %v2164
  %v2183 = vunpack.c.l.b16 %v2165
  %v2184 = vunpack.c.l.b16 %v2166
  %v2185 = vunpack.c.l.b16 %v2167
  %v2186 = vpack.c.b16 %v2183, %v2182
  %v2187 = vpack.c.b16 %v2185, %v2184
  %v2191 = vsel %vm76, %v2168, 0
  %v2194 = vsel %vm76, %v2169, 0
  %2196 = vmatprep.subr.bf16.mxu0 0
  %2197 = vmatpush1.bf16.msra.mxu0 %v2186
  %2198 = vmatprep.subr.bf16.mxu0 0
  %2199 = vmatpush1.bf16.msra.mxu0 %v2187
  %2200 = vmatprep.subr.bf16.mxu0 0
  %2201 = vmatpush1.bf16.msra.mxu0 0
  %2202 = vmatprep.subr.bf16.mxu0 0
  %2203 = vmatpush1.bf16.msra.mxu0 0
  %2204 = vmatprep.subr.bf16.mxu0 0
  %2205 = vmatpush1.bf16.msra.mxu0 0
  %2206 = vmatprep.subr.bf16.mxu0 0
  %2207 = vmatpush1.bf16.msra.mxu0 0
  %2208 = vmatprep.subr.bf16.mxu0 0
  %2209 = vmatpush1.bf16.msra.mxu0 0
  %2210 = vmatprep.subr.bf16.mxu0 0
  %2211 = vmatpush1.bf16.msra.mxu0 0
  %2212 = vmatprep.subr.bf16.mxu0 0
  %2213 = vmatpush1.bf16.msra.mxu0 0
  %2214 = vmatprep.subr.bf16.mxu0 0
  %2215 = vmatpush1.bf16.msra.mxu0 0
  %2216 = vmatprep.subr.bf16.mxu0 0
  %2217 = vmatpush1.bf16.msra.mxu0 0
  %2218 = vmatprep.subr.bf16.mxu0 0
  %2219 = vmatpush1.bf16.msra.mxu0 0
  %2220 = vmatprep.subr.bf16.mxu0 0
  %2221 = vmatpush1.bf16.msra.mxu0 0
  %2222 = vmatprep.subr.bf16.mxu0 0
  %2223 = vmatpush1.bf16.msra.mxu0 0
  %2224 = vmatprep.subr.bf16.mxu0 0
  %2225 = vmatpush1.bf16.msra.mxu0 0
  %2226 = vmatprep.subr.bf16.mxu0 0
  %2227 = vmatpush1.bf16.msra.mxu0 0
  %2228 = vmatprep.mubr.bf16.mxu0 0
  %2229 = vmatmul.mubr.bf16.gmra.mrb[0].mxu0 %v2191
  %v2230 = vpop.f32.mrb[0].mxu0
  %v2231 = vadd.f32 %v2176, %v2230
  %v2232 = vpop.f32.mrb[0].mxu0
  %v2233 = vpop.f32.mrb[0].mxu0
  %v2234 = vadd.f32 %v2176, %v2233
  %v2235 = vpop.f32.mrb[0].mxu0
  %2236 = vmatprep.mubr.bf16.mxu0 0
  %2237 = vmatmul.mubr.bf16.gmra.mrb[0].mxu0 %v2194
  %v2238 = vpop.f32.mrb[0].mxu0
  %v2239 = vadd.f32 %v2176, %v2238
  %v2240 = vpop.f32.mrb[0].mxu0
  %v2241 = vpop.f32.mrb[0].mxu0
  %v2242 = vpop.f32.mrb[0].mxu0
  %2243 = vdwg.mxu0
  %v2244 = vadd.f32 %v2231, %v1292
  %v2245 = vadd.f32 %v2234, %v1293
  %v2246 = vadd.f32 %v2239, %v1294
  %s2247 = scalar_lea.vmem %s10, 3
  %v2248 = vld [vmem:[%s2247] sm:$0x1]
  %s2249 = scalar_lea.vmem %s11, 3
  %v2250 = vld [vmem:[%s2249] sm:$0x1]
  %v2251 = vsel %vm76, %v2244, 0.0
  %2252 = vadd.xlane.f32.xlu0 %v2251
  %v2253 = vpop.xlane.xlu0 %2252
  %v2254 = vsel %vm76, %v2245, 0.0
  %2255 = vadd.xlane.f32.xlu0 %v2254
  %v2256 = vpop.xlane.xlu0 %2255
  %v2257 = vsel %vm83, %v2246, 0.0
  %2258 = vadd.xlane.f32.xlu0 %v2257
  %v2259 = vpop.xlane.xlu0 %2258
  %v2260 = vmul.f32 %v2253, %v87
  %v2261 = vmul.f32 %v2256, %v87
  %v2262 = vmul.f32 %v2259, %v87
  %v2263 = vsub.f32 %v2244, %v2260
  %v2264 = vsub.f32 %v2245, %v2261
  %v2265 = vsub.f32 %v2246, %v2262
  %v2266 = vmul.f32 %v2263, %v2263
  %v2267 = vmul.f32 %v2264, %v2264
  %v2268 = vmul.f32 %v2265, %v2265
  %v2269 = vsel %vm76, %v2266, 0.0
  %2270 = vadd.xlane.f32.xlu0 %v2269
  %v2271 = vpop.xlane.xlu0 %2270
  %v2272 = vsel %vm76, %v2267, 0.0
  %2273 = vadd.xlane.f32.xlu0 %v2272
  %v2274 = vpop.xlane.xlu0 %2273
  %v2275 = vsel %vm83, %v2268, 0.0
  %2276 = vadd.xlane.f32.xlu0 %v2275
  %v2277 = vpop.xlane.xlu0 %2276
  %v2278 = vmul.f32 %v2271, 0.032258064
  %v2279 = vmul.f32 %v2274, 0.032258064
  %v2280 = vmul.f32 %v2277, 0.032258064
  %v2281 = vrsqrt.pop %v2278
  %v2282 = vmul.f32 %v2278, %v2281
  %vm2283 = vcmp.eq.f32.partialorder %v2278, inf
  %v2284 = vsel %vm2283, %v2278, %v2282
  %vm2285 = vcmp.eq.f32.partialorder %v2278, 0.0
  %v2286 = vand.u32 %v2278, 2147483648
  %v2287 = vsel %vm2285, %v2286, %v2284
  %v2288 = vrsqrt.pop %v2279
  %v2289 = vmul.f32 %v2279, %v2288
  %vm2290 = vcmp.eq.f32.partialorder %v2279, inf
  %v2291 = vsel %vm2290, %v2279, %v2289
  %vm2292 = vcmp.eq.f32.partialorder %v2279, 0.0
  %v2293 = vand.u32 %v2279, 2147483648
  %v2294 = vsel %vm2292, %v2293, %v2291
  %v2295 = vrsqrt.pop %v2280
  %v2296 = vmul.f32 %v2280, %v2295
  %vm2297 = vcmp.eq.f32.partialorder %v2280, inf
  %v2298 = vsel %vm2297, %v2280, %v2296
  %vm2299 = vcmp.eq.f32.partialorder %v2280, 0.0
  %v2300 = vand.u32 %v2280, 2147483648
  %v2301 = vsel %vm2299, %v2300, %v2298
  %v2302 = vadd.f32 %v2287, 1e-06
  %v2303 = vadd.f32 %v2294, 1e-06
  %v2304 = vadd.f32 %v2301, 1e-06
  %v2305 = vrcp.pop %v2302
  %v2306 = vrcp.pop %v2303
  %v2307 = vrcp.pop %v2304
  %v2308 = vmul.f32 %v2263, %v2305
  %v2309 = vmul.f32 %v2264, %v2306
  %v2310 = vmul.f32 %v2265, %v2307
  %v2312 = vlaneseq
  %v2313 = vshrl.u32 %v2312, 7
  %v2314 = vsub.s32 0, %v2313
  %v2315 = vrot.slane %v2248, %v2314
  %v2317 = vmul.f32 %v2308, %v2315
  %v2318 = vmul.f32 %v2309, %v2315
  %v2319 = vmul.f32 %v2310, %v2315
  %v2321 = vlaneseq
  %v2322 = vshrl.u32 %v2321, 7
  %v2323 = vsub.s32 0, %v2322
  %v2324 = vrot.slane %v2250, %v2323
  %v2326 = vadd.f32 %v2317, %v2324
  %v2327 = vadd.f32 %v2318, %v2324
  %v2328 = vadd.f32 %v2319, %v2324
  %s2329 = scalar_lea.vmem %s12, 16
  %v2330 = vld [vmem:[%s2329] sm:$0xf]
  %v2331 = vld [vmem:[%s2329 + $0x4] sm:$0xf]
  %v2332 = vld [vmem:[%s2329 + $0x8] sm:$0xf]
  %v2333 = vld [vmem:[%s2329 + $0xc] sm:$0xf]
  %v2334 = vpack.c.bf16 %v2327, %v2326
  %v2335 = vpack.c.bf16 %v2328, %v2328
  %s2336 = scalar_lea.vmem %s13, 1
  %v2337 = vld [vmem:[%s2336] sm:$0x1]
  %v2339 = vlaneseq
  %v2340 = vshrl.u32 %v2339, 7
  %v2341 = vsub.s32 0, %v2340
  %v2342 = vrot.slane %v2337, %v2341
  %v2348 = vunpack.c.l.b16 %v2330
  %v2349 = vunpack.c.l.b16 %v2331
  %v2350 = vunpack.c.l.b16 %v2332
  %v2351 = vunpack.c.l.b16 %v2333
  %v2352 = vpack.c.b16 %v2349, %v2348
  %v2353 = vpack.c.b16 %v2351, %v2350
  %v2357 = vsel %vm76, %v2334, 0
  %v2360 = vsel %vm76, %v2335, 0
  %2362 = vmatprep.subr.bf16.mxu0 0
  %2363 = vmatpush1.bf16.msra.mxu0 %v2352
  %2364 = vmatprep.subr.bf16.mxu0 0
  %2365 = vmatpush1.bf16.msra.mxu0 %v2353
  %2366 = vmatprep.subr.bf16.mxu0 0
  %2367 = vmatpush1.bf16.msra.mxu0 0
  %2368 = vmatprep.subr.bf16.mxu0 0
  %2369 = vmatpush1.bf16.msra.mxu0 0
  %2370 = vmatprep.subr.bf16.mxu0 0
  %2371 = vmatpush1.bf16.msra.mxu0 0
  %2372 = vmatprep.subr.bf16.mxu0 0
  %2373 = vmatpush1.bf16.msra.mxu0 0
  %2374 = vmatprep.subr.bf16.mxu0 0
  %2375 = vmatpush1.bf16.msra.mxu0 0
  %2376 = vmatprep.subr.bf16.mxu0 0
  %2377 = vmatpush1.bf16.msra.mxu0 0
  %2378 = vmatprep.subr.bf16.mxu0 0
  %2379 = vmatpush1.bf16.msra.mxu0 0
  %2380 = vmatprep.subr.bf16.mxu0 0
  %2381 = vmatpush1.bf16.msra.mxu0 0
  %2382 = vmatprep.subr.bf16.mxu0 0
  %2383 = vmatpush1.bf16.msra.mxu0 0
  %2384 = vmatprep.subr.bf16.mxu0 0
  %2385 = vmatpush1.bf16.msra.mxu0 0
  %2386 = vmatprep.subr.bf16.mxu0 0
  %2387 = vmatpush1.bf16.msra.mxu0 0
  %2388 = vmatprep.subr.bf16.mxu0 0
  %2389 = vmatpush1.bf16.msra.mxu0 0
  %2390 = vmatprep.subr.bf16.mxu0 0
  %2391 = vmatpush1.bf16.msra.mxu0 0
  %2392 = vmatprep.subr.bf16.mxu0 0
  %2393 = vmatpush1.bf16.msra.mxu0 0
  %2394 = vmatprep.mubr.bf16.mxu0 0
  %2395 = vmatmul.mubr.bf16.gmra.mrb[0].mxu0 %v2357
  %v2396 = vpop.f32.mrb[0].mxu0
  %v2397 = vadd.f32 %v2342, %v2396
  %v2398 = vpop.f32.mrb[0].mxu0
  %v2399 = vpop.f32.mrb[0].mxu0
  %v2400 = vadd.f32 %v2342, %v2399
  %v2401 = vpop.f32.mrb[0].mxu0
  %2402 = vmatprep.mubr.bf16.mxu0 0
  %2403 = vmatmul.mubr.bf16.gmra.mrb[0].mxu0 %v2360
  %v2404 = vpop.f32.mrb[0].mxu0
  %v2405 = vadd.f32 %v2342, %v2404
  %v2406 = vpop.f32.mrb[0].mxu0
  %v2407 = vpop.f32.mrb[0].mxu0
  %v2408 = vpop.f32.mrb[0].mxu0
  %2409 = vdwg.mxu0
  %v2410 = vmax.f32 %v2397, 0.0
  %v2411 = vmax.f32 %v2400, 0.0
  %v2412 = vmax.f32 %v2405, 0.0
  %s2413 = scalar_lea.vmem %s14, 32
  %v2414 = vld [vmem:[%s2413] sm:$0xf]
  %v2415 = vld [vmem:[%s2413 + $0x4] sm:$0xf]
  %v2416 = vld [vmem:[%s2413 + $0x8] sm:$0xf]
  %v2417 = vld [vmem:[%s2413 + $0xc] sm:$0xf]
  %v2418 = vld [vmem:[%s2413 + $0x10] sm:$0xf]
  %v2419 = vld [vmem:[%s2413 + $0x14] sm:$0xf]
  %v2420 = vld [vmem:[%s2413 + $0x18] sm:$0xf]
  %v2421 = vld [vmem:[%s2413 + $0x1c] sm:$0xf]
  %v2422 = vpack.c.bf16 %v2411, %v2410
  %v2423 = vpack.c.bf16 %v2412, %v2412
  %v2432 = vunpack.c.l.b16 %v2414
  %v2433 = vunpack.c.l.b16 %v2415
  %v2434 = vunpack.c.l.b16 %v2416
  %v2435 = vunpack.c.l.b16 %v2417
  %v2436 = vunpack.c.l.b16 %v2418
  %v2437 = vunpack.c.l.b16 %v2419
  %v2438 = vunpack.c.l.b16 %v2420
  %v2439 = vunpack.c.l.b16 %v2421
  %v2440 = vpack.c.b16 %v2433, %v2432
  %v2441 = vpack.c.b16 %v2435, %v2434
  %v2442 = vpack.c.b16 %v2437, %v2436
  %v2443 = vpack.c.b16 %v2439, %v2438
  %v2449 = vsel %vm1227, %v2422, 0
  %v2452 = vsel %vm1227, %v2423, 0
  %2454 = vmatprep.subr.bf16.mxu0 0
  %2455 = vmatpush1.bf16.msra.mxu0 %v2440
  %2456 = vmatprep.subr.bf16.mxu0 0
  %2457 = vmatpush1.bf16.msra.mxu0 %v2441
  %2458 = vmatprep.subr.bf16.mxu0 0
  %2459 = vmatpush1.bf16.msra.mxu0 %v2442
  %2460 = vmatprep.subr.bf16.mxu0 0
  %2461 = vmatpush1.bf16.msra.mxu0 %v2443
  %2462 = vmatprep.subr.bf16.mxu0 0
  %2463 = vmatpush1.bf16.msra.mxu0 0
  %2464 = vmatprep.subr.bf16.mxu0 0
  %2465 = vmatpush1.bf16.msra.mxu0 0
  %2466 = vmatprep.subr.bf16.mxu0 0
  %2467 = vmatpush1.bf16.msra.mxu0 0
  %2468 = vmatprep.subr.bf16.mxu0 0
  %2469 = vmatpush1.bf16.msra.mxu0 0
  %2470 = vmatprep.subr.bf16.mxu0 0
  %2471 = vmatpush1.bf16.msra.mxu0 0
  %2472 = vmatprep.subr.bf16.mxu0 0
  %2473 = vmatpush1.bf16.msra.mxu0 0
  %2474 = vmatprep.subr.bf16.mxu0 0
  %2475 = vmatpush1.bf16.msra.mxu0 0
  %2476 = vmatprep.subr.bf16.mxu0 0
  %2477 = vmatpush1.bf16.msra.mxu0 0
  %2478 = vmatprep.subr.bf16.mxu0 0
  %2479 = vmatpush1.bf16.msra.mxu0 0
  %2480 = vmatprep.subr.bf16.mxu0 0
  %2481 = vmatpush1.bf16.msra.mxu0 0
  %2482 = vmatprep.subr.bf16.mxu0 0
  %2483 = vmatpush1.bf16.msra.mxu0 0
  %2484 = vmatprep.subr.bf16.mxu0 0
  %2485 = vmatpush1.bf16.msra.mxu0 0
  %2486 = vmatprep.mubr.bf16.mxu0 0
  %2487 = vmatmul.mubr.bf16.gmra.mrb[0].mxu0 %v2449
  %v2488 = vpop.f32.mrb[0].mxu0
  %v2489 = vadd.f32 0.0, %v2488
  %v2490 = vpop.f32.mrb[0].mxu0
  %v2491 = vpop.f32.mrb[0].mxu0
  %v2492 = vadd.f32 0.0, %v2491
  %v2493 = vpop.f32.mrb[0].mxu0
  %2494 = vmatprep.mubr.bf16.mxu0 0
  %2495 = vmatmul.mubr.bf16.gmra.mrb[0].mxu0 %v2452
  %v2496 = vpop.f32.mrb[0].mxu0
  %v2497 = vadd.f32 0.0, %v2496
  %v2498 = vpop.f32.mrb[0].mxu0
  %v2499 = vpop.f32.mrb[0].mxu0
  %v2500 = vpop.f32.mrb[0].mxu0
  %2501 = vdwg.mxu0
  %v2502 = vadd.f32 %v2244, %v2489
  %v2503 = vadd.f32 %v2245, %v2492
  %v2504 = vadd.f32 %v2246, %v2497
  %s2505 = scalar_lea.vmem %s15, 1
  %v2506 = vld [vmem:[%s2505] sm:$0x1]
  %v2508 = vlaneseq
  %v2509 = vshrl.u32 %v2508, 7
  %v2510 = vsub.s32 0, %v2509
  %v2511 = vrot.slane %v2506, %v2510
  %v2513 = vadd.f32 %v2502, %v2511
  %v2514 = vadd.f32 %v2503, %v2511
  %v2515 = vadd.f32 %v2504, %v2511
  %s2516 = scalar_lea.vmem %s10, 4
  %v2517 = vld [vmem:[%s2516] sm:$0x1]
  %s2518 = scalar_lea.vmem %s11, 4
  %v2519 = vld [vmem:[%s2518] sm:$0x1]
  %v2520 = vsel %vm76, %v2513, 0.0
  %2521 = vadd.xlane.f32.xlu0 %v2520
  %v2522 = vpop.xlane.xlu0 %2521
  %v2523 = vsel %vm76, %v2514, 0.0
  %2524 = vadd.xlane.f32.xlu0 %v2523
  %v2525 = vpop.xlane.xlu0 %2524
  %v2526 = vsel %vm83, %v2515, 0.0
  %2527 = vadd.xlane.f32.xlu0 %v2526
  %v2528 = vpop.xlane.xlu0 %2527
  %v2529 = vmul.f32 %v2522, %v87
  %v2530 = vmul.f32 %v2525, %v87
  %v2531 = vmul.f32 %v2528, %v87
  %v2532 = vsub.f32 %v2513, %v2529
  %v2533 = vsub.f32 %v2514, %v2530
  %v2534 = vsub.f32 %v2515, %v2531
  %v2535 = vmul.f32 %v2532, %v2532
  %v2536 = vmul.f32 %v2533, %v2533
  %v2537 = vmul.f32 %v2534, %v2534
  %v2538 = vsel %vm76, %v2535, 0.0
  %2539 = vadd.xlane.f32.xlu0 %v2538
  %v2540 = vpop.xlane.xlu0 %2539
  %v2541 = vsel %vm76, %v2536, 0.0
  %2542 = vadd.xlane.f32.xlu0 %v2541
  %v2543 = vpop.xlane.xlu0 %2542
  %v2544 = vsel %vm83, %v2537, 0.0
  %2545 = vadd.xlane.f32.xlu0 %v2544
  %v2546 = vpop.xlane.xlu0 %2545
  %v2547 = vmul.f32 %v2540, 0.032258064
  %v2548 = vmul.f32 %v2543, 0.032258064
  %v2549 = vmul.f32 %v2546, 0.032258064
  %v2550 = vrsqrt.pop %v2547
  %v2551 = vmul.f32 %v2547, %v2550
  %vm2552 = vcmp.eq.f32.partialorder %v2547, inf
  %v2553 = vsel %vm2552, %v2547, %v2551
  %vm2554 = vcmp.eq.f32.partialorder %v2547, 0.0
  %v2555 = vand.u32 %v2547, 2147483648
  %v2556 = vsel %vm2554, %v2555, %v2553
  %v2557 = vrsqrt.pop %v2548
  %v2558 = vmul.f32 %v2548, %v2557
  %vm2559 = vcmp.eq.f32.partialorder %v2548, inf
  %v2560 = vsel %vm2559, %v2548, %v2558
  %vm2561 = vcmp.eq.f32.partialorder %v2548, 0.0
  %v2562 = vand.u32 %v2548, 2147483648
  %v2563 = vsel %vm2561, %v2562, %v2560
  %v2564 = vrsqrt.pop %v2549
  %v2565 = vmul.f32 %v2549, %v2564
  %vm2566 = vcmp.eq.f32.partialorder %v2549, inf
  %v2567 = vsel %vm2566, %v2549, %v2565
  %vm2568 = vcmp.eq.f32.partialorder %v2549, 0.0
  %v2569 = vand.u32 %v2549, 2147483648
  %v2570 = vsel %vm2568, %v2569, %v2567
  %v2571 = vadd.f32 %v2556, 1e-06
  %v2572 = vadd.f32 %v2563, 1e-06
  %v2573 = vadd.f32 %v2570, 1e-06
  %v2574 = vrcp.pop %v2571
  %v2575 = vrcp.pop %v2572
  %v2576 = vrcp.pop %v2573
  %v2577 = vmul.f32 %v2532, %v2574
  %v2578 = vmul.f32 %v2533, %v2575
  %v2579 = vmul.f32 %v2534, %v2576
  %v2581 = vlaneseq
  %v2582 = vshrl.u32 %v2581, 7
  %v2583 = vsub.s32 0, %v2582
  %v2584 = vrot.slane %v2517, %v2583
  %v2586 = vmul.f32 %v2577, %v2584
  %v2587 = vmul.f32 %v2578, %v2584
  %v2588 = vmul.f32 %v2579, %v2584
  %v2590 = vlaneseq
  %v2591 = vshrl.u32 %v2590, 7
  %v2592 = vsub.s32 0, %v2591
  %v2593 = vrot.slane %v2519, %v2592
  %v2595 = vadd.f32 %v2586, %v2593
  %v2596 = vadd.f32 %v2587, %v2593
  %v2597 = vadd.f32 %v2588, %v2593
  %v2598 = vld [vmem:[%s2] sm:$0xff]
  %v2599 = vld [vmem:[%s2 + $0x8] sm:$0xff]
  %v2600 = vld [vmem:[%s16] sm:$0xf]
  %v2601 = vld [vmem:[%s16 + $0x4] sm:$0xf]
  %v2602 = vld [vmem:[%s16 + $0x8] sm:$0xf]
  %v2603 = vld [vmem:[%s16 + $0xc] sm:$0xf]
  %v2604 = vld [vmem:[%s16 + $0x10] sm:$0xf]
  %v2605 = vpack.c.bf16 %v2599, %v2598
  %v2606 = vld [vmem:[%s17] sm:$0x1]
  %v2608 = vlaneseq
  %v2609 = vshrl.u32 %v2608, 7
  %v2610 = vsub.s32 0, %v2609
  %v2611 = vrot.slane %v2606, %v2610
  %v2618 = vunpack.c.l.b16 %v2600
  %v2619 = vunpack.c.l.b16 %v2601
  %v2620 = vunpack.c.l.b16 %v2602
  %v2621 = vunpack.c.l.b16 %v2603
  %v2622 = vunpack.c.l.b16 %v2604
  %v2623 = vpack.c.b16 %v2619, %v2618
  %v2624 = vpack.c.b16 %v2621, %v2620
  %v2625 = vpack.c.b16 %v2622, %v2622
  %vm2628 = vcmask 326656
  %v2630 = vsel %vm2628, %v2605, 0
  %vm2632 = vcmask 1043456
  %v2634 = vsel %vm2632, %v2625, 0
  %2636 = vmatprep.subr.bf16.mxu0 0
  %2637 = vmatpush1.bf16.msra.mxu0 %v2623
  %2638 = vmatprep.subr.bf16.mxu0 0
  %2639 = vmatpush1.bf16.msra.mxu0 %v2624
  %2640 = vmatprep.subr.bf16.mxu0 0
  %2641 = vmatpush1.bf16.msra.mxu0 %v2634
  %2642 = vmatprep.subr.bf16.mxu0 0
  %2643 = vmatpush1.bf16.msra.mxu0 0
  %2644 = vmatprep.subr.bf16.mxu0 0
  %2645 = vmatpush1.bf16.msra.mxu0 0
  %2646 = vmatprep.subr.bf16.mxu0 0
  %2647 = vmatpush1.bf16.msra.mxu0 0
  %2648 = vmatprep.subr.bf16.mxu0 0
  %2649 = vmatpush1.bf16.msra.mxu0 0
  %2650 = vmatprep.subr.bf16.mxu0 0
  %2651 = vmatpush1.bf16.msra.mxu0 0
  %2652 = vmatprep.subr.bf16.mxu0 0
  %2653 = vmatpush1.bf16.msra.mxu0 0
  %2654 = vmatprep.subr.bf16.mxu0 0
  %2655 = vmatpush1.bf16.msra.mxu0 0
  %2656 = vmatprep.subr.bf16.mxu0 0
  %2657 = vmatpush1.bf16.msra.mxu0 0
  %2658 = vmatprep.subr.bf16.mxu0 0
  %2659 = vmatpush1.bf16.msra.mxu0 0
  %2660 = vmatprep.subr.bf16.mxu0 0
  %2661 = vmatpush1.bf16.msra.mxu0 0
  %2662 = vmatprep.subr.bf16.mxu0 0
  %2663 = vmatpush1.bf16.msra.mxu0 0
  %2664 = vmatprep.subr.bf16.mxu0 0
  %2665 = vmatpush1.bf16.msra.mxu0 0
  %2666 = vmatprep.subr.bf16.mxu0 0
  %2667 = vmatpush1.bf16.msra.mxu0 0
  %2668 = vmatprep.mubr.bf16.mxu0 0
  %2669 = vmatmul.mubr.bf16.gmra.mrb[0].mxu0 %v2630
  %v2670 = vpop.f32.mrb[0].mxu0
  %v2671 = vadd.f32 %v2611, %v2670
  %v2672 = vpop.f32.mrb[0].mxu0
  %v2673 = vpop.f32.mrb[0].mxu0
  %v2674 = vadd.f32 %v2611, %v2673
  %v2675 = vpop.f32.mrb[0].mxu0
  %2676 = vdwg.mxu0
  %v2677 = vld [vmem:[%s1] sm:$0xff]
  %v2678 = vld [vmem:[%s1 + $0x8] sm:$0xff]
  %v2679 = vadd.f32 %v2677, %v2671
  %v2680 = vadd.f32 %v2678, %v2674
  %v2681 = vld [vmem:[%s4] sm:$0xff]
  %v2682 = vld [vmem:[%s4 + $0x8] sm:$0xff]
  %v2683 = vld [vmem:[%s5] sm:$0xff]
  %v2684 = vld [vmem:[%s5 + $0x8] sm:$0xff]
  %s2685 = scalar_lea.vmem %s10, 5
  %v2686 = vld [vmem:[%s2685] sm:$0x1]
  %s2687 = scalar_lea.vmem %s11, 5
  %v2688 = vld [vmem:[%s2687] sm:$0x1]
  %v2689 = vsel %vm76, %v2679, 0.0
  %2690 = vadd.xlane.f32.xlu0 %v2689
  %v2691 = vpop.xlane.xlu0 %2690
  %v2692 = vsel %vm76, %v2680, 0.0
  %2693 = vadd.xlane.f32.xlu0 %v2692
  %v2694 = vpop.xlane.xlu0 %2693
  %v2695 = vmul.f32 %v2691, %v87
  %v2696 = vmul.f32 %v2694, %v87
  %v2697 = vsub.f32 %v2679, %v2695
  %v2698 = vsub.f32 %v2680, %v2696
  %v2699 = vmul.f32 %v2697, %v2697
  %v2700 = vmul.f32 %v2698, %v2698
  %v2701 = vsel %vm76, %v2699, 0.0
  %2702 = vadd.xlane.f32.xlu0 %v2701
  %v2703 = vpop.xlane.xlu0 %2702
  %v2704 = vsel %vm76, %v2700, 0.0
  %2705 = vadd.xlane.f32.xlu0 %v2704
  %v2706 = vpop.xlane.xlu0 %2705
  %v2707 = vmul.f32 %v2703, 0.032258064
  %v2708 = vmul.f32 %v2706, 0.032258064
  %v2709 = vrsqrt.pop %v2707
  %v2710 = vmul.f32 %v2707, %v2709
  %vm2711 = vcmp.eq.f32.partialorder %v2707, inf
  %v2712 = vsel %vm2711, %v2707, %v2710
  %vm2713 = vcmp.eq.f32.partialorder %v2707, 0.0
  %v2714 = vand.u32 %v2707, 2147483648
  %v2715 = vsel %vm2713, %v2714, %v2712
  %v2716 = vrsqrt.pop %v2708
  %v2717 = vmul.f32 %v2708, %v2716
  %vm2718 = vcmp.eq.f32.partialorder %v2708, inf
  %v2719 = vsel %vm2718, %v2708, %v2717
  %vm2720 = vcmp.eq.f32.partialorder %v2708, 0.0
  %v2721 = vand.u32 %v2708, 2147483648
  %v2722 = vsel %vm2720, %v2721, %v2719
  %v2723 = vadd.f32 %v2715, 1e-06
  %v2724 = vadd.f32 %v2722, 1e-06
  %v2725 = vrcp.pop %v2723
  %v2726 = vrcp.pop %v2724
  %v2727 = vmul.f32 %v2697, %v2725
  %v2728 = vmul.f32 %v2698, %v2726
  %v2730 = vlaneseq
  %v2731 = vshrl.u32 %v2730, 7
  %v2732 = vsub.s32 0, %v2731
  %v2733 = vrot.slane %v2686, %v2732
  %v2735 = vmul.f32 %v2727, %v2733
  %v2736 = vmul.f32 %v2728, %v2733
  %v2738 = vlaneseq
  %v2739 = vshrl.u32 %v2738, 7
  %v2740 = vsub.s32 0, %v2739
  %v2741 = vrot.slane %v2688, %v2740
  %v2743 = vadd.f32 %v2735, %v2741
  %v2744 = vadd.f32 %v2736, %v2741
  %s2745 = scalar_lea.vmem %s6, 32
  %v2746 = vld [vmem:[%s2745] sm:$0xf]
  %v2747 = vld [vmem:[%s2745 + $0x4] sm:$0xf]
  %v2748 = vld [vmem:[%s2745 + $0x8] sm:$0xf]
  %v2749 = vld [vmem:[%s2745 + $0xc] sm:$0xf]
  %v2750 = vpack.c.bf16 %v2744, %v2743
  %s2751 = scalar_lea.vmem %s7, 2
  %v2752 = vld [vmem:[%s2751] sm:$0x1]
  %v2754 = vlaneseq
  %v2755 = vshrl.u32 %v2754, 7
  %v2756 = vsub.s32 0, %v2755
  %v2757 = vrot.slane %v2752, %v2756
  %v2763 = vunpack.c.l.b16 %v2746
  %v2764 = vunpack.c.l.b16 %v2747
  %v2765 = vunpack.c.l.b16 %v2748
  %v2766 = vunpack.c.l.b16 %v2749
  %v2767 = vpack.c.b16 %v2764, %v2763
  %v2768 = vpack.c.b16 %v2766, %v2765
  %v2772 = vsel %vm76, %v2750, 0
  %2774 = vmatprep.subr.bf16.mxu0 0
  %2775 = vmatpush1.bf16.msra.mxu0 %v2767
  %2776 = vmatprep.subr.bf16.mxu0 0
  %2777 = vmatpush1.bf16.msra.mxu0 %v2768
  %2778 = vmatprep.subr.bf16.mxu0 0
  %2779 = vmatpush1.bf16.msra.mxu0 0
  %2780 = vmatprep.subr.bf16.mxu0 0
  %2781 = vmatpush1.bf16.msra.mxu0 0
  %2782 = vmatprep.subr.bf16.mxu0 0
  %2783 = vmatpush1.bf16.msra.mxu0 0
  %2784 = vmatprep.subr.bf16.mxu0 0
  %2785 = vmatpush1.bf16.msra.mxu0 0
  %2786 = vmatprep.subr.bf16.mxu0 0
  %2787 = vmatpush1.bf16.msra.mxu0 0
  %2788 = vmatprep.subr.bf16.mxu0 0
  %2789 = vmatpush1.bf16.msra.mxu0 0
  %2790 = vmatprep.subr.bf16.mxu0 0
  %2791 = vmatpush1.bf16.msra.mxu0 0
  %2792 = vmatprep.subr.bf16.mxu0 0
  %2793 = vmatpush1.bf16.msra.mxu0 0
  %2794 = vmatprep.subr.bf16.mxu0 0
  %2795 = vmatpush1.bf16.msra.mxu0 0
  %2796 = vmatprep.subr.bf16.mxu0 0
  %2797 = vmatpush1.bf16.msra.mxu0 0
  %2798 = vmatprep.subr.bf16.mxu0 0
  %2799 = vmatpush1.bf16.msra.mxu0 0
  %2800 = vmatprep.subr.bf16.mxu0 0
  %2801 = vmatpush1.bf16.msra.mxu0 0
  %2802 = vmatprep.subr.bf16.mxu0 0
  %2803 = vmatpush1.bf16.msra.mxu0 0
  %2804 = vmatprep.subr.bf16.mxu0 0
  %2805 = vmatpush1.bf16.msra.mxu0 0
  %2806 = vmatprep.mubr.bf16.mxu0 0
  %2807 = vmatmul.mubr.bf16.gmra.mrb[0].mxu0 %v2772
  %v2808 = vpop.f32.mrb[0].mxu0
  %v2809 = vadd.f32 %v2757, %v2808
  %v2810 = vpop.f32.mrb[0].mxu0
  %v2811 = vpop.f32.mrb[0].mxu0
  %v2812 = vadd.f32 %v2757, %v2811
  %v2813 = vpop.f32.mrb[0].mxu0
  %2814 = vdwg.mxu0
  %v2815 = vpack.c.bf16 %v2812, %v2809
  %2817 = vrot.lane.b32.xlu0 %v2815, 96
  %v2818 = vpop.permute.xlu0 %2817
  %v2820 = vsel %vm244, %v2815, 0
  %v2823 = vsel %vm244, %v2818, 0
  %2825 = vmatprep.subr.bf16.mxu0 0
  %2826 = vmatpush1.bf16.xpose.msra.mxu0 %v2823
  %2827 = vmatprep.subr.bf16.mxu0 0
  %2828 = vmatpush1.bf16.xpose.msra.mxu0 0
  %2829 = vmatprep.subr.bf16.mxu0 0
  %2830 = vmatpush1.bf16.xpose.msra.mxu0 0
  %2831 = vmatprep.subr.bf16.mxu0 0
  %2832 = vmatpush1.bf16.xpose.msra.mxu0 0
  %2833 = vmatprep.subr.bf16.mxu0 0
  %2834 = vmatpush1.bf16.xpose.msra.mxu0 0
  %2835 = vmatprep.subr.bf16.mxu0 0
  %2836 = vmatpush1.bf16.xpose.msra.mxu0 0
  %2837 = vmatprep.subr.bf16.mxu0 0
  %2838 = vmatpush1.bf16.xpose.msra.mxu0 0
  %2839 = vmatprep.subr.bf16.mxu0 0
  %2840 = vmatpush1.bf16.xpose.msra.mxu0 0
  %2841 = vmatprep.subr.bf16.mxu0 0
  %2842 = vmatpush1.bf16.xpose.msra.mxu0 0
  %2843 = vmatprep.subr.bf16.mxu0 0
  %2844 = vmatpush1.bf16.xpose.msra.mxu0 0
  %2845 = vmatprep.subr.bf16.mxu0 0
  %2846 = vmatpush1.bf16.xpose.msra.mxu0 0
  %2847 = vmatprep.subr.bf16.mxu0 0
  %2848 = vmatpush1.bf16.xpose.msra.mxu0 0
  %2849 = vmatprep.subr.bf16.mxu0 0
  %2850 = vmatpush1.bf16.xpose.msra.mxu0 0
  %2851 = vmatprep.subr.bf16.mxu0 0
  %2852 = vmatpush1.bf16.xpose.msra.mxu0 0
  %2853 = vmatprep.subr.bf16.mxu0 0
  %2854 = vmatpush1.bf16.xpose.msra.mxu0 0
  %2855 = vmatprep.subr.bf16.mxu0 0
  %2856 = vmatpush1.bf16.xpose.msra.mxu0 0
  %2857 = vmatprep.mubr.bf16.mxu0 0
  %2858 = vmatmul.mubr.bf16.gmra.mrb[0].mxu0 %v2820
  %v2859 = vpop.f32.mrb[0].mxu0
  %v2860 = vadd.f32 %v2681, %v2859
  %v2861 = vpop.f32.mrb[0].mxu0
  %v2862 = vpop.f32.mrb[0].mxu0
  %v2863 = vadd.f32 %v2682, %v2862
  %v2864 = vpop.f32.mrb[0].mxu0
  %2865 = vdwg.mxu0
  %v2866 = vsel %vm939, %v2860, -inf
  %2867 = vmax.xlane.f32.xlu0 %v2866
  %v2868 = vpop.xlane.xlu0 %2867
  %v2869 = vsel %vm939, %v2863, -inf
  %2870 = vmax.xlane.f32.xlu0 %v2869
  %v2871 = vpop.xlane.xlu0 %2870
  %v2872 = vsub.f32 %v2860, %v2868
  %v2873 = vsub.f32 %v2863, %v2871
  %v2874 = vmul.f32 %v2872, 1.442695
  %v2875 = vpow.pop %v2874
  %v2876 = vmul.f32 %v2873, 1.442695
  %v2877 = vpow.pop %v2876
  %v2878 = vsel %vm939, %v2875, 0.0
  %2879 = vadd.xlane.f32.xlu0 %v2878
  %v2880 = vpop.xlane.xlu0 %2879
  %v2881 = vsel %vm939, %v2877, 0.0
  %2882 = vadd.xlane.f32.xlu0 %v2881
  %v2883 = vpop.xlane.xlu0 %2882
  %v2884 = vrcp.pop %v2880
  %v2885 = vrcp.pop %v2883
  %v2886 = vmul.f32 %v2875, %v2884
  %v2887 = vmul.f32 %v2877, %v2885
  %v2888 = vpack.c.bf16 %v2887, %v2886
  %2889 = vrot.lane.b32.xlu0 %v2815, 64
  %v2890 = vpop.permute.xlu0 %2889
  %v2893 = vsel %vm939, %v2888, 0
  %2895 = vmatprep.subr.bf16.mxu0 0
  %2896 = vmatpush1.bf16.msra.mxu0 %v2890
  %2897 = vmatprep.subr.bf16.mxu0 0
  %2898 = vmatpush1.bf16.msra.mxu0 0
  %2899 = vmatprep.subr.bf16.mxu0 0
  %2900 = vmatpush1.bf16.msra.mxu0 0
  %2901 = vmatprep.subr.bf16.mxu0 0
  %2902 = vmatpush1.bf16.msra.mxu0 0
  %2903 = vmatprep.subr.bf16.mxu0 0
  %2904 = vmatpush1.bf16.msra.mxu0 0
  %2905 = vmatprep.subr.bf16.mxu0 0
  %2906 = vmatpush1.bf16.msra.mxu0 0
  %2907 = vmatprep.subr.bf16.mxu0 0
  %2908 = vmatpush1.bf16.msra.mxu0 0
  %2909 = vmatprep.subr.bf16.mxu0 0
  %2910 = vmatpush1.bf16.msra.mxu0 0
  %2911 = vmatprep.subr.bf16.mxu0 0
  %2912 = vmatpush1.bf16.msra.mxu0 0
  %2913 = vmatprep.subr.bf16.mxu0 0
  %2914 = vmatpush1.bf16.msra.mxu0 0
  %2915 = vmatprep.subr.bf16.mxu0 0
  %2916 = vmatpush1.bf16.msra.mxu0 0
  %2917 = vmatprep.subr.bf16.mxu0 0
  %2918 = vmatpush1.bf16.msra.mxu0 0
  %2919 = vmatprep.subr.bf16.mxu0 0
  %2920 = vmatpush1.bf16.msra.mxu0 0
  %2921 = vmatprep.subr.bf16.mxu0 0
  %2922 = vmatpush1.bf16.msra.mxu0 0
  %2923 = vmatprep.subr.bf16.mxu0 0
  %2924 = vmatpush1.bf16.msra.mxu0 0
  %2925 = vmatprep.subr.bf16.mxu0 0
  %2926 = vmatpush1.bf16.msra.mxu0 0
  %2927 = vmatprep.mubr.bf16.mxu0 0
  %2928 = vmatmul.mubr.bf16.gmra.mrb[0].mxu0 %v2893
  %v2929 = vpop.f32.mrb[0].mxu0
  %v2930 = vadd.f32 0.0, %v2929
  %v2931 = vpop.f32.mrb[0].mxu0
  %v2932 = vpop.f32.mrb[0].mxu0
  %v2933 = vadd.f32 0.0, %v2932
  %v2934 = vpop.f32.mrb[0].mxu0
  %2935 = vdwg.mxu0
  %2936 = vrot.lane.b32.xlu0 %v2815, 120
  %v2937 = vpop.permute.xlu0 %2936
  %2938 = vrot.lane.b32.xlu0 %v2815, 88
  %v2939 = vpop.permute.xlu0 %2938
  %v2941 = vsel %vm244, %v2937, 0
  %v2944 = vsel %vm244, %v2939, 0
  %2946 = vmatprep.subr.bf16.mxu0 0
  %2947 = vmatpush1.bf16.xpose.msra.mxu0 %v2944
  %2948 = vmatprep.subr.bf16.mxu0 0
  %2949 = vmatpush1.bf16.xpose.msra.mxu0 0
  %2950 = vmatprep.subr.bf16.mxu0 0
  %2951 = vmatpush1.bf16.xpose.msra.mxu0 0
  %2952 = vmatprep.subr.bf16.mxu0 0
  %2953 = vmatpush1.bf16.xpose.msra.mxu0 0
  %2954 = vmatprep.subr.bf16.mxu0 0
  %2955 = vmatpush1.bf16.xpose.msra.mxu0 0
  %2956 = vmatprep.subr.bf16.mxu0 0
  %2957 = vmatpush1.bf16.xpose.msra.mxu0 0
  %2958 = vmatprep.subr.bf16.mxu0 0
  %2959 = vmatpush1.bf16.xpose.msra.mxu0 0
  %2960 = vmatprep.subr.bf16.mxu0 0
  %2961 = vmatpush1.bf16.xpose.msra.mxu0 0
  %2962 = vmatprep.subr.bf16.mxu0 0
  %2963 = vmatpush1.bf16.xpose.msra.mxu0 0
  %2964 = vmatprep.subr.bf16.mxu0 0
  %2965 = vmatpush1.bf16.xpose.msra.mxu0 0
  %2966 = vmatprep.subr.bf16.mxu0 0
  %2967 = vmatpush1.bf16.xpose.msra.mxu0 0
  %2968 = vmatprep.subr.bf16.mxu0 0
  %2969 = vmatpush1.bf16.xpose.msra.mxu0 0
  %2970 = vmatprep.subr.bf16.mxu0 0
  %2971 = vmatpush1.bf16.xpose.msra.mxu0 0
  %2972 = vmatprep.subr.bf16.mxu0 0
  %2973 = vmatpush1.bf16.xpose.msra.mxu0 0
  %2974 = vmatprep.subr.bf16.mxu0 0
  %2975 = vmatpush1.bf16.xpose.msra.mxu0 0
  %2976 = vmatprep.subr.bf16.mxu0 0
  %2977 = vmatpush1.bf16.xpose.msra.mxu0 0
  %2978 = vmatprep.mubr.bf16.mxu0 0
  %2979 = vmatmul.mubr.bf16.gmra.mrb[0].mxu0 %v2941
  %v2980 = vpop.f32.mrb[0].mxu0
  %v2981 = vadd.f32 %v2681, %v2980
  %v2982 = vpop.f32.mrb[0].mxu0
  %v2983 = vpop.f32.mrb[0].mxu0
  %v2984 = vadd.f32 %v2682, %v2983
  %v2985 = vpop.f32.mrb[0].mxu0
  %2986 = vdwg.mxu0
  %v2987 = vsel %vm939, %v2981, -inf
  %2988 = vmax.xlane.f32.xlu0 %v2987
  %v2989 = vpop.xlane.xlu0 %2988
  %v2990 = vsel %vm939, %v2984, -inf
  %2991 = vmax.xlane.f32.xlu0 %v2990
  %v2992 = vpop.xlane.xlu0 %2991
  %v2993 = vsub.f32 %v2981, %v2989
  %v2994 = vsub.f32 %v2984, %v2992
  %v2995 = vmul.f32 %v2993, 1.442695
  %v2996 = vpow.pop %v2995
  %v2997 = vmul.f32 %v2994, 1.442695
  %v2998 = vpow.pop %v2997
  %v2999 = vsel %vm939, %v2996, 0.0
  %3000 = vadd.xlane.f32.xlu0 %v2999
  %v3001 = vpop.xlane.xlu0 %3000
  %v3002 = vsel %vm939, %v2998, 0.0
  %3003 = vadd.xlane.f32.xlu0 %v3002
  %v3004 = vpop.xlane.xlu0 %3003
  %v3005 = vrcp.pop %v3001
  %v3006 = vrcp.pop %v3004
  %v3007 = vmul.f32 %v2996, %v3005
  %v3008 = vmul.f32 %v2998, %v3006
  %v3009 = vpack.c.bf16 %v3008, %v3007
  %3010 = vrot.lane.b32.xlu0 %v2815, 56
  %v3011 = vpop.permute.xlu0 %3010
  %v3014 = vsel %vm939, %v3009, 0
  %3016 = vmatprep.subr.bf16.mxu0 0
  %3017 = vmatpush1.bf16.msra.mxu0 %v3011
  %3018 = vmatprep.subr.bf16.mxu0 0
  %3019 = vmatpush1.bf16.msra.mxu0 0
  %3020 = vmatprep.subr.bf16.mxu0 0
  %3021 = vmatpush1.bf16.msra.mxu0 0
  %3022 = vmatprep.subr.bf16.mxu0 0
  %3023 = vmatpush1.bf16.msra.mxu0 0
  %3024 = vmatprep.subr.bf16.mxu0 0
  %3025 = vmatpush1.bf16.msra.mxu0 0
  %3026 = vmatprep.subr.bf16.mxu0 0
  %3027 = vmatpush1.bf16.msra.mxu0 0
  %3028 = vmatprep.subr.bf16.mxu0 0
  %3029 = vmatpush1.bf16.msra.mxu0 0
  %3030 = vmatprep.subr.bf16.mxu0 0
  %3031 = vmatpush1.bf16.msra.mxu0 0
  %3032 = vmatprep.subr.bf16.mxu0 0
  %3033 = vmatpush1.bf16.msra.mxu0 0
  %3034 = vmatprep.subr.bf16.mxu0 0
  %3035 = vmatpush1.bf16.msra.mxu0 0
  %3036 = vmatprep.subr.bf16.mxu0 0
  %3037 = vmatpush1.bf16.msra.mxu0 0
  %3038 = vmatprep.subr.bf16.mxu0 0
  %3039 = vmatpush1.bf16.msra.mxu0 0
  %3040 = vmatprep.subr.bf16.mxu0 0
  %3041 = vmatpush1.bf16.msra.mxu0 0
  %3042 = vmatprep.subr.bf16.mxu0 0
  %3043 = vmatpush1.bf16.msra.mxu0 0
  %3044 = vmatprep.subr.bf16.mxu0 0
  %3045 = vmatpush1.bf16.msra.mxu0 0
  %3046 = vmatprep.subr.bf16.mxu0 0
  %3047 = vmatpush1.bf16.msra.mxu0 0
  %3048 = vmatprep.mubr.bf16.mxu0 0
  %3049 = vmatmul.mubr.bf16.gmra.mrb[0].mxu0 %v3014
  %v3050 = vpop.f32.mrb[0].mxu0
  %v3051 = vadd.f32 0.0, %v3050
  %v3052 = vpop.f32.mrb[0].mxu0
  %v3053 = vpop.f32.mrb[0].mxu0
  %v3054 = vadd.f32 0.0, %v3053
  %v3055 = vpop.f32.mrb[0].mxu0
  %3056 = vdwg.mxu0
  %3057 = vrot.lane.b32.xlu0 %v2815, 112
  %v3058 = vpop.permute.xlu0 %3057
  %3059 = vrot.lane.b32.xlu0 %v2815, 80
  %v3060 = vpop.permute.xlu0 %3059
  %v3062 = vsel %vm244, %v3058, 0
  %v3065 = vsel %vm244, %v3060, 0
  %3067 = vmatprep.subr.bf16.mxu0 0
  %3068 = vmatpush1.bf16.xpose.msra.mxu0 %v3065
  %3069 = vmatprep.subr.bf16.mxu0 0
  %3070 = vmatpush1.bf16.xpose.msra.mxu0 0
  %3071 = vmatprep.subr.bf16.mxu0 0
  %3072 = vmatpush1.bf16.xpose.msra.mxu0 0
  %3073 = vmatprep.subr.bf16.mxu0 0
  %3074 = vmatpush1.bf16.xpose.msra.mxu0 0
  %3075 = vmatprep.subr.bf16.mxu0 0
  %3076 = vmatpush1.bf16.xpose.msra.mxu0 0
  %3077 = vmatprep.subr.bf16.mxu0 0
  %3078 = vmatpush1.bf16.xpose.msra.mxu0 0
  %3079 = vmatprep.subr.bf16.mxu0 0
  %3080 = vmatpush1.bf16.xpose.msra.mxu0 0
  %3081 = vmatprep.subr.bf16.mxu0 0
  %3082 = vmatpush1.bf16.xpose.msra.mxu0 0
  %3083 = vmatprep.subr.bf16.mxu0 0
  %3084 = vmatpush1.bf16.xpose.msra.mxu0 0
  %3085 = vmatprep.subr.bf16.mxu0 0
  %3086 = vmatpush1.bf16.xpose.msra.mxu0 0
  %3087 = vmatprep.subr.bf16.mxu0 0
  %3088 = vmatpush1.bf16.xpose.msra.mxu0 0
  %3089 = vmatprep.subr.bf16.mxu0 0
  %3090 = vmatpush1.bf16.xpose.msra.mxu0 0
  %3091 = vmatprep.subr.bf16.mxu0 0
  %3092 = vmatpush1.bf16.xpose.msra.mxu0 0
  %3093 = vmatprep.subr.bf16.mxu0 0
  %3094 = vmatpush1.bf16.xpose.msra.mxu0 0
  %3095 = vmatprep.subr.bf16.mxu0 0
  %3096 = vmatpush1.bf16.xpose.msra.mxu0 0
  %3097 = vmatprep.subr.bf16.mxu0 0
  %3098 = vmatpush1.bf16.xpose.msra.mxu0 0
  %3099 = vmatprep.mubr.bf16.mxu0 0
  %3100 = vmatmul.mubr.bf16.gmra.mrb[0].mxu0 %v3062
  %v3101 = vpop.f32.mrb[0].mxu0
  %v3102 = vadd.f32 %v2681, %v3101
  %v3103 = vpop.f32.mrb[0].mxu0
  %v3104 = vpop.f32.mrb[0].mxu0
  %v3105 = vadd.f32 %v2682, %v3104
  %v3106 = vpop.f32.mrb[0].mxu0
  %3107 = vdwg.mxu0
  %v3108 = vsel %vm939, %v3102, -inf
  %3109 = vmax.xlane.f32.xlu0 %v3108
  %v3110 = vpop.xlane.xlu0 %3109
  %v3111 = vsel %vm939, %v3105, -inf
  %3112 = vmax.xlane.f32.xlu0 %v3111
  %v3113 = vpop.xlane.xlu0 %3112
  %v3114 = vsub.f32 %v3102, %v3110
  %v3115 = vsub.f32 %v3105, %v3113
  %v3116 = vmul.f32 %v3114, 1.442695
  %v3117 = vpow.pop %v3116
  %v3118 = vmul.f32 %v3115, 1.442695
  %v3119 = vpow.pop %v3118
  %v3120 = vsel %vm939, %v3117, 0.0
  %3121 = vadd.xlane.f32.xlu0 %v3120
  %v3122 = vpop.xlane.xlu0 %3121
  %v3123 = vsel %vm939, %v3119, 0.0
  %3124 = vadd.xlane.f32.xlu0 %v3123
  %v3125 = vpop.xlane.xlu0 %3124
  %v3126 = vrcp.pop %v3122
  %v3127 = vrcp.pop %v3125
  %v3128 = vmul.f32 %v3117, %v3126
  %v3129 = vmul.f32 %v3119, %v3127
  %v3130 = vpack.c.bf16 %v3129, %v3128
  %3131 = vrot.lane.b32.xlu0 %v2815, 48
  %v3132 = vpop.permute.xlu0 %3131
  %v3135 = vsel %vm939, %v3130, 0
  %3137 = vmatprep.subr.bf16.mxu0 0
  %3138 = vmatpush1.bf16.msra.mxu0 %v3132
  %3139 = vmatprep.subr.bf16.mxu0 0
  %3140 = vmatpush1.bf16.msra.mxu0 0
  %3141 = vmatprep.subr.bf16.mxu0 0
  %3142 = vmatpush1.bf16.msra.mxu0 0
  %3143 = vmatprep.subr.bf16.mxu0 0
  %3144 = vmatpush1.bf16.msra.mxu0 0
  %3145 = vmatprep.subr.bf16.mxu0 0
  %3146 = vmatpush1.bf16.msra.mxu0 0
  %3147 = vmatprep.subr.bf16.mxu0 0
  %3148 = vmatpush1.bf16.msra.mxu0 0
  %3149 = vmatprep.subr.bf16.mxu0 0
  %3150 = vmatpush1.bf16.msra.mxu0 0
  %3151 = vmatprep.subr.bf16.mxu0 0
  %3152 = vmatpush1.bf16.msra.mxu0 0
  %3153 = vmatprep.subr.bf16.mxu0 0
  %3154 = vmatpush1.bf16.msra.mxu0 0
  %3155 = vmatprep.subr.bf16.mxu0 0
  %3156 = vmatpush1.bf16.msra.mxu0 0
  %3157 = vmatprep.subr.bf16.mxu0 0
  %3158 = vmatpush1.bf16.msra.mxu0 0
  %3159 = vmatprep.subr.bf16.mxu0 0
  %3160 = vmatpush1.bf16.msra.mxu0 0
  %3161 = vmatprep.subr.bf16.mxu0 0
  %3162 = vmatpush1.bf16.msra.mxu0 0
  %3163 = vmatprep.subr.bf16.mxu0 0
  %3164 = vmatpush1.bf16.msra.mxu0 0
  %3165 = vmatprep.subr.bf16.mxu0 0
  %3166 = vmatpush1.bf16.msra.mxu0 0
  %3167 = vmatprep.subr.bf16.mxu0 0
  %3168 = vmatpush1.bf16.msra.mxu0 0
  %3169 = vmatprep.mubr.bf16.mxu0 0
  %3170 = vmatmul.mubr.bf16.gmra.mrb[0].mxu0 %v3135
  %v3171 = vpop.f32.mrb[0].mxu0
  %v3172 = vadd.f32 0.0, %v3171
  %v3173 = vpop.f32.mrb[0].mxu0
  %v3174 = vpop.f32.mrb[0].mxu0
  %v3175 = vadd.f32 0.0, %v3174
  %v3176 = vpop.f32.mrb[0].mxu0
  %3177 = vdwg.mxu0
  %3178 = vrot.lane.b32.xlu0 %v2815, 104
  %v3179 = vpop.permute.xlu0 %3178
  %3180 = vrot.lane.b32.xlu0 %v2815, 72
  %v3181 = vpop.permute.xlu0 %3180
  %v3183 = vsel %vm244, %v3179, 0
  %v3186 = vsel %vm244, %v3181, 0
  %3188 = vmatprep.subr.bf16.mxu0 0
  %3189 = vmatpush1.bf16.xpose.msra.mxu0 %v3186
  %3190 = vmatprep.subr.bf16.mxu0 0
  %3191 = vmatpush1.bf16.xpose.msra.mxu0 0
  %3192 = vmatprep.subr.bf16.mxu0 0
  %3193 = vmatpush1.bf16.xpose.msra.mxu0 0
  %3194 = vmatprep.subr.bf16.mxu0 0
  %3195 = vmatpush1.bf16.xpose.msra.mxu0 0
  %3196 = vmatprep.subr.bf16.mxu0 0
  %3197 = vmatpush1.bf16.xpose.msra.mxu0 0
  %3198 = vmatprep.subr.bf16.mxu0 0
  %3199 = vmatpush1.bf16.xpose.msra.mxu0 0
  %3200 = vmatprep.subr.bf16.mxu0 0
  %3201 = vmatpush1.bf16.xpose.msra.mxu0 0
  %3202 = vmatprep.subr.bf16.mxu0 0
  %3203 = vmatpush1.bf16.xpose.msra.mxu0 0
  %3204 = vmatprep.subr.bf16.mxu0 0
  %3205 = vmatpush1.bf16.xpose.msra.mxu0 0
  %3206 = vmatprep.subr.bf16.mxu0 0
  %3207 = vmatpush1.bf16.xpose.msra.mxu0 0
  %3208 = vmatprep.subr.bf16.mxu0 0
  %3209 = vmatpush1.bf16.xpose.msra.mxu0 0
  %3210 = vmatprep.subr.bf16.mxu0 0
  %3211 = vmatpush1.bf16.xpose.msra.mxu0 0
  %3212 = vmatprep.subr.bf16.mxu0 0
  %3213 = vmatpush1.bf16.xpose.msra.mxu0 0
  %3214 = vmatprep.subr.bf16.mxu0 0
  %3215 = vmatpush1.bf16.xpose.msra.mxu0 0
  %3216 = vmatprep.subr.bf16.mxu0 0
  %3217 = vmatpush1.bf16.xpose.msra.mxu0 0
  %3218 = vmatprep.subr.bf16.mxu0 0
  %3219 = vmatpush1.bf16.xpose.msra.mxu0 0
  %3220 = vmatprep.mubr.bf16.mxu0 0
  %3221 = vmatmul.mubr.bf16.gmra.mrb[0].mxu0 %v3183
  %v3222 = vpop.f32.mrb[0].mxu0
  %v3223 = vadd.f32 %v2681, %v3222
  %v3224 = vpop.f32.mrb[0].mxu0
  %v3225 = vpop.f32.mrb[0].mxu0
  %v3226 = vadd.f32 %v2682, %v3225
  %v3227 = vpop.f32.mrb[0].mxu0
  %3228 = vdwg.mxu0
  %v3229 = vsel %vm939, %v3223, -inf
  %3230 = vmax.xlane.f32.xlu0 %v3229
  %v3231 = vpop.xlane.xlu0 %3230
  %v3232 = vsel %vm939, %v3226, -inf
  %3233 = vmax.xlane.f32.xlu0 %v3232
  %v3234 = vpop.xlane.xlu0 %3233
  %v3235 = vsub.f32 %v3223, %v3231
  %v3236 = vsub.f32 %v3226, %v3234
  %v3237 = vmul.f32 %v3235, 1.442695
  %v3238 = vpow.pop %v3237
  %v3239 = vmul.f32 %v3236, 1.442695
  %v3240 = vpow.pop %v3239
  %v3241 = vsel %vm939, %v3238, 0.0
  %3242 = vadd.xlane.f32.xlu0 %v3241
  %v3243 = vpop.xlane.xlu0 %3242
  %v3244 = vsel %vm939, %v3240, 0.0
  %3245 = vadd.xlane.f32.xlu0 %v3244
  %v3246 = vpop.xlane.xlu0 %3245
  %v3247 = vrcp.pop %v3243
  %v3248 = vrcp.pop %v3246
  %v3249 = vmul.f32 %v3238, %v3247
  %v3250 = vmul.f32 %v3240, %v3248
  %v3251 = vpack.c.bf16 %v3250, %v3249
  %3252 = vrot.lane.b32.xlu0 %v2815, 40
  %v3253 = vpop.permute.xlu0 %3252
  %v3256 = vsel %vm939, %v3251, 0
  %3258 = vmatprep.subr.bf16.mxu0 0
  %3259 = vmatpush1.bf16.msra.mxu0 %v3253
  %3260 = vmatprep.subr.bf16.mxu0 0
  %3261 = vmatpush1.bf16.msra.mxu0 0
  %3262 = vmatprep.subr.bf16.mxu0 0
  %3263 = vmatpush1.bf16.msra.mxu0 0
  %3264 = vmatprep.subr.bf16.mxu0 0
  %3265 = vmatpush1.bf16.msra.mxu0 0
  %3266 = vmatprep.subr.bf16.mxu0 0
  %3267 = vmatpush1.bf16.msra.mxu0 0
  %3268 = vmatprep.subr.bf16.mxu0 0
  %3269 = vmatpush1.bf16.msra.mxu0 0
  %3270 = vmatprep.subr.bf16.mxu0 0
  %3271 = vmatpush1.bf16.msra.mxu0 0
  %3272 = vmatprep.subr.bf16.mxu0 0
  %3273 = vmatpush1.bf16.msra.mxu0 0
  %3274 = vmatprep.subr.bf16.mxu0 0
  %3275 = vmatpush1.bf16.msra.mxu0 0
  %3276 = vmatprep.subr.bf16.mxu0 0
  %3277 = vmatpush1.bf16.msra.mxu0 0
  %3278 = vmatprep.subr.bf16.mxu0 0
  %3279 = vmatpush1.bf16.msra.mxu0 0
  %3280 = vmatprep.subr.bf16.mxu0 0
  %3281 = vmatpush1.bf16.msra.mxu0 0
  %3282 = vmatprep.subr.bf16.mxu0 0
  %3283 = vmatpush1.bf16.msra.mxu0 0
  %3284 = vmatprep.subr.bf16.mxu0 0
  %3285 = vmatpush1.bf16.msra.mxu0 0
  %3286 = vmatprep.subr.bf16.mxu0 0
  %3287 = vmatpush1.bf16.msra.mxu0 0
  %3288 = vmatprep.subr.bf16.mxu0 0
  %3289 = vmatpush1.bf16.msra.mxu0 0
  %3290 = vmatprep.mubr.bf16.mxu0 0
  %3291 = vmatmul.mubr.bf16.gmra.mrb[0].mxu0 %v3256
  %v3292 = vpop.f32.mrb[0].mxu0
  %v3293 = vadd.f32 0.0, %v3292
  %v3294 = vpop.f32.mrb[0].mxu0
  %v3295 = vpop.f32.mrb[0].mxu0
  %v3296 = vadd.f32 0.0, %v3295
  %v3297 = vpop.f32.mrb[0].mxu0
  %3298 = vdwg.mxu0
  %3301 = vrot.lane.b32.xlu0 %v3051, 8
  %v3302 = vpop.permute.xlu0 %3301
  %3303 = vrot.lane.b32.xlu0 %v3054, 8
  %v3304 = vpop.permute.xlu0 %3303
  %3309 = vrot.lane.b32.xlu0 %v3172, 16
  %v3310 = vpop.permute.xlu0 %3309
  %3311 = vrot.lane.b32.xlu0 %v3175, 16
  %v3312 = vpop.permute.xlu0 %3311
  %3317 = vrot.lane.b32.xlu0 %v3293, 24
  %v3318 = vpop.permute.xlu0 %3317
  %3319 = vrot.lane.b32.xlu0 %v3296, 24
  %v3320 = vpop.permute.xlu0 %3319
  %v3323 = vsel %vm244, %v2930, %v3302
  %v3324 = vsel %vm244, %v2933, %v3304
  %v3325 = vsel %vm939, %v3323, %v3310
  %v3326 = vsel %vm939, %v3324, %v3312
  %v3327 = vsel %vm943, %v3325, %v3318
  %v3328 = vsel %vm943, %v3326, %v3320
  %s3329 = scalar_lea.vmem %s8, 32
  %v3330 = vld [vmem:[%s3329] sm:$0xf]
  %v3331 = vld [vmem:[%s3329 + $0x4] sm:$0xf]
  %v3332 = vld [vmem:[%s3329 + $0x8] sm:$0xf]
  %v3333 = vld [vmem:[%s3329 + $0xc] sm:$0xf]
  %v3334 = vpack.c.bf16 %v3328, %v3327
  %s3335 = scalar_lea.vmem %s9, 2
  %v3336 = vld [vmem:[%s3335] sm:$0x1]
  %v3338 = vlaneseq
  %v3339 = vshrl.u32 %v3338, 7
  %v3340 = vsub.s32 0, %v3339
  %v3341 = vrot.slane %v3336, %v3340
  %v3347 = vunpack.c.l.b16 %v3330
  %v3348 = vunpack.c.l.b16 %v3331
  %v3349 = vunpack.c.l.b16 %v3332
  %v3350 = vunpack.c.l.b16 %v3333
  %v3351 = vpack.c.b16 %v3348, %v3347
  %v3352 = vpack.c.b16 %v3350, %v3349
  %v3356 = vsel %vm76, %v3334, 0
  %3358 = vmatprep.subr.bf16.mxu0 0
  %3359 = vmatpush1.bf16.msra.mxu0 %v3351
  %3360 = vmatprep.subr.bf16.mxu0 0
  %3361 = vmatpush1.bf16.msra.mxu0 %v3352
  %3362 = vmatprep.subr.bf16.mxu0 0
  %3363 = vmatpush1.bf16.msra.mxu0 0
  %3364 = vmatprep.subr.bf16.mxu0 0
  %3365 = vmatpush1.bf16.msra.mxu0 0
  %3366 = vmatprep.subr.bf16.mxu0 0
  %3367 = vmatpush1.bf16.msra.mxu0 0
  %3368 = vmatprep.subr.bf16.mxu0 0
  %3369 = vmatpush1.bf16.msra.mxu0 0
  %3370 = vmatprep.subr.bf16.mxu0 0
  %3371 = vmatpush1.bf16.msra.mxu0 0
  %3372 = vmatprep.subr.bf16.mxu0 0
  %3373 = vmatpush1.bf16.msra.mxu0 0
  %3374 = vmatprep.subr.bf16.mxu0 0
  %3375 = vmatpush1.bf16.msra.mxu0 0
  %3376 = vmatprep.subr.bf16.mxu0 0
  %3377 = vmatpush1.bf16.msra.mxu0 0
  %3378 = vmatprep.subr.bf16.mxu0 0
  %3379 = vmatpush1.bf16.msra.mxu0 0
  %3380 = vmatprep.subr.bf16.mxu0 0
  %3381 = vmatpush1.bf16.msra.mxu0 0
  %3382 = vmatprep.subr.bf16.mxu0 0
  %3383 = vmatpush1.bf16.msra.mxu0 0
  %3384 = vmatprep.subr.bf16.mxu0 0
  %3385 = vmatpush1.bf16.msra.mxu0 0
  %3386 = vmatprep.subr.bf16.mxu0 0
  %3387 = vmatpush1.bf16.msra.mxu0 0
  %3388 = vmatprep.subr.bf16.mxu0 0
  %3389 = vmatpush1.bf16.msra.mxu0 0
  %3390 = vmatprep.mubr.bf16.mxu0 0
  %3391 = vmatmul.mubr.bf16.gmra.mrb[0].mxu0 %v3356
  %v3392 = vpop.f32.mrb[0].mxu0
  %v3393 = vadd.f32 %v3341, %v3392
  %v3394 = vpop.f32.mrb[0].mxu0
  %v3395 = vpop.f32.mrb[0].mxu0
  %v3396 = vadd.f32 %v3341, %v3395
  %v3397 = vpop.f32.mrb[0].mxu0
  %3398 = vdwg.mxu0
  %v3399 = vadd.f32 %v3393, %v2679
  %v3400 = vadd.f32 %v3396, %v2680
  %s3401 = scalar_lea.vmem %s10, 6
  %v3402 = vld [vmem:[%s3401] sm:$0x1]
  %s3403 = scalar_lea.vmem %s11, 6
  %v3404 = vld [vmem:[%s3403] sm:$0x1]
  %v3405 = vsel %vm76, %v3399, 0.0
  %3406 = vadd.xlane.f32.xlu0 %v3405
  %v3407 = vpop.xlane.xlu0 %3406
  %v3408 = vsel %vm76, %v3400, 0.0
  %3409 = vadd.xlane.f32.xlu0 %v3408
  %v3410 = vpop.xlane.xlu0 %3409
  %v3411 = vmul.f32 %v3407, %v87
  %v3412 = vmul.f32 %v3410, %v87
  %v3413 = vsub.f32 %v3399, %v3411
  %v3414 = vsub.f32 %v3400, %v3412
  %v3415 = vmul.f32 %v3413, %v3413
  %v3416 = vmul.f32 %v3414, %v3414
  %v3417 = vsel %vm76, %v3415, 0.0
  %3418 = vadd.xlane.f32.xlu0 %v3417
  %v3419 = vpop.xlane.xlu0 %3418
  %v3420 = vsel %vm76, %v3416, 0.0
  %3421 = vadd.xlane.f32.xlu0 %v3420
  %v3422 = vpop.xlane.xlu0 %3421
  %v3423 = vmul.f32 %v3419, 0.032258064
  %v3424 = vmul.f32 %v3422, 0.032258064
  %v3425 = vrsqrt.pop %v3423
  %v3426 = vmul.f32 %v3423, %v3425
  %vm3427 = vcmp.eq.f32.partialorder %v3423, inf
  %v3428 = vsel %vm3427, %v3423, %v3426
  %vm3429 = vcmp.eq.f32.partialorder %v3423, 0.0
  %v3430 = vand.u32 %v3423, 2147483648
  %v3431 = vsel %vm3429, %v3430, %v3428
  %v3432 = vrsqrt.pop %v3424
  %v3433 = vmul.f32 %v3424, %v3432
  %vm3434 = vcmp.eq.f32.partialorder %v3424, inf
  %v3435 = vsel %vm3434, %v3424, %v3433
  %vm3436 = vcmp.eq.f32.partialorder %v3424, 0.0
  %v3437 = vand.u32 %v3424, 2147483648
  %v3438 = vsel %vm3436, %v3437, %v3435
  %v3439 = vadd.f32 %v3431, 1e-06
  %v3440 = vadd.f32 %v3438, 1e-06
  %v3441 = vrcp.pop %v3439
  %v3442 = vrcp.pop %v3440
  %v3443 = vmul.f32 %v3413, %v3441
  %v3444 = vmul.f32 %v3414, %v3442
  %v3446 = vlaneseq
  %v3447 = vshrl.u32 %v3446, 7
  %v3448 = vsub.s32 0, %v3447
  %v3449 = vrot.slane %v3402, %v3448
  %v3451 = vmul.f32 %v3443, %v3449
  %v3452 = vmul.f32 %v3444, %v3449
  %v3454 = vlaneseq
  %v3455 = vshrl.u32 %v3454, 7
  %v3456 = vsub.s32 0, %v3455
  %v3457 = vrot.slane %v3404, %v3456
  %v3459 = vadd.f32 %v3451, %v3457
  %v3460 = vadd.f32 %v3452, %v3457
  %s3461 = scalar_lea.vmem %s6, 48
  %v3462 = vld [vmem:[%s3461] sm:$0xf]
  %v3463 = vld [vmem:[%s3461 + $0x4] sm:$0xf]
  %v3464 = vld [vmem:[%s3461 + $0x8] sm:$0xf]
  %v3465 = vld [vmem:[%s3461 + $0xc] sm:$0xf]
  %v3466 = vpack.c.bf16 %v3460, %v3459
  %s3467 = scalar_lea.vmem %s7, 3
  %v3468 = vld [vmem:[%s3467] sm:$0x1]
  %v3470 = vlaneseq
  %v3471 = vshrl.u32 %v3470, 7
  %v3472 = vsub.s32 0, %v3471
  %v3473 = vrot.slane %v3468, %v3472
  %v3479 = vunpack.c.l.b16 %v3462
  %v3480 = vunpack.c.l.b16 %v3463
  %v3481 = vunpack.c.l.b16 %v3464
  %v3482 = vunpack.c.l.b16 %v3465
  %v3483 = vpack.c.b16 %v3480, %v3479
  %v3484 = vpack.c.b16 %v3482, %v3481
  %v3488 = vsel %vm76, %v3466, 0
  %3490 = vmatprep.subr.bf16.mxu0 0
  %3491 = vmatpush1.bf16.msra.mxu0 %v3483
  %3492 = vmatprep.subr.bf16.mxu0 0
  %3493 = vmatpush1.bf16.msra.mxu0 %v3484
  %3494 = vmatprep.subr.bf16.mxu0 0
  %3495 = vmatpush1.bf16.msra.mxu0 0
  %3496 = vmatprep.subr.bf16.mxu0 0
  %3497 = vmatpush1.bf16.msra.mxu0 0
  %3498 = vmatprep.subr.bf16.mxu0 0
  %3499 = vmatpush1.bf16.msra.mxu0 0
  %3500 = vmatprep.subr.bf16.mxu0 0
  %3501 = vmatpush1.bf16.msra.mxu0 0
  %3502 = vmatprep.subr.bf16.mxu0 0
  %3503 = vmatpush1.bf16.msra.mxu0 0
  %3504 = vmatprep.subr.bf16.mxu0 0
  %3505 = vmatpush1.bf16.msra.mxu0 0
  %3506 = vmatprep.subr.bf16.mxu0 0
  %3507 = vmatpush1.bf16.msra.mxu0 0
  %3508 = vmatprep.subr.bf16.mxu0 0
  %3509 = vmatpush1.bf16.msra.mxu0 0
  %3510 = vmatprep.subr.bf16.mxu0 0
  %3511 = vmatpush1.bf16.msra.mxu0 0
  %3512 = vmatprep.subr.bf16.mxu0 0
  %3513 = vmatpush1.bf16.msra.mxu0 0
  %3514 = vmatprep.subr.bf16.mxu0 0
  %3515 = vmatpush1.bf16.msra.mxu0 0
  %3516 = vmatprep.subr.bf16.mxu0 0
  %3517 = vmatpush1.bf16.msra.mxu0 0
  %3518 = vmatprep.subr.bf16.mxu0 0
  %3519 = vmatpush1.bf16.msra.mxu0 0
  %3520 = vmatprep.subr.bf16.mxu0 0
  %3521 = vmatpush1.bf16.msra.mxu0 0
  %3522 = vmatprep.mubr.bf16.mxu0 0
  %3523 = vmatmul.mubr.bf16.gmra.mrb[0].mxu0 %v3488
  %v3524 = vpop.f32.mrb[0].mxu0
  %v3525 = vadd.f32 %v3473, %v3524
  %v3526 = vpop.f32.mrb[0].mxu0
  %v3527 = vpop.f32.mrb[0].mxu0
  %v3528 = vadd.f32 %v3473, %v3527
  %v3529 = vpop.f32.mrb[0].mxu0
  %3530 = vdwg.mxu0
  %v3531 = vpack.c.bf16 %v2596, %v2595
  %v3532 = vpack.c.bf16 %v2597, %v2597
  %3533 = vrot.lane.b32.xlu0 %v3483, 96
  %v3534 = vpop.permute.xlu0 %3533
  %3535 = vrot.lane.b32.xlu0 %v3484, 96
  %v3536 = vpop.permute.xlu0 %3535
  %3539 = vrot.lane.b32.xlu0 %v3473, 96
  %v3540 = vpop.permute.xlu0 %3539
  %v3543 = vsel %vm76, %v3531, 0
  %v3546 = vsel %vm76, %v3532, 0
  %3548 = vmatprep.subr.bf16.mxu0 0
  %3549 = vmatpush1.bf16.msra.mxu0 %v3534
  %3550 = vmatprep.subr.bf16.mxu0 0
  %3551 = vmatpush1.bf16.msra.mxu0 %v3536
  %3552 = vmatprep.subr.bf16.mxu0 0
  %3553 = vmatpush1.bf16.msra.mxu0 0
  %3554 = vmatprep.subr.bf16.mxu0 0
  %3555 = vmatpush1.bf16.msra.mxu0 0
  %3556 = vmatprep.subr.bf16.mxu0 0
  %3557 = vmatpush1.bf16.msra.mxu0 0
  %3558 = vmatprep.subr.bf16.mxu0 0
  %3559 = vmatpush1.bf16.msra.mxu0 0
  %3560 = vmatprep.subr.bf16.mxu0 0
  %3561 = vmatpush1.bf16.msra.mxu0 0
  %3562 = vmatprep.subr.bf16.mxu0 0
  %3563 = vmatpush1.bf16.msra.mxu0 0
  %3564 = vmatprep.subr.bf16.mxu0 0
  %3565 = vmatpush1.bf16.msra.mxu0 0
  %3566 = vmatprep.subr.bf16.mxu0 0
  %3567 = vmatpush1.bf16.msra.mxu0 0
  %3568 = vmatprep.subr.bf16.mxu0 0
  %3569 = vmatpush1.bf16.msra.mxu0 0
  %3570 = vmatprep.subr.bf16.mxu0 0
  %3571 = vmatpush1.bf16.msra.mxu0 0
  %3572 = vmatprep.subr.bf16.mxu0 0
  %3573 = vmatpush1.bf16.msra.mxu0 0
  %3574 = vmatprep.subr.bf16.mxu0 0
  %3575 = vmatpush1.bf16.msra.mxu0 0
  %3576 = vmatprep.subr.bf16.mxu0 0
  %3577 = vmatpush1.bf16.msra.mxu0 0
  %3578 = vmatprep.subr.bf16.mxu0 0
  %3579 = vmatpush1.bf16.msra.mxu0 0
  %3580 = vmatprep.mubr.bf16.mxu0 0
  %3581 = vmatmul.mubr.bf16.gmra.mrb[0].mxu0 %v3543
  %v3582 = vpop.f32.mrb[0].mxu0
  %v3583 = vadd.f32 %v3540, %v3582
  %v3584 = vpop.f32.mrb[0].mxu0
  %v3585 = vpop.f32.mrb[0].mxu0
  %v3586 = vadd.f32 %v3540, %v3585
  %v3587 = vpop.f32.mrb[0].mxu0
  %3588 = vmatprep.mubr.bf16.mxu0 0
  %3589 = vmatmul.mubr.bf16.gmra.mrb[0].mxu0 %v3546
  %v3590 = vpop.f32.mrb[0].mxu0
  %v3591 = vadd.f32 %v3540, %v3590
  %v3592 = vpop.f32.mrb[0].mxu0
  %v3593 = vpop.f32.mrb[0].mxu0
  %v3594 = vpop.f32.mrb[0].mxu0
  %3595 = vdwg.mxu0
  %v3596 = vpack.c.bf16 %v3528, %v3525
  %v3597 = vpack.c.bf16 %v3586, %v3583
  %v3598 = vpack.c.bf16 %v3591, %v3591
  %v3600 = vsel %vm244, %v3596, 0
  %v3603 = vsel %vm244, %v3597, 0
  %v3606 = vsel %vm244, %v3598, 0
  %3608 = vmatprep.subr.bf16.mxu0 0
  %3609 = vmatpush1.bf16.xpose.msra.mxu0 %v3603
  %3610 = vmatprep.subr.bf16.mxu0 0
  %3611 = vmatpush1.bf16.xpose.msra.mxu0 %v3606
  %3612 = vmatprep.subr.bf16.mxu0 0
  %3613 = vmatpush1.bf16.xpose.msra.mxu0 0
  %3614 = vmatprep.subr.bf16.mxu0 0
  %3615 = vmatpush1.bf16.xpose.msra.mxu0 0
  %3616 = vmatprep.subr.bf16.mxu0 0
  %3617 = vmatpush1.bf16.xpose.msra.mxu0 0
  %3618 = vmatprep.subr.bf16.mxu0 0
  %3619 = vmatpush1.bf16.xpose.msra.mxu0 0
  %3620 = vmatprep.subr.bf16.mxu0 0
  %3621 = vmatpush1.bf16.xpose.msra.mxu0 0
  %3622 = vmatprep.subr.bf16.mxu0 0
  %3623 = vmatpush1.bf16.xpose.msra.mxu0 0
  %3624 = vmatprep.subr.bf16.mxu0 0
  %3625 = vmatpush1.bf16.xpose.msra.mxu0 0
  %3626 = vmatprep.subr.bf16.mxu0 0
  %3627 = vmatpush1.bf16.xpose.msra.mxu0 0
  %3628 = vmatprep.subr.bf16.mxu0 0
  %3629 = vmatpush1.bf16.xpose.msra.mxu0 0
  %3630 = vmatprep.subr.bf16.mxu0 0
  %3631 = vmatpush1.bf16.xpose.msra.mxu0 0
  %3632 = vmatprep.subr.bf16.mxu0 0
  %3633 = vmatpush1.bf16.xpose.msra.mxu0 0
  %3634 = vmatprep.subr.bf16.mxu0 0
  %3635 = vmatpush1.bf16.xpose.msra.mxu0 0
  %3636 = vmatprep.subr.bf16.mxu0 0
  %3637 = vmatpush1.bf16.xpose.msra.mxu0 0
  %3638 = vmatprep.subr.bf16.mxu0 0
  %3639 = vmatpush1.bf16.xpose.msra.mxu0 0
  %3640 = vmatprep.mubr.bf16.mxu0 0
  %3641 = vmatmul.mubr.bf16.gmra.mrb[0].mxu0 %v3600
  %v3642 = vpop.f32.mrb[0].mxu0
  %v3643 = vadd.f32 %v2683, %v3642
  %v3644 = vpop.f32.mrb[0].mxu0
  %v3645 = vpop.f32.mrb[0].mxu0
  %v3646 = vadd.f32 %v2684, %v3645
  %v3647 = vpop.f32.mrb[0].mxu0
  %3648 = vdwg.mxu0
  %v3649 = vsel %vm305, %v3643, -inf
  %3650 = vmax.xlane.f32.xlu0 %v3649
  %v3651 = vpop.xlane.xlu0 %3650
  %v3652 = vsel %vm305, %v3646, -inf
  %3653 = vmax.xlane.f32.xlu0 %v3652
  %v3654 = vpop.xlane.xlu0 %3653
  %v3655 = vsub.f32 %v3643, %v3651
  %v3656 = vsub.f32 %v3646, %v3654
  %v3657 = vmul.f32 %v3655, 1.442695
  %v3658 = vpow.pop %v3657
  %v3659 = vmul.f32 %v3656, 1.442695
  %v3660 = vpow.pop %v3659
  %v3661 = vsel %vm305, %v3658, 0.0
  %3662 = vadd.xlane.f32.xlu0 %v3661
  %v3663 = vpop.xlane.xlu0 %3662
  %v3664 = vsel %vm305, %v3660, 0.0
  %3665 = vadd.xlane.f32.xlu0 %v3664
  %v3666 = vpop.xlane.xlu0 %3665
  %v3667 = vrcp.pop %v3663
  %v3668 = vrcp.pop %v3666
  %v3669 = vmul.f32 %v3658, %v3667
  %v3670 = vmul.f32 %v3660, %v3668
  %v3671 = vpack.c.bf16 %v3670, %v3669
  %3674 = vrot.lane.b32.xlu0 %v3597, 96
  %v3675 = vpop.permute.xlu0 %3674
  %3676 = vrot.lane.b32.xlu0 %v3598, 96
  %v3677 = vpop.permute.xlu0 %3676
  %v3680 = vsel %vm305, %v3671, 0
  %v3683 = vsel %vm353, %v3677, 0
  %3685 = vmatprep.subr.bf16.mxu0 0
  %3686 = vmatpush1.bf16.msra.mxu0 %v3675
  %3687 = vmatprep.subr.bf16.mxu0 0
  %3688 = vmatpush1.bf16.msra.mxu0 %v3683
  %3689 = vmatprep.subr.bf16.mxu0 0
  %3690 = vmatpush1.bf16.msra.mxu0 0
  %3691 = vmatprep.subr.bf16.mxu0 0
  %3692 = vmatpush1.bf16.msra.mxu0 0
  %3693 = vmatprep.subr.bf16.mxu0 0
  %3694 = vmatpush1.bf16.msra.mxu0 0
  %3695 = vmatprep.subr.bf16.mxu0 0
  %3696 = vmatpush1.bf16.msra.mxu0 0
  %3697 = vmatprep.subr.bf16.mxu0 0
  %3698 = vmatpush1.bf16.msra.mxu0 0
  %3699 = vmatprep.subr.bf16.mxu0 0
  %3700 = vmatpush1.bf16.msra.mxu0 0
  %3701 = vmatprep.subr.bf16.mxu0 0
  %3702 = vmatpush1.bf16.msra.mxu0 0
  %3703 = vmatprep.subr.bf16.mxu0 0
  %3704 = vmatpush1.bf16.msra.mxu0 0
  %3705 = vmatprep.subr.bf16.mxu0 0
  %3706 = vmatpush1.bf16.msra.mxu0 0
  %3707 = vmatprep.subr.bf16.mxu0 0
  %3708 = vmatpush1.bf16.msra.mxu0 0
  %3709 = vmatprep.subr.bf16.mxu0 0
  %3710 = vmatpush1.bf16.msra.mxu0 0
  %3711 = vmatprep.subr.bf16.mxu0 0
  %3712 = vmatpush1.bf16.msra.mxu0 0
  %3713 = vmatprep.subr.bf16.mxu0 0
  %3714 = vmatpush1.bf16.msra.mxu0 0
  %3715 = vmatprep.subr.bf16.mxu0 0
  %3716 = vmatpush1.bf16.msra.mxu0 0
  %3717 = vmatprep.mubr.bf16.mxu0 0
  %3718 = vmatmul.mubr.bf16.gmra.mrb[0].mxu0 %v3680
  %v3719 = vpop.f32.mrb[0].mxu0
  %v3720 = vadd.f32 0.0, %v3719
  %v3721 = vpop.f32.mrb[0].mxu0
  %v3722 = vpop.f32.mrb[0].mxu0
  %v3723 = vadd.f32 0.0, %v3722
  %v3724 = vpop.f32.mrb[0].mxu0
  %3725 = vdwg.mxu0
  %3727 = vrot.lane.b32.xlu0 %v3596, 120
  %v3728 = vpop.permute.xlu0 %3727
  %3729 = vrot.lane.b32.xlu0 %v3597, 120
  %v3730 = vpop.permute.xlu0 %3729
  %3731 = vrot.lane.b32.xlu0 %v3598, 120
  %v3732 = vpop.permute.xlu0 %3731
  %v3734 = vsel %vm244, %v3728, 0
  %v3737 = vsel %vm244, %v3730, 0
  %v3740 = vsel %vm244, %v3732, 0
  %3742 = vmatprep.subr.bf16.mxu0 0
  %3743 = vmatpush1.bf16.xpose.msra.mxu0 %v3737
  %3744 = vmatprep.subr.bf16.mxu0 0
  %3745 = vmatpush1.bf16.xpose.msra.mxu0 %v3740
  %3746 = vmatprep.subr.bf16.mxu0 0
  %3747 = vmatpush1.bf16.xpose.msra.mxu0 0
  %3748 = vmatprep.subr.bf16.mxu0 0
  %3749 = vmatpush1.bf16.xpose.msra.mxu0 0
  %3750 = vmatprep.subr.bf16.mxu0 0
  %3751 = vmatpush1.bf16.xpose.msra.mxu0 0
  %3752 = vmatprep.subr.bf16.mxu0 0
  %3753 = vmatpush1.bf16.xpose.msra.mxu0 0
  %3754 = vmatprep.subr.bf16.mxu0 0
  %3755 = vmatpush1.bf16.xpose.msra.mxu0 0
  %3756 = vmatprep.subr.bf16.mxu0 0
  %3757 = vmatpush1.bf16.xpose.msra.mxu0 0
  %3758 = vmatprep.subr.bf16.mxu0 0
  %3759 = vmatpush1.bf16.xpose.msra.mxu0 0
  %3760 = vmatprep.subr.bf16.mxu0 0
  %3761 = vmatpush1.bf16.xpose.msra.mxu0 0
  %3762 = vmatprep.subr.bf16.mxu0 0
  %3763 = vmatpush1.bf16.xpose.msra.mxu0 0
  %3764 = vmatprep.subr.bf16.mxu0 0
  %3765 = vmatpush1.bf16.xpose.msra.mxu0 0
  %3766 = vmatprep.subr.bf16.mxu0 0
  %3767 = vmatpush1.bf16.xpose.msra.mxu0 0
  %3768 = vmatprep.subr.bf16.mxu0 0
  %3769 = vmatpush1.bf16.xpose.msra.mxu0 0
  %3770 = vmatprep.subr.bf16.mxu0 0
  %3771 = vmatpush1.bf16.xpose.msra.mxu0 0
  %3772 = vmatprep.subr.bf16.mxu0 0
  %3773 = vmatpush1.bf16.xpose.msra.mxu0 0
  %3774 = vmatprep.mubr.bf16.mxu0 0
  %3775 = vmatmul.mubr.bf16.gmra.mrb[0].mxu0 %v3734
  %v3776 = vpop.f32.mrb[0].mxu0
  %v3777 = vadd.f32 %v2683, %v3776
  %v3778 = vpop.f32.mrb[0].mxu0
  %v3779 = vpop.f32.mrb[0].mxu0
  %v3780 = vadd.f32 %v2684, %v3779
  %v3781 = vpop.f32.mrb[0].mxu0
  %3782 = vdwg.mxu0
  %v3783 = vsel %vm305, %v3777, -inf
  %3784 = vmax.xlane.f32.xlu0 %v3783
  %v3785 = vpop.xlane.xlu0 %3784
  %v3786 = vsel %vm305, %v3780, -inf
  %3787 = vmax.xlane.f32.xlu0 %v3786
  %v3788 = vpop.xlane.xlu0 %3787
  %v3789 = vsub.f32 %v3777, %v3785
  %v3790 = vsub.f32 %v3780, %v3788
  %v3791 = vmul.f32 %v3789, 1.442695
  %v3792 = vpow.pop %v3791
  %v3793 = vmul.f32 %v3790, 1.442695
  %v3794 = vpow.pop %v3793
  %v3795 = vsel %vm305, %v3792, 0.0
  %3796 = vadd.xlane.f32.xlu0 %v3795
  %v3797 = vpop.xlane.xlu0 %3796
  %v3798 = vsel %vm305, %v3794, 0.0
  %3799 = vadd.xlane.f32.xlu0 %v3798
  %v3800 = vpop.xlane.xlu0 %3799
  %v3801 = vrcp.pop %v3797
  %v3802 = vrcp.pop %v3800
  %v3803 = vmul.f32 %v3792, %v3801
  %v3804 = vmul.f32 %v3794, %v3802
  %v3805 = vpack.c.bf16 %v3804, %v3803
  %3806 = vrot.lane.b32.xlu0 %v3597, 88
  %v3807 = vpop.permute.xlu0 %3806
  %3808 = vrot.lane.b32.xlu0 %v3598, 88
  %v3809 = vpop.permute.xlu0 %3808
  %v3812 = vsel %vm305, %v3805, 0
  %v3815 = vsel %vm353, %v3809, 0
  %3817 = vmatprep.subr.bf16.mxu0 0
  %3818 = vmatpush1.bf16.msra.mxu0 %v3807
  %3819 = vmatprep.subr.bf16.mxu0 0
  %3820 = vmatpush1.bf16.msra.mxu0 %v3815
  %3821 = vmatprep.subr.bf16.mxu0 0
  %3822 = vmatpush1.bf16.msra.mxu0 0
  %3823 = vmatprep.subr.bf16.mxu0 0
  %3824 = vmatpush1.bf16.msra.mxu0 0
  %3825 = vmatprep.subr.bf16.mxu0 0
  %3826 = vmatpush1.bf16.msra.mxu0 0
  %3827 = vmatprep.subr.bf16.mxu0 0
  %3828 = vmatpush1.bf16.msra.mxu0 0
  %3829 = vmatprep.subr.bf16.mxu0 0
  %3830 = vmatpush1.bf16.msra.mxu0 0
  %3831 = vmatprep.subr.bf16.mxu0 0
  %3832 = vmatpush1.bf16.msra.mxu0 0
  %3833 = vmatprep.subr.bf16.mxu0 0
  %3834 = vmatpush1.bf16.msra.mxu0 0
  %3835 = vmatprep.subr.bf16.mxu0 0
  %3836 = vmatpush1.bf16.msra.mxu0 0
  %3837 = vmatprep.subr.bf16.mxu0 0
  %3838 = vmatpush1.bf16.msra.mxu0 0
  %3839 = vmatprep.subr.bf16.mxu0 0
  %3840 = vmatpush1.bf16.msra.mxu0 0
  %3841 = vmatprep.subr.bf16.mxu0 0
  %3842 = vmatpush1.bf16.msra.mxu0 0
  %3843 = vmatprep.subr.bf16.mxu0 0
  %3844 = vmatpush1.bf16.msra.mxu0 0
  %3845 = vmatprep.subr.bf16.mxu0 0
  %3846 = vmatpush1.bf16.msra.mxu0 0
  %3847 = vmatprep.subr.bf16.mxu0 0
  %3848 = vmatpush1.bf16.msra.mxu0 0
  %3849 = vmatprep.mubr.bf16.mxu0 0
  %3850 = vmatmul.mubr.bf16.gmra.mrb[0].mxu0 %v3812
  %v3851 = vpop.f32.mrb[0].mxu0
  %v3852 = vadd.f32 0.0, %v3851
  %v3853 = vpop.f32.mrb[0].mxu0
  %v3854 = vpop.f32.mrb[0].mxu0
  %v3855 = vadd.f32 0.0, %v3854
  %v3856 = vpop.f32.mrb[0].mxu0
  %3857 = vdwg.mxu0
  %3858 = vrot.lane.b32.xlu0 %v3596, 112
  %v3859 = vpop.permute.xlu0 %3858
  %3860 = vrot.lane.b32.xlu0 %v3597, 112
  %v3861 = vpop.permute.xlu0 %3860
  %3862 = vrot.lane.b32.xlu0 %v3598, 112
  %v3863 = vpop.permute.xlu0 %3862
  %v3865 = vsel %vm244, %v3859, 0
  %v3868 = vsel %vm244, %v3861, 0
  %v3871 = vsel %vm244, %v3863, 0
  %3873 = vmatprep.subr.bf16.mxu0 0
  %3874 = vmatpush1.bf16.xpose.msra.mxu0 %v3868
  %3875 = vmatprep.subr.bf16.mxu0 0
  %3876 = vmatpush1.bf16.xpose.msra.mxu0 %v3871
  %3877 = vmatprep.subr.bf16.mxu0 0
  %3878 = vmatpush1.bf16.xpose.msra.mxu0 0
  %3879 = vmatprep.subr.bf16.mxu0 0
  %3880 = vmatpush1.bf16.xpose.msra.mxu0 0
  %3881 = vmatprep.subr.bf16.mxu0 0
  %3882 = vmatpush1.bf16.xpose.msra.mxu0 0
  %3883 = vmatprep.subr.bf16.mxu0 0
  %3884 = vmatpush1.bf16.xpose.msra.mxu0 0
  %3885 = vmatprep.subr.bf16.mxu0 0
  %3886 = vmatpush1.bf16.xpose.msra.mxu0 0
  %3887 = vmatprep.subr.bf16.mxu0 0
  %3888 = vmatpush1.bf16.xpose.msra.mxu0 0
  %3889 = vmatprep.subr.bf16.mxu0 0
  %3890 = vmatpush1.bf16.xpose.msra.mxu0 0
  %3891 = vmatprep.subr.bf16.mxu0 0
  %3892 = vmatpush1.bf16.xpose.msra.mxu0 0
  %3893 = vmatprep.subr.bf16.mxu0 0
  %3894 = vmatpush1.bf16.xpose.msra.mxu0 0
  %3895 = vmatprep.subr.bf16.mxu0 0
  %3896 = vmatpush1.bf16.xpose.msra.mxu0 0
  %3897 = vmatprep.subr.bf16.mxu0 0
  %3898 = vmatpush1.bf16.xpose.msra.mxu0 0
  %3899 = vmatprep.subr.bf16.mxu0 0
  %3900 = vmatpush1.bf16.xpose.msra.mxu0 0
  %3901 = vmatprep.subr.bf16.mxu0 0
  %3902 = vmatpush1.bf16.xpose.msra.mxu0 0
  %3903 = vmatprep.subr.bf16.mxu0 0
  %3904 = vmatpush1.bf16.xpose.msra.mxu0 0
  %3905 = vmatprep.mubr.bf16.mxu0 0
  %3906 = vmatmul.mubr.bf16.gmra.mrb[0].mxu0 %v3865
  %v3907 = vpop.f32.mrb[0].mxu0
  %v3908 = vadd.f32 %v2683, %v3907
  %v3909 = vpop.f32.mrb[0].mxu0
  %v3910 = vpop.f32.mrb[0].mxu0
  %v3911 = vadd.f32 %v2684, %v3910
  %v3912 = vpop.f32.mrb[0].mxu0
  %3913 = vdwg.mxu0
  %v3914 = vsel %vm305, %v3908, -inf
  %3915 = vmax.xlane.f32.xlu0 %v3914
  %v3916 = vpop.xlane.xlu0 %3915
  %v3917 = vsel %vm305, %v3911, -inf
  %3918 = vmax.xlane.f32.xlu0 %v3917
  %v3919 = vpop.xlane.xlu0 %3918
  %v3920 = vsub.f32 %v3908, %v3916
  %v3921 = vsub.f32 %v3911, %v3919
  %v3922 = vmul.f32 %v3920, 1.442695
  %v3923 = vpow.pop %v3922
  %v3924 = vmul.f32 %v3921, 1.442695
  %v3925 = vpow.pop %v3924
  %v3926 = vsel %vm305, %v3923, 0.0
  %3927 = vadd.xlane.f32.xlu0 %v3926
  %v3928 = vpop.xlane.xlu0 %3927
  %v3929 = vsel %vm305, %v3925, 0.0
  %3930 = vadd.xlane.f32.xlu0 %v3929
  %v3931 = vpop.xlane.xlu0 %3930
  %v3932 = vrcp.pop %v3928
  %v3933 = vrcp.pop %v3931
  %v3934 = vmul.f32 %v3923, %v3932
  %v3935 = vmul.f32 %v3925, %v3933
  %v3936 = vpack.c.bf16 %v3935, %v3934
  %3937 = vrot.lane.b32.xlu0 %v3597, 80
  %v3938 = vpop.permute.xlu0 %3937
  %3939 = vrot.lane.b32.xlu0 %v3598, 80
  %v3940 = vpop.permute.xlu0 %3939
  %v3943 = vsel %vm305, %v3936, 0
  %v3946 = vsel %vm353, %v3940, 0
  %3948 = vmatprep.subr.bf16.mxu0 0
  %3949 = vmatpush1.bf16.msra.mxu0 %v3938
  %3950 = vmatprep.subr.bf16.mxu0 0
  %3951 = vmatpush1.bf16.msra.mxu0 %v3946
  %3952 = vmatprep.subr.bf16.mxu0 0
  %3953 = vmatpush1.bf16.msra.mxu0 0
  %3954 = vmatprep.subr.bf16.mxu0 0
  %3955 = vmatpush1.bf16.msra.mxu0 0
  %3956 = vmatprep.subr.bf16.mxu0 0
  %3957 = vmatpush1.bf16.msra.mxu0 0
  %3958 = vmatprep.subr.bf16.mxu0 0
  %3959 = vmatpush1.bf16.msra.mxu0 0
  %3960 = vmatprep.subr.bf16.mxu0 0
  %3961 = vmatpush1.bf16.msra.mxu0 0
  %3962 = vmatprep.subr.bf16.mxu0 0
  %3963 = vmatpush1.bf16.msra.mxu0 0
  %3964 = vmatprep.subr.bf16.mxu0 0
  %3965 = vmatpush1.bf16.msra.mxu0 0
  %3966 = vmatprep.subr.bf16.mxu0 0
  %3967 = vmatpush1.bf16.msra.mxu0 0
  %3968 = vmatprep.subr.bf16.mxu0 0
  %3969 = vmatpush1.bf16.msra.mxu0 0
  %3970 = vmatprep.subr.bf16.mxu0 0
  %3971 = vmatpush1.bf16.msra.mxu0 0
  %3972 = vmatprep.subr.bf16.mxu0 0
  %3973 = vmatpush1.bf16.msra.mxu0 0
  %3974 = vmatprep.subr.bf16.mxu0 0
  %3975 = vmatpush1.bf16.msra.mxu0 0
  %3976 = vmatprep.subr.bf16.mxu0 0
  %3977 = vmatpush1.bf16.msra.mxu0 0
  %3978 = vmatprep.subr.bf16.mxu0 0
  %3979 = vmatpush1.bf16.msra.mxu0 0
  %3980 = vmatprep.mubr.bf16.mxu0 0
  %3981 = vmatmul.mubr.bf16.gmra.mrb[0].mxu0 %v3943
  %v3982 = vpop.f32.mrb[0].mxu0
  %v3983 = vadd.f32 0.0, %v3982
  %v3984 = vpop.f32.mrb[0].mxu0
  %v3985 = vpop.f32.mrb[0].mxu0
  %v3986 = vadd.f32 0.0, %v3985
  %v3987 = vpop.f32.mrb[0].mxu0
  %3988 = vdwg.mxu0
  %3989 = vrot.lane.b32.xlu0 %v3596, 104
  %v3990 = vpop.permute.xlu0 %3989
  %3991 = vrot.lane.b32.xlu0 %v3597, 104
  %v3992 = vpop.permute.xlu0 %3991
  %3993 = vrot.lane.b32.xlu0 %v3598, 104
  %v3994 = vpop.permute.xlu0 %3993
  %v3996 = vsel %vm244, %v3990, 0
  %v3999 = vsel %vm244, %v3992, 0
  %v4002 = vsel %vm244, %v3994, 0
  %4004 = vmatprep.subr.bf16.mxu0 0
  %4005 = vmatpush1.bf16.xpose.msra.mxu0 %v3999
  %4006 = vmatprep.subr.bf16.mxu0 0
  %4007 = vmatpush1.bf16.xpose.msra.mxu0 %v4002
  %4008 = vmatprep.subr.bf16.mxu0 0
  %4009 = vmatpush1.bf16.xpose.msra.mxu0 0
  %4010 = vmatprep.subr.bf16.mxu0 0
  %4011 = vmatpush1.bf16.xpose.msra.mxu0 0
  %4012 = vmatprep.subr.bf16.mxu0 0
  %4013 = vmatpush1.bf16.xpose.msra.mxu0 0
  %4014 = vmatprep.subr.bf16.mxu0 0
  %4015 = vmatpush1.bf16.xpose.msra.mxu0 0
  %4016 = vmatprep.subr.bf16.mxu0 0
  %4017 = vmatpush1.bf16.xpose.msra.mxu0 0
  %4018 = vmatprep.subr.bf16.mxu0 0
  %4019 = vmatpush1.bf16.xpose.msra.mxu0 0
  %4020 = vmatprep.subr.bf16.mxu0 0
  %4021 = vmatpush1.bf16.xpose.msra.mxu0 0
  %4022 = vmatprep.subr.bf16.mxu0 0
  %4023 = vmatpush1.bf16.xpose.msra.mxu0 0
  %4024 = vmatprep.subr.bf16.mxu0 0
  %4025 = vmatpush1.bf16.xpose.msra.mxu0 0
  %4026 = vmatprep.subr.bf16.mxu0 0
  %4027 = vmatpush1.bf16.xpose.msra.mxu0 0
  %4028 = vmatprep.subr.bf16.mxu0 0
  %4029 = vmatpush1.bf16.xpose.msra.mxu0 0
  %4030 = vmatprep.subr.bf16.mxu0 0
  %4031 = vmatpush1.bf16.xpose.msra.mxu0 0
  %4032 = vmatprep.subr.bf16.mxu0 0
  %4033 = vmatpush1.bf16.xpose.msra.mxu0 0
  %4034 = vmatprep.subr.bf16.mxu0 0
  %4035 = vmatpush1.bf16.xpose.msra.mxu0 0
  %4036 = vmatprep.mubr.bf16.mxu0 0
  %4037 = vmatmul.mubr.bf16.gmra.mrb[0].mxu0 %v3996
  %v4038 = vpop.f32.mrb[0].mxu0
  %v4039 = vadd.f32 %v2683, %v4038
  %v4040 = vpop.f32.mrb[0].mxu0
  %v4041 = vpop.f32.mrb[0].mxu0
  %v4042 = vadd.f32 %v2684, %v4041
  %v4043 = vpop.f32.mrb[0].mxu0
  %4044 = vdwg.mxu0
  %v4045 = vsel %vm305, %v4039, -inf
  %4046 = vmax.xlane.f32.xlu0 %v4045
  %v4047 = vpop.xlane.xlu0 %4046
  %v4048 = vsel %vm305, %v4042, -inf
  %4049 = vmax.xlane.f32.xlu0 %v4048
  %v4050 = vpop.xlane.xlu0 %4049
  %v4051 = vsub.f32 %v4039, %v4047
  %v4052 = vsub.f32 %v4042, %v4050
  %v4053 = vmul.f32 %v4051, 1.442695
  %v4054 = vpow.pop %v4053
  %v4055 = vmul.f32 %v4052, 1.442695
  %v4056 = vpow.pop %v4055
  %v4057 = vsel %vm305, %v4054, 0.0
  %4058 = vadd.xlane.f32.xlu0 %v4057
  %v4059 = vpop.xlane.xlu0 %4058
  %v4060 = vsel %vm305, %v4056, 0.0
  %4061 = vadd.xlane.f32.xlu0 %v4060
  %v4062 = vpop.xlane.xlu0 %4061
  %v4063 = vrcp.pop %v4059
  %v4064 = vrcp.pop %v4062
  %v4065 = vmul.f32 %v4054, %v4063
  %v4066 = vmul.f32 %v4056, %v4064
  %v4067 = vpack.c.bf16 %v4066, %v4065
  %4068 = vrot.lane.b32.xlu0 %v3597, 72
  %v4069 = vpop.permute.xlu0 %4068
  %4070 = vrot.lane.b32.xlu0 %v3598, 72
  %v4071 = vpop.permute.xlu0 %4070
  %v4074 = vsel %vm305, %v4067, 0
  %v4077 = vsel %vm353, %v4071, 0
  %4079 = vmatprep.subr.bf16.mxu0 0
  %4080 = vmatpush1.bf16.msra.mxu0 %v4069
  %4081 = vmatprep.subr.bf16.mxu0 0
  %4082 = vmatpush1.bf16.msra.mxu0 %v4077
  %4083 = vmatprep.subr.bf16.mxu0 0
  %4084 = vmatpush1.bf16.msra.mxu0 0
  %4085 = vmatprep.subr.bf16.mxu0 0
  %4086 = vmatpush1.bf16.msra.mxu0 0
  %4087 = vmatprep.subr.bf16.mxu0 0
  %4088 = vmatpush1.bf16.msra.mxu0 0
  %4089 = vmatprep.subr.bf16.mxu0 0
  %4090 = vmatpush1.bf16.msra.mxu0 0
  %4091 = vmatprep.subr.bf16.mxu0 0
  %4092 = vmatpush1.bf16.msra.mxu0 0
  %4093 = vmatprep.subr.bf16.mxu0 0
  %4094 = vmatpush1.bf16.msra.mxu0 0
  %4095 = vmatprep.subr.bf16.mxu0 0
  %4096 = vmatpush1.bf16.msra.mxu0 0
  %4097 = vmatprep.subr.bf16.mxu0 0
  %4098 = vmatpush1.bf16.msra.mxu0 0
  %4099 = vmatprep.subr.bf16.mxu0 0
  %4100 = vmatpush1.bf16.msra.mxu0 0
  %4101 = vmatprep.subr.bf16.mxu0 0
  %4102 = vmatpush1.bf16.msra.mxu0 0
  %4103 = vmatprep.subr.bf16.mxu0 0
  %4104 = vmatpush1.bf16.msra.mxu0 0
  %4105 = vmatprep.subr.bf16.mxu0 0
  %4106 = vmatpush1.bf16.msra.mxu0 0
  %4107 = vmatprep.subr.bf16.mxu0 0
  %4108 = vmatpush1.bf16.msra.mxu0 0
  %4109 = vmatprep.subr.bf16.mxu0 0
  %4110 = vmatpush1.bf16.msra.mxu0 0
  %4111 = vmatprep.mubr.bf16.mxu0 0
  %4112 = vmatmul.mubr.bf16.gmra.mrb[0].mxu0 %v4074
  %v4113 = vpop.f32.mrb[0].mxu0
  %v4114 = vadd.f32 0.0, %v4113
  %v4115 = vpop.f32.mrb[0].mxu0
  %v4116 = vpop.f32.mrb[0].mxu0
  %v4117 = vadd.f32 0.0, %v4116
  %v4118 = vpop.f32.mrb[0].mxu0
  %4119 = vdwg.mxu0
  %4122 = vrot.lane.b32.xlu0 %v3852, 8
  %v4123 = vpop.permute.xlu0 %4122
  %4124 = vrot.lane.b32.xlu0 %v3855, 8
  %v4125 = vpop.permute.xlu0 %4124
  %4130 = vrot.lane.b32.xlu0 %v3983, 16
  %v4131 = vpop.permute.xlu0 %4130
  %4132 = vrot.lane.b32.xlu0 %v3986, 16
  %v4133 = vpop.permute.xlu0 %4132
  %4138 = vrot.lane.b32.xlu0 %v4114, 24
  %v4139 = vpop.permute.xlu0 %4138
  %4140 = vrot.lane.b32.xlu0 %v4117, 24
  %v4141 = vpop.permute.xlu0 %4140
  %v4144 = vsel %vm244, %v3720, %v4123
  %v4145 = vsel %vm244, %v3723, %v4125
  %v4146 = vsel %vm939, %v4144, %v4131
  %v4147 = vsel %vm939, %v4145, %v4133
  %v4148 = vsel %vm943, %v4146, %v4139
  %v4149 = vsel %vm943, %v4147, %v4141
  %s4150 = scalar_lea.vmem %s8, 48
  %v4151 = vld [vmem:[%s4150] sm:$0xf]
  %v4152 = vld [vmem:[%s4150 + $0x4] sm:$0xf]
  %v4153 = vld [vmem:[%s4150 + $0x8] sm:$0xf]
  %v4154 = vld [vmem:[%s4150 + $0xc] sm:$0xf]
  %v4155 = vpack.c.bf16 %v4149, %v4148
  %s4156 = scalar_lea.vmem %s9, 3
  %v4157 = vld [vmem:[%s4156] sm:$0x1]
  %v4159 = vlaneseq
  %v4160 = vshrl.u32 %v4159, 7
  %v4161 = vsub.s32 0, %v4160
  %v4162 = vrot.slane %v4157, %v4161
  %v4168 = vunpack.c.l.b16 %v4151
  %v4169 = vunpack.c.l.b16 %v4152
  %v4170 = vunpack.c.l.b16 %v4153
  %v4171 = vunpack.c.l.b16 %v4154
  %v4172 = vpack.c.b16 %v4169, %v4168
  %v4173 = vpack.c.b16 %v4171, %v4170
  %v4177 = vsel %vm76, %v4155, 0
  %4179 = vmatprep.subr.bf16.mxu0 0
  %4180 = vmatpush1.bf16.msra.mxu0 %v4172
  %4181 = vmatprep.subr.bf16.mxu0 0
  %4182 = vmatpush1.bf16.msra.mxu0 %v4173
  %4183 = vmatprep.subr.bf16.mxu0 0
  %4184 = vmatpush1.bf16.msra.mxu0 0
  %4185 = vmatprep.subr.bf16.mxu0 0
  %4186 = vmatpush1.bf16.msra.mxu0 0
  %4187 = vmatprep.subr.bf16.mxu0 0
  %4188 = vmatpush1.bf16.msra.mxu0 0
  %4189 = vmatprep.subr.bf16.mxu0 0
  %4190 = vmatpush1.bf16.msra.mxu0 0
  %4191 = vmatprep.subr.bf16.mxu0 0
  %4192 = vmatpush1.bf16.msra.mxu0 0
  %4193 = vmatprep.subr.bf16.mxu0 0
  %4194 = vmatpush1.bf16.msra.mxu0 0
  %4195 = vmatprep.subr.bf16.mxu0 0
  %4196 = vmatpush1.bf16.msra.mxu0 0
  %4197 = vmatprep.subr.bf16.mxu0 0
  %4198 = vmatpush1.bf16.msra.mxu0 0
  %4199 = vmatprep.subr.bf16.mxu0 0
  %4200 = vmatpush1.bf16.msra.mxu0 0
  %4201 = vmatprep.subr.bf16.mxu0 0
  %4202 = vmatpush1.bf16.msra.mxu0 0
  %4203 = vmatprep.subr.bf16.mxu0 0
  %4204 = vmatpush1.bf16.msra.mxu0 0
  %4205 = vmatprep.subr.bf16.mxu0 0
  %4206 = vmatpush1.bf16.msra.mxu0 0
  %4207 = vmatprep.subr.bf16.mxu0 0
  %4208 = vmatpush1.bf16.msra.mxu0 0
  %4209 = vmatprep.subr.bf16.mxu0 0
  %4210 = vmatpush1.bf16.msra.mxu0 0
  %4211 = vmatprep.mubr.bf16.mxu0 0
  %4212 = vmatmul.mubr.bf16.gmra.mrb[0].mxu0 %v4177
  %v4213 = vpop.f32.mrb[0].mxu0
  %v4214 = vadd.f32 %v4162, %v4213
  %v4215 = vpop.f32.mrb[0].mxu0
  %v4216 = vpop.f32.mrb[0].mxu0
  %v4217 = vadd.f32 %v4162, %v4216
  %v4218 = vpop.f32.mrb[0].mxu0
  %4219 = vdwg.mxu0
  %v4220 = vadd.f32 %v4214, %v3399
  %v4221 = vadd.f32 %v4217, %v3400
  %s4222 = scalar_lea.vmem %s10, 7
  %v4223 = vld [vmem:[%s4222] sm:$0x1]
  %s4224 = scalar_lea.vmem %s11, 7
  %v4225 = vld [vmem:[%s4224] sm:$0x1]
  %v4226 = vsel %vm76, %v4220, 0.0
  %4227 = vadd.xlane.f32.xlu0 %v4226
  %v4228 = vpop.xlane.xlu0 %4227
  %v4229 = vsel %vm76, %v4221, 0.0
  %4230 = vadd.xlane.f32.xlu0 %v4229
  %v4231 = vpop.xlane.xlu0 %4230
  %v4232 = vmul.f32 %v4228, %v87
  %v4233 = vmul.f32 %v4231, %v87
  %v4234 = vsub.f32 %v4220, %v4232
  %v4235 = vsub.f32 %v4221, %v4233
  %v4236 = vmul.f32 %v4234, %v4234
  %v4237 = vmul.f32 %v4235, %v4235
  %v4238 = vsel %vm76, %v4236, 0.0
  %4239 = vadd.xlane.f32.xlu0 %v4238
  %v4240 = vpop.xlane.xlu0 %4239
  %v4241 = vsel %vm76, %v4237, 0.0
  %4242 = vadd.xlane.f32.xlu0 %v4241
  %v4243 = vpop.xlane.xlu0 %4242
  %v4244 = vmul.f32 %v4240, 0.032258064
  %v4245 = vmul.f32 %v4243, 0.032258064
  %v4246 = vrsqrt.pop %v4244
  %v4247 = vmul.f32 %v4244, %v4246
  %vm4248 = vcmp.eq.f32.partialorder %v4244, inf
  %v4249 = vsel %vm4248, %v4244, %v4247
  %vm4250 = vcmp.eq.f32.partialorder %v4244, 0.0
  %v4251 = vand.u32 %v4244, 2147483648
  %v4252 = vsel %vm4250, %v4251, %v4249
  %v4253 = vrsqrt.pop %v4245
  %v4254 = vmul.f32 %v4245, %v4253
  %vm4255 = vcmp.eq.f32.partialorder %v4245, inf
  %v4256 = vsel %vm4255, %v4245, %v4254
  %vm4257 = vcmp.eq.f32.partialorder %v4245, 0.0
  %v4258 = vand.u32 %v4245, 2147483648
  %v4259 = vsel %vm4257, %v4258, %v4256
  %v4260 = vadd.f32 %v4252, 1e-06
  %v4261 = vadd.f32 %v4259, 1e-06
  %v4262 = vrcp.pop %v4260
  %v4263 = vrcp.pop %v4261
  %v4264 = vmul.f32 %v4234, %v4262
  %v4265 = vmul.f32 %v4235, %v4263
  %v4267 = vlaneseq
  %v4268 = vshrl.u32 %v4267, 7
  %v4269 = vsub.s32 0, %v4268
  %v4270 = vrot.slane %v4223, %v4269
  %v4272 = vmul.f32 %v4264, %v4270
  %v4273 = vmul.f32 %v4265, %v4270
  %v4275 = vlaneseq
  %v4276 = vshrl.u32 %v4275, 7
  %v4277 = vsub.s32 0, %v4276
  %v4278 = vrot.slane %v4225, %v4277
  %v4280 = vadd.f32 %v4272, %v4278
  %v4281 = vadd.f32 %v4273, %v4278
  %s4282 = scalar_lea.vmem %s12, 32
  %v4283 = vld [vmem:[%s4282] sm:$0xf]
  %v4284 = vld [vmem:[%s4282 + $0x4] sm:$0xf]
  %v4285 = vld [vmem:[%s4282 + $0x8] sm:$0xf]
  %v4286 = vld [vmem:[%s4282 + $0xc] sm:$0xf]
  %v4287 = vpack.c.bf16 %v4281, %v4280
  %s4288 = scalar_lea.vmem %s13, 2
  %v4289 = vld [vmem:[%s4288] sm:$0x1]
  %v4291 = vlaneseq
  %v4292 = vshrl.u32 %v4291, 7
  %v4293 = vsub.s32 0, %v4292
  %v4294 = vrot.slane %v4289, %v4293
  %v4300 = vunpack.c.l.b16 %v4283
  %v4301 = vunpack.c.l.b16 %v4284
  %v4302 = vunpack.c.l.b16 %v4285
  %v4303 = vunpack.c.l.b16 %v4286
  %v4304 = vpack.c.b16 %v4301, %v4300
  %v4305 = vpack.c.b16 %v4303, %v4302
  %v4309 = vsel %vm76, %v4287, 0
  %4311 = vmatprep.subr.bf16.mxu0 0
  %4312 = vmatpush1.bf16.msra.mxu0 %v4304
  %4313 = vmatprep.subr.bf16.mxu0 0
  %4314 = vmatpush1.bf16.msra.mxu0 %v4305
  %4315 = vmatprep.subr.bf16.mxu0 0
  %4316 = vmatpush1.bf16.msra.mxu0 0
  %4317 = vmatprep.subr.bf16.mxu0 0
  %4318 = vmatpush1.bf16.msra.mxu0 0
  %4319 = vmatprep.subr.bf16.mxu0 0
  %4320 = vmatpush1.bf16.msra.mxu0 0
  %4321 = vmatprep.subr.bf16.mxu0 0
  %4322 = vmatpush1.bf16.msra.mxu0 0
  %4323 = vmatprep.subr.bf16.mxu0 0
  %4324 = vmatpush1.bf16.msra.mxu0 0
  %4325 = vmatprep.subr.bf16.mxu0 0
  %4326 = vmatpush1.bf16.msra.mxu0 0
  %4327 = vmatprep.subr.bf16.mxu0 0
  %4328 = vmatpush1.bf16.msra.mxu0 0
  %4329 = vmatprep.subr.bf16.mxu0 0
  %4330 = vmatpush1.bf16.msra.mxu0 0
  %4331 = vmatprep.subr.bf16.mxu0 0
  %4332 = vmatpush1.bf16.msra.mxu0 0
  %4333 = vmatprep.subr.bf16.mxu0 0
  %4334 = vmatpush1.bf16.msra.mxu0 0
  %4335 = vmatprep.subr.bf16.mxu0 0
  %4336 = vmatpush1.bf16.msra.mxu0 0
  %4337 = vmatprep.subr.bf16.mxu0 0
  %4338 = vmatpush1.bf16.msra.mxu0 0
  %4339 = vmatprep.subr.bf16.mxu0 0
  %4340 = vmatpush1.bf16.msra.mxu0 0
  %4341 = vmatprep.subr.bf16.mxu0 0
  %4342 = vmatpush1.bf16.msra.mxu0 0
  %4343 = vmatprep.mubr.bf16.mxu0 0
  %4344 = vmatmul.mubr.bf16.gmra.mrb[0].mxu0 %v4309
  %v4345 = vpop.f32.mrb[0].mxu0
  %v4346 = vadd.f32 %v4294, %v4345
  %v4347 = vpop.f32.mrb[0].mxu0
  %v4348 = vpop.f32.mrb[0].mxu0
  %v4349 = vadd.f32 %v4294, %v4348
  %v4350 = vpop.f32.mrb[0].mxu0
  %4351 = vdwg.mxu0
  %v4352 = vmax.f32 %v4346, 0.0
  %v4353 = vmax.f32 %v4349, 0.0
  %s4354 = scalar_lea.vmem %s14, 64
  %v4355 = vld [vmem:[%s4354] sm:$0xf]
  %v4356 = vld [vmem:[%s4354 + $0x4] sm:$0xf]
  %v4357 = vld [vmem:[%s4354 + $0x8] sm:$0xf]
  %v4358 = vld [vmem:[%s4354 + $0xc] sm:$0xf]
  %v4359 = vld [vmem:[%s4354 + $0x10] sm:$0xf]
  %v4360 = vld [vmem:[%s4354 + $0x14] sm:$0xf]
  %v4361 = vld [vmem:[%s4354 + $0x18] sm:$0xf]
  %v4362 = vld [vmem:[%s4354 + $0x1c] sm:$0xf]
  %v4363 = vpack.c.bf16 %v4353, %v4352
  %v4372 = vunpack.c.l.b16 %v4355
  %v4373 = vunpack.c.l.b16 %v4356
  %v4374 = vunpack.c.l.b16 %v4357
  %v4375 = vunpack.c.l.b16 %v4358
  %v4376 = vunpack.c.l.b16 %v4359
  %v4377 = vunpack.c.l.b16 %v4360
  %v4378 = vunpack.c.l.b16 %v4361
  %v4379 = vunpack.c.l.b16 %v4362
  %v4380 = vpack.c.b16 %v4373, %v4372
  %v4381 = vpack.c.b16 %v4375, %v4374
  %v4382 = vpack.c.b16 %v4377, %v4376
  %v4383 = vpack.c.b16 %v4379, %v4378
  %v4389 = vsel %vm1227, %v4363, 0
  %4391 = vmatprep.subr.bf16.mxu0 0
  %4392 = vmatpush1.bf16.msra.mxu0 %v4380
  %4393 = vmatprep.subr.bf16.mxu0 0
  %4394 = vmatpush1.bf16.msra.mxu0 %v4381
  %4395 = vmatprep.subr.bf16.mxu0 0
  %4396 = vmatpush1.bf16.msra.mxu0 %v4382
  %4397 = vmatprep.subr.bf16.mxu0 0
  %4398 = vmatpush1.bf16.msra.mxu0 %v4383
  %4399 = vmatprep.subr.bf16.mxu0 0
  %4400 = vmatpush1.bf16.msra.mxu0 0
  %4401 = vmatprep.subr.bf16.mxu0 0
  %4402 = vmatpush1.bf16.msra.mxu0 0
  %4403 = vmatprep.subr.bf16.mxu0 0
  %4404 = vmatpush1.bf16.msra.mxu0 0
  %4405 = vmatprep.subr.bf16.mxu0 0
  %4406 = vmatpush1.bf16.msra.mxu0 0
  %4407 = vmatprep.subr.bf16.mxu0 0
  %4408 = vmatpush1.bf16.msra.mxu0 0
  %4409 = vmatprep.subr.bf16.mxu0 0
  %4410 = vmatpush1.bf16.msra.mxu0 0
  %4411 = vmatprep.subr.bf16.mxu0 0
  %4412 = vmatpush1.bf16.msra.mxu0 0
  %4413 = vmatprep.subr.bf16.mxu0 0
  %4414 = vmatpush1.bf16.msra.mxu0 0
  %4415 = vmatprep.subr.bf16.mxu0 0
  %4416 = vmatpush1.bf16.msra.mxu0 0
  %4417 = vmatprep.subr.bf16.mxu0 0
  %4418 = vmatpush1.bf16.msra.mxu0 0
  %4419 = vmatprep.subr.bf16.mxu0 0
  %4420 = vmatpush1.bf16.msra.mxu0 0
  %4421 = vmatprep.subr.bf16.mxu0 0
  %4422 = vmatpush1.bf16.msra.mxu0 0
  %4423 = vmatprep.mubr.bf16.mxu0 0
  %4424 = vmatmul.mubr.bf16.gmra.mrb[0].mxu0 %v4389
  %v4425 = vpop.f32.mrb[0].mxu0
  %v4426 = vadd.f32 0.0, %v4425
  %v4427 = vpop.f32.mrb[0].mxu0
  %v4428 = vpop.f32.mrb[0].mxu0
  %v4429 = vadd.f32 0.0, %v4428
  %v4430 = vpop.f32.mrb[0].mxu0
  %4431 = vdwg.mxu0
  %v4432 = vadd.f32 %v4220, %v4426
  %v4433 = vadd.f32 %v4221, %v4429
  %s4434 = scalar_lea.vmem %s15, 2
  %v4435 = vld [vmem:[%s4434] sm:$0x1]
  %v4437 = vlaneseq
  %v4438 = vshrl.u32 %v4437, 7
  %v4439 = vsub.s32 0, %v4438
  %v4440 = vrot.slane %v4435, %v4439
  %v4442 = vadd.f32 %v4432, %v4440
  %v4443 = vadd.f32 %v4433, %v4440
  %s4444 = scalar_lea.vmem %s10, 8
  %v4445 = vld [vmem:[%s4444] sm:$0x1]
  %s4446 = scalar_lea.vmem %s11, 8
  %v4447 = vld [vmem:[%s4446] sm:$0x1]
  %v4448 = vsel %vm76, %v4442, 0.0
  %4449 = vadd.xlane.f32.xlu0 %v4448
  %v4450 = vpop.xlane.xlu0 %4449
  %v4451 = vsel %vm76, %v4443, 0.0
  %4452 = vadd.xlane.f32.xlu0 %v4451
  %v4453 = vpop.xlane.xlu0 %4452
  %v4454 = vmul.f32 %v4450, %v87
  %v4455 = vmul.f32 %v4453, %v87
  %v4456 = vsub.f32 %v4442, %v4454
  %v4457 = vsub.f32 %v4443, %v4455
  %v4458 = vmul.f32 %v4456, %v4456
  %v4459 = vmul.f32 %v4457, %v4457
  %v4460 = vsel %vm76, %v4458, 0.0
  %4461 = vadd.xlane.f32.xlu0 %v4460
  %v4462 = vpop.xlane.xlu0 %4461
  %v4463 = vsel %vm76, %v4459, 0.0
  %4464 = vadd.xlane.f32.xlu0 %v4463
  %v4465 = vpop.xlane.xlu0 %4464
  %v4466 = vmul.f32 %v4462, 0.032258064
  %v4467 = vmul.f32 %v4465, 0.032258064
  %v4468 = vrsqrt.pop %v4466
  %v4469 = vmul.f32 %v4466, %v4468
  %vm4470 = vcmp.eq.f32.partialorder %v4466, inf
  %v4471 = vsel %vm4470, %v4466, %v4469
  %vm4472 = vcmp.eq.f32.partialorder %v4466, 0.0
  %v4473 = vand.u32 %v4466, 2147483648
  %v4474 = vsel %vm4472, %v4473, %v4471
  %v4475 = vrsqrt.pop %v4467
  %v4476 = vmul.f32 %v4467, %v4475
  %vm4477 = vcmp.eq.f32.partialorder %v4467, inf
  %v4478 = vsel %vm4477, %v4467, %v4476
  %vm4479 = vcmp.eq.f32.partialorder %v4467, 0.0
  %v4480 = vand.u32 %v4467, 2147483648
  %v4481 = vsel %vm4479, %v4480, %v4478
  %v4482 = vadd.f32 %v4474, 1e-06
  %v4483 = vadd.f32 %v4481, 1e-06
  %v4484 = vrcp.pop %v4482
  %v4485 = vrcp.pop %v4483
  %v4486 = vmul.f32 %v4456, %v4484
  %v4487 = vmul.f32 %v4457, %v4485
  %v4489 = vlaneseq
  %v4490 = vshrl.u32 %v4489, 7
  %v4491 = vsub.s32 0, %v4490
  %v4492 = vrot.slane %v4445, %v4491
  %v4494 = vmul.f32 %v4486, %v4492
  %v4495 = vmul.f32 %v4487, %v4492
  %v4497 = vlaneseq
  %v4498 = vshrl.u32 %v4497, 7
  %v4499 = vsub.s32 0, %v4498
  %v4500 = vrot.slane %v4447, %v4499
  %v4502 = vadd.f32 %v4494, %v4500
  %v4503 = vadd.f32 %v4495, %v4500
  %s4504 = scalar_lea.vmem %s6, 64
  %v4505 = vld [vmem:[%s4504] sm:$0xf]
  %v4506 = vld [vmem:[%s4504 + $0x4] sm:$0xf]
  %v4507 = vld [vmem:[%s4504 + $0x8] sm:$0xf]
  %v4508 = vld [vmem:[%s4504 + $0xc] sm:$0xf]
  %v4509 = vpack.c.bf16 %v4503, %v4502
  %s4510 = scalar_lea.vmem %s7, 4
  %v4511 = vld [vmem:[%s4510] sm:$0x1]
  %v4513 = vlaneseq
  %v4514 = vshrl.u32 %v4513, 7
  %v4515 = vsub.s32 0, %v4514
  %v4516 = vrot.slane %v4511, %v4515
  %v4522 = vunpack.c.l.b16 %v4505
  %v4523 = vunpack.c.l.b16 %v4506
  %v4524 = vunpack.c.l.b16 %v4507
  %v4525 = vunpack.c.l.b16 %v4508
  %v4526 = vpack.c.b16 %v4523, %v4522
  %v4527 = vpack.c.b16 %v4525, %v4524
  %v4531 = vsel %vm76, %v4509, 0
  %4533 = vmatprep.subr.bf16.mxu0 0
  %4534 = vmatpush1.bf16.msra.mxu0 %v4526
  %4535 = vmatprep.subr.bf16.mxu0 0
  %4536 = vmatpush1.bf16.msra.mxu0 %v4527
  %4537 = vmatprep.subr.bf16.mxu0 0
  %4538 = vmatpush1.bf16.msra.mxu0 0
  %4539 = vmatprep.subr.bf16.mxu0 0
  %4540 = vmatpush1.bf16.msra.mxu0 0
  %4541 = vmatprep.subr.bf16.mxu0 0
  %4542 = vmatpush1.bf16.msra.mxu0 0
  %4543 = vmatprep.subr.bf16.mxu0 0
  %4544 = vmatpush1.bf16.msra.mxu0 0
  %4545 = vmatprep.subr.bf16.mxu0 0
  %4546 = vmatpush1.bf16.msra.mxu0 0
  %4547 = vmatprep.subr.bf16.mxu0 0
  %4548 = vmatpush1.bf16.msra.mxu0 0
  %4549 = vmatprep.subr.bf16.mxu0 0
  %4550 = vmatpush1.bf16.msra.mxu0 0
  %4551 = vmatprep.subr.bf16.mxu0 0
  %4552 = vmatpush1.bf16.msra.mxu0 0
  %4553 = vmatprep.subr.bf16.mxu0 0
  %4554 = vmatpush1.bf16.msra.mxu0 0
  %4555 = vmatprep.subr.bf16.mxu0 0
  %4556 = vmatpush1.bf16.msra.mxu0 0
  %4557 = vmatprep.subr.bf16.mxu0 0
  %4558 = vmatpush1.bf16.msra.mxu0 0
  %4559 = vmatprep.subr.bf16.mxu0 0
  %4560 = vmatpush1.bf16.msra.mxu0 0
  %4561 = vmatprep.subr.bf16.mxu0 0
  %4562 = vmatpush1.bf16.msra.mxu0 0
  %4563 = vmatprep.subr.bf16.mxu0 0
  %4564 = vmatpush1.bf16.msra.mxu0 0
  %4565 = vmatprep.mubr.bf16.mxu0 0
  %4566 = vmatmul.mubr.bf16.gmra.mrb[0].mxu0 %v4531
  %v4567 = vpop.f32.mrb[0].mxu0
  %v4568 = vadd.f32 %v4516, %v4567
  %v4569 = vpop.f32.mrb[0].mxu0
  %v4570 = vpop.f32.mrb[0].mxu0
  %v4571 = vadd.f32 %v4516, %v4570
  %v4572 = vpop.f32.mrb[0].mxu0
  %4573 = vdwg.mxu0
  %v4574 = vpack.c.bf16 %v4571, %v4568
  %4576 = vrot.lane.b32.xlu0 %v4574, 96
  %v4577 = vpop.permute.xlu0 %4576
  %v4579 = vsel %vm244, %v4574, 0
  %v4582 = vsel %vm244, %v4577, 0
  %4584 = vmatprep.subr.bf16.mxu0 0
  %4585 = vmatpush1.bf16.xpose.msra.mxu0 %v4582
  %4586 = vmatprep.subr.bf16.mxu0 0
  %4587 = vmatpush1.bf16.xpose.msra.mxu0 0
  %4588 = vmatprep.subr.bf16.mxu0 0
  %4589 = vmatpush1.bf16.xpose.msra.mxu0 0
  %4590 = vmatprep.subr.bf16.mxu0 0
  %4591 = vmatpush1.bf16.xpose.msra.mxu0 0
  %4592 = vmatprep.subr.bf16.mxu0 0
  %4593 = vmatpush1.bf16.xpose.msra.mxu0 0
  %4594 = vmatprep.subr.bf16.mxu0 0
  %4595 = vmatpush1.bf16.xpose.msra.mxu0 0
  %4596 = vmatprep.subr.bf16.mxu0 0
  %4597 = vmatpush1.bf16.xpose.msra.mxu0 0
  %4598 = vmatprep.subr.bf16.mxu0 0
  %4599 = vmatpush1.bf16.xpose.msra.mxu0 0
  %4600 = vmatprep.subr.bf16.mxu0 0
  %4601 = vmatpush1.bf16.xpose.msra.mxu0 0
  %4602 = vmatprep.subr.bf16.mxu0 0
  %4603 = vmatpush1.bf16.xpose.msra.mxu0 0
  %4604 = vmatprep.subr.bf16.mxu0 0
  %4605 = vmatpush1.bf16.xpose.msra.mxu0 0
  %4606 = vmatprep.subr.bf16.mxu0 0
  %4607 = vmatpush1.bf16.xpose.msra.mxu0 0
  %4608 = vmatprep.subr.bf16.mxu0 0
  %4609 = vmatpush1.bf16.xpose.msra.mxu0 0
  %4610 = vmatprep.subr.bf16.mxu0 0
  %4611 = vmatpush1.bf16.xpose.msra.mxu0 0
  %4612 = vmatprep.subr.bf16.mxu0 0
  %4613 = vmatpush1.bf16.xpose.msra.mxu0 0
  %4614 = vmatprep.subr.bf16.mxu0 0
  %4615 = vmatpush1.bf16.xpose.msra.mxu0 0
  %4616 = vmatprep.mubr.bf16.mxu0 0
  %4617 = vmatmul.mubr.bf16.gmra.mrb[0].mxu0 %v4579
  %v4618 = vpop.f32.mrb[0].mxu0
  %v4619 = vadd.f32 %v2681, %v4618
  %v4620 = vpop.f32.mrb[0].mxu0
  %v4621 = vpop.f32.mrb[0].mxu0
  %v4622 = vadd.f32 %v2682, %v4621
  %v4623 = vpop.f32.mrb[0].mxu0
  %4624 = vdwg.mxu0
  %v4625 = vsel %vm939, %v4619, -inf
  %4626 = vmax.xlane.f32.xlu0 %v4625
  %v4627 = vpop.xlane.xlu0 %4626
  %v4628 = vsel %vm939, %v4622, -inf
  %4629 = vmax.xlane.f32.xlu0 %v4628
  %v4630 = vpop.xlane.xlu0 %4629
  %v4631 = vsub.f32 %v4619, %v4627
  %v4632 = vsub.f32 %v4622, %v4630
  %v4633 = vmul.f32 %v4631, 1.442695
  %v4634 = vpow.pop %v4633
  %v4635 = vmul.f32 %v4632, 1.442695
  %v4636 = vpow.pop %v4635
  %v4637 = vsel %vm939, %v4634, 0.0
  %4638 = vadd.xlane.f32.xlu0 %v4637
  %v4639 = vpop.xlane.xlu0 %4638
  %v4640 = vsel %vm939, %v4636, 0.0
  %4641 = vadd.xlane.f32.xlu0 %v4640
  %v4642 = vpop.xlane.xlu0 %4641
  %v4643 = vrcp.pop %v4639
  %v4644 = vrcp.pop %v4642
  %v4645 = vmul.f32 %v4634, %v4643
  %v4646 = vmul.f32 %v4636, %v4644
  %v4647 = vpack.c.bf16 %v4646, %v4645
  %4648 = vrot.lane.b32.xlu0 %v4574, 64
  %v4649 = vpop.permute.xlu0 %4648
  %v4652 = vsel %vm939, %v4647, 0
  %4654 = vmatprep.subr.bf16.mxu0 0
  %4655 = vmatpush1.bf16.msra.mxu0 %v4649
  %4656 = vmatprep.subr.bf16.mxu0 0
  %4657 = vmatpush1.bf16.msra.mxu0 0
  %4658 = vmatprep.subr.bf16.mxu0 0
  %4659 = vmatpush1.bf16.msra.mxu0 0
  %4660 = vmatprep.subr.bf16.mxu0 0
  %4661 = vmatpush1.bf16.msra.mxu0 0
  %4662 = vmatprep.subr.bf16.mxu0 0
  %4663 = vmatpush1.bf16.msra.mxu0 0
  %4664 = vmatprep.subr.bf16.mxu0 0
  %4665 = vmatpush1.bf16.msra.mxu0 0
  %4666 = vmatprep.subr.bf16.mxu0 0
  %4667 = vmatpush1.bf16.msra.mxu0 0
  %4668 = vmatprep.subr.bf16.mxu0 0
  %4669 = vmatpush1.bf16.msra.mxu0 0
  %4670 = vmatprep.subr.bf16.mxu0 0
  %4671 = vmatpush1.bf16.msra.mxu0 0
  %4672 = vmatprep.subr.bf16.mxu0 0
  %4673 = vmatpush1.bf16.msra.mxu0 0
  %4674 = vmatprep.subr.bf16.mxu0 0
  %4675 = vmatpush1.bf16.msra.mxu0 0
  %4676 = vmatprep.subr.bf16.mxu0 0
  %4677 = vmatpush1.bf16.msra.mxu0 0
  %4678 = vmatprep.subr.bf16.mxu0 0
  %4679 = vmatpush1.bf16.msra.mxu0 0
  %4680 = vmatprep.subr.bf16.mxu0 0
  %4681 = vmatpush1.bf16.msra.mxu0 0
  %4682 = vmatprep.subr.bf16.mxu0 0
  %4683 = vmatpush1.bf16.msra.mxu0 0
  %4684 = vmatprep.subr.bf16.mxu0 0
  %4685 = vmatpush1.bf16.msra.mxu0 0
  %4686 = vmatprep.mubr.bf16.mxu0 0
  %4687 = vmatmul.mubr.bf16.gmra.mrb[0].mxu0 %v4652
  %v4688 = vpop.f32.mrb[0].mxu0
  %v4689 = vadd.f32 0.0, %v4688
  %v4690 = vpop.f32.mrb[0].mxu0
  %v4691 = vpop.f32.mrb[0].mxu0
  %v4692 = vadd.f32 0.0, %v4691
  %v4693 = vpop.f32.mrb[0].mxu0
  %4694 = vdwg.mxu0
  %4695 = vrot.lane.b32.xlu0 %v4574, 120
  %v4696 = vpop.permute.xlu0 %4695
  %4697 = vrot.lane.b32.xlu0 %v4574, 88
  %v4698 = vpop.permute.xlu0 %4697
  %v4700 = vsel %vm244, %v4696, 0
  %v4703 = vsel %vm244, %v4698, 0
  %4705 = vmatprep.subr.bf16.mxu0 0
  %4706 = vmatpush1.bf16.xpose.msra.mxu0 %v4703
  %4707 = vmatprep.subr.bf16.mxu0 0
  %4708 = vmatpush1.bf16.xpose.msra.mxu0 0
  %4709 = vmatprep.subr.bf16.mxu0 0
  %4710 = vmatpush1.bf16.xpose.msra.mxu0 0
  %4711 = vmatprep.subr.bf16.mxu0 0
  %4712 = vmatpush1.bf16.xpose.msra.mxu0 0
  %4713 = vmatprep.subr.bf16.mxu0 0
  %4714 = vmatpush1.bf16.xpose.msra.mxu0 0
  %4715 = vmatprep.subr.bf16.mxu0 0
  %4716 = vmatpush1.bf16.xpose.msra.mxu0 0
  %4717 = vmatprep.subr.bf16.mxu0 0
  %4718 = vmatpush1.bf16.xpose.msra.mxu0 0
  %4719 = vmatprep.subr.bf16.mxu0 0
  %4720 = vmatpush1.bf16.xpose.msra.mxu0 0
  %4721 = vmatprep.subr.bf16.mxu0 0
  %4722 = vmatpush1.bf16.xpose.msra.mxu0 0
  %4723 = vmatprep.subr.bf16.mxu0 0
  %4724 = vmatpush1.bf16.xpose.msra.mxu0 0
  %4725 = vmatprep.subr.bf16.mxu0 0
  %4726 = vmatpush1.bf16.xpose.msra.mxu0 0
  %4727 = vmatprep.subr.bf16.mxu0 0
  %4728 = vmatpush1.bf16.xpose.msra.mxu0 0
  %4729 = vmatprep.subr.bf16.mxu0 0
  %4730 = vmatpush1.bf16.xpose.msra.mxu0 0
  %4731 = vmatprep.subr.bf16.mxu0 0
  %4732 = vmatpush1.bf16.xpose.msra.mxu0 0
  %4733 = vmatprep.subr.bf16.mxu0 0
  %4734 = vmatpush1.bf16.xpose.msra.mxu0 0
  %4735 = vmatprep.subr.bf16.mxu0 0
  %4736 = vmatpush1.bf16.xpose.msra.mxu0 0
  %4737 = vmatprep.mubr.bf16.mxu0 0
  %4738 = vmatmul.mubr.bf16.gmra.mrb[0].mxu0 %v4700
  %v4739 = vpop.f32.mrb[0].mxu0
  %v4740 = vadd.f32 %v2681, %v4739
  %v4741 = vpop.f32.mrb[0].mxu0
  %v4742 = vpop.f32.mrb[0].mxu0
  %v4743 = vadd.f32 %v2682, %v4742
  %v4744 = vpop.f32.mrb[0].mxu0
  %4745 = vdwg.mxu0
  %v4746 = vsel %vm939, %v4740, -inf
  %4747 = vmax.xlane.f32.xlu0 %v4746
  %v4748 = vpop.xlane.xlu0 %4747
  %v4749 = vsel %vm939, %v4743, -inf
  %4750 = vmax.xlane.f32.xlu0 %v4749
  %v4751 = vpop.xlane.xlu0 %4750
  %v4752 = vsub.f32 %v4740, %v4748
  %v4753 = vsub.f32 %v4743, %v4751
  %v4754 = vmul.f32 %v4752, 1.442695
  %v4755 = vpow.pop %v4754
  %v4756 = vmul.f32 %v4753, 1.442695
  %v4757 = vpow.pop %v4756
  %v4758 = vsel %vm939, %v4755, 0.0
  %4759 = vadd.xlane.f32.xlu0 %v4758
  %v4760 = vpop.xlane.xlu0 %4759
  %v4761 = vsel %vm939, %v4757, 0.0
  %4762 = vadd.xlane.f32.xlu0 %v4761
  %v4763 = vpop.xlane.xlu0 %4762
  %v4764 = vrcp.pop %v4760
  %v4765 = vrcp.pop %v4763
  %v4766 = vmul.f32 %v4755, %v4764
  %v4767 = vmul.f32 %v4757, %v4765
  %v4768 = vpack.c.bf16 %v4767, %v4766
  %4769 = vrot.lane.b32.xlu0 %v4574, 56
  %v4770 = vpop.permute.xlu0 %4769
  %v4773 = vsel %vm939, %v4768, 0
  %4775 = vmatprep.subr.bf16.mxu0 0
  %4776 = vmatpush1.bf16.msra.mxu0 %v4770
  %4777 = vmatprep.subr.bf16.mxu0 0
  %4778 = vmatpush1.bf16.msra.mxu0 0
  %4779 = vmatprep.subr.bf16.mxu0 0
  %4780 = vmatpush1.bf16.msra.mxu0 0
  %4781 = vmatprep.subr.bf16.mxu0 0
  %4782 = vmatpush1.bf16.msra.mxu0 0
  %4783 = vmatprep.subr.bf16.mxu0 0
  %4784 = vmatpush1.bf16.msra.mxu0 0
  %4785 = vmatprep.subr.bf16.mxu0 0
  %4786 = vmatpush1.bf16.msra.mxu0 0
  %4787 = vmatprep.subr.bf16.mxu0 0
  %4788 = vmatpush1.bf16.msra.mxu0 0
  %4789 = vmatprep.subr.bf16.mxu0 0
  %4790 = vmatpush1.bf16.msra.mxu0 0
  %4791 = vmatprep.subr.bf16.mxu0 0
  %4792 = vmatpush1.bf16.msra.mxu0 0
  %4793 = vmatprep.subr.bf16.mxu0 0
  %4794 = vmatpush1.bf16.msra.mxu0 0
  %4795 = vmatprep.subr.bf16.mxu0 0
  %4796 = vmatpush1.bf16.msra.mxu0 0
  %4797 = vmatprep.subr.bf16.mxu0 0
  %4798 = vmatpush1.bf16.msra.mxu0 0
  %4799 = vmatprep.subr.bf16.mxu0 0
  %4800 = vmatpush1.bf16.msra.mxu0 0
  %4801 = vmatprep.subr.bf16.mxu0 0
  %4802 = vmatpush1.bf16.msra.mxu0 0
  %4803 = vmatprep.subr.bf16.mxu0 0
  %4804 = vmatpush1.bf16.msra.mxu0 0
  %4805 = vmatprep.subr.bf16.mxu0 0
  %4806 = vmatpush1.bf16.msra.mxu0 0
  %4807 = vmatprep.mubr.bf16.mxu0 0
  %4808 = vmatmul.mubr.bf16.gmra.mrb[0].mxu0 %v4773
  %v4809 = vpop.f32.mrb[0].mxu0
  %v4810 = vadd.f32 0.0, %v4809
  %v4811 = vpop.f32.mrb[0].mxu0
  %v4812 = vpop.f32.mrb[0].mxu0
  %v4813 = vadd.f32 0.0, %v4812
  %v4814 = vpop.f32.mrb[0].mxu0
  %4815 = vdwg.mxu0
  %4816 = vrot.lane.b32.xlu0 %v4574, 112
  %v4817 = vpop.permute.xlu0 %4816
  %4818 = vrot.lane.b32.xlu0 %v4574, 80
  %v4819 = vpop.permute.xlu0 %4818
  %v4821 = vsel %vm244, %v4817, 0
  %v4824 = vsel %vm244, %v4819, 0
  %4826 = vmatprep.subr.bf16.mxu0 0
  %4827 = vmatpush1.bf16.xpose.msra.mxu0 %v4824
  %4828 = vmatprep.subr.bf16.mxu0 0
  %4829 = vmatpush1.bf16.xpose.msra.mxu0 0
  %4830 = vmatprep.subr.bf16.mxu0 0
  %4831 = vmatpush1.bf16.xpose.msra.mxu0 0
  %4832 = vmatprep.subr.bf16.mxu0 0
  %4833 = vmatpush1.bf16.xpose.msra.mxu0 0
  %4834 = vmatprep.subr.bf16.mxu0 0
  %4835 = vmatpush1.bf16.xpose.msra.mxu0 0
  %4836 = vmatprep.subr.bf16.mxu0 0
  %4837 = vmatpush1.bf16.xpose.msra.mxu0 0
  %4838 = vmatprep.subr.bf16.mxu0 0
  %4839 = vmatpush1.bf16.xpose.msra.mxu0 0
  %4840 = vmatprep.subr.bf16.mxu0 0
  %4841 = vmatpush1.bf16.xpose.msra.mxu0 0
  %4842 = vmatprep.subr.bf16.mxu0 0
  %4843 = vmatpush1.bf16.xpose.msra.mxu0 0
  %4844 = vmatprep.subr.bf16.mxu0 0
  %4845 = vmatpush1.bf16.xpose.msra.mxu0 0
  %4846 = vmatprep.subr.bf16.mxu0 0
  %4847 = vmatpush1.bf16.xpose.msra.mxu0 0
  %4848 = vmatprep.subr.bf16.mxu0 0
  %4849 = vmatpush1.bf16.xpose.msra.mxu0 0
  %4850 = vmatprep.subr.bf16.mxu0 0
  %4851 = vmatpush1.bf16.xpose.msra.mxu0 0
  %4852 = vmatprep.subr.bf16.mxu0 0
  %4853 = vmatpush1.bf16.xpose.msra.mxu0 0
  %4854 = vmatprep.subr.bf16.mxu0 0
  %4855 = vmatpush1.bf16.xpose.msra.mxu0 0
  %4856 = vmatprep.subr.bf16.mxu0 0
  %4857 = vmatpush1.bf16.xpose.msra.mxu0 0
  %4858 = vmatprep.mubr.bf16.mxu0 0
  %4859 = vmatmul.mubr.bf16.gmra.mrb[0].mxu0 %v4821
  %v4860 = vpop.f32.mrb[0].mxu0
  %v4861 = vadd.f32 %v2681, %v4860
  %v4862 = vpop.f32.mrb[0].mxu0
  %v4863 = vpop.f32.mrb[0].mxu0
  %v4864 = vadd.f32 %v2682, %v4863
  %v4865 = vpop.f32.mrb[0].mxu0
  %4866 = vdwg.mxu0
  %v4867 = vsel %vm939, %v4861, -inf
  %4868 = vmax.xlane.f32.xlu0 %v4867
  %v4869 = vpop.xlane.xlu0 %4868
  %v4870 = vsel %vm939, %v4864, -inf
  %4871 = vmax.xlane.f32.xlu0 %v4870
  %v4872 = vpop.xlane.xlu0 %4871
  %v4873 = vsub.f32 %v4861, %v4869
  %v4874 = vsub.f32 %v4864, %v4872
  %v4875 = vmul.f32 %v4873, 1.442695
  %v4876 = vpow.pop %v4875
  %v4877 = vmul.f32 %v4874, 1.442695
  %v4878 = vpow.pop %v4877
  %v4879 = vsel %vm939, %v4876, 0.0
  %4880 = vadd.xlane.f32.xlu0 %v4879
  %v4881 = vpop.xlane.xlu0 %4880
  %v4882 = vsel %vm939, %v4878, 0.0
  %4883 = vadd.xlane.f32.xlu0 %v4882
  %v4884 = vpop.xlane.xlu0 %4883
  %v4885 = vrcp.pop %v4881
  %v4886 = vrcp.pop %v4884
  %v4887 = vmul.f32 %v4876, %v4885
  %v4888 = vmul.f32 %v4878, %v4886
  %v4889 = vpack.c.bf16 %v4888, %v4887
  %4890 = vrot.lane.b32.xlu0 %v4574, 48
  %v4891 = vpop.permute.xlu0 %4890
  %v4894 = vsel %vm939, %v4889, 0
  %4896 = vmatprep.subr.bf16.mxu0 0
  %4897 = vmatpush1.bf16.msra.mxu0 %v4891
  %4898 = vmatprep.subr.bf16.mxu0 0
  %4899 = vmatpush1.bf16.msra.mxu0 0
  %4900 = vmatprep.subr.bf16.mxu0 0
  %4901 = vmatpush1.bf16.msra.mxu0 0
  %4902 = vmatprep.subr.bf16.mxu0 0
  %4903 = vmatpush1.bf16.msra.mxu0 0
  %4904 = vmatprep.subr.bf16.mxu0 0
  %4905 = vmatpush1.bf16.msra.mxu0 0
  %4906 = vmatprep.subr.bf16.mxu0 0
  %4907 = vmatpush1.bf16.msra.mxu0 0
  %4908 = vmatprep.subr.bf16.mxu0 0
  %4909 = vmatpush1.bf16.msra.mxu0 0
  %4910 = vmatprep.subr.bf16.mxu0 0
  %4911 = vmatpush1.bf16.msra.mxu0 0
  %4912 = vmatprep.subr.bf16.mxu0 0
  %4913 = vmatpush1.bf16.msra.mxu0 0
  %4914 = vmatprep.subr.bf16.mxu0 0
  %4915 = vmatpush1.bf16.msra.mxu0 0
  %4916 = vmatprep.subr.bf16.mxu0 0
  %4917 = vmatpush1.bf16.msra.mxu0 0
  %4918 = vmatprep.subr.bf16.mxu0 0
  %4919 = vmatpush1.bf16.msra.mxu0 0
  %4920 = vmatprep.subr.bf16.mxu0 0
  %4921 = vmatpush1.bf16.msra.mxu0 0
  %4922 = vmatprep.subr.bf16.mxu0 0
  %4923 = vmatpush1.bf16.msra.mxu0 0
  %4924 = vmatprep.subr.bf16.mxu0 0
  %4925 = vmatpush1.bf16.msra.mxu0 0
  %4926 = vmatprep.subr.bf16.mxu0 0
  %4927 = vmatpush1.bf16.msra.mxu0 0
  %4928 = vmatprep.mubr.bf16.mxu0 0
  %4929 = vmatmul.mubr.bf16.gmra.mrb[0].mxu0 %v4894
  %v4930 = vpop.f32.mrb[0].mxu0
  %v4931 = vadd.f32 0.0, %v4930
  %v4932 = vpop.f32.mrb[0].mxu0
  %v4933 = vpop.f32.mrb[0].mxu0
  %v4934 = vadd.f32 0.0, %v4933
  %v4935 = vpop.f32.mrb[0].mxu0
  %4936 = vdwg.mxu0
  %4937 = vrot.lane.b32.xlu0 %v4574, 104
  %v4938 = vpop.permute.xlu0 %4937
  %4939 = vrot.lane.b32.xlu0 %v4574, 72
  %v4940 = vpop.permute.xlu0 %4939
  %v4942 = vsel %vm244, %v4938, 0
  %v4945 = vsel %vm244, %v4940, 0
  %4947 = vmatprep.subr.bf16.mxu0 0
  %4948 = vmatpush1.bf16.xpose.msra.mxu0 %v4945
  %4949 = vmatprep.subr.bf16.mxu0 0
  %4950 = vmatpush1.bf16.xpose.msra.mxu0 0
  %4951 = vmatprep.subr.bf16.mxu0 0
  %4952 = vmatpush1.bf16.xpose.msra.mxu0 0
  %4953 = vmatprep.subr.bf16.mxu0 0
  %4954 = vmatpush1.bf16.xpose.msra.mxu0 0
  %4955 = vmatprep.subr.bf16.mxu0 0
  %4956 = vmatpush1.bf16.xpose.msra.mxu0 0
  %4957 = vmatprep.subr.bf16.mxu0 0
  %4958 = vmatpush1.bf16.xpose.msra.mxu0 0
  %4959 = vmatprep.subr.bf16.mxu0 0
  %4960 = vmatpush1.bf16.xpose.msra.mxu0 0
  %4961 = vmatprep.subr.bf16.mxu0 0
  %4962 = vmatpush1.bf16.xpose.msra.mxu0 0
  %4963 = vmatprep.subr.bf16.mxu0 0
  %4964 = vmatpush1.bf16.xpose.msra.mxu0 0
  %4965 = vmatprep.subr.bf16.mxu0 0
  %4966 = vmatpush1.bf16.xpose.msra.mxu0 0
  %4967 = vmatprep.subr.bf16.mxu0 0
  %4968 = vmatpush1.bf16.xpose.msra.mxu0 0
  %4969 = vmatprep.subr.bf16.mxu0 0
  %4970 = vmatpush1.bf16.xpose.msra.mxu0 0
  %4971 = vmatprep.subr.bf16.mxu0 0
  %4972 = vmatpush1.bf16.xpose.msra.mxu0 0
  %4973 = vmatprep.subr.bf16.mxu0 0
  %4974 = vmatpush1.bf16.xpose.msra.mxu0 0
  %4975 = vmatprep.subr.bf16.mxu0 0
  %4976 = vmatpush1.bf16.xpose.msra.mxu0 0
  %4977 = vmatprep.subr.bf16.mxu0 0
  %4978 = vmatpush1.bf16.xpose.msra.mxu0 0
  %4979 = vmatprep.mubr.bf16.mxu0 0
  %4980 = vmatmul.mubr.bf16.gmra.mrb[0].mxu0 %v4942
  %v4981 = vpop.f32.mrb[0].mxu0
  %v4982 = vadd.f32 %v2681, %v4981
  %v4983 = vpop.f32.mrb[0].mxu0
  %v4984 = vpop.f32.mrb[0].mxu0
  %v4985 = vadd.f32 %v2682, %v4984
  %v4986 = vpop.f32.mrb[0].mxu0
  %4987 = vdwg.mxu0
  %v4988 = vsel %vm939, %v4982, -inf
  %4989 = vmax.xlane.f32.xlu0 %v4988
  %v4990 = vpop.xlane.xlu0 %4989
  %v4991 = vsel %vm939, %v4985, -inf
  %4992 = vmax.xlane.f32.xlu0 %v4991
  %v4993 = vpop.xlane.xlu0 %4992
  %v4994 = vsub.f32 %v4982, %v4990
  %v4995 = vsub.f32 %v4985, %v4993
  %v4996 = vmul.f32 %v4994, 1.442695
  %v4997 = vpow.pop %v4996
  %v4998 = vmul.f32 %v4995, 1.442695
  %v4999 = vpow.pop %v4998
  %v5000 = vsel %vm939, %v4997, 0.0
  %5001 = vadd.xlane.f32.xlu0 %v5000
  %v5002 = vpop.xlane.xlu0 %5001
  %v5003 = vsel %vm939, %v4999, 0.0
  %5004 = vadd.xlane.f32.xlu0 %v5003
  %v5005 = vpop.xlane.xlu0 %5004
  %v5006 = vrcp.pop %v5002
  %v5007 = vrcp.pop %v5005
  %v5008 = vmul.f32 %v4997, %v5006
  %v5009 = vmul.f32 %v4999, %v5007
  %v5010 = vpack.c.bf16 %v5009, %v5008
  %5011 = vrot.lane.b32.xlu0 %v4574, 40
  %v5012 = vpop.permute.xlu0 %5011
  %v5015 = vsel %vm939, %v5010, 0
  %5017 = vmatprep.subr.bf16.mxu0 0
  %5018 = vmatpush1.bf16.msra.mxu0 %v5012
  %5019 = vmatprep.subr.bf16.mxu0 0
  %5020 = vmatpush1.bf16.msra.mxu0 0
  %5021 = vmatprep.subr.bf16.mxu0 0
  %5022 = vmatpush1.bf16.msra.mxu0 0
  %5023 = vmatprep.subr.bf16.mxu0 0
  %5024 = vmatpush1.bf16.msra.mxu0 0
  %5025 = vmatprep.subr.bf16.mxu0 0
  %5026 = vmatpush1.bf16.msra.mxu0 0
  %5027 = vmatprep.subr.bf16.mxu0 0
  %5028 = vmatpush1.bf16.msra.mxu0 0
  %5029 = vmatprep.subr.bf16.mxu0 0
  %5030 = vmatpush1.bf16.msra.mxu0 0
  %5031 = vmatprep.subr.bf16.mxu0 0
  %5032 = vmatpush1.bf16.msra.mxu0 0
  %5033 = vmatprep.subr.bf16.mxu0 0
  %5034 = vmatpush1.bf16.msra.mxu0 0
  %5035 = vmatprep.subr.bf16.mxu0 0
  %5036 = vmatpush1.bf16.msra.mxu0 0
  %5037 = vmatprep.subr.bf16.mxu0 0
  %5038 = vmatpush1.bf16.msra.mxu0 0
  %5039 = vmatprep.subr.bf16.mxu0 0
  %5040 = vmatpush1.bf16.msra.mxu0 0
  %5041 = vmatprep.subr.bf16.mxu0 0
  %5042 = vmatpush1.bf16.msra.mxu0 0
  %5043 = vmatprep.subr.bf16.mxu0 0
  %5044 = vmatpush1.bf16.msra.mxu0 0
  %5045 = vmatprep.subr.bf16.mxu0 0
  %5046 = vmatpush1.bf16.msra.mxu0 0
  %5047 = vmatprep.subr.bf16.mxu0 0
  %5048 = vmatpush1.bf16.msra.mxu0 0
  %5049 = vmatprep.mubr.bf16.mxu0 0
  %5050 = vmatmul.mubr.bf16.gmra.mrb[0].mxu0 %v5015
  %v5051 = vpop.f32.mrb[0].mxu0
  %v5052 = vadd.f32 0.0, %v5051
  %v5053 = vpop.f32.mrb[0].mxu0
  %v5054 = vpop.f32.mrb[0].mxu0
  %v5055 = vadd.f32 0.0, %v5054
  %v5056 = vpop.f32.mrb[0].mxu0
  %5057 = vdwg.mxu0
  %5060 = vrot.lane.b32.xlu0 %v4810, 8
  %v5061 = vpop.permute.xlu0 %5060
  %5062 = vrot.lane.b32.xlu0 %v4813, 8
  %v5063 = vpop.permute.xlu0 %5062
  %5068 = vrot.lane.b32.xlu0 %v4931, 16
  %v5069 = vpop.permute.xlu0 %5068
  %5070 = vrot.lane.b32.xlu0 %v4934, 16
  %v5071 = vpop.permute.xlu0 %5070
  %5076 = vrot.lane.b32.xlu0 %v5052, 24
  %v5077 = vpop.permute.xlu0 %5076
  %5078 = vrot.lane.b32.xlu0 %v5055, 24
  %v5079 = vpop.permute.xlu0 %5078
  %v5082 = vsel %vm244, %v4689, %v5061
  %v5083 = vsel %vm244, %v4692, %v5063
  %v5084 = vsel %vm939, %v5082, %v5069
  %v5085 = vsel %vm939, %v5083, %v5071
  %v5086 = vsel %vm943, %v5084, %v5077
  %v5087 = vsel %vm943, %v5085, %v5079
  %s5088 = scalar_lea.vmem %s8, 64
  %v5089 = vld [vmem:[%s5088] sm:$0xf]
  %v5090 = vld [vmem:[%s5088 + $0x4] sm:$0xf]
  %v5091 = vld [vmem:[%s5088 + $0x8] sm:$0xf]
  %v5092 = vld [vmem:[%s5088 + $0xc] sm:$0xf]
  %v5093 = vpack.c.bf16 %v5087, %v5086
  %s5094 = scalar_lea.vmem %s9, 4
  %v5095 = vld [vmem:[%s5094] sm:$0x1]
  %v5097 = vlaneseq
  %v5098 = vshrl.u32 %v5097, 7
  %v5099 = vsub.s32 0, %v5098
  %v5100 = vrot.slane %v5095, %v5099
  %v5106 = vunpack.c.l.b16 %v5089
  %v5107 = vunpack.c.l.b16 %v5090
  %v5108 = vunpack.c.l.b16 %v5091
  %v5109 = vunpack.c.l.b16 %v5092
  %v5110 = vpack.c.b16 %v5107, %v5106
  %v5111 = vpack.c.b16 %v5109, %v5108
  %v5115 = vsel %vm76, %v5093, 0
  %5117 = vmatprep.subr.bf16.mxu0 0
  %5118 = vmatpush1.bf16.msra.mxu0 %v5110
  %5119 = vmatprep.subr.bf16.mxu0 0
  %5120 = vmatpush1.bf16.msra.mxu0 %v5111
  %5121 = vmatprep.subr.bf16.mxu0 0
  %5122 = vmatpush1.bf16.msra.mxu0 0
  %5123 = vmatprep.subr.bf16.mxu0 0
  %5124 = vmatpush1.bf16.msra.mxu0 0
  %5125 = vmatprep.subr.bf16.mxu0 0
  %5126 = vmatpush1.bf16.msra.mxu0 0
  %5127 = vmatprep.subr.bf16.mxu0 0
  %5128 = vmatpush1.bf16.msra.mxu0 0
  %5129 = vmatprep.subr.bf16.mxu0 0
  %5130 = vmatpush1.bf16.msra.mxu0 0
  %5131 = vmatprep.subr.bf16.mxu0 0
  %5132 = vmatpush1.bf16.msra.mxu0 0
  %5133 = vmatprep.subr.bf16.mxu0 0
  %5134 = vmatpush1.bf16.msra.mxu0 0
  %5135 = vmatprep.subr.bf16.mxu0 0
  %5136 = vmatpush1.bf16.msra.mxu0 0
  %5137 = vmatprep.subr.bf16.mxu0 0
  %5138 = vmatpush1.bf16.msra.mxu0 0
  %5139 = vmatprep.subr.bf16.mxu0 0
  %5140 = vmatpush1.bf16.msra.mxu0 0
  %5141 = vmatprep.subr.bf16.mxu0 0
  %5142 = vmatpush1.bf16.msra.mxu0 0
  %5143 = vmatprep.subr.bf16.mxu0 0
  %5144 = vmatpush1.bf16.msra.mxu0 0
  %5145 = vmatprep.subr.bf16.mxu0 0
  %5146 = vmatpush1.bf16.msra.mxu0 0
  %5147 = vmatprep.subr.bf16.mxu0 0
  %5148 = vmatpush1.bf16.msra.mxu0 0
  %5149 = vmatprep.mubr.bf16.mxu0 0
  %5150 = vmatmul.mubr.bf16.gmra.mrb[0].mxu0 %v5115
  %v5151 = vpop.f32.mrb[0].mxu0
  %v5152 = vadd.f32 %v5100, %v5151
  %v5153 = vpop.f32.mrb[0].mxu0
  %v5154 = vpop.f32.mrb[0].mxu0
  %v5155 = vadd.f32 %v5100, %v5154
  %v5156 = vpop.f32.mrb[0].mxu0
  %5157 = vdwg.mxu0
  %v5158 = vadd.f32 %v5152, %v4442
  %v5159 = vadd.f32 %v5155, %v4443
  %s5160 = scalar_lea.vmem %s10, 9
  %v5161 = vld [vmem:[%s5160] sm:$0x1]
  %s5162 = scalar_lea.vmem %s11, 9
  %v5163 = vld [vmem:[%s5162] sm:$0x1]
  %v5164 = vsel %vm76, %v5158, 0.0
  %5165 = vadd.xlane.f32.xlu0 %v5164
  %v5166 = vpop.xlane.xlu0 %5165
  %v5167 = vsel %vm76, %v5159, 0.0
  %5168 = vadd.xlane.f32.xlu0 %v5167
  %v5169 = vpop.xlane.xlu0 %5168
  %v5170 = vmul.f32 %v5166, %v87
  %v5171 = vmul.f32 %v5169, %v87
  %v5172 = vsub.f32 %v5158, %v5170
  %v5173 = vsub.f32 %v5159, %v5171
  %v5174 = vmul.f32 %v5172, %v5172
  %v5175 = vmul.f32 %v5173, %v5173
  %v5176 = vsel %vm76, %v5174, 0.0
  %5177 = vadd.xlane.f32.xlu0 %v5176
  %v5178 = vpop.xlane.xlu0 %5177
  %v5179 = vsel %vm76, %v5175, 0.0
  %5180 = vadd.xlane.f32.xlu0 %v5179
  %v5181 = vpop.xlane.xlu0 %5180
  %v5182 = vmul.f32 %v5178, 0.032258064
  %v5183 = vmul.f32 %v5181, 0.032258064
  %v5184 = vrsqrt.pop %v5182
  %v5185 = vmul.f32 %v5182, %v5184
  %vm5186 = vcmp.eq.f32.partialorder %v5182, inf
  %v5187 = vsel %vm5186, %v5182, %v5185
  %vm5188 = vcmp.eq.f32.partialorder %v5182, 0.0
  %v5189 = vand.u32 %v5182, 2147483648
  %v5190 = vsel %vm5188, %v5189, %v5187
  %v5191 = vrsqrt.pop %v5183
  %v5192 = vmul.f32 %v5183, %v5191
  %vm5193 = vcmp.eq.f32.partialorder %v5183, inf
  %v5194 = vsel %vm5193, %v5183, %v5192
  %vm5195 = vcmp.eq.f32.partialorder %v5183, 0.0
  %v5196 = vand.u32 %v5183, 2147483648
  %v5197 = vsel %vm5195, %v5196, %v5194
  %v5198 = vadd.f32 %v5190, 1e-06
  %v5199 = vadd.f32 %v5197, 1e-06
  %v5200 = vrcp.pop %v5198
  %v5201 = vrcp.pop %v5199
  %v5202 = vmul.f32 %v5172, %v5200
  %v5203 = vmul.f32 %v5173, %v5201
  %v5205 = vlaneseq
  %v5206 = vshrl.u32 %v5205, 7
  %v5207 = vsub.s32 0, %v5206
  %v5208 = vrot.slane %v5161, %v5207
  %v5210 = vmul.f32 %v5202, %v5208
  %v5211 = vmul.f32 %v5203, %v5208
  %v5213 = vlaneseq
  %v5214 = vshrl.u32 %v5213, 7
  %v5215 = vsub.s32 0, %v5214
  %v5216 = vrot.slane %v5163, %v5215
  %v5218 = vadd.f32 %v5210, %v5216
  %v5219 = vadd.f32 %v5211, %v5216
  %s5220 = scalar_lea.vmem %s6, 80
  %v5221 = vld [vmem:[%s5220] sm:$0xf]
  %v5222 = vld [vmem:[%s5220 + $0x4] sm:$0xf]
  %v5223 = vld [vmem:[%s5220 + $0x8] sm:$0xf]
  %v5224 = vld [vmem:[%s5220 + $0xc] sm:$0xf]
  %v5225 = vpack.c.bf16 %v5219, %v5218
  %s5226 = scalar_lea.vmem %s7, 5
  %v5227 = vld [vmem:[%s5226] sm:$0x1]
  %v5229 = vlaneseq
  %v5230 = vshrl.u32 %v5229, 7
  %v5231 = vsub.s32 0, %v5230
  %v5232 = vrot.slane %v5227, %v5231
  %v5238 = vunpack.c.l.b16 %v5221
  %v5239 = vunpack.c.l.b16 %v5222
  %v5240 = vunpack.c.l.b16 %v5223
  %v5241 = vunpack.c.l.b16 %v5224
  %v5242 = vpack.c.b16 %v5239, %v5238
  %v5243 = vpack.c.b16 %v5241, %v5240
  %v5247 = vsel %vm76, %v5225, 0
  %5249 = vmatprep.subr.bf16.mxu0 0
  %5250 = vmatpush1.bf16.msra.mxu0 %v5242
  %5251 = vmatprep.subr.bf16.mxu0 0
  %5252 = vmatpush1.bf16.msra.mxu0 %v5243
  %5253 = vmatprep.subr.bf16.mxu0 0
  %5254 = vmatpush1.bf16.msra.mxu0 0
  %5255 = vmatprep.subr.bf16.mxu0 0
  %5256 = vmatpush1.bf16.msra.mxu0 0
  %5257 = vmatprep.subr.bf16.mxu0 0
  %5258 = vmatpush1.bf16.msra.mxu0 0
  %5259 = vmatprep.subr.bf16.mxu0 0
  %5260 = vmatpush1.bf16.msra.mxu0 0
  %5261 = vmatprep.subr.bf16.mxu0 0
  %5262 = vmatpush1.bf16.msra.mxu0 0
  %5263 = vmatprep.subr.bf16.mxu0 0
  %5264 = vmatpush1.bf16.msra.mxu0 0
  %5265 = vmatprep.subr.bf16.mxu0 0
  %5266 = vmatpush1.bf16.msra.mxu0 0
  %5267 = vmatprep.subr.bf16.mxu0 0
  %5268 = vmatpush1.bf16.msra.mxu0 0
  %5269 = vmatprep.subr.bf16.mxu0 0
  %5270 = vmatpush1.bf16.msra.mxu0 0
  %5271 = vmatprep.subr.bf16.mxu0 0
  %5272 = vmatpush1.bf16.msra.mxu0 0
  %5273 = vmatprep.subr.bf16.mxu0 0
  %5274 = vmatpush1.bf16.msra.mxu0 0
  %5275 = vmatprep.subr.bf16.mxu0 0
  %5276 = vmatpush1.bf16.msra.mxu0 0
  %5277 = vmatprep.subr.bf16.mxu0 0
  %5278 = vmatpush1.bf16.msra.mxu0 0
  %5279 = vmatprep.subr.bf16.mxu0 0
  %5280 = vmatpush1.bf16.msra.mxu0 0
  %5281 = vmatprep.mubr.bf16.mxu0 0
  %5282 = vmatmul.mubr.bf16.gmra.mrb[0].mxu0 %v5247
  %v5283 = vpop.f32.mrb[0].mxu0
  %v5284 = vadd.f32 %v5232, %v5283
  %v5285 = vpop.f32.mrb[0].mxu0
  %v5286 = vpop.f32.mrb[0].mxu0
  %v5287 = vadd.f32 %v5232, %v5286
  %v5288 = vpop.f32.mrb[0].mxu0
  %5289 = vdwg.mxu0
  %5290 = vrot.lane.b32.xlu0 %v5242, 96
  %v5291 = vpop.permute.xlu0 %5290
  %5292 = vrot.lane.b32.xlu0 %v5243, 96
  %v5293 = vpop.permute.xlu0 %5292
  %5296 = vrot.lane.b32.xlu0 %v5232, 96
  %v5297 = vpop.permute.xlu0 %5296
  %5299 = vmatprep.subr.bf16.mxu0 0
  %5300 = vmatpush1.bf16.msra.mxu0 %v5291
  %5301 = vmatprep.subr.bf16.mxu0 0
  %5302 = vmatpush1.bf16.msra.mxu0 %v5293
  %5303 = vmatprep.subr.bf16.mxu0 0
  %5304 = vmatpush1.bf16.msra.mxu0 0
  %5305 = vmatprep.subr.bf16.mxu0 0
  %5306 = vmatpush1.bf16.msra.mxu0 0
  %5307 = vmatprep.subr.bf16.mxu0 0
  %5308 = vmatpush1.bf16.msra.mxu0 0
  %5309 = vmatprep.subr.bf16.mxu0 0
  %5310 = vmatpush1.bf16.msra.mxu0 0
  %5311 = vmatprep.subr.bf16.mxu0 0
  %5312 = vmatpush1.bf16.msra.mxu0 0
  %5313 = vmatprep.subr.bf16.mxu0 0
  %5314 = vmatpush1.bf16.msra.mxu0 0
  %5315 = vmatprep.subr.bf16.mxu0 0
  %5316 = vmatpush1.bf16.msra.mxu0 0
  %5317 = vmatprep.subr.bf16.mxu0 0
  %5318 = vmatpush1.bf16.msra.mxu0 0
  %5319 = vmatprep.subr.bf16.mxu0 0
  %5320 = vmatpush1.bf16.msra.mxu0 0
  %5321 = vmatprep.subr.bf16.mxu0 0
  %5322 = vmatpush1.bf16.msra.mxu0 0
  %5323 = vmatprep.subr.bf16.mxu0 0
  %5324 = vmatpush1.bf16.msra.mxu0 0
  %5325 = vmatprep.subr.bf16.mxu0 0
  %5326 = vmatpush1.bf16.msra.mxu0 0
  %5327 = vmatprep.subr.bf16.mxu0 0
  %5328 = vmatpush1.bf16.msra.mxu0 0
  %5329 = vmatprep.subr.bf16.mxu0 0
  %5330 = vmatpush1.bf16.msra.mxu0 0
  %5331 = vmatprep.mubr.bf16.mxu0 0
  %5332 = vmatmul.mubr.bf16.gmra.mrb[0].mxu0 %v3543
  %v5333 = vpop.f32.mrb[0].mxu0
  %v5334 = vadd.f32 %v5297, %v5333
  %v5335 = vpop.f32.mrb[0].mxu0
  %v5336 = vpop.f32.mrb[0].mxu0
  %v5337 = vadd.f32 %v5297, %v5336
  %v5338 = vpop.f32.mrb[0].mxu0
  %5339 = vmatprep.mubr.bf16.mxu0 0
  %5340 = vmatmul.mubr.bf16.gmra.mrb[0].mxu0 %v3546
  %v5341 = vpop.f32.mrb[0].mxu0
  %v5342 = vadd.f32 %v5297, %v5341
  %v5343 = vpop.f32.mrb[0].mxu0
  %v5344 = vpop.f32.mrb[0].mxu0
  %v5345 = vpop.f32.mrb[0].mxu0
  %5346 = vdwg.mxu0
  %v5347 = vpack.c.bf16 %v5287, %v5284
  %v5348 = vpack.c.bf16 %v5337, %v5334
  %v5349 = vpack.c.bf16 %v5342, %v5342
  %v5351 = vsel %vm244, %v5347, 0
  %v5354 = vsel %vm244, %v5348, 0
  %v5357 = vsel %vm244, %v5349, 0
  %5359 = vmatprep.subr.bf16.mxu0 0
  %5360 = vmatpush1.bf16.xpose.msra.mxu0 %v5354
  %5361 = vmatprep.subr.bf16.mxu0 0
  %5362 = vmatpush1.bf16.xpose.msra.mxu0 %v5357
  %5363 = vmatprep.subr.bf16.mxu0 0
  %5364 = vmatpush1.bf16.xpose.msra.mxu0 0
  %5365 = vmatprep.subr.bf16.mxu0 0
  %5366 = vmatpush1.bf16.xpose.msra.mxu0 0
  %5367 = vmatprep.subr.bf16.mxu0 0
  %5368 = vmatpush1.bf16.xpose.msra.mxu0 0
  %5369 = vmatprep.subr.bf16.mxu0 0
  %5370 = vmatpush1.bf16.xpose.msra.mxu0 0
  %5371 = vmatprep.subr.bf16.mxu0 0
  %5372 = vmatpush1.bf16.xpose.msra.mxu0 0
  %5373 = vmatprep.subr.bf16.mxu0 0
  %5374 = vmatpush1.bf16.xpose.msra.mxu0 0
  %5375 = vmatprep.subr.bf16.mxu0 0
  %5376 = vmatpush1.bf16.xpose.msra.mxu0 0
  %5377 = vmatprep.subr.bf16.mxu0 0
  %5378 = vmatpush1.bf16.xpose.msra.mxu0 0
  %5379 = vmatprep.subr.bf16.mxu0 0
  %5380 = vmatpush1.bf16.xpose.msra.mxu0 0
  %5381 = vmatprep.subr.bf16.mxu0 0
  %5382 = vmatpush1.bf16.xpose.msra.mxu0 0
  %5383 = vmatprep.subr.bf16.mxu0 0
  %5384 = vmatpush1.bf16.xpose.msra.mxu0 0
  %5385 = vmatprep.subr.bf16.mxu0 0
  %5386 = vmatpush1.bf16.xpose.msra.mxu0 0
  %5387 = vmatprep.subr.bf16.mxu0 0
  %5388 = vmatpush1.bf16.xpose.msra.mxu0 0
  %5389 = vmatprep.subr.bf16.mxu0 0
  %5390 = vmatpush1.bf16.xpose.msra.mxu0 0
  %5391 = vmatprep.mubr.bf16.mxu0 0
  %5392 = vmatmul.mubr.bf16.gmra.mrb[0].mxu0 %v5351
  %v5393 = vpop.f32.mrb[0].mxu0
  %v5394 = vadd.f32 %v2683, %v5393
  %v5395 = vpop.f32.mrb[0].mxu0
  %v5396 = vpop.f32.mrb[0].mxu0
  %v5397 = vadd.f32 %v2684, %v5396
  %v5398 = vpop.f32.mrb[0].mxu0
  %5399 = vdwg.mxu0
  %v5400 = vsel %vm305, %v5394, -inf
  %5401 = vmax.xlane.f32.xlu0 %v5400
  %v5402 = vpop.xlane.xlu0 %5401
  %v5403 = vsel %vm305, %v5397, -inf
  %5404 = vmax.xlane.f32.xlu0 %v5403
  %v5405 = vpop.xlane.xlu0 %5404
  %v5406 = vsub.f32 %v5394, %v5402
  %v5407 = vsub.f32 %v5397, %v5405
  %v5408 = vmul.f32 %v5406, 1.442695
  %v5409 = vpow.pop %v5408
  %v5410 = vmul.f32 %v5407, 1.442695
  %v5411 = vpow.pop %v5410
  %v5412 = vsel %vm305, %v5409, 0.0
  %5413 = vadd.xlane.f32.xlu0 %v5412
  %v5414 = vpop.xlane.xlu0 %5413
  %v5415 = vsel %vm305, %v5411, 0.0
  %5416 = vadd.xlane.f32.xlu0 %v5415
  %v5417 = vpop.xlane.xlu0 %5416
  %v5418 = vrcp.pop %v5414
  %v5419 = vrcp.pop %v5417
  %v5420 = vmul.f32 %v5409, %v5418
  %v5421 = vmul.f32 %v5411, %v5419
  %v5422 = vpack.c.bf16 %v5421, %v5420
  %5425 = vrot.lane.b32.xlu0 %v5348, 96
  %v5426 = vpop.permute.xlu0 %5425
  %5427 = vrot.lane.b32.xlu0 %v5349, 96
  %v5428 = vpop.permute.xlu0 %5427
  %v5431 = vsel %vm305, %v5422, 0
  %v5434 = vsel %vm353, %v5428, 0
  %5436 = vmatprep.subr.bf16.mxu0 0
  %5437 = vmatpush1.bf16.msra.mxu0 %v5426
  %5438 = vmatprep.subr.bf16.mxu0 0
  %5439 = vmatpush1.bf16.msra.mxu0 %v5434
  %5440 = vmatprep.subr.bf16.mxu0 0
  %5441 = vmatpush1.bf16.msra.mxu0 0
  %5442 = vmatprep.subr.bf16.mxu0 0
  %5443 = vmatpush1.bf16.msra.mxu0 0
  %5444 = vmatprep.subr.bf16.mxu0 0
  %5445 = vmatpush1.bf16.msra.mxu0 0
  %5446 = vmatprep.subr.bf16.mxu0 0
  %5447 = vmatpush1.bf16.msra.mxu0 0
  %5448 = vmatprep.subr.bf16.mxu0 0
  %5449 = vmatpush1.bf16.msra.mxu0 0
  %5450 = vmatprep.subr.bf16.mxu0 0
  %5451 = vmatpush1.bf16.msra.mxu0 0
  %5452 = vmatprep.subr.bf16.mxu0 0
  %5453 = vmatpush1.bf16.msra.mxu0 0
  %5454 = vmatprep.subr.bf16.mxu0 0
  %5455 = vmatpush1.bf16.msra.mxu0 0
  %5456 = vmatprep.subr.bf16.mxu0 0
  %5457 = vmatpush1.bf16.msra.mxu0 0
  %5458 = vmatprep.subr.bf16.mxu0 0
  %5459 = vmatpush1.bf16.msra.mxu0 0
  %5460 = vmatprep.subr.bf16.mxu0 0
  %5461 = vmatpush1.bf16.msra.mxu0 0
  %5462 = vmatprep.subr.bf16.mxu0 0
  %5463 = vmatpush1.bf16.msra.mxu0 0
  %5464 = vmatprep.subr.bf16.mxu0 0
  %5465 = vmatpush1.bf16.msra.mxu0 0
  %5466 = vmatprep.subr.bf16.mxu0 0
  %5467 = vmatpush1.bf16.msra.mxu0 0
  %5468 = vmatprep.mubr.bf16.mxu0 0
  %5469 = vmatmul.mubr.bf16.gmra.mrb[0].mxu0 %v5431
  %v5470 = vpop.f32.mrb[0].mxu0
  %v5471 = vadd.f32 0.0, %v5470
  %v5472 = vpop.f32.mrb[0].mxu0
  %v5473 = vpop.f32.mrb[0].mxu0
  %v5474 = vadd.f32 0.0, %v5473
  %v5475 = vpop.f32.mrb[0].mxu0
  %5476 = vdwg.mxu0
  %5478 = vrot.lane.b32.xlu0 %v5347, 120
  %v5479 = vpop.permute.xlu0 %5478
  %5480 = vrot.lane.b32.xlu0 %v5348, 120
  %v5481 = vpop.permute.xlu0 %5480
  %5482 = vrot.lane.b32.xlu0 %v5349, 120
  %v5483 = vpop.permute.xlu0 %5482
  %v5485 = vsel %vm244, %v5479, 0
  %v5488 = vsel %vm244, %v5481, 0
  %v5491 = vsel %vm244, %v5483, 0
  %5493 = vmatprep.subr.bf16.mxu0 0
  %5494 = vmatpush1.bf16.xpose.msra.mxu0 %v5488
  %5495 = vmatprep.subr.bf16.mxu0 0
  %5496 = vmatpush1.bf16.xpose.msra.mxu0 %v5491
  %5497 = vmatprep.subr.bf16.mxu0 0
  %5498 = vmatpush1.bf16.xpose.msra.mxu0 0
  %5499 = vmatprep.subr.bf16.mxu0 0
  %5500 = vmatpush1.bf16.xpose.msra.mxu0 0
  %5501 = vmatprep.subr.bf16.mxu0 0
  %5502 = vmatpush1.bf16.xpose.msra.mxu0 0
  %5503 = vmatprep.subr.bf16.mxu0 0
  %5504 = vmatpush1.bf16.xpose.msra.mxu0 0
  %5505 = vmatprep.subr.bf16.mxu0 0
  %5506 = vmatpush1.bf16.xpose.msra.mxu0 0
  %5507 = vmatprep.subr.bf16.mxu0 0
  %5508 = vmatpush1.bf16.xpose.msra.mxu0 0
  %5509 = vmatprep.subr.bf16.mxu0 0
  %5510 = vmatpush1.bf16.xpose.msra.mxu0 0
  %5511 = vmatprep.subr.bf16.mxu0 0
  %5512 = vmatpush1.bf16.xpose.msra.mxu0 0
  %5513 = vmatprep.subr.bf16.mxu0 0
  %5514 = vmatpush1.bf16.xpose.msra.mxu0 0
  %5515 = vmatprep.subr.bf16.mxu0 0
  %5516 = vmatpush1.bf16.xpose.msra.mxu0 0
  %5517 = vmatprep.subr.bf16.mxu0 0
  %5518 = vmatpush1.bf16.xpose.msra.mxu0 0
  %5519 = vmatprep.subr.bf16.mxu0 0
  %5520 = vmatpush1.bf16.xpose.msra.mxu0 0
  %5521 = vmatprep.subr.bf16.mxu0 0
  %5522 = vmatpush1.bf16.xpose.msra.mxu0 0
  %5523 = vmatprep.subr.bf16.mxu0 0
  %5524 = vmatpush1.bf16.xpose.msra.mxu0 0
  %5525 = vmatprep.mubr.bf16.mxu0 0
  %5526 = vmatmul.mubr.bf16.gmra.mrb[0].mxu0 %v5485
  %v5527 = vpop.f32.mrb[0].mxu0
  %v5528 = vadd.f32 %v2683, %v5527
  %v5529 = vpop.f32.mrb[0].mxu0
  %v5530 = vpop.f32.mrb[0].mxu0
  %v5531 = vadd.f32 %v2684, %v5530
  %v5532 = vpop.f32.mrb[0].mxu0
  %5533 = vdwg.mxu0
  %v5534 = vsel %vm305, %v5528, -inf
  %5535 = vmax.xlane.f32.xlu0 %v5534
  %v5536 = vpop.xlane.xlu0 %5535
  %v5537 = vsel %vm305, %v5531, -inf
  %5538 = vmax.xlane.f32.xlu0 %v5537
  %v5539 = vpop.xlane.xlu0 %5538
  %v5540 = vsub.f32 %v5528, %v5536
  %v5541 = vsub.f32 %v5531, %v5539
  %v5542 = vmul.f32 %v5540, 1.442695
  %v5543 = vpow.pop %v5542
  %v5544 = vmul.f32 %v5541, 1.442695
  %v5545 = vpow.pop %v5544
  %v5546 = vsel %vm305, %v5543, 0.0
  %5547 = vadd.xlane.f32.xlu0 %v5546
  %v5548 = vpop.xlane.xlu0 %5547
  %v5549 = vsel %vm305, %v5545, 0.0
  %5550 = vadd.xlane.f32.xlu0 %v5549
  %v5551 = vpop.xlane.xlu0 %5550
  %v5552 = vrcp.pop %v5548
  %v5553 = vrcp.pop %v5551
  %v5554 = vmul.f32 %v5543, %v5552
  %v5555 = vmul.f32 %v5545, %v5553
  %v5556 = vpack.c.bf16 %v5555, %v5554
  %5557 = vrot.lane.b32.xlu0 %v5348, 88
  %v5558 = vpop.permute.xlu0 %5557
  %5559 = vrot.lane.b32.xlu0 %v5349, 88
  %v5560 = vpop.permute.xlu0 %5559
  %v5563 = vsel %vm305, %v5556, 0
  %v5566 = vsel %vm353, %v5560, 0
  %5568 = vmatprep.subr.bf16.mxu0 0
  %5569 = vmatpush1.bf16.msra.mxu0 %v5558
  %5570 = vmatprep.subr.bf16.mxu0 0
  %5571 = vmatpush1.bf16.msra.mxu0 %v5566
  %5572 = vmatprep.subr.bf16.mxu0 0
  %5573 = vmatpush1.bf16.msra.mxu0 0
  %5574 = vmatprep.subr.bf16.mxu0 0
  %5575 = vmatpush1.bf16.msra.mxu0 0
  %5576 = vmatprep.subr.bf16.mxu0 0
  %5577 = vmatpush1.bf16.msra.mxu0 0
  %5578 = vmatprep.subr.bf16.mxu0 0
  %5579 = vmatpush1.bf16.msra.mxu0 0
  %5580 = vmatprep.subr.bf16.mxu0 0
  %5581 = vmatpush1.bf16.msra.mxu0 0
  %5582 = vmatprep.subr.bf16.mxu0 0
  %5583 = vmatpush1.bf16.msra.mxu0 0
  %5584 = vmatprep.subr.bf16.mxu0 0
  %5585 = vmatpush1.bf16.msra.mxu0 0
  %5586 = vmatprep.subr.bf16.mxu0 0
  %5587 = vmatpush1.bf16.msra.mxu0 0
  %5588 = vmatprep.subr.bf16.mxu0 0
  %5589 = vmatpush1.bf16.msra.mxu0 0
  %5590 = vmatprep.subr.bf16.mxu0 0
  %5591 = vmatpush1.bf16.msra.mxu0 0
  %5592 = vmatprep.subr.bf16.mxu0 0
  %5593 = vmatpush1.bf16.msra.mxu0 0
  %5594 = vmatprep.subr.bf16.mxu0 0
  %5595 = vmatpush1.bf16.msra.mxu0 0
  %5596 = vmatprep.subr.bf16.mxu0 0
  %5597 = vmatpush1.bf16.msra.mxu0 0
  %5598 = vmatprep.subr.bf16.mxu0 0
  %5599 = vmatpush1.bf16.msra.mxu0 0
  %5600 = vmatprep.mubr.bf16.mxu0 0
  %5601 = vmatmul.mubr.bf16.gmra.mrb[0].mxu0 %v5563
  %v5602 = vpop.f32.mrb[0].mxu0
  %v5603 = vadd.f32 0.0, %v5602
  %v5604 = vpop.f32.mrb[0].mxu0
  %v5605 = vpop.f32.mrb[0].mxu0
  %v5606 = vadd.f32 0.0, %v5605
  %v5607 = vpop.f32.mrb[0].mxu0
  %5608 = vdwg.mxu0
  %5609 = vrot.lane.b32.xlu0 %v5347, 112
  %v5610 = vpop.permute.xlu0 %5609
  %5611 = vrot.lane.b32.xlu0 %v5348, 112
  %v5612 = vpop.permute.xlu0 %5611
  %5613 = vrot.lane.b32.xlu0 %v5349, 112
  %v5614 = vpop.permute.xlu0 %5613
  %v5616 = vsel %vm244, %v5610, 0
  %v5619 = vsel %vm244, %v5612, 0
  %v5622 = vsel %vm244, %v5614, 0
  %5624 = vmatprep.subr.bf16.mxu0 0
  %5625 = vmatpush1.bf16.xpose.msra.mxu0 %v5619
  %5626 = vmatprep.subr.bf16.mxu0 0
  %5627 = vmatpush1.bf16.xpose.msra.mxu0 %v5622
  %5628 = vmatprep.subr.bf16.mxu0 0
  %5629 = vmatpush1.bf16.xpose.msra.mxu0 0
  %5630 = vmatprep.subr.bf16.mxu0 0
  %5631 = vmatpush1.bf16.xpose.msra.mxu0 0
  %5632 = vmatprep.subr.bf16.mxu0 0
  %5633 = vmatpush1.bf16.xpose.msra.mxu0 0
  %5634 = vmatprep.subr.bf16.mxu0 0
  %5635 = vmatpush1.bf16.xpose.msra.mxu0 0
  %5636 = vmatprep.subr.bf16.mxu0 0
  %5637 = vmatpush1.bf16.xpose.msra.mxu0 0
  %5638 = vmatprep.subr.bf16.mxu0 0
  %5639 = vmatpush1.bf16.xpose.msra.mxu0 0
  %5640 = vmatprep.subr.bf16.mxu0 0
  %5641 = vmatpush1.bf16.xpose.msra.mxu0 0
  %5642 = vmatprep.subr.bf16.mxu0 0
  %5643 = vmatpush1.bf16.xpose.msra.mxu0 0
  %5644 = vmatprep.subr.bf16.mxu0 0
  %5645 = vmatpush1.bf16.xpose.msra.mxu0 0
  %5646 = vmatprep.subr.bf16.mxu0 0
  %5647 = vmatpush1.bf16.xpose.msra.mxu0 0
  %5648 = vmatprep.subr.bf16.mxu0 0
  %5649 = vmatpush1.bf16.xpose.msra.mxu0 0
  %5650 = vmatprep.subr.bf16.mxu0 0
  %5651 = vmatpush1.bf16.xpose.msra.mxu0 0
  %5652 = vmatprep.subr.bf16.mxu0 0
  %5653 = vmatpush1.bf16.xpose.msra.mxu0 0
  %5654 = vmatprep.subr.bf16.mxu0 0
  %5655 = vmatpush1.bf16.xpose.msra.mxu0 0
  %5656 = vmatprep.mubr.bf16.mxu0 0
  %5657 = vmatmul.mubr.bf16.gmra.mrb[0].mxu0 %v5616
  %v5658 = vpop.f32.mrb[0].mxu0
  %v5659 = vadd.f32 %v2683, %v5658
  %v5660 = vpop.f32.mrb[0].mxu0
  %v5661 = vpop.f32.mrb[0].mxu0
  %v5662 = vadd.f32 %v2684, %v5661
  %v5663 = vpop.f32.mrb[0].mxu0
  %5664 = vdwg.mxu0
  %v5665 = vsel %vm305, %v5659, -inf
  %5666 = vmax.xlane.f32.xlu0 %v5665
  %v5667 = vpop.xlane.xlu0 %5666
  %v5668 = vsel %vm305, %v5662, -inf
  %5669 = vmax.xlane.f32.xlu0 %v5668
  %v5670 = vpop.xlane.xlu0 %5669
  %v5671 = vsub.f32 %v5659, %v5667
  %v5672 = vsub.f32 %v5662, %v5670
  %v5673 = vmul.f32 %v5671, 1.442695
  %v5674 = vpow.pop %v5673
  %v5675 = vmul.f32 %v5672, 1.442695
  %v5676 = vpow.pop %v5675
  %v5677 = vsel %vm305, %v5674, 0.0
  %5678 = vadd.xlane.f32.xlu0 %v5677
  %v5679 = vpop.xlane.xlu0 %5678
  %v5680 = vsel %vm305, %v5676, 0.0
  %5681 = vadd.xlane.f32.xlu0 %v5680
  %v5682 = vpop.xlane.xlu0 %5681
  %v5683 = vrcp.pop %v5679
  %v5684 = vrcp.pop %v5682
  %v5685 = vmul.f32 %v5674, %v5683
  %v5686 = vmul.f32 %v5676, %v5684
  %v5687 = vpack.c.bf16 %v5686, %v5685
  %5688 = vrot.lane.b32.xlu0 %v5348, 80
  %v5689 = vpop.permute.xlu0 %5688
  %5690 = vrot.lane.b32.xlu0 %v5349, 80
  %v5691 = vpop.permute.xlu0 %5690
  %v5694 = vsel %vm305, %v5687, 0
  %v5697 = vsel %vm353, %v5691, 0
  %5699 = vmatprep.subr.bf16.mxu0 0
  %5700 = vmatpush1.bf16.msra.mxu0 %v5689
  %5701 = vmatprep.subr.bf16.mxu0 0
  %5702 = vmatpush1.bf16.msra.mxu0 %v5697
  %5703 = vmatprep.subr.bf16.mxu0 0
  %5704 = vmatpush1.bf16.msra.mxu0 0
  %5705 = vmatprep.subr.bf16.mxu0 0
  %5706 = vmatpush1.bf16.msra.mxu0 0
  %5707 = vmatprep.subr.bf16.mxu0 0
  %5708 = vmatpush1.bf16.msra.mxu0 0
  %5709 = vmatprep.subr.bf16.mxu0 0
  %5710 = vmatpush1.bf16.msra.mxu0 0
  %5711 = vmatprep.subr.bf16.mxu0 0
  %5712 = vmatpush1.bf16.msra.mxu0 0
  %5713 = vmatprep.subr.bf16.mxu0 0
  %5714 = vmatpush1.bf16.msra.mxu0 0
  %5715 = vmatprep.subr.bf16.mxu0 0
  %5716 = vmatpush1.bf16.msra.mxu0 0
  %5717 = vmatprep.subr.bf16.mxu0 0
  %5718 = vmatpush1.bf16.msra.mxu0 0
  %5719 = vmatprep.subr.bf16.mxu0 0
  %5720 = vmatpush1.bf16.msra.mxu0 0
  %5721 = vmatprep.subr.bf16.mxu0 0
  %5722 = vmatpush1.bf16.msra.mxu0 0
  %5723 = vmatprep.subr.bf16.mxu0 0
  %5724 = vmatpush1.bf16.msra.mxu0 0
  %5725 = vmatprep.subr.bf16.mxu0 0
  %5726 = vmatpush1.bf16.msra.mxu0 0
  %5727 = vmatprep.subr.bf16.mxu0 0
  %5728 = vmatpush1.bf16.msra.mxu0 0
  %5729 = vmatprep.subr.bf16.mxu0 0
  %5730 = vmatpush1.bf16.msra.mxu0 0
  %5731 = vmatprep.mubr.bf16.mxu0 0
  %5732 = vmatmul.mubr.bf16.gmra.mrb[0].mxu0 %v5694
  %v5733 = vpop.f32.mrb[0].mxu0
  %v5734 = vadd.f32 0.0, %v5733
  %v5735 = vpop.f32.mrb[0].mxu0
  %v5736 = vpop.f32.mrb[0].mxu0
  %v5737 = vadd.f32 0.0, %v5736
  %v5738 = vpop.f32.mrb[0].mxu0
  %5739 = vdwg.mxu0
  %5740 = vrot.lane.b32.xlu0 %v5347, 104
  %v5741 = vpop.permute.xlu0 %5740
  %5742 = vrot.lane.b32.xlu0 %v5348, 104
  %v5743 = vpop.permute.xlu0 %5742
  %5744 = vrot.lane.b32.xlu0 %v5349, 104
  %v5745 = vpop.permute.xlu0 %5744
  %v5747 = vsel %vm244, %v5741, 0
  %v5750 = vsel %vm244, %v5743, 0
  %v5753 = vsel %vm244, %v5745, 0
  %5755 = vmatprep.subr.bf16.mxu0 0
  %5756 = vmatpush1.bf16.xpose.msra.mxu0 %v5750
  %5757 = vmatprep.subr.bf16.mxu0 0
  %5758 = vmatpush1.bf16.xpose.msra.mxu0 %v5753
  %5759 = vmatprep.subr.bf16.mxu0 0
  %5760 = vmatpush1.bf16.xpose.msra.mxu0 0
  %5761 = vmatprep.subr.bf16.mxu0 0
  %5762 = vmatpush1.bf16.xpose.msra.mxu0 0
  %5763 = vmatprep.subr.bf16.mxu0 0
  %5764 = vmatpush1.bf16.xpose.msra.mxu0 0
  %5765 = vmatprep.subr.bf16.mxu0 0
  %5766 = vmatpush1.bf16.xpose.msra.mxu0 0
  %5767 = vmatprep.subr.bf16.mxu0 0
  %5768 = vmatpush1.bf16.xpose.msra.mxu0 0
  %5769 = vmatprep.subr.bf16.mxu0 0
  %5770 = vmatpush1.bf16.xpose.msra.mxu0 0
  %5771 = vmatprep.subr.bf16.mxu0 0
  %5772 = vmatpush1.bf16.xpose.msra.mxu0 0
  %5773 = vmatprep.subr.bf16.mxu0 0
  %5774 = vmatpush1.bf16.xpose.msra.mxu0 0
  %5775 = vmatprep.subr.bf16.mxu0 0
  %5776 = vmatpush1.bf16.xpose.msra.mxu0 0
  %5777 = vmatprep.subr.bf16.mxu0 0
  %5778 = vmatpush1.bf16.xpose.msra.mxu0 0
  %5779 = vmatprep.subr.bf16.mxu0 0
  %5780 = vmatpush1.bf16.xpose.msra.mxu0 0
  %5781 = vmatprep.subr.bf16.mxu0 0
  %5782 = vmatpush1.bf16.xpose.msra.mxu0 0
  %5783 = vmatprep.subr.bf16.mxu0 0
  %5784 = vmatpush1.bf16.xpose.msra.mxu0 0
  %5785 = vmatprep.subr.bf16.mxu0 0
  %5786 = vmatpush1.bf16.xpose.msra.mxu0 0
  %5787 = vmatprep.mubr.bf16.mxu0 0
  %5788 = vmatmul.mubr.bf16.gmra.mrb[0].mxu0 %v5747
  %v5789 = vpop.f32.mrb[0].mxu0
  %v5790 = vadd.f32 %v2683, %v5789
  %v5791 = vpop.f32.mrb[0].mxu0
  %v5792 = vpop.f32.mrb[0].mxu0
  %v5793 = vadd.f32 %v2684, %v5792
  %v5794 = vpop.f32.mrb[0].mxu0
  %5795 = vdwg.mxu0
  %v5796 = vsel %vm305, %v5790, -inf
  %5797 = vmax.xlane.f32.xlu0 %v5796
  %v5798 = vpop.xlane.xlu0 %5797
  %v5799 = vsel %vm305, %v5793, -inf
  %5800 = vmax.xlane.f32.xlu0 %v5799
  %v5801 = vpop.xlane.xlu0 %5800
  %v5802 = vsub.f32 %v5790, %v5798
  %v5803 = vsub.f32 %v5793, %v5801
  %v5804 = vmul.f32 %v5802, 1.442695
  %v5805 = vpow.pop %v5804
  %v5806 = vmul.f32 %v5803, 1.442695
  %v5807 = vpow.pop %v5806
  %v5808 = vsel %vm305, %v5805, 0.0
  %5809 = vadd.xlane.f32.xlu0 %v5808
  %v5810 = vpop.xlane.xlu0 %5809
  %v5811 = vsel %vm305, %v5807, 0.0
  %5812 = vadd.xlane.f32.xlu0 %v5811
  %v5813 = vpop.xlane.xlu0 %5812
  %v5814 = vrcp.pop %v5810
  %v5815 = vrcp.pop %v5813
  %v5816 = vmul.f32 %v5805, %v5814
  %v5817 = vmul.f32 %v5807, %v5815
  %v5818 = vpack.c.bf16 %v5817, %v5816
  %5819 = vrot.lane.b32.xlu0 %v5348, 72
  %v5820 = vpop.permute.xlu0 %5819
  %5821 = vrot.lane.b32.xlu0 %v5349, 72
  %v5822 = vpop.permute.xlu0 %5821
  %v5825 = vsel %vm305, %v5818, 0
  %v5828 = vsel %vm353, %v5822, 0
  %5830 = vmatprep.subr.bf16.mxu0 0
  %5831 = vmatpush1.bf16.msra.mxu0 %v5820
  %5832 = vmatprep.subr.bf16.mxu0 0
  %5833 = vmatpush1.bf16.msra.mxu0 %v5828
  %5834 = vmatprep.subr.bf16.mxu0 0
  %5835 = vmatpush1.bf16.msra.mxu0 0
  %5836 = vmatprep.subr.bf16.mxu0 0
  %5837 = vmatpush1.bf16.msra.mxu0 0
  %5838 = vmatprep.subr.bf16.mxu0 0
  %5839 = vmatpush1.bf16.msra.mxu0 0
  %5840 = vmatprep.subr.bf16.mxu0 0
  %5841 = vmatpush1.bf16.msra.mxu0 0
  %5842 = vmatprep.subr.bf16.mxu0 0
  %5843 = vmatpush1.bf16.msra.mxu0 0
  %5844 = vmatprep.subr.bf16.mxu0 0
  %5845 = vmatpush1.bf16.msra.mxu0 0
  %5846 = vmatprep.subr.bf16.mxu0 0
  %5847 = vmatpush1.bf16.msra.mxu0 0
  %5848 = vmatprep.subr.bf16.mxu0 0
  %5849 = vmatpush1.bf16.msra.mxu0 0
  %5850 = vmatprep.subr.bf16.mxu0 0
  %5851 = vmatpush1.bf16.msra.mxu0 0
  %5852 = vmatprep.subr.bf16.mxu0 0
  %5853 = vmatpush1.bf16.msra.mxu0 0
  %5854 = vmatprep.subr.bf16.mxu0 0
  %5855 = vmatpush1.bf16.msra.mxu0 0
  %5856 = vmatprep.subr.bf16.mxu0 0
  %5857 = vmatpush1.bf16.msra.mxu0 0
  %5858 = vmatprep.subr.bf16.mxu0 0
  %5859 = vmatpush1.bf16.msra.mxu0 0
  %5860 = vmatprep.subr.bf16.mxu0 0
  %5861 = vmatpush1.bf16.msra.mxu0 0
  %5862 = vmatprep.mubr.bf16.mxu0 0
  %5863 = vmatmul.mubr.bf16.gmra.mrb[0].mxu0 %v5825
  %v5864 = vpop.f32.mrb[0].mxu0
  %v5865 = vadd.f32 0.0, %v5864
  %v5866 = vpop.f32.mrb[0].mxu0
  %v5867 = vpop.f32.mrb[0].mxu0
  %v5868 = vadd.f32 0.0, %v5867
  %v5869 = vpop.f32.mrb[0].mxu0
  %5870 = vdwg.mxu0
  %5873 = vrot.lane.b32.xlu0 %v5603, 8
  %v5874 = vpop.permute.xlu0 %5873
  %5875 = vrot.lane.b32.xlu0 %v5606, 8
  %v5876 = vpop.permute.xlu0 %5875
  %5881 = vrot.lane.b32.xlu0 %v5734, 16
  %v5882 = vpop.permute.xlu0 %5881
  %5883 = vrot.lane.b32.xlu0 %v5737, 16
  %v5884 = vpop.permute.xlu0 %5883
  %5889 = vrot.lane.b32.xlu0 %v5865, 24
  %v5890 = vpop.permute.xlu0 %5889
  %5891 = vrot.lane.b32.xlu0 %v5868, 24
  %v5892 = vpop.permute.xlu0 %5891
  %v5895 = vsel %vm244, %v5471, %v5874
  %v5896 = vsel %vm244, %v5474, %v5876
  %v5897 = vsel %vm939, %v5895, %v5882
  %v5898 = vsel %vm939, %v5896, %v5884
  %v5899 = vsel %vm943, %v5897, %v5890
  %v5900 = vsel %vm943, %v5898, %v5892
  %s5901 = scalar_lea.vmem %s8, 80
  %v5902 = vld [vmem:[%s5901] sm:$0xf]
  %v5903 = vld [vmem:[%s5901 + $0x4] sm:$0xf]
  %v5904 = vld [vmem:[%s5901 + $0x8] sm:$0xf]
  %v5905 = vld [vmem:[%s5901 + $0xc] sm:$0xf]
  %v5906 = vpack.c.bf16 %v5900, %v5899
  %s5907 = scalar_lea.vmem %s9, 5
  %v5908 = vld [vmem:[%s5907] sm:$0x1]
  %v5910 = vlaneseq
  %v5911 = vshrl.u32 %v5910, 7
  %v5912 = vsub.s32 0, %v5911
  %v5913 = vrot.slane %v5908, %v5912
  %v5919 = vunpack.c.l.b16 %v5902
  %v5920 = vunpack.c.l.b16 %v5903
  %v5921 = vunpack.c.l.b16 %v5904
  %v5922 = vunpack.c.l.b16 %v5905
  %v5923 = vpack.c.b16 %v5920, %v5919
  %v5924 = vpack.c.b16 %v5922, %v5921
  %v5928 = vsel %vm76, %v5906, 0
  %5930 = vmatprep.subr.bf16.mxu0 0
  %5931 = vmatpush1.bf16.msra.mxu0 %v5923
  %5932 = vmatprep.subr.bf16.mxu0 0
  %5933 = vmatpush1.bf16.msra.mxu0 %v5924
  %5934 = vmatprep.subr.bf16.mxu0 0
  %5935 = vmatpush1.bf16.msra.mxu0 0
  %5936 = vmatprep.subr.bf16.mxu0 0
  %5937 = vmatpush1.bf16.msra.mxu0 0
  %5938 = vmatprep.subr.bf16.mxu0 0
  %5939 = vmatpush1.bf16.msra.mxu0 0
  %5940 = vmatprep.subr.bf16.mxu0 0
  %5941 = vmatpush1.bf16.msra.mxu0 0
  %5942 = vmatprep.subr.bf16.mxu0 0
  %5943 = vmatpush1.bf16.msra.mxu0 0
  %5944 = vmatprep.subr.bf16.mxu0 0
  %5945 = vmatpush1.bf16.msra.mxu0 0
  %5946 = vmatprep.subr.bf16.mxu0 0
  %5947 = vmatpush1.bf16.msra.mxu0 0
  %5948 = vmatprep.subr.bf16.mxu0 0
  %5949 = vmatpush1.bf16.msra.mxu0 0
  %5950 = vmatprep.subr.bf16.mxu0 0
  %5951 = vmatpush1.bf16.msra.mxu0 0
  %5952 = vmatprep.subr.bf16.mxu0 0
  %5953 = vmatpush1.bf16.msra.mxu0 0
  %5954 = vmatprep.subr.bf16.mxu0 0
  %5955 = vmatpush1.bf16.msra.mxu0 0
  %5956 = vmatprep.subr.bf16.mxu0 0
  %5957 = vmatpush1.bf16.msra.mxu0 0
  %5958 = vmatprep.subr.bf16.mxu0 0
  %5959 = vmatpush1.bf16.msra.mxu0 0
  %5960 = vmatprep.subr.bf16.mxu0 0
  %5961 = vmatpush1.bf16.msra.mxu0 0
  %5962 = vmatprep.mubr.bf16.mxu0 0
  %5963 = vmatmul.mubr.bf16.gmra.mrb[0].mxu0 %v5928
  %v5964 = vpop.f32.mrb[0].mxu0
  %v5965 = vadd.f32 %v5913, %v5964
  %v5966 = vpop.f32.mrb[0].mxu0
  %v5967 = vpop.f32.mrb[0].mxu0
  %v5968 = vadd.f32 %v5913, %v5967
  %v5969 = vpop.f32.mrb[0].mxu0
  %5970 = vdwg.mxu0
  %v5971 = vadd.f32 %v5965, %v5158
  %v5972 = vadd.f32 %v5968, %v5159
  %s5973 = scalar_lea.vmem %s10, 10
  %v5974 = vld [vmem:[%s5973] sm:$0x1]
  %s5975 = scalar_lea.vmem %s11, 10
  %v5976 = vld [vmem:[%s5975] sm:$0x1]
  %v5977 = vsel %vm76, %v5971, 0.0
  %5978 = vadd.xlane.f32.xlu0 %v5977
  %v5979 = vpop.xlane.xlu0 %5978
  %v5980 = vsel %vm76, %v5972, 0.0
  %5981 = vadd.xlane.f32.xlu0 %v5980
  %v5982 = vpop.xlane.xlu0 %5981
  %v5983 = vmul.f32 %v5979, %v87
  %v5984 = vmul.f32 %v5982, %v87
  %v5985 = vsub.f32 %v5971, %v5983
  %v5986 = vsub.f32 %v5972, %v5984
  %v5987 = vmul.f32 %v5985, %v5985
  %v5988 = vmul.f32 %v5986, %v5986
  %v5989 = vsel %vm76, %v5987, 0.0
  %5990 = vadd.xlane.f32.xlu0 %v5989
  %v5991 = vpop.xlane.xlu0 %5990
  %v5992 = vsel %vm76, %v5988, 0.0
  %5993 = vadd.xlane.f32.xlu0 %v5992
  %v5994 = vpop.xlane.xlu0 %5993
  %v5995 = vmul.f32 %v5991, 0.032258064
  %v5996 = vmul.f32 %v5994, 0.032258064
  %v5997 = vrsqrt.pop %v5995
  %v5998 = vmul.f32 %v5995, %v5997
  %vm5999 = vcmp.eq.f32.partialorder %v5995, inf
  %v6000 = vsel %vm5999, %v5995, %v5998
  %vm6001 = vcmp.eq.f32.partialorder %v5995, 0.0
  %v6002 = vand.u32 %v5995, 2147483648
  %v6003 = vsel %vm6001, %v6002, %v6000
  %v6004 = vrsqrt.pop %v5996
  %v6005 = vmul.f32 %v5996, %v6004
  %vm6006 = vcmp.eq.f32.partialorder %v5996, inf
  %v6007 = vsel %vm6006, %v5996, %v6005
  %vm6008 = vcmp.eq.f32.partialorder %v5996, 0.0
  %v6009 = vand.u32 %v5996, 2147483648
  %v6010 = vsel %vm6008, %v6009, %v6007
  %v6011 = vadd.f32 %v6003, 1e-06
  %v6012 = vadd.f32 %v6010, 1e-06
  %v6013 = vrcp.pop %v6011
  %v6014 = vrcp.pop %v6012
  %v6015 = vmul.f32 %v5985, %v6013
  %v6016 = vmul.f32 %v5986, %v6014
  %v6018 = vlaneseq
  %v6019 = vshrl.u32 %v6018, 7
  %v6020 = vsub.s32 0, %v6019
  %v6021 = vrot.slane %v5974, %v6020
  %v6023 = vmul.f32 %v6015, %v6021
  %v6024 = vmul.f32 %v6016, %v6021
  %v6026 = vlaneseq
  %v6027 = vshrl.u32 %v6026, 7
  %v6028 = vsub.s32 0, %v6027
  %v6029 = vrot.slane %v5976, %v6028
  %v6031 = vadd.f32 %v6023, %v6029
  %v6032 = vadd.f32 %v6024, %v6029
  %s6033 = scalar_lea.vmem %s12, 48
  %v6034 = vld [vmem:[%s6033] sm:$0xf]
  %v6035 = vld [vmem:[%s6033 + $0x4] sm:$0xf]
  %v6036 = vld [vmem:[%s6033 + $0x8] sm:$0xf]
  %v6037 = vld [vmem:[%s6033 + $0xc] sm:$0xf]
  %v6038 = vpack.c.bf16 %v6032, %v6031
  %s6039 = scalar_lea.vmem %s13, 3
  %v6040 = vld [vmem:[%s6039] sm:$0x1]
  %v6042 = vlaneseq
  %v6043 = vshrl.u32 %v6042, 7
  %v6044 = vsub.s32 0, %v6043
  %v6045 = vrot.slane %v6040, %v6044
  %v6051 = vunpack.c.l.b16 %v6034
  %v6052 = vunpack.c.l.b16 %v6035
  %v6053 = vunpack.c.l.b16 %v6036
  %v6054 = vunpack.c.l.b16 %v6037
  %v6055 = vpack.c.b16 %v6052, %v6051
  %v6056 = vpack.c.b16 %v6054, %v6053
  %v6060 = vsel %vm76, %v6038, 0
  %6062 = vmatprep.subr.bf16.mxu0 0
  %6063 = vmatpush1.bf16.msra.mxu0 %v6055
  %6064 = vmatprep.subr.bf16.mxu0 0
  %6065 = vmatpush1.bf16.msra.mxu0 %v6056
  %6066 = vmatprep.subr.bf16.mxu0 0
  %6067 = vmatpush1.bf16.msra.mxu0 0
  %6068 = vmatprep.subr.bf16.mxu0 0
  %6069 = vmatpush1.bf16.msra.mxu0 0
  %6070 = vmatprep.subr.bf16.mxu0 0
  %6071 = vmatpush1.bf16.msra.mxu0 0
  %6072 = vmatprep.subr.bf16.mxu0 0
  %6073 = vmatpush1.bf16.msra.mxu0 0
  %6074 = vmatprep.subr.bf16.mxu0 0
  %6075 = vmatpush1.bf16.msra.mxu0 0
  %6076 = vmatprep.subr.bf16.mxu0 0
  %6077 = vmatpush1.bf16.msra.mxu0 0
  %6078 = vmatprep.subr.bf16.mxu0 0
  %6079 = vmatpush1.bf16.msra.mxu0 0
  %6080 = vmatprep.subr.bf16.mxu0 0
  %6081 = vmatpush1.bf16.msra.mxu0 0
  %6082 = vmatprep.subr.bf16.mxu0 0
  %6083 = vmatpush1.bf16.msra.mxu0 0
  %6084 = vmatprep.subr.bf16.mxu0 0
  %6085 = vmatpush1.bf16.msra.mxu0 0
  %6086 = vmatprep.subr.bf16.mxu0 0
  %6087 = vmatpush1.bf16.msra.mxu0 0
  %6088 = vmatprep.subr.bf16.mxu0 0
  %6089 = vmatpush1.bf16.msra.mxu0 0
  %6090 = vmatprep.subr.bf16.mxu0 0
  %6091 = vmatpush1.bf16.msra.mxu0 0
  %6092 = vmatprep.subr.bf16.mxu0 0
  %6093 = vmatpush1.bf16.msra.mxu0 0
  %6094 = vmatprep.mubr.bf16.mxu0 0
  %6095 = vmatmul.mubr.bf16.gmra.mrb[0].mxu0 %v6060
  %v6096 = vpop.f32.mrb[0].mxu0
  %v6097 = vadd.f32 %v6045, %v6096
  %v6098 = vpop.f32.mrb[0].mxu0
  %v6099 = vpop.f32.mrb[0].mxu0
  %v6100 = vadd.f32 %v6045, %v6099
  %v6101 = vpop.f32.mrb[0].mxu0
  %6102 = vdwg.mxu0
  %v6103 = vmax.f32 %v6097, 0.0
  %v6104 = vmax.f32 %v6100, 0.0
  %s6105 = scalar_lea.vmem %s14, 96
  %v6106 = vld [vmem:[%s6105] sm:$0xf]
  %v6107 = vld [vmem:[%s6105 + $0x4] sm:$0xf]
  %v6108 = vld [vmem:[%s6105 + $0x8] sm:$0xf]
  %v6109 = vld [vmem:[%s6105 + $0xc] sm:$0xf]
  %v6110 = vld [vmem:[%s6105 + $0x10] sm:$0xf]
  %v6111 = vld [vmem:[%s6105 + $0x14] sm:$0xf]
  %v6112 = vld [vmem:[%s6105 + $0x18] sm:$0xf]
  %v6113 = vld [vmem:[%s6105 + $0x1c] sm:$0xf]
  %v6114 = vpack.c.bf16 %v6104, %v6103
  %v6123 = vunpack.c.l.b16 %v6106
  %v6124 = vunpack.c.l.b16 %v6107
  %v6125 = vunpack.c.l.b16 %v6108
  %v6126 = vunpack.c.l.b16 %v6109
  %v6127 = vunpack.c.l.b16 %v6110
  %v6128 = vunpack.c.l.b16 %v6111
  %v6129 = vunpack.c.l.b16 %v6112
  %v6130 = vunpack.c.l.b16 %v6113
  %v6131 = vpack.c.b16 %v6124, %v6123
  %v6132 = vpack.c.b16 %v6126, %v6125
  %v6133 = vpack.c.b16 %v6128, %v6127
  %v6134 = vpack.c.b16 %v6130, %v6129
  %v6140 = vsel %vm1227, %v6114, 0
  %6142 = vmatprep.subr.bf16.mxu0 0
  %6143 = vmatpush1.bf16.msra.mxu0 %v6131
  %6144 = vmatprep.subr.bf16.mxu0 0
  %6145 = vmatpush1.bf16.msra.mxu0 %v6132
  %6146 = vmatprep.subr.bf16.mxu0 0
  %6147 = vmatpush1.bf16.msra.mxu0 %v6133
  %6148 = vmatprep.subr.bf16.mxu0 0
  %6149 = vmatpush1.bf16.msra.mxu0 %v6134
  %6150 = vmatprep.subr.bf16.mxu0 0
  %6151 = vmatpush1.bf16.msra.mxu0 0
  %6152 = vmatprep.subr.bf16.mxu0 0
  %6153 = vmatpush1.bf16.msra.mxu0 0
  %6154 = vmatprep.subr.bf16.mxu0 0
  %6155 = vmatpush1.bf16.msra.mxu0 0
  %6156 = vmatprep.subr.bf16.mxu0 0
  %6157 = vmatpush1.bf16.msra.mxu0 0
  %6158 = vmatprep.subr.bf16.mxu0 0
  %6159 = vmatpush1.bf16.msra.mxu0 0
  %6160 = vmatprep.subr.bf16.mxu0 0
  %6161 = vmatpush1.bf16.msra.mxu0 0
  %6162 = vmatprep.subr.bf16.mxu0 0
  %6163 = vmatpush1.bf16.msra.mxu0 0
  %6164 = vmatprep.subr.bf16.mxu0 0
  %6165 = vmatpush1.bf16.msra.mxu0 0
  %6166 = vmatprep.subr.bf16.mxu0 0
  %6167 = vmatpush1.bf16.msra.mxu0 0
  %6168 = vmatprep.subr.bf16.mxu0 0
  %6169 = vmatpush1.bf16.msra.mxu0 0
  %6170 = vmatprep.subr.bf16.mxu0 0
  %6171 = vmatpush1.bf16.msra.mxu0 0
  %6172 = vmatprep.subr.bf16.mxu0 0
  %6173 = vmatpush1.bf16.msra.mxu0 0
  %6174 = vmatprep.mubr.bf16.mxu0 0
  %6175 = vmatmul.mubr.bf16.gmra.mrb[0].mxu0 %v6140
  %v6176 = vpop.f32.mrb[0].mxu0
  %v6177 = vadd.f32 0.0, %v6176
  %v6178 = vpop.f32.mrb[0].mxu0
  %v6179 = vpop.f32.mrb[0].mxu0
  %v6180 = vadd.f32 0.0, %v6179
  %v6181 = vpop.f32.mrb[0].mxu0
  %6182 = vdwg.mxu0
  %v6183 = vadd.f32 %v5971, %v6177
  %v6184 = vadd.f32 %v5972, %v6180
  %s6185 = scalar_lea.vmem %s15, 3
  %v6186 = vld [vmem:[%s6185] sm:$0x1]
  %v6188 = vlaneseq
  %v6189 = vshrl.u32 %v6188, 7
  %v6190 = vsub.s32 0, %v6189
  %v6191 = vrot.slane %v6186, %v6190
  %v6193 = vadd.f32 %v6183, %v6191
  %v6194 = vadd.f32 %v6184, %v6191
  %s6195 = scalar_lea.vmem %s10, 11
  %v6196 = vld [vmem:[%s6195] sm:$0x1]
  %s6197 = scalar_lea.vmem %s11, 11
  %v6198 = vld [vmem:[%s6197] sm:$0x1]
  %v6199 = vsel %vm76, %v6193, 0.0
  %6200 = vadd.xlane.f32.xlu0 %v6199
  %v6201 = vpop.xlane.xlu0 %6200
  %v6202 = vsel %vm76, %v6194, 0.0
  %6203 = vadd.xlane.f32.xlu0 %v6202
  %v6204 = vpop.xlane.xlu0 %6203
  %v6205 = vmul.f32 %v6201, %v87
  %v6206 = vmul.f32 %v6204, %v87
  %v6207 = vsub.f32 %v6193, %v6205
  %v6208 = vsub.f32 %v6194, %v6206
  %v6209 = vmul.f32 %v6207, %v6207
  %v6210 = vmul.f32 %v6208, %v6208
  %v6211 = vsel %vm76, %v6209, 0.0
  %6212 = vadd.xlane.f32.xlu0 %v6211
  %v6213 = vpop.xlane.xlu0 %6212
  %v6214 = vsel %vm76, %v6210, 0.0
  %6215 = vadd.xlane.f32.xlu0 %v6214
  %v6216 = vpop.xlane.xlu0 %6215
  %v6217 = vmul.f32 %v6213, 0.032258064
  %v6218 = vmul.f32 %v6216, 0.032258064
  %v6219 = vrsqrt.pop %v6217
  %v6220 = vmul.f32 %v6217, %v6219
  %vm6221 = vcmp.eq.f32.partialorder %v6217, inf
  %v6222 = vsel %vm6221, %v6217, %v6220
  %vm6223 = vcmp.eq.f32.partialorder %v6217, 0.0
  %v6224 = vand.u32 %v6217, 2147483648
  %v6225 = vsel %vm6223, %v6224, %v6222
  %v6226 = vrsqrt.pop %v6218
  %v6227 = vmul.f32 %v6218, %v6226
  %vm6228 = vcmp.eq.f32.partialorder %v6218, inf
  %v6229 = vsel %vm6228, %v6218, %v6227
  %vm6230 = vcmp.eq.f32.partialorder %v6218, 0.0
  %v6231 = vand.u32 %v6218, 2147483648
  %v6232 = vsel %vm6230, %v6231, %v6229
  %v6233 = vadd.f32 %v6225, 1e-06
  %v6234 = vadd.f32 %v6232, 1e-06
  %v6235 = vrcp.pop %v6233
  %v6236 = vrcp.pop %v6234
  %v6237 = vmul.f32 %v6207, %v6235
  %v6238 = vmul.f32 %v6208, %v6236
  %v6240 = vlaneseq
  %v6241 = vshrl.u32 %v6240, 7
  %v6242 = vsub.s32 0, %v6241
  %v6243 = vrot.slane %v6196, %v6242
  %v6245 = vmul.f32 %v6237, %v6243
  %v6246 = vmul.f32 %v6238, %v6243
  %v6248 = vlaneseq
  %v6249 = vshrl.u32 %v6248, 7
  %v6250 = vsub.s32 0, %v6249
  %v6251 = vrot.slane %v6198, %v6250
  %v6253 = vadd.f32 %v6245, %v6251
  %v6254 = vadd.f32 %v6246, %v6251
  %v6255 = vld [vmem:[%s18] sm:$0x1]
  %v6256 = vpack.c.bf16 %v6254, %v6253
  %v6257 = vld [vmem:[#allocation2] sm:$0x1]
  %6259 = vset.pattern.permute.xlu0 0
  %6260 = vperm.xlu0 %6259, %v6257
  %v6261 = vpop.permute.xlu0 %6260
  %v6263 = vlaneseq
  %v6264 = vshrl.u32 %v6263, 7
  %v6265 = vsub.s32 0, %v6264
  %v6266 = vrot.slane %v6261, %v6265
  %v6268 = vsel %vm76, %v6255, 0
  %v6271 = vsel %vm76, %v6256, 0
  %6273 = vmatprep.subr.bf16.mxu0 0
  %6274 = vmatpush1.bf16.xpose.msra.mxu0 %v6271
  %6275 = vmatprep.subr.bf16.mxu0 0
  %6276 = vmatpush1.bf16.xpose.msra.mxu0 0
  %6277 = vmatprep.subr.bf16.mxu0 0
  %6278 = vmatpush1.bf16.xpose.msra.mxu0 0
  %6279 = vmatprep.subr.bf16.mxu0 0
  %6280 = vmatpush1.bf16.xpose.msra.mxu0 0
  %6281 = vmatprep.subr.bf16.mxu0 0
  %6282 = vmatpush1.bf16.xpose.msra.mxu0 0
  %6283 = vmatprep.subr.bf16.mxu0 0
  %6284 = vmatpush1.bf16.xpose.msra.mxu0 0
  %6285 = vmatprep.subr.bf16.mxu0 0
  %6286 = vmatpush1.bf16.xpose.msra.mxu0 0
  %6287 = vmatprep.subr.bf16.mxu0 0
  %6288 = vmatpush1.bf16.xpose.msra.mxu0 0
  %6289 = vmatprep.subr.bf16.mxu0 0
  %6290 = vmatpush1.bf16.xpose.msra.mxu0 0
  %6291 = vmatprep.subr.bf16.mxu0 0
  %6292 = vmatpush1.bf16.xpose.msra.mxu0 0
  %6293 = vmatprep.subr.bf16.mxu0 0
  %6294 = vmatpush1.bf16.xpose.msra.mxu0 0
  %6295 = vmatprep.subr.bf16.mxu0 0
  %6296 = vmatpush1.bf16.xpose.msra.mxu0 0
  %6297 = vmatprep.subr.bf16.mxu0 0
  %6298 = vmatpush1.bf16.xpose.msra.mxu0 0
  %6299 = vmatprep.subr.bf16.mxu0 0
  %6300 = vmatpush1.bf16.xpose.msra.mxu0 0
  %6301 = vmatprep.subr.bf16.mxu0 0
  %6302 = vmatpush1.bf16.xpose.msra.mxu0 0
  %6303 = vmatprep.subr.bf16.mxu0 0
  %6304 = vmatpush1.bf16.xpose.msra.mxu0 0
  %6305 = vmatprep.mubr.bf16.mxu0 0
  %6306 = vmatmul.mubr.bf16.gmra.mrb[0].mxu0 %v6268
  %v6307 = vpop.f32.mrb[0].mxu0
  %v6308 = vadd.f32 %v6266, %v6307
  %v6309 = vpop.f32.mrb[0].mxu0
  %v6310 = vpop.f32.mrb[0].mxu0
  %v6311 = vpop.f32.mrb[0].mxu0
  %6312 = vdwg.mxu0
  %v6313 = vtanh.pop %v6308
  %vm6314 = vcmask 122880
  %6315 = vst.msk [vmem:[%s20] sm:$0x1] %vm6314, %v6313
  // Predicated region
  $region82: #{ddpg_critic_forward.1} parent=0 // pred_check
    _
  $region83: #{ddpg_critic_forward.1} parent=0 // pred_check_branch
    %6317 = sbr.rel (0) target = $region85
  $region84: #{ddpg_critic_forward.1} parent=0 // pred_region
    _
  $region85: #{ddpg_critic_forward.1} parent=0 // pred_fallthru
    _
  // Predicated region
  $region86: #{ddpg_critic_forward.1} parent=0 // pred_check
    _
  $region87: #{ddpg_critic_forward.1} parent=0 // pred_check_branch
    %6319 = sbr.rel (0) target = $region89
  $region88: #{ddpg_critic_forward.1} parent=0 // pred_region
    _
  $region89: #{ddpg_critic_forward.1} parent=0 // pred_fallthru
    _

</llo_original>
